<compile_context>
chip_gen: v5e
topology: v5e:2x2
jax: 0.10.0
libtpu: 0.0.40
codegen_flags: <defaults>
</compile_context>

<pallas_src>
import functools

import jax
import jax.numpy as jnp
import numpy as np
from jax.experimental import pallas as pl
from jax.experimental.pallas import tpu as pltpu

# ---- module hyper-parameters (PyTorch defaults) ----
D = 8
W = 256
INPUT_CH = 3
INPUT_CH_VIEWS = 3
OUTPUT_CH = 4
SKIPS = (4,)

OUT_PAD = 128   # lane-dense padded output width (sliced back to OUTPUT_CH)
TM = 2048       # default batch tile (rows per grid step); sweepable via tm=


def nerf_kernel(x_ref,
                w03, b0, w1, b1, w2, b2, w3, b3, w4, b4,
                w5h, b5, w6, b6, w7, b7, wo, bo,
                out_ref):
    f32 = jnp.float32
    bf16 = jnp.bfloat16
    pts = x_ref[...]  # (TM, INPUT_CH) f32

    # Fused K=3 matmul (f32, cheap at K=3): one (3, 2W) weight push produces
    # both the layer-0 pre-activation (first W cols) and the skip term
    # pts @ W5p (last W cols), avoiding a second tiny matmul at layer 5.
    pts_proj = jnp.dot(pts, w03[...], preferred_element_type=f32)  # (TM, 2W) f32
    # Cache the skip term in bf16 so the live-across-5-layers intermediate is
    # half the size; widen back to f32 only at the layer-5 add.
    skip = pts_proj[:, W:].astype(bf16)                            # pts @ W5p

    def lin_relu(h_bf16, w_ref, b_ref):
        y = jnp.dot(h_bf16, w_ref[...], preferred_element_type=f32) + b_ref[...]
        # cast -> bf16 ReLU: 2x VPU rate on v6e/v7x, shortens the serial
        # layer-to-layer epilogue sitting on the MXU dependency chain.
        return jnp.maximum(y.astype(bf16), 0.0)

    # layer 0: Linear(input_ch, W) + ReLU   (pts_proj dies after this slice)
    h = jnp.maximum((pts_proj[:, :W] + b0[...]).astype(bf16), 0.0)
    # layers 1..4: Linear(W, W) + ReLU
    h = lin_relu(h, w1, b1)
    h = lin_relu(h, w2, b2)
    h = lin_relu(h, w3, b3)
    h = lin_relu(h, w4, b4)
    # skip after layer 4: cat([pts, h]) @ W5 == pts @ W5p + h @ W5h
    y5 = (jnp.dot(h, w5h[...], preferred_element_type=f32)
          + skip.astype(f32) + b5[...])
    h = jnp.maximum(y5.astype(bf16), 0.0)
    # layers 6, 7: Linear(W, W) + ReLU
    h = lin_relu(h, w6, b6)
    h = lin_relu(h, w7, b7)
    # output_linear: Linear(W, output_ch) zero-padded to OUT_PAD lanes so the
    # store is unmasked / lane-dense; stored as bf16 (halves HBM writeback),
    # wrapper slices back to OUTPUT_CH and widens to f32.
    out_ref[...] = (jnp.dot(h, wo[...], preferred_element_type=f32)
                    + bo[...]).astype(out_ref.dtype)


def _full_spec(shape):
    # Whole-array block, constant block index => stays VMEM-resident across
    # the grid (no re-DMA after the first step).
    return pl.BlockSpec(shape, lambda i: (0,) * len(shape))


def _pack_kernel_params(params):
    """Cast / repack per-layer params into the kernel operand list.

    Hidden-layer weights -> bf16, biases -> f32 [1, out].  Layer-5's first
    INPUT_CH rows are fused with layer-0 into w03 (kept f32 so raw input
    coordinates are never bf16-quantized; K=3 so the f32 matmul is free); its
    remaining W rows become w5h.  The output head is zero-padded to OUT_PAD
    columns.
    """
    # The w03 fusion hard-codes this exact config; guard against silent breaks.
    assert D == 8 and SKIPS == (4,) and len(params) == D + 1, (
        "_pack_kernel_params assumes D=8, skips=(4,), use_viewdirs=False")

    (w0, b0), (w1, b1), (w2, b2), (w3, b3), (w4, b4), \
        (w5, b5), (w6, b6), (w7, b7), (wo, bo) = params
    assert w5.shape[0] == W + INPUT_CH
    bf16, f32 = jnp.bfloat16, jnp.float32

    def b2d(b):
        return b.astype(f32).reshape(1, -1)

    w03 = jnp.concatenate([w0, w5[:INPUT_CH, :]], axis=1).astype(f32)   # (3, 2W)
    w5h = w5[INPUT_CH:, :].astype(bf16)                                 # (W, W)
    wo_p = jnp.pad(wo, ((0, 0), (0, OUT_PAD - OUTPUT_CH))).astype(bf16)
    bo_p = jnp.pad(bo, ((0, OUT_PAD - OUTPUT_CH),)).astype(f32).reshape(1, OUT_PAD)

    return [w03, b2d(b0),
            w1.astype(bf16), b2d(b1), w2.astype(bf16), b2d(b2),
            w3.astype(bf16), b2d(b3), w4.astype(bf16), b2d(b4),
            w5h, b2d(b5),
            w6.astype(bf16), b2d(b6), w7.astype(bf16), b2d(b7),
            wo_p, bo_p]


@functools.partial(jax.jit, static_argnames=("tm",))
def nerf_forward(x, params, tm=None):
    """x: [N, INPUT_CH + INPUT_CH_VIEWS] float32.  Ragged N allowed."""
    n = x.shape[0]
    if tm is None:
        tm = TM
        # Keep at least 2 grid steps when the batch allows, so the "parallel"
        # batch axis can shard across both TensorCores on v7x.
        while tm > 256 and pl.cdiv(n, tm) < 2:
            tm //= 2
    n_pad = pl.cdiv(n, tm) * tm

    # use_viewdirs=False: only the first INPUT_CH columns feed the MLP.
    # Kept in f32 (layer 0 has K=3, so f32 there is essentially free).
    pts = x[:, :INPUT_CH]
    if n_pad != n:
        pts = jnp.pad(pts, ((0, n_pad - n), (0, 0)))

    kparams = _pack_kernel_params(params)

    in_specs = [pl.BlockSpec((tm, INPUT_CH), lambda i: (i, 0))]
    in_specs += [_full_spec(p.shape) for p in kparams]

    # 48 MiB fits v7x's 64 MiB/TC physical VMEM with headroom; only go to
    # 64 MiB for very large tiles (v5e/v6e, 128 MiB physical).
    vmem_limit = (64 if tm >= 4096 else 48) * 1024 * 1024

    out = pl.pallas_call(
        nerf_kernel,
        out_shape=jax.ShapeDtypeStruct((n_pad, OUT_PAD), jnp.bfloat16),
        grid_spec=pltpu.PrefetchScalarGridSpec(
            num_scalar_prefetch=0,
            grid=(n_pad // tm,),
            in_specs=in_specs,
            out_specs=pl.BlockSpec((tm, OUT_PAD), lambda i: (i, 0)),
        ),
        compiler_params=pltpu.CompilerParams(
            dimension_semantics=("parallel",),
            vmem_limit_bytes=vmem_limit,
        ),
    )(pts, *kparams)
    return out[:n, :OUTPUT_CH].astype(jnp.float32)


def init_params(key):
    """Per-layer (W[in,out], b[out]) pairs, uniform(+-1/sqrt(fan_in)) like
    PyTorch's default Linear init.  Layer 5 has fan_in = W + INPUT_CH (skip)."""
    def linear(k, fan_in, fan_out):
        kw, kb = jax.random.split(k)
        bound = 1.0 / np.sqrt(fan_in)
        w = jax.random.uniform(kw, (fan_in, fan_out), jnp.float32, -bound, bound)
        b = jax.random.uniform(kb, (fan_out,), jnp.float32, -bound, bound)
        return w, b

    keys = jax.random.split(key, D + 1)
    params = [linear(keys[0], INPUT_CH, W)]
    for i in range(1, D):
        fan_in = W + INPUT_CH if (i - 1) in SKIPS else W
        params.append(linear(keys[i], fan_in, W))
    params.append(linear(keys[D], W, OUTPUT_CH))
    return params


def nerf_reference(x, params):
    """Pure-JAX f32 reference, direct transcription of the PyTorch forward
    (use_viewdirs=False)."""
    pts = x[:, :INPUT_CH]
    h = pts
    for i in range(D):
        w, b = params[i]
        h = jax.nn.relu(h @ w + b)
        if i in SKIPS:
            h = jnp.concatenate([pts, h], axis=-1)
    wo, bo = params[D]
    return h @ wo + bo


if __name__ == "__main__":
    key = jax.random.PRNGKey(0)
    k_params, k_x = jax.random.split(key)
    params = init_params(k_params)

    # Small batch of sampled points, deliberately NOT a multiple of the tile
    # size to exercise the ragged-N padding and adaptive-TM (>=2 grid steps)
    # paths.
    N = 500
    x = jax.random.normal(k_x, (N, INPUT_CH + INPUT_CH_VIEWS), jnp.float32)

    out = jax.block_until_ready(nerf_forward(x, params))
    ref = nerf_reference(x, params)

    # bf16 matmuls / bf16 output store with f32 accumulation: loosen
    # tolerances vs. the f32 reference.
    np.testing.assert_allclose(np.asarray(out), np.asarray(ref),
                               rtol=5e-2, atol=1e-2)
    assert out.shape == (N, OUTPUT_CH) and out.dtype == jnp.float32
    print("KERNEL_OK")
</pallas_src>

<mosaic_0001>
module attributes {stable_mosaic.version = 11 : i64} {
  func.func @nerf_kernel(%arg0: i32, %arg1: memref<256x3xf32, #tpu.memory_space<vmem>>, %arg2: memref<3x512xf32, #tpu.memory_space<vmem>>, %arg3: memref<1x256xf32, #tpu.memory_space<vmem>>, %arg4: memref<256x256xbf16, #tpu.memory_space<vmem>>, %arg5: memref<1x256xf32, #tpu.memory_space<vmem>>, %arg6: memref<256x256xbf16, #tpu.memory_space<vmem>>, %arg7: memref<1x256xf32, #tpu.memory_space<vmem>>, %arg8: memref<256x256xbf16, #tpu.memory_space<vmem>>, %arg9: memref<1x256xf32, #tpu.memory_space<vmem>>, %arg10: memref<256x256xbf16, #tpu.memory_space<vmem>>, %arg11: memref<1x256xf32, #tpu.memory_space<vmem>>, %arg12: memref<256x256xbf16, #tpu.memory_space<vmem>>, %arg13: memref<1x256xf32, #tpu.memory_space<vmem>>, %arg14: memref<256x256xbf16, #tpu.memory_space<vmem>>, %arg15: memref<1x256xf32, #tpu.memory_space<vmem>>, %arg16: memref<256x256xbf16, #tpu.memory_space<vmem>>, %arg17: memref<1x256xf32, #tpu.memory_space<vmem>>, %arg18: memref<256x128xbf16, #tpu.memory_space<vmem>>, %arg19: memref<1x128xf32, #tpu.memory_space<vmem>>, %arg20: memref<256x128xbf16, #tpu.memory_space<vmem>>) attributes {dimension_semantics = [#tpu.dimension_semantics<parallel>], iteration_bounds = array<i64: 2>, scalar_prefetch = 0 : i64, scratch_operands = 0 : i64, tpu.core_type = #tpu.core_type<tc>, window_params = [{transform_indices = @transform_0, window_bounds = array<i64: 256, 3>}, {pipeline_mode = #tpu.pipeline_mode<synchronous>, transform_indices = @transform_1, window_bounds = array<i64: 3, 512>}, {pipeline_mode = #tpu.pipeline_mode<synchronous>, transform_indices = @transform_2, window_bounds = array<i64: 1, 256>}, {pipeline_mode = #tpu.pipeline_mode<synchronous>, transform_indices = @transform_3, window_bounds = array<i64: 256, 256>}, {pipeline_mode = #tpu.pipeline_mode<synchronous>, transform_indices = @transform_4, window_bounds = array<i64: 1, 256>}, {pipeline_mode = #tpu.pipeline_mode<synchronous>, transform_indices = @transform_5, window_bounds = array<i64: 256, 256>}, {pipeline_mode = #tpu.pipeline_mode<synchronous>, transform_indices = @transform_6, window_bounds = array<i64: 1, 256>}, {pipeline_mode = #tpu.pipeline_mode<synchronous>, transform_indices = @transform_7, window_bounds = array<i64: 256, 256>}, {pipeline_mode = #tpu.pipeline_mode<synchronous>, transform_indices = @transform_8, window_bounds = array<i64: 1, 256>}, {pipeline_mode = #tpu.pipeline_mode<synchronous>, transform_indices = @transform_9, window_bounds = array<i64: 256, 256>}, {pipeline_mode = #tpu.pipeline_mode<synchronous>, transform_indices = @transform_10, window_bounds = array<i64: 1, 256>}, {pipeline_mode = #tpu.pipeline_mode<synchronous>, transform_indices = @transform_11, window_bounds = array<i64: 256, 256>}, {pipeline_mode = #tpu.pipeline_mode<synchronous>, transform_indices = @transform_12, window_bounds = array<i64: 1, 256>}, {pipeline_mode = #tpu.pipeline_mode<synchronous>, transform_indices = @transform_13, window_bounds = array<i64: 256, 256>}, {pipeline_mode = #tpu.pipeline_mode<synchronous>, transform_indices = @transform_14, window_bounds = array<i64: 1, 256>}, {pipeline_mode = #tpu.pipeline_mode<synchronous>, transform_indices = @transform_15, window_bounds = array<i64: 256, 256>}, {pipeline_mode = #tpu.pipeline_mode<synchronous>, transform_indices = @transform_16, window_bounds = array<i64: 1, 256>}, {pipeline_mode = #tpu.pipeline_mode<synchronous>, transform_indices = @transform_17, window_bounds = array<i64: 256, 128>}, {pipeline_mode = #tpu.pipeline_mode<synchronous>, transform_indices = @transform_18, window_bounds = array<i64: 1, 128>}, {transform_indices = @transform_19, window_bounds = array<i64: 256, 128>}]} {
    %c0 = arith.constant 0 : index
    %c0_0 = arith.constant 0 : index
    %0 = vector.load %arg1[%c0, %c0_0] : memref<256x3xf32, #tpu.memory_space<vmem>>, vector<256x3xf32>
    %c0_1 = arith.constant 0 : index
    %c0_2 = arith.constant 0 : index
    %1 = vector.load %arg2[%c0_1, %c0_2] : memref<3x512xf32, #tpu.memory_space<vmem>>, vector<3x512xf32>
    %cst = arith.constant dense<0.000000e+00> : vector<256x512xf32>
    %2 = tpu.matmul %0, %1, %cst {dimension_numbers = #tpu.dot_dimension_numbers<[1], [0], [0], [1], [0, 0, 1, 1], [], []>} : vector<256x3xf32>, vector<3x512xf32>, vector<256x512xf32> -> vector<256x512xf32>
    %3 = vector.extract_strided_slice %2 {offsets = [0, 256], sizes = [256, 256], strides = [1, 1]} : vector<256x512xf32> to vector<256x256xf32>
    %4 = arith.truncf %3 : vector<256x256xf32> to vector<256x256xbf16>
    %5 = vector.extract_strided_slice %2 {offsets = [0, 0], sizes = [256, 256], strides = [1, 1]} : vector<256x512xf32> to vector<256x256xf32>
    %c0_3 = arith.constant 0 : index
    %c0_4 = arith.constant 0 : index
    %6 = vector.load %arg3[%c0_3, %c0_4] : memref<1x256xf32, #tpu.memory_space<vmem>>, vector<1x256xf32>
    %7 = vector.broadcast %6 : vector<1x256xf32> to vector<256x256xf32>
    %8 = arith.addf %5, %7 : vector<256x256xf32>
    %9 = arith.truncf %8 : vector<256x256xf32> to vector<256x256xbf16>
    %cst_5 = arith.constant 0.000000e+00 : bf16
    %10 = vector.broadcast %cst_5 : bf16 to vector<256x256xbf16>
    %11 = arith.maximumf %9, %10 : vector<256x256xbf16>
    %c0_6 = arith.constant 0 : index
    %c0_7 = arith.constant 0 : index
    %12 = vector.load %arg4[%c0_6, %c0_7] : memref<256x256xbf16, #tpu.memory_space<vmem>>, vector<256x256xbf16>
    %cst_8 = arith.constant dense<0.000000e+00> : vector<256x256xf32>
    %13 = tpu.matmul %11, %12, %cst_8 {dimension_numbers = #tpu.dot_dimension_numbers<[1], [0], [0], [1], [0, 0, 1, 1], [], []>} : vector<256x256xbf16>, vector<256x256xbf16>, vector<256x256xf32> -> vector<256x256xf32>
    %c0_9 = arith.constant 0 : index
    %c0_10 = arith.constant 0 : index
    %14 = vector.load %arg5[%c0_9, %c0_10] : memref<1x256xf32, #tpu.memory_space<vmem>>, vector<1x256xf32>
    %15 = vector.broadcast %14 : vector<1x256xf32> to vector<256x256xf32>
    %16 = arith.addf %13, %15 : vector<256x256xf32>
    %17 = arith.truncf %16 : vector<256x256xf32> to vector<256x256xbf16>
    %cst_11 = arith.constant 0.000000e+00 : bf16
    %18 = vector.broadcast %cst_11 : bf16 to vector<256x256xbf16>
    %19 = arith.maximumf %17, %18 : vector<256x256xbf16>
    %c0_12 = arith.constant 0 : index
    %c0_13 = arith.constant 0 : index
    %20 = vector.load %arg6[%c0_12, %c0_13] : memref<256x256xbf16, #tpu.memory_space<vmem>>, vector<256x256xbf16>
    %cst_14 = arith.constant dense<0.000000e+00> : vector<256x256xf32>
    %21 = tpu.matmul %19, %20, %cst_14 {dimension_numbers = #tpu.dot_dimension_numbers<[1], [0], [0], [1], [0, 0, 1, 1], [], []>} : vector<256x256xbf16>, vector<256x256xbf16>, vector<256x256xf32> -> vector<256x256xf32>
    %c0_15 = arith.constant 0 : index
    %c0_16 = arith.constant 0 : index
    %22 = vector.load %arg7[%c0_15, %c0_16] : memref<1x256xf32, #tpu.memory_space<vmem>>, vector<1x256xf32>
    %23 = vector.broadcast %22 : vector<1x256xf32> to vector<256x256xf32>
    %24 = arith.addf %21, %23 : vector<256x256xf32>
    %25 = arith.truncf %24 : vector<256x256xf32> to vector<256x256xbf16>
    %cst_17 = arith.constant 0.000000e+00 : bf16
    %26 = vector.broadcast %cst_17 : bf16 to vector<256x256xbf16>
    %27 = arith.maximumf %25, %26 : vector<256x256xbf16>
    %c0_18 = arith.constant 0 : index
    %c0_19 = arith.constant 0 : index
    %28 = vector.load %arg8[%c0_18, %c0_19] : memref<256x256xbf16, #tpu.memory_space<vmem>>, vector<256x256xbf16>
    %cst_20 = arith.constant dense<0.000000e+00> : vector<256x256xf32>
    %29 = tpu.matmul %27, %28, %cst_20 {dimension_numbers = #tpu.dot_dimension_numbers<[1], [0], [0], [1], [0, 0, 1, 1], [], []>} : vector<256x256xbf16>, vector<256x256xbf16>, vector<256x256xf32> -> vector<256x256xf32>
    %c0_21 = arith.constant 0 : index
    %c0_22 = arith.constant 0 : index
    %30 = vector.load %arg9[%c0_21, %c0_22] : memref<1x256xf32, #tpu.memory_space<vmem>>, vector<1x256xf32>
    %31 = vector.broadcast %30 : vector<1x256xf32> to vector<256x256xf32>
    %32 = arith.addf %29, %31 : vector<256x256xf32>
    %33 = arith.truncf %32 : vector<256x256xf32> to vector<256x256xbf16>
    %cst_23 = arith.constant 0.000000e+00 : bf16
    %34 = vector.broadcast %cst_23 : bf16 to vector<256x256xbf16>
    %35 = arith.maximumf %33, %34 : vector<256x256xbf16>
    %c0_24 = arith.constant 0 : index
    %c0_25 = arith.constant 0 : index
    %36 = vector.load %arg10[%c0_24, %c0_25] : memref<256x256xbf16, #tpu.memory_space<vmem>>, vector<256x256xbf16>
    %cst_26 = arith.constant dense<0.000000e+00> : vector<256x256xf32>
    %37 = tpu.matmul %35, %36, %cst_26 {dimension_numbers = #tpu.dot_dimension_numbers<[1], [0], [0], [1], [0, 0, 1, 1], [], []>} : vector<256x256xbf16>, vector<256x256xbf16>, vector<256x256xf32> -> vector<256x256xf32>
    %c0_27 = arith.constant 0 : index
    %c0_28 = arith.constant 0 : index
    %38 = vector.load %arg11[%c0_27, %c0_28] : memref<1x256xf32, #tpu.memory_space<vmem>>, vector<1x256xf32>
    %39 = vector.broadcast %38 : vector<1x256xf32> to vector<256x256xf32>
    %40 = arith.addf %37, %39 : vector<256x256xf32>
    %41 = arith.truncf %40 : vector<256x256xf32> to vector<256x256xbf16>
    %cst_29 = arith.constant 0.000000e+00 : bf16
    %42 = vector.broadcast %cst_29 : bf16 to vector<256x256xbf16>
    %43 = arith.maximumf %41, %42 : vector<256x256xbf16>
    %c0_30 = arith.constant 0 : index
    %c0_31 = arith.constant 0 : index
    %44 = vector.load %arg12[%c0_30, %c0_31] : memref<256x256xbf16, #tpu.memory_space<vmem>>, vector<256x256xbf16>
    %cst_32 = arith.constant dense<0.000000e+00> : vector<256x256xf32>
    %45 = tpu.matmul %43, %44, %cst_32 {dimension_numbers = #tpu.dot_dimension_numbers<[1], [0], [0], [1], [0, 0, 1, 1], [], []>} : vector<256x256xbf16>, vector<256x256xbf16>, vector<256x256xf32> -> vector<256x256xf32>
    %46 = arith.extf %4 : vector<256x256xbf16> to vector<256x256xf32>
    %47 = arith.addf %45, %46 : vector<256x256xf32>
    %c0_33 = arith.constant 0 : index
    %c0_34 = arith.constant 0 : index
    %48 = vector.load %arg13[%c0_33, %c0_34] : memref<1x256xf32, #tpu.memory_space<vmem>>, vector<1x256xf32>
    %49 = vector.broadcast %48 : vector<1x256xf32> to vector<256x256xf32>
    %50 = arith.addf %47, %49 : vector<256x256xf32>
    %51 = arith.truncf %50 : vector<256x256xf32> to vector<256x256xbf16>
    %cst_35 = arith.constant 0.000000e+00 : bf16
    %52 = vector.broadcast %cst_35 : bf16 to vector<256x256xbf16>
    %53 = arith.maximumf %51, %52 : vector<256x256xbf16>
    %c0_36 = arith.constant 0 : index
    %c0_37 = arith.constant 0 : index
    %54 = vector.load %arg14[%c0_36, %c0_37] : memref<256x256xbf16, #tpu.memory_space<vmem>>, vector<256x256xbf16>
    %cst_38 = arith.constant dense<0.000000e+00> : vector<256x256xf32>
    %55 = tpu.matmul %53, %54, %cst_38 {dimension_numbers = #tpu.dot_dimension_numbers<[1], [0], [0], [1], [0, 0, 1, 1], [], []>} : vector<256x256xbf16>, vector<256x256xbf16>, vector<256x256xf32> -> vector<256x256xf32>
    %c0_39 = arith.constant 0 : index
    %c0_40 = arith.constant 0 : index
    %56 = vector.load %arg15[%c0_39, %c0_40] : memref<1x256xf32, #tpu.memory_space<vmem>>, vector<1x256xf32>
    %57 = vector.broadcast %56 : vector<1x256xf32> to vector<256x256xf32>
    %58 = arith.addf %55, %57 : vector<256x256xf32>
    %59 = arith.truncf %58 : vector<256x256xf32> to vector<256x256xbf16>
    %cst_41 = arith.constant 0.000000e+00 : bf16
    %60 = vector.broadcast %cst_41 : bf16 to vector<256x256xbf16>
    %61 = arith.maximumf %59, %60 : vector<256x256xbf16>
    %c0_42 = arith.constant 0 : index
    %c0_43 = arith.constant 0 : index
    %62 = vector.load %arg16[%c0_42, %c0_43] : memref<256x256xbf16, #tpu.memory_space<vmem>>, vector<256x256xbf16>
    %cst_44 = arith.constant dense<0.000000e+00> : vector<256x256xf32>
    %63 = tpu.matmul %61, %62, %cst_44 {dimension_numbers = #tpu.dot_dimension_numbers<[1], [0], [0], [1], [0, 0, 1, 1], [], []>} : vector<256x256xbf16>, vector<256x256xbf16>, vector<256x256xf32> -> vector<256x256xf32>
    %c0_45 = arith.constant 0 : index
    %c0_46 = arith.constant 0 : index
    %64 = vector.load %arg17[%c0_45, %c0_46] : memref<1x256xf32, #tpu.memory_space<vmem>>, vector<1x256xf32>
    %65 = vector.broadcast %64 : vector<1x256xf32> to vector<256x256xf32>
    %66 = arith.addf %63, %65 : vector<256x256xf32>
    %67 = arith.truncf %66 : vector<256x256xf32> to vector<256x256xbf16>
    %cst_47 = arith.constant 0.000000e+00 : bf16
    %68 = vector.broadcast %cst_47 : bf16 to vector<256x256xbf16>
    %69 = arith.maximumf %67, %68 : vector<256x256xbf16>
    %c0_48 = arith.constant 0 : index
    %c0_49 = arith.constant 0 : index
    %70 = vector.load %arg18[%c0_48, %c0_49] : memref<256x128xbf16, #tpu.memory_space<vmem>>, vector<256x128xbf16>
    %cst_50 = arith.constant dense<0.000000e+00> : vector<256x128xf32>
    %71 = tpu.matmul %69, %70, %cst_50 {dimension_numbers = #tpu.dot_dimension_numbers<[1], [0], [0], [1], [0, 0, 1, 1], [], []>} : vector<256x256xbf16>, vector<256x128xbf16>, vector<256x128xf32> -> vector<256x128xf32>
    %c0_51 = arith.constant 0 : index
    %c0_52 = arith.constant 0 : index
    %72 = vector.load %arg19[%c0_51, %c0_52] : memref<1x128xf32, #tpu.memory_space<vmem>>, vector<1x128xf32>
    %73 = vector.broadcast %72 : vector<1x128xf32> to vector<256x128xf32>
    %74 = arith.addf %71, %73 : vector<256x128xf32>
    %75 = arith.truncf %74 : vector<256x128xf32> to vector<256x128xbf16>
    %c0_53 = arith.constant 0 : index
    %c0_54 = arith.constant 0 : index
    %76 = vector.load %arg20[%c0_53, %c0_54] : memref<256x128xbf16, #tpu.memory_space<vmem>>, vector<256x128xbf16>
    tpu.vector_store %arg20[%c0_53, %c0_54], %75 {strides = array<i32>} : memref<256x128xbf16, #tpu.memory_space<vmem>>, vector<256x128xbf16>,
    return
  }
  func.func @transform_0(%arg0: i32) -> (i32, i32) {
    %c0_i32 = arith.constant 0 : i32
    %c0_i32_0 = arith.constant 0 : i32
    return %arg0, %c0_i32 : i32, i32
  }
  func.func @transform_1(%arg0: i32) -> (i32, i32) {
    %c0_i32 = arith.constant 0 : i32
    %c0_i32_0 = arith.constant 0 : i32
    %c0_i32_1 = arith.constant 0 : i32
    return %c0_i32, %c0_i32_0 : i32, i32
  }
  func.func @transform_2(%arg0: i32) -> (i32, i32) {
    %c0_i32 = arith.constant 0 : i32
    %c0_i32_0 = arith.constant 0 : i32
    %c0_i32_1 = arith.constant 0 : i32
    return %c0_i32, %c0_i32_0 : i32, i32
  }
  func.func @transform_3(%arg0: i32) -> (i32, i32) {
    %c0_i32 = arith.constant 0 : i32
    %c0_i32_0 = arith.constant 0 : i32
    %c0_i32_1 = arith.constant 0 : i32
    return %c0_i32, %c0_i32_0 : i32, i32
  }
  func.func @transform_4(%arg0: i32) -> (i32, i32) {
    %c0_i32 = arith.constant 0 : i32
    %c0_i32_0 = arith.constant 0 : i32
    %c0_i32_1 = arith.constant 0 : i32
    return %c0_i32, %c0_i32_0 : i32, i32
  }
  func.func @transform_5(%arg0: i32) -> (i32, i32) {
    %c0_i32 = arith.constant 0 : i32
    %c0_i32_0 = arith.constant 0 : i32
    %c0_i32_1 = arith.constant 0 : i32
    return %c0_i32, %c0_i32_0 : i32, i32
  }
  func.func @transform_6(%arg0: i32) -> (i32, i32) {
    %c0_i32 = arith.constant 0 : i32
    %c0_i32_0 = arith.constant 0 : i32
    %c0_i32_1 = arith.constant 0 : i32
    return %c0_i32, %c0_i32_0 : i32, i32
  }
  func.func @transform_7(%arg0: i32) -> (i32, i32) {
    %c0_i32 = arith.constant 0 : i32
    %c0_i32_0 = arith.constant 0 : i32
    %c0_i32_1 = arith.constant 0 : i32
    return %c0_i32, %c0_i32_0 : i32, i32
  }
  func.func @transform_8(%arg0: i32) -> (i32, i32) {
    %c0_i32 = arith.constant 0 : i32
    %c0_i32_0 = arith.constant 0 : i32
    %c0_i32_1 = arith.constant 0 : i32
    return %c0_i32, %c0_i32_0 : i32, i32
  }
  func.func @transform_9(%arg0: i32) -> (i32, i32) {
    %c0_i32 = arith.constant 0 : i32
    %c0_i32_0 = arith.constant 0 : i32
    %c0_i32_1 = arith.constant 0 : i32
    return %c0_i32, %c0_i32_0 : i32, i32
  }
  func.func @transform_10(%arg0: i32) -> (i32, i32) {
    %c0_i32 = arith.constant 0 : i32
    %c0_i32_0 = arith.constant 0 : i32
    %c0_i32_1 = arith.constant 0 : i32
    return %c0_i32, %c0_i32_0 : i32, i32
  }
  func.func @transform_11(%arg0: i32) -> (i32, i32) {
    %c0_i32 = arith.constant 0 : i32
    %c0_i32_0 = arith.constant 0 : i32
    %c0_i32_1 = arith.constant 0 : i32
    return %c0_i32, %c0_i32_0 : i32, i32
  }
  func.func @transform_12(%arg0: i32) -> (i32, i32) {
    %c0_i32 = arith.constant 0 : i32
    %c0_i32_0 = arith.constant 0 : i32
    %c0_i32_1 = arith.constant 0 : i32
    return %c0_i32, %c0_i32_0 : i32, i32
  }
  func.func @transform_13(%arg0: i32) -> (i32, i32) {
    %c0_i32 = arith.constant 0 : i32
    %c0_i32_0 = arith.constant 0 : i32
    %c0_i32_1 = arith.constant 0 : i32
    return %c0_i32, %c0_i32_0 : i32, i32
  }
  func.func @transform_14(%arg0: i32) -> (i32, i32) {
    %c0_i32 = arith.constant 0 : i32
    %c0_i32_0 = arith.constant 0 : i32
    %c0_i32_1 = arith.constant 0 : i32
    return %c0_i32, %c0_i32_0 : i32, i32
  }
  func.func @transform_15(%arg0: i32) -> (i32, i32) {
    %c0_i32 = arith.constant 0 : i32
    %c0_i32_0 = arith.constant 0 : i32
    %c0_i32_1 = arith.constant 0 : i32
    return %c0_i32, %c0_i32_0 : i32, i32
  }
  func.func @transform_16(%arg0: i32) -> (i32, i32) {
    %c0_i32 = arith.constant 0 : i32
    %c0_i32_0 = arith.constant 0 : i32
    %c0_i32_1 = arith.constant 0 : i32
    return %c0_i32, %c0_i32_0 : i32, i32
  }
  func.func @transform_17(%arg0: i32) -> (i32, i32) {
    %c0_i32 = arith.constant 0 : i32
    %c0_i32_0 = arith.constant 0 : i32
    %c0_i32_1 = arith.constant 0 : i32
    return %c0_i32, %c0_i32_0 : i32, i32
  }
  func.func @transform_18(%arg0: i32) -> (i32, i32) {
    %c0_i32 = arith.constant 0 : i32
    %c0_i32_0 = arith.constant 0 : i32
    %c0_i32_1 = arith.constant 0 : i32
    return %c0_i32, %c0_i32_0 : i32, i32
  }
  func.func @transform_19(%arg0: i32) -> (i32, i32) {
    %c0_i32 = arith.constant 0 : i32
    %c0_i32_0 = arith.constant 0 : i32
    return %arg0, %c0_i32 : i32, i32
  }
}

</mosaic_0001>

<llo_original>
// kernel: nerf_forward.1
$region0: #{nerf_forward.1}
  #allocation0 [shape = 'u32[]', space=smem, size = 0x4, offset = 0x4, fixed_abs, tag = 'smem constant byte address 0x4 - core index']
  #allocation1 [shape = 'u32[72,128]{1,0:T(1,128)}', space=vmem, size = 0x9000, scoped, tag = 'internal scratch']
  %s0 = inlined_call_operand.vmem [shape: f32[512,3], index: 0, kind: input, shape index: {}]
  %s1 = inlined_call_operand.vmem [shape: f32[3,512], index: 1, kind: input, shape index: {}]
  %s2 = inlined_call_operand.vmem [shape: f32[1,256], index: 2, kind: input, shape index: {}]
  %s3 = inlined_call_operand.vmem [shape: bf16[256,256], index: 3, kind: input, shape index: {}]
  %s4 = inlined_call_operand.vmem [shape: f32[1,256], index: 4, kind: input, shape index: {}]
  %s5 = inlined_call_operand.vmem [shape: bf16[256,256], index: 5, kind: input, shape index: {}]
  %s6 = inlined_call_operand.vmem [shape: f32[1,256], index: 6, kind: input, shape index: {}]
  %s7 = inlined_call_operand.vmem [shape: bf16[256,256], index: 7, kind: input, shape index: {}]
  %s8 = inlined_call_operand.vmem [shape: f32[1,256], index: 8, kind: input, shape index: {}]
  %s9 = inlined_call_operand.vmem [shape: bf16[256,256], index: 9, kind: input, shape index: {}]
  %s10 = inlined_call_operand.vmem [shape: f32[1,256], index: 10, kind: input, shape index: {}]
  %s11 = inlined_call_operand.vmem [shape: bf16[256,256], index: 11, kind: input, shape index: {}]
  %s12 = inlined_call_operand.vmem [shape: f32[1,256], index: 12, kind: input, shape index: {}]
  %s13 = inlined_call_operand.vmem [shape: bf16[256,256], index: 13, kind: input, shape index: {}]
  %s14 = inlined_call_operand.vmem [shape: f32[1,256], index: 14, kind: input, shape index: {}]
  %s15 = inlined_call_operand.vmem [shape: bf16[256,256], index: 15, kind: input, shape index: {}]
  %s16 = inlined_call_operand.vmem [shape: f32[1,256], index: 16, kind: input, shape index: {}]
  %s17 = inlined_call_operand.vmem [shape: bf16[256,128], index: 17, kind: input, shape index: {}]
  %s18 = inlined_call_operand.vmem [shape: f32[1,128], index: 18, kind: input, shape index: {}]
  %s19 = inlined_call_operand.vmem [shape: bf16[512,128], index: 19, kind: output, shape index: {}]
  %s20 = sld [smem:[#allocation0]]
  $region109: #{nerf_forward.1} parent=0
    _
  %s22 = ssub.s32 1, %s20
  %s23 = scalar_select 0, %s22, %s20
  loop: start=0, step=1, limit=4
  $region2: #{nerf_forward.1} parent=0 // loop_pre_header
    _
  $region3: #{nerf_forward.1} parent=0 // loop_header
    %s25 = sphi 0, %s29
    %p26 = scmp.ge.s32.totalorder %s25, 4
    %s35 = sphi 0, %s37
    %s38 = sphi 0, %s35
    %s39 = sphi 0, %s38
    %s55 = sphi 0, %s39
    %s59 = sphi 0, %s59
    %s61 = sphi 0, %s59
    %s62 = sphi 0, %s61
    %s76 = sphi 0, %s62
    %s80 = sphi 0, %s80
    %s82 = sphi 0, %s80
    %s83 = sphi 0, %s82
    %s97 = sphi 0, %s83
    %s101 = sphi 0, %s101
    %s103 = sphi 0, %s101
    %s104 = sphi 0, %s103
    %s118 = sphi 0, %s104
    %s122 = sphi 0, %s122
    %s124 = sphi 0, %s122
    %s125 = sphi 0, %s124
    %s139 = sphi 0, %s125
    %s143 = sphi 0, %s143
    %s145 = sphi 0, %s143
    %s146 = sphi 0, %s145
    %s160 = sphi 0, %s146
    %s164 = sphi 0, %s164
    %s166 = sphi 0, %s164
    %s167 = sphi 0, %s166
    %s181 = sphi 0, %s167
    %s185 = sphi 0, %s185
    %s187 = sphi 0, %s185
    %s188 = sphi 0, %s187
    %s202 = sphi 0, %s188
    %s206 = sphi 0, %s206
    %s208 = sphi 0, %s206
    %s209 = sphi 0, %s208
    %s223 = sphi 0, %s209
    %s227 = sphi 0, %s227
    %s229 = sphi 0, %s227
    %s230 = sphi 0, %s229
    %s244 = sphi 0, %s230
    %s248 = sphi 0, %s248
    %s250 = sphi 0, %s248
    %s251 = sphi 0, %s250
    %s265 = sphi 0, %s251
    %s269 = sphi 0, %s269
    %s271 = sphi 0, %s269
    %s272 = sphi 0, %s271
    %s286 = sphi 0, %s272
    %s290 = sphi 0, %s290
    %s292 = sphi 0, %s290
    %s293 = sphi 0, %s292
    %s307 = sphi 0, %s293
    %s311 = sphi 0, %s311
    %s313 = sphi 0, %s311
    %s314 = sphi 0, %s313
    %s328 = sphi 0, %s314
    %s332 = sphi 0, %s332
    %s334 = sphi 0, %s332
    %s335 = sphi 0, %s334
    %s349 = sphi 0, %s335
    %s353 = sphi 0, %s353
    %s355 = sphi 0, %s353
    %s356 = sphi 0, %s355
    %s370 = sphi 0, %s356
    %s374 = sphi 0, %s374
    %s376 = sphi 0, %s374
    %s377 = sphi 0, %s376
    %s391 = sphi 0, %s377
    %s395 = sphi 0, %s395
    %s397 = sphi 0, %s395
    %s398 = sphi 0, %s397
    %s412 = sphi 0, %s398
    %s416 = sphi 0, %s416
    %s418 = sphi 0, %s416
    %s419 = sphi 0, %s418
    %s433 = sphi 0, %s419
    %s439 = sphi 0, %s441
    %s442 = sphi 0, %s439
    %s443 = sphi 0, %s442
    %s459 = sphi 0, %s443
  $region4: #{nerf_forward.1} parent=0 // loop_header_branch
    %28 = sbr.rel (%p26) target = $region8
  $region5: #{nerf_forward.1} parent=0 // loop_body
    %s30 = ssub.s32 %s25, 1
    %s31 = ssub.s32 %s25, 2
    %s32 = sadd.s32 %s25, 1
    %s33 = ssub.s32 %s25, %s32
    %p34 = scmp.eq.s32.totalorder %s33, 0
    %s36 = sadd.s32 %s35, 1
    %s37 = scalar_select %p34, %s35, %s36
    %p40 = pneg %p34
    %p41 = scmp.eq.s32.totalorder %s25, 1
    %p42 = por %p40, %p41
    %p43 = scmp.ne.s32.totalorder %s35, %s38
    %p44 = scmp.eq.s32.totalorder %s25, 0
    %p45 = por %p43, %p44
    %p46 = scmp.ne.s32.totalorder %s35, %s38
    %p47 = scmp.eq.s32.totalorder %s30, 1
    %p48 = por %p46, %p47
    %p49 = scmp.ne.s32.totalorder %s38, %s39
    %p50 = scmp.eq.s32.totalorder %s30, 0
    %p51 = por %p49, %p50
    %p52 = scmp.ne.s32.totalorder %s38, %s39
    %p53 = scmp.eq.s32.totalorder %s31, 1
    %p54 = por %p52, %p53
    %p56 = scmp.ne.s32.totalorder %s39, %s55
    %p57 = scmp.eq.s32.totalorder %s31, 0
    %p58 = por %p56, %p57
    %s60 = sadd.s32 %s59, 1
    %p63 = scmp.eq.s32.totalorder %s25, 1
    %p64 = scmp.ne.s32.totalorder %s59, %s61
    %p65 = scmp.eq.s32.totalorder %s25, 0
    %p66 = por %p64, %p65
    %p67 = scmp.ne.s32.totalorder %s59, %s61
    %p68 = scmp.eq.s32.totalorder %s30, 1
    %p69 = por %p67, %p68
    %p70 = scmp.ne.s32.totalorder %s61, %s62
    %p71 = scmp.eq.s32.totalorder %s30, 0
    %p72 = por %p70, %p71
    %p73 = scmp.ne.s32.totalorder %s61, %s62
    %p74 = scmp.eq.s32.totalorder %s31, 1
    %p75 = por %p73, %p74
    %p77 = scmp.ne.s32.totalorder %s62, %s76
    %p78 = scmp.eq.s32.totalorder %s31, 0
    %p79 = por %p77, %p78
    %s81 = sadd.s32 %s80, 1
    %p84 = scmp.eq.s32.totalorder %s25, 1
    %p85 = scmp.ne.s32.totalorder %s80, %s82
    %p86 = scmp.eq.s32.totalorder %s25, 0
    %p87 = por %p85, %p86
    %p88 = scmp.ne.s32.totalorder %s80, %s82
    %p89 = scmp.eq.s32.totalorder %s30, 1
    %p90 = por %p88, %p89
    %p91 = scmp.ne.s32.totalorder %s82, %s83
    %p92 = scmp.eq.s32.totalorder %s30, 0
    %p93 = por %p91, %p92
    %p94 = scmp.ne.s32.totalorder %s82, %s83
    %p95 = scmp.eq.s32.totalorder %s31, 1
    %p96 = por %p94, %p95
    %p98 = scmp.ne.s32.totalorder %s83, %s97
    %p99 = scmp.eq.s32.totalorder %s31, 0
    %p100 = por %p98, %p99
    %s102 = sadd.s32 %s101, 1
    %p105 = scmp.eq.s32.totalorder %s25, 1
    %p106 = scmp.ne.s32.totalorder %s101, %s103
    %p107 = scmp.eq.s32.totalorder %s25, 0
    %p108 = por %p106, %p107
    %p109 = scmp.ne.s32.totalorder %s101, %s103
    %p110 = scmp.eq.s32.totalorder %s30, 1
    %p111 = por %p109, %p110
    %p112 = scmp.ne.s32.totalorder %s103, %s104
    %p113 = scmp.eq.s32.totalorder %s30, 0
    %p114 = por %p112, %p113
    %p115 = scmp.ne.s32.totalorder %s103, %s104
    %p116 = scmp.eq.s32.totalorder %s31, 1
    %p117 = por %p115, %p116
    %p119 = scmp.ne.s32.totalorder %s104, %s118
    %p120 = scmp.eq.s32.totalorder %s31, 0
    %p121 = por %p119, %p120
    %s123 = sadd.s32 %s122, 1
    %p126 = scmp.eq.s32.totalorder %s25, 1
    %p127 = scmp.ne.s32.totalorder %s122, %s124
    %p128 = scmp.eq.s32.totalorder %s25, 0
    %p129 = por %p127, %p128
    %p130 = scmp.ne.s32.totalorder %s122, %s124
    %p131 = scmp.eq.s32.totalorder %s30, 1
    %p132 = por %p130, %p131
    %p133 = scmp.ne.s32.totalorder %s124, %s125
    %p134 = scmp.eq.s32.totalorder %s30, 0
    %p135 = por %p133, %p134
    %p136 = scmp.ne.s32.totalorder %s124, %s125
    %p137 = scmp.eq.s32.totalorder %s31, 1
    %p138 = por %p136, %p137
    %p140 = scmp.ne.s32.totalorder %s125, %s139
    %p141 = scmp.eq.s32.totalorder %s31, 0
    %p142 = por %p140, %p141
    %s144 = sadd.s32 %s143, 1
    %p147 = scmp.eq.s32.totalorder %s25, 1
    %p148 = scmp.ne.s32.totalorder %s143, %s145
    %p149 = scmp.eq.s32.totalorder %s25, 0
    %p150 = por %p148, %p149
    %p151 = scmp.ne.s32.totalorder %s143, %s145
    %p152 = scmp.eq.s32.totalorder %s30, 1
    %p153 = por %p151, %p152
    %p154 = scmp.ne.s32.totalorder %s145, %s146
    %p155 = scmp.eq.s32.totalorder %s30, 0
    %p156 = por %p154, %p155
    %p157 = scmp.ne.s32.totalorder %s145, %s146
    %p158 = scmp.eq.s32.totalorder %s31, 1
    %p159 = por %p157, %p158
    %p161 = scmp.ne.s32.totalorder %s146, %s160
    %p162 = scmp.eq.s32.totalorder %s31, 0
    %p163 = por %p161, %p162
    %s165 = sadd.s32 %s164, 1
    %p168 = scmp.eq.s32.totalorder %s25, 1
    %p169 = scmp.ne.s32.totalorder %s164, %s166
    %p170 = scmp.eq.s32.totalorder %s25, 0
    %p171 = por %p169, %p170
    %p172 = scmp.ne.s32.totalorder %s164, %s166
    %p173 = scmp.eq.s32.totalorder %s30, 1
    %p174 = por %p172, %p173
    %p175 = scmp.ne.s32.totalorder %s166, %s167
    %p176 = scmp.eq.s32.totalorder %s30, 0
    %p177 = por %p175, %p176
    %p178 = scmp.ne.s32.totalorder %s166, %s167
    %p179 = scmp.eq.s32.totalorder %s31, 1
    %p180 = por %p178, %p179
    %p182 = scmp.ne.s32.totalorder %s167, %s181
    %p183 = scmp.eq.s32.totalorder %s31, 0
    %p184 = por %p182, %p183
    %s186 = sadd.s32 %s185, 1
    %p189 = scmp.eq.s32.totalorder %s25, 1
    %p190 = scmp.ne.s32.totalorder %s185, %s187
    %p191 = scmp.eq.s32.totalorder %s25, 0
    %p192 = por %p190, %p191
    %p193 = scmp.ne.s32.totalorder %s185, %s187
    %p194 = scmp.eq.s32.totalorder %s30, 1
    %p195 = por %p193, %p194
    %p196 = scmp.ne.s32.totalorder %s187, %s188
    %p197 = scmp.eq.s32.totalorder %s30, 0
    %p198 = por %p196, %p197
    %p199 = scmp.ne.s32.totalorder %s187, %s188
    %p200 = scmp.eq.s32.totalorder %s31, 1
    %p201 = por %p199, %p200
    %p203 = scmp.ne.s32.totalorder %s188, %s202
    %p204 = scmp.eq.s32.totalorder %s31, 0
    %p205 = por %p203, %p204
    %s207 = sadd.s32 %s206, 1
    %p210 = scmp.eq.s32.totalorder %s25, 1
    %p211 = scmp.ne.s32.totalorder %s206, %s208
    %p212 = scmp.eq.s32.totalorder %s25, 0
    %p213 = por %p211, %p212
    %p214 = scmp.ne.s32.totalorder %s206, %s208
    %p215 = scmp.eq.s32.totalorder %s30, 1
    %p216 = por %p214, %p215
    %p217 = scmp.ne.s32.totalorder %s208, %s209
    %p218 = scmp.eq.s32.totalorder %s30, 0
    %p219 = por %p217, %p218
    %p220 = scmp.ne.s32.totalorder %s208, %s209
    %p221 = scmp.eq.s32.totalorder %s31, 1
    %p222 = por %p220, %p221
    %p224 = scmp.ne.s32.totalorder %s209, %s223
    %p225 = scmp.eq.s32.totalorder %s31, 0
    %p226 = por %p224, %p225
    %s228 = sadd.s32 %s227, 1
    %p231 = scmp.eq.s32.totalorder %s25, 1
    %p232 = scmp.ne.s32.totalorder %s227, %s229
    %p233 = scmp.eq.s32.totalorder %s25, 0
    %p234 = por %p232, %p233
    %p235 = scmp.ne.s32.totalorder %s227, %s229
    %p236 = scmp.eq.s32.totalorder %s30, 1
    %p237 = por %p235, %p236
    %p238 = scmp.ne.s32.totalorder %s229, %s230
    %p239 = scmp.eq.s32.totalorder %s30, 0
    %p240 = por %p238, %p239
    %p241 = scmp.ne.s32.totalorder %s229, %s230
    %p242 = scmp.eq.s32.totalorder %s31, 1
    %p243 = por %p241, %p242
    %p245 = scmp.ne.s32.totalorder %s230, %s244
    %p246 = scmp.eq.s32.totalorder %s31, 0
    %p247 = por %p245, %p246
    %s249 = sadd.s32 %s248, 1
    %p252 = scmp.eq.s32.totalorder %s25, 1
    %p253 = scmp.ne.s32.totalorder %s248, %s250
    %p254 = scmp.eq.s32.totalorder %s25, 0
    %p255 = por %p253, %p254
    %p256 = scmp.ne.s32.totalorder %s248, %s250
    %p257 = scmp.eq.s32.totalorder %s30, 1
    %p258 = por %p256, %p257
    %p259 = scmp.ne.s32.totalorder %s250, %s251
    %p260 = scmp.eq.s32.totalorder %s30, 0
    %p261 = por %p259, %p260
    %p262 = scmp.ne.s32.totalorder %s250, %s251
    %p263 = scmp.eq.s32.totalorder %s31, 1
    %p264 = por %p262, %p263
    %p266 = scmp.ne.s32.totalorder %s251, %s265
    %p267 = scmp.eq.s32.totalorder %s31, 0
    %p268 = por %p266, %p267
    %s270 = sadd.s32 %s269, 1
    %p273 = scmp.eq.s32.totalorder %s25, 1
    %p274 = scmp.ne.s32.totalorder %s269, %s271
    %p275 = scmp.eq.s32.totalorder %s25, 0
    %p276 = por %p274, %p275
    %p277 = scmp.ne.s32.totalorder %s269, %s271
    %p278 = scmp.eq.s32.totalorder %s30, 1
    %p279 = por %p277, %p278
    %p280 = scmp.ne.s32.totalorder %s271, %s272
    %p281 = scmp.eq.s32.totalorder %s30, 0
    %p282 = por %p280, %p281
    %p283 = scmp.ne.s32.totalorder %s271, %s272
    %p284 = scmp.eq.s32.totalorder %s31, 1
    %p285 = por %p283, %p284
    %p287 = scmp.ne.s32.totalorder %s272, %s286
    %p288 = scmp.eq.s32.totalorder %s31, 0
    %p289 = por %p287, %p288
    %s291 = sadd.s32 %s290, 1
    %p294 = scmp.eq.s32.totalorder %s25, 1
    %p295 = scmp.ne.s32.totalorder %s290, %s292
    %p296 = scmp.eq.s32.totalorder %s25, 0
    %p297 = por %p295, %p296
    %p298 = scmp.ne.s32.totalorder %s290, %s292
    %p299 = scmp.eq.s32.totalorder %s30, 1
    %p300 = por %p298, %p299
    %p301 = scmp.ne.s32.totalorder %s292, %s293
    %p302 = scmp.eq.s32.totalorder %s30, 0
    %p303 = por %p301, %p302
    %p304 = scmp.ne.s32.totalorder %s292, %s293
    %p305 = scmp.eq.s32.totalorder %s31, 1
    %p306 = por %p304, %p305
    %p308 = scmp.ne.s32.totalorder %s293, %s307
    %p309 = scmp.eq.s32.totalorder %s31, 0
    %p310 = por %p308, %p309
    %s312 = sadd.s32 %s311, 1
    %p315 = scmp.eq.s32.totalorder %s25, 1
    %p316 = scmp.ne.s32.totalorder %s311, %s313
    %p317 = scmp.eq.s32.totalorder %s25, 0
    %p318 = por %p316, %p317
    %p319 = scmp.ne.s32.totalorder %s311, %s313
    %p320 = scmp.eq.s32.totalorder %s30, 1
    %p321 = por %p319, %p320
    %p322 = scmp.ne.s32.totalorder %s313, %s314
    %p323 = scmp.eq.s32.totalorder %s30, 0
    %p324 = por %p322, %p323
    %p325 = scmp.ne.s32.totalorder %s313, %s314
    %p326 = scmp.eq.s32.totalorder %s31, 1
    %p327 = por %p325, %p326
    %p329 = scmp.ne.s32.totalorder %s314, %s328
    %p330 = scmp.eq.s32.totalorder %s31, 0
    %p331 = por %p329, %p330
    %s333 = sadd.s32 %s332, 1
    %p336 = scmp.eq.s32.totalorder %s25, 1
    %p337 = scmp.ne.s32.totalorder %s332, %s334
    %p338 = scmp.eq.s32.totalorder %s25, 0
    %p339 = por %p337, %p338
    %p340 = scmp.ne.s32.totalorder %s332, %s334
    %p341 = scmp.eq.s32.totalorder %s30, 1
    %p342 = por %p340, %p341
    %p343 = scmp.ne.s32.totalorder %s334, %s335
    %p344 = scmp.eq.s32.totalorder %s30, 0
    %p345 = por %p343, %p344
    %p346 = scmp.ne.s32.totalorder %s334, %s335
    %p347 = scmp.eq.s32.totalorder %s31, 1
    %p348 = por %p346, %p347
    %p350 = scmp.ne.s32.totalorder %s335, %s349
    %p351 = scmp.eq.s32.totalorder %s31, 0
    %p352 = por %p350, %p351
    %s354 = sadd.s32 %s353, 1
    %p357 = scmp.eq.s32.totalorder %s25, 1
    %p358 = scmp.ne.s32.totalorder %s353, %s355
    %p359 = scmp.eq.s32.totalorder %s25, 0
    %p360 = por %p358, %p359
    %p361 = scmp.ne.s32.totalorder %s353, %s355
    %p362 = scmp.eq.s32.totalorder %s30, 1
    %p363 = por %p361, %p362
    %p364 = scmp.ne.s32.totalorder %s355, %s356
    %p365 = scmp.eq.s32.totalorder %s30, 0
    %p366 = por %p364, %p365
    %p367 = scmp.ne.s32.totalorder %s355, %s356
    %p368 = scmp.eq.s32.totalorder %s31, 1
    %p369 = por %p367, %p368
    %p371 = scmp.ne.s32.totalorder %s356, %s370
    %p372 = scmp.eq.s32.totalorder %s31, 0
    %p373 = por %p371, %p372
    %s375 = sadd.s32 %s374, 1
    %p378 = scmp.eq.s32.totalorder %s25, 1
    %p379 = scmp.ne.s32.totalorder %s374, %s376
    %p380 = scmp.eq.s32.totalorder %s25, 0
    %p381 = por %p379, %p380
    %p382 = scmp.ne.s32.totalorder %s374, %s376
    %p383 = scmp.eq.s32.totalorder %s30, 1
    %p384 = por %p382, %p383
    %p385 = scmp.ne.s32.totalorder %s376, %s377
    %p386 = scmp.eq.s32.totalorder %s30, 0
    %p387 = por %p385, %p386
    %p388 = scmp.ne.s32.totalorder %s376, %s377
    %p389 = scmp.eq.s32.totalorder %s31, 1
    %p390 = por %p388, %p389
    %p392 = scmp.ne.s32.totalorder %s377, %s391
    %p393 = scmp.eq.s32.totalorder %s31, 0
    %p394 = por %p392, %p393
    %s396 = sadd.s32 %s395, 1
    %p399 = scmp.eq.s32.totalorder %s25, 1
    %p400 = scmp.ne.s32.totalorder %s395, %s397
    %p401 = scmp.eq.s32.totalorder %s25, 0
    %p402 = por %p400, %p401
    %p403 = scmp.ne.s32.totalorder %s395, %s397
    %p404 = scmp.eq.s32.totalorder %s30, 1
    %p405 = por %p403, %p404
    %p406 = scmp.ne.s32.totalorder %s397, %s398
    %p407 = scmp.eq.s32.totalorder %s30, 0
    %p408 = por %p406, %p407
    %p409 = scmp.ne.s32.totalorder %s397, %s398
    %p410 = scmp.eq.s32.totalorder %s31, 1
    %p411 = por %p409, %p410
    %p413 = scmp.ne.s32.totalorder %s398, %s412
    %p414 = scmp.eq.s32.totalorder %s31, 0
    %p415 = por %p413, %p414
    %s417 = sadd.s32 %s416, 1
    %p420 = scmp.eq.s32.totalorder %s25, 1
    %p421 = scmp.ne.s32.totalorder %s416, %s418
    %p422 = scmp.eq.s32.totalorder %s25, 0
    %p423 = por %p421, %p422
    %p424 = scmp.ne.s32.totalorder %s416, %s418
    %p425 = scmp.eq.s32.totalorder %s30, 1
    %p426 = por %p424, %p425
    %p427 = scmp.ne.s32.totalorder %s418, %s419
    %p428 = scmp.eq.s32.totalorder %s30, 0
    %p429 = por %p427, %p428
    %p430 = scmp.ne.s32.totalorder %s418, %s419
    %p431 = scmp.eq.s32.totalorder %s31, 1
    %p432 = por %p430, %p431
    %p434 = scmp.ne.s32.totalorder %s419, %s433
    %p435 = scmp.eq.s32.totalorder %s31, 0
    %p436 = por %p434, %p435
    %s437 = ssub.s32 %s25, %s32
    %p438 = scmp.eq.s32.totalorder %s437, 0
    %s440 = sadd.s32 %s439, 1
    %s441 = scalar_select %p438, %s439, %s440
    %p444 = pneg %p438
    %p445 = scmp.eq.s32.totalorder %s25, 1
    %p446 = por %p444, %p445
    %p447 = scmp.ne.s32.totalorder %s439, %s442
    %p448 = scmp.eq.s32.totalorder %s25, 0
    %p449 = por %p447, %p448
    %p450 = scmp.ne.s32.totalorder %s439, %s442
    %p451 = scmp.eq.s32.totalorder %s30, 1
    %p452 = por %p450, %p451
    %p453 = scmp.ne.s32.totalorder %s442, %s443
    %p454 = scmp.eq.s32.totalorder %s30, 0
    %p455 = por %p453, %p454
    %p456 = scmp.ne.s32.totalorder %s442, %s443
    %p457 = scmp.eq.s32.totalorder %s31, 1
    %p458 = por %p456, %p457
    %p460 = scmp.ne.s32.totalorder %s443, %s459
    %p461 = scmp.eq.s32.totalorder %s31, 0
    %p462 = por %p460, %p461
    %p463 = scmp.le.s32.totalorder 1, %s25
    %p464 = scmp.lt.s32.totalorder %s25, 3
    %p465 = pnand %p463, %p464
    %p466 = pneg %p465
    // Predicated region
    $region9: #{nerf_forward.1} parent=5 // pred_check
      _
    $region10: #{nerf_forward.1} parent=5 // pred_check_branch
      %468 = sbr.rel (%p465) target = $region12
    $region11: #{nerf_forward.1} parent=5 // pred_region
      %s469 = ssub.s32 %s25, 1
      // Predicated region
      $region13: #{nerf_forward.1} parent=11 // pred_check
        %p470 = pneg %p72
      $region14: #{nerf_forward.1} parent=11 // pred_check_branch
        %472 = sbr.rel (%p470) target = $region16
      $region15: #{nerf_forward.1} parent=11 // pred_region
        _
      $region16: #{nerf_forward.1} parent=11 // pred_fallthru
        _
      // Predicated region
      $region17: #{nerf_forward.1} parent=11 // pred_check
        %p473 = pneg %p93
      $region18: #{nerf_forward.1} parent=11 // pred_check_branch
        %475 = sbr.rel (%p473) target = $region20
      $region19: #{nerf_forward.1} parent=11 // pred_region
        _
      $region20: #{nerf_forward.1} parent=11 // pred_fallthru
        _
      // Predicated region
      $region21: #{nerf_forward.1} parent=11 // pred_check
        %p476 = pneg %p114
      $region22: #{nerf_forward.1} parent=11 // pred_check_branch
        %478 = sbr.rel (%p476) target = $region24
      $region23: #{nerf_forward.1} parent=11 // pred_region
        _
      $region24: #{nerf_forward.1} parent=11 // pred_fallthru
        _
      // Predicated region
      $region25: #{nerf_forward.1} parent=11 // pred_check
        %p479 = pneg %p135
      $region26: #{nerf_forward.1} parent=11 // pred_check_branch
        %481 = sbr.rel (%p479) target = $region28
      $region27: #{nerf_forward.1} parent=11 // pred_region
        _
      $region28: #{nerf_forward.1} parent=11 // pred_fallthru
        _
      // Predicated region
      $region29: #{nerf_forward.1} parent=11 // pred_check
        %p482 = pneg %p156
      $region30: #{nerf_forward.1} parent=11 // pred_check_branch
        %484 = sbr.rel (%p482) target = $region32
      $region31: #{nerf_forward.1} parent=11 // pred_region
        _
      $region32: #{nerf_forward.1} parent=11 // pred_fallthru
        _
      // Predicated region
      $region33: #{nerf_forward.1} parent=11 // pred_check
        %p485 = pneg %p177
      $region34: #{nerf_forward.1} parent=11 // pred_check_branch
        %487 = sbr.rel (%p485) target = $region36
      $region35: #{nerf_forward.1} parent=11 // pred_region
        _
      $region36: #{nerf_forward.1} parent=11 // pred_fallthru
        _
      // Predicated region
      $region37: #{nerf_forward.1} parent=11 // pred_check
        %p488 = pneg %p198
      $region38: #{nerf_forward.1} parent=11 // pred_check_branch
        %490 = sbr.rel (%p488) target = $region40
      $region39: #{nerf_forward.1} parent=11 // pred_region
        _
      $region40: #{nerf_forward.1} parent=11 // pred_fallthru
        _
      // Predicated region
      $region41: #{nerf_forward.1} parent=11 // pred_check
        %p491 = pneg %p219
      $region42: #{nerf_forward.1} parent=11 // pred_check_branch
        %493 = sbr.rel (%p491) target = $region44
      $region43: #{nerf_forward.1} parent=11 // pred_region
        _
      $region44: #{nerf_forward.1} parent=11 // pred_fallthru
        _
      // Predicated region
      $region45: #{nerf_forward.1} parent=11 // pred_check
        %p494 = pneg %p240
      $region46: #{nerf_forward.1} parent=11 // pred_check_branch
        %496 = sbr.rel (%p494) target = $region48
      $region47: #{nerf_forward.1} parent=11 // pred_region
        _
      $region48: #{nerf_forward.1} parent=11 // pred_fallthru
        _
      // Predicated region
      $region49: #{nerf_forward.1} parent=11 // pred_check
        %p497 = pneg %p261
      $region50: #{nerf_forward.1} parent=11 // pred_check_branch
        %499 = sbr.rel (%p497) target = $region52
      $region51: #{nerf_forward.1} parent=11 // pred_region
        _
      $region52: #{nerf_forward.1} parent=11 // pred_fallthru
        _
      // Predicated region
      $region53: #{nerf_forward.1} parent=11 // pred_check
        %p500 = pneg %p282
      $region54: #{nerf_forward.1} parent=11 // pred_check_branch
        %502 = sbr.rel (%p500) target = $region56
      $region55: #{nerf_forward.1} parent=11 // pred_region
        _
      $region56: #{nerf_forward.1} parent=11 // pred_fallthru
        _
      // Predicated region
      $region57: #{nerf_forward.1} parent=11 // pred_check
        %p503 = pneg %p303
      $region58: #{nerf_forward.1} parent=11 // pred_check_branch
        %505 = sbr.rel (%p503) target = $region60
      $region59: #{nerf_forward.1} parent=11 // pred_region
        _
      $region60: #{nerf_forward.1} parent=11 // pred_fallthru
        _
      // Predicated region
      $region61: #{nerf_forward.1} parent=11 // pred_check
        %p506 = pneg %p324
      $region62: #{nerf_forward.1} parent=11 // pred_check_branch
        %508 = sbr.rel (%p506) target = $region64
      $region63: #{nerf_forward.1} parent=11 // pred_region
        _
      $region64: #{nerf_forward.1} parent=11 // pred_fallthru
        _
      // Predicated region
      $region65: #{nerf_forward.1} parent=11 // pred_check
        %p509 = pneg %p345
      $region66: #{nerf_forward.1} parent=11 // pred_check_branch
        %511 = sbr.rel (%p509) target = $region68
      $region67: #{nerf_forward.1} parent=11 // pred_region
        _
      $region68: #{nerf_forward.1} parent=11 // pred_fallthru
        _
      // Predicated region
      $region69: #{nerf_forward.1} parent=11 // pred_check
        %p512 = pneg %p366
      $region70: #{nerf_forward.1} parent=11 // pred_check_branch
        %514 = sbr.rel (%p512) target = $region72
      $region71: #{nerf_forward.1} parent=11 // pred_region
        _
      $region72: #{nerf_forward.1} parent=11 // pred_fallthru
        _
      // Predicated region
      $region73: #{nerf_forward.1} parent=11 // pred_check
        %p515 = pneg %p387
      $region74: #{nerf_forward.1} parent=11 // pred_check_branch
        %517 = sbr.rel (%p515) target = $region76
      $region75: #{nerf_forward.1} parent=11 // pred_region
        _
      $region76: #{nerf_forward.1} parent=11 // pred_fallthru
        _
      // Predicated region
      $region77: #{nerf_forward.1} parent=11 // pred_check
        %p518 = pneg %p408
      $region78: #{nerf_forward.1} parent=11 // pred_check_branch
        %520 = sbr.rel (%p518) target = $region80
      $region79: #{nerf_forward.1} parent=11 // pred_region
        _
      $region80: #{nerf_forward.1} parent=11 // pred_fallthru
        _
      // Predicated region
      $region81: #{nerf_forward.1} parent=11 // pred_check
        %p521 = pneg %p429
      $region82: #{nerf_forward.1} parent=11 // pred_check_branch
        %523 = sbr.rel (%p521) target = $region84
      $region83: #{nerf_forward.1} parent=11 // pred_region
        _
      $region84: #{nerf_forward.1} parent=11 // pred_fallthru
        _
    $region12: #{nerf_forward.1} parent=5 // pred_fallthru
      _
    %p524 = scmp.lt.s32.totalorder %s25, 2
    // Predicated region
    $region85: #{nerf_forward.1} parent=5 // pred_check
      %p525 = pneg %p524
    $region86: #{nerf_forward.1} parent=5 // pred_check_branch
      %527 = sbr.rel (%p525) target = $region88
    $region87: #{nerf_forward.1} parent=5 // pred_region
      // Predicated region
      $region89: #{nerf_forward.1} parent=87 // pred_check
        %p528 = pneg %p45
      $region90: #{nerf_forward.1} parent=87 // pred_check_branch
        %530 = sbr.rel (%p528) target = $region92
      $region91: #{nerf_forward.1} parent=87 // pred_region
        %s531 = smul.u32 32, %s25
        %p532 = scmp.lt.s32.totalorder %s531, 63
        %s533 = scalar_select %p532, %s531, 63
        %s534 = smul.addr %s533, 8
        %s535 = scalar_lea.vmem %s0, %s534
        %s536 = smul.u32 32, %s25
      $region92: #{nerf_forward.1} parent=87 // pred_fallthru
        _
    $region88: #{nerf_forward.1} parent=5 // pred_fallthru
      _
    %p537 = scmp.le.s32.totalorder 1, %s25
    %p538 = scmp.lt.s32.totalorder %s25, 3
    %p539 = pnand %p537, %p538
    %p540 = pneg %p539
    // Predicated region
    $region93: #{nerf_forward.1} parent=5 // pred_check
      _
    $region94: #{nerf_forward.1} parent=5 // pred_check_branch
      %542 = sbr.rel (%p539) target = $region96
    $region95: #{nerf_forward.1} parent=5 // pred_region
      %s543 = ssub.s32 %s25, 1
      %s544 = smul.u32 32, %s30
      %p545 = scmp.lt.s32.totalorder %s544, 63
      %s546 = scalar_select %p545, %s544, 63
      %s547 = smul.addr %s546, 8
      %s548 = scalar_lea.vmem %s0, %s547
      %p549 = pneg %p51
      %p550 = pneg %p48
      %p551 = pneg %p72
      %p552 = pneg %p69
      %p553 = pneg %p93
      %p554 = pneg %p90
      %p555 = pneg %p114
      %p556 = pneg %p111
      %p557 = pneg %p135
      %p558 = pneg %p132
      %p559 = pneg %p156
      %p560 = pneg %p153
      %p561 = pneg %p177
      %p562 = pneg %p174
      %p563 = pneg %p198
      %p564 = pneg %p195
      %p565 = pneg %p219
      %p566 = pneg %p216
      %p567 = pneg %p240
      %p568 = pneg %p237
      %p569 = pneg %p261
      %p570 = pneg %p258
      %p571 = pneg %p282
      %p572 = pneg %p279
      %p573 = pneg %p303
      %p574 = pneg %p300
      %p575 = pneg %p324
      %p576 = pneg %p321
      %p577 = pneg %p345
      %p578 = pneg %p342
      %p579 = pneg %p366
      %p580 = pneg %p363
      %p581 = pneg %p387
      %p582 = pneg %p384
      %p583 = pneg %p408
      %p584 = pneg %p405
      %p585 = pneg %p429
      %p586 = pneg %p426
      %p587 = pneg %p455
      %p588 = pneg %p452
      %s589 = smul.u32 32, %s30
      %p590 = scmp.lt.s32.totalorder %s589, 63
      %s591 = scalar_select %p590, %s589, 63
      %s592 = smul.addr %s591, 4
      %s593 = scalar_lea.vmem %s19, %s592
      %s594 = smul.u32 32, %s30
      %p595 = scmp.lt.s32.totalorder %s594, 63
      %s596 = scalar_select %p595, %s594, 63
      %s597 = smul.addr %s596, 8
      %s598 = scalar_lea.vmem %s0, %s597
      %s599 = smul.u32 32, %s30
      %s600 = smul.u32 32, %s30
      %p601 = scmp.lt.s32.totalorder %s600, 63
      %s602 = scalar_select %p601, %s600, 63
      %s603 = smul.addr %s602, 4
      %s604 = scalar_lea.vmem %s19, %s603
      %s605 = smul.u32 32, %s30
      %v606 = vld [vmem:[%s598] sm:$0xff]
      %v607 = vld [vmem:[%s598 + $0x8] sm:$0xff]
      %v608 = vld [vmem:[%s598 + $0x10] sm:$0xff]
      %v609 = vld [vmem:[%s598 + $0x18] sm:$0xff]
      %v610 = vld [vmem:[%s598 + $0x20] sm:$0xff]
      %v611 = vld [vmem:[%s598 + $0x28] sm:$0xff]
      %v612 = vld [vmem:[%s598 + $0x30] sm:$0xff]
      %v613 = vld [vmem:[%s598 + $0x38] sm:$0xff]
      %v614 = vld [vmem:[%s598 + $0x40] sm:$0xff]
      %v615 = vld [vmem:[%s598 + $0x48] sm:$0xff]
      %v616 = vld [vmem:[%s598 + $0x50] sm:$0xff]
      %v617 = vld [vmem:[%s598 + $0x58] sm:$0xff]
      %v618 = vld [vmem:[%s598 + $0x60] sm:$0xff]
      %v619 = vld [vmem:[%s598 + $0x68] sm:$0xff]
      %v620 = vld [vmem:[%s598 + $0x70] sm:$0xff]
      %v621 = vld [vmem:[%s598 + $0x78] sm:$0xff]
      %v622 = vld [vmem:[%s598 + $0x80] sm:$0xff]
      %v623 = vld [vmem:[%s598 + $0x88] sm:$0xff]
      %v624 = vld [vmem:[%s598 + $0x90] sm:$0xff]
      %v625 = vld [vmem:[%s598 + $0x98] sm:$0xff]
      %v626 = vld [vmem:[%s598 + $0xa0] sm:$0xff]
      %v627 = vld [vmem:[%s598 + $0xa8] sm:$0xff]
      %v628 = vld [vmem:[%s598 + $0xb0] sm:$0xff]
      %v629 = vld [vmem:[%s598 + $0xb8] sm:$0xff]
      %v630 = vld [vmem:[%s598 + $0xc0] sm:$0xff]
      %v631 = vld [vmem:[%s598 + $0xc8] sm:$0xff]
      %v632 = vld [vmem:[%s598 + $0xd0] sm:$0xff]
      %v633 = vld [vmem:[%s598 + $0xd8] sm:$0xff]
      %v634 = vld [vmem:[%s598 + $0xe0] sm:$0xff]
      %v635 = vld [vmem:[%s598 + $0xe8] sm:$0xff]
      %v636 = vld [vmem:[%s598 + $0xf0] sm:$0xff]
      %v637 = vld [vmem:[%s598 + $0xf8] sm:$0xff]
      %v638 = vld [vmem:[%s1] sm:$0x77]
      %v639 = vld [vmem:[%s1 + $0x8] sm:$0x77]
      %642 = vst [vmem:[#allocation1] ss:$2 sm:$0xff] %v638
      %s643 = scalar_lea.vmem [#allocation1], 16
      %644 = vst [vmem:[%s643] ss:$2 sm:$0xff] %v639
      %v645 = vld.sshfl [vmem:[#allocation1] sm:$0xff pattern:$0x75316420]
      %v646 = vld.sshfl [vmem:[#allocation1 + $0x8] sm:$0xff pattern:$0x75316420]
      %v647 = vld.sshfl [vmem:[#allocation1 + $0x10] sm:$0xff pattern:$0x75316420]
      %v648 = vld.sshfl [vmem:[#allocation1 + $0x18] sm:$0xff pattern:$0x75316420]
      %vm649 = vcmask 23552
      %v651 = vsel %vm649, %v606, 0
      %v654 = vsel %vm649, %v607, 0
      %v657 = vsel %vm649, %v608, 0
      %v660 = vsel %vm649, %v609, 0
      %v663 = vsel %vm649, %v610, 0
      %v666 = vsel %vm649, %v611, 0
      %v669 = vsel %vm649, %v612, 0
      %v672 = vsel %vm649, %v613, 0
      %v675 = vsel %vm649, %v614, 0
      %v678 = vsel %vm649, %v615, 0
      %v681 = vsel %vm649, %v616, 0
      %v684 = vsel %vm649, %v617, 0
      %v687 = vsel %vm649, %v618, 0
      %v690 = vsel %vm649, %v619, 0
      %v693 = vsel %vm649, %v620, 0
      %v696 = vsel %vm649, %v621, 0
      %v699 = vsel %vm649, %v622, 0
      %v702 = vsel %vm649, %v623, 0
      %v705 = vsel %vm649, %v624, 0
      %v708 = vsel %vm649, %v625, 0
      %v711 = vsel %vm649, %v626, 0
      %v714 = vsel %vm649, %v627, 0
      %v717 = vsel %vm649, %v628, 0
      %v720 = vsel %vm649, %v629, 0
      %v723 = vsel %vm649, %v630, 0
      %v726 = vsel %vm649, %v631, 0
      %v729 = vsel %vm649, %v632, 0
      %v732 = vsel %vm649, %v633, 0
      %v735 = vsel %vm649, %v634, 0
      %v738 = vsel %vm649, %v635, 0
      %v741 = vsel %vm649, %v636, 0
      %v744 = vsel %vm649, %v637, 0
      %vm746 = vcmask 1042432
      %v747 = vsel %vm746, %v645, 0
      %v749 = vsel %vm746, %v646, 0
      %v751 = vsel %vm746, %v647, 0
      %v753 = vsel %vm746, %v648, 0
      %755 = vmatpush.msra.mxu0 0.0
      %756 = vmatpush.msra.mxu0 0.0
      %757 = vmatpush.msra.mxu0 0.0
      %758 = vmatpush.msra.mxu0 0.0
      %759 = vmatpush.msra.mxu0 0.0
      %760 = vmatpush.msra.mxu0 0.0
      %761 = vmatpush.msra.mxu0 0.0
      %762 = vmatpush.msra.mxu0 0.0
      %763 = vmatpush.msra.mxu0 0.0
      %764 = vmatpush.msra.mxu0 0.0
      %765 = vmatpush.msra.mxu0 0.0
      %766 = vmatpush.msra.mxu0 0.0
      %767 = vmatpush.msra.mxu0 0.0
      %768 = vmatpush.msra.mxu0 0.0
      %769 = vmatpush.msra.mxu0 0.0
      %770 = vmatpush.msra.mxu0 %v747
      %771 = vmatmul.f32.gmra.mxu0 %v651
      %v772 = vpop.f32.mrf.mxu0
      %v773 = vadd.f32 0.0, %v772
      %774 = vmatmul.f32.gmra.mxu0 %v654
      %v775 = vpop.f32.mrf.mxu0
      %v776 = vadd.f32 0.0, %v775
      %777 = vmatmul.f32.gmra.mxu0 %v657
      %v778 = vpop.f32.mrf.mxu0
      %v779 = vadd.f32 0.0, %v778
      %780 = vmatmul.f32.gmra.mxu0 %v660
      %v781 = vpop.f32.mrf.mxu0
      %v782 = vadd.f32 0.0, %v781
      %783 = vmatmul.f32.gmra.mxu0 %v663
      %v784 = vpop.f32.mrf.mxu0
      %v785 = vadd.f32 0.0, %v784
      %786 = vmatmul.f32.gmra.mxu0 %v666
      %v787 = vpop.f32.mrf.mxu0
      %v788 = vadd.f32 0.0, %v787
      %789 = vmatmul.f32.gmra.mxu0 %v669
      %v790 = vpop.f32.mrf.mxu0
      %v791 = vadd.f32 0.0, %v790
      %792 = vmatmul.f32.gmra.mxu0 %v672
      %v793 = vpop.f32.mrf.mxu0
      %v794 = vadd.f32 0.0, %v793
      %795 = vmatmul.f32.gmra.mxu0 %v675
      %v796 = vpop.f32.mrf.mxu0
      %v797 = vadd.f32 0.0, %v796
      %798 = vmatmul.f32.gmra.mxu0 %v678
      %v799 = vpop.f32.mrf.mxu0
      %v800 = vadd.f32 0.0, %v799
      %801 = vmatmul.f32.gmra.mxu0 %v681
      %v802 = vpop.f32.mrf.mxu0
      %v803 = vadd.f32 0.0, %v802
      %804 = vmatmul.f32.gmra.mxu0 %v684
      %v805 = vpop.f32.mrf.mxu0
      %v806 = vadd.f32 0.0, %v805
      %807 = vmatmul.f32.gmra.mxu0 %v687
      %v808 = vpop.f32.mrf.mxu0
      %v809 = vadd.f32 0.0, %v808
      %810 = vmatmul.f32.gmra.mxu0 %v690
      %v811 = vpop.f32.mrf.mxu0
      %v812 = vadd.f32 0.0, %v811
      %813 = vmatmul.f32.gmra.mxu0 %v693
      %v814 = vpop.f32.mrf.mxu0
      %v815 = vadd.f32 0.0, %v814
      %816 = vmatmul.f32.gmra.mxu0 %v696
      %v817 = vpop.f32.mrf.mxu0
      %v818 = vadd.f32 0.0, %v817
      %819 = vmatmul.f32.gmra.mxu0 %v699
      %v820 = vpop.f32.mrf.mxu0
      %v821 = vadd.f32 0.0, %v820
      %822 = vmatmul.f32.gmra.mxu0 %v702
      %v823 = vpop.f32.mrf.mxu0
      %v824 = vadd.f32 0.0, %v823
      %825 = vmatmul.f32.gmra.mxu0 %v705
      %v826 = vpop.f32.mrf.mxu0
      %v827 = vadd.f32 0.0, %v826
      %828 = vmatmul.f32.gmra.mxu0 %v708
      %v829 = vpop.f32.mrf.mxu0
      %v830 = vadd.f32 0.0, %v829
      %831 = vmatmul.f32.gmra.mxu0 %v711
      %v832 = vpop.f32.mrf.mxu0
      %v833 = vadd.f32 0.0, %v832
      %834 = vmatmul.f32.gmra.mxu0 %v714
      %v835 = vpop.f32.mrf.mxu0
      %v836 = vadd.f32 0.0, %v835
      %837 = vmatmul.f32.gmra.mxu0 %v717
      %v838 = vpop.f32.mrf.mxu0
      %v839 = vadd.f32 0.0, %v838
      %840 = vmatmul.f32.gmra.mxu0 %v720
      %v841 = vpop.f32.mrf.mxu0
      %v842 = vadd.f32 0.0, %v841
      %843 = vmatmul.f32.gmra.mxu0 %v723
      %v844 = vpop.f32.mrf.mxu0
      %v845 = vadd.f32 0.0, %v844
      %846 = vmatmul.f32.gmra.mxu0 %v726
      %v847 = vpop.f32.mrf.mxu0
      %v848 = vadd.f32 0.0, %v847
      %849 = vmatmul.f32.gmra.mxu0 %v729
      %v850 = vpop.f32.mrf.mxu0
      %v851 = vadd.f32 0.0, %v850
      %852 = vmatmul.f32.gmra.mxu0 %v732
      %v853 = vpop.f32.mrf.mxu0
      %v854 = vadd.f32 0.0, %v853
      %855 = vmatmul.f32.gmra.mxu0 %v735
      %v856 = vpop.f32.mrf.mxu0
      %v857 = vadd.f32 0.0, %v856
      %858 = vmatmul.f32.gmra.mxu0 %v738
      %v859 = vpop.f32.mrf.mxu0
      %v860 = vadd.f32 0.0, %v859
      %861 = vmatmul.f32.gmra.mxu0 %v741
      %v862 = vpop.f32.mrf.mxu0
      %v863 = vadd.f32 0.0, %v862
      %864 = vmatmul.f32.gmra.mxu0 %v744
      %v865 = vpop.f32.mrf.mxu0
      %v866 = vadd.f32 0.0, %v865
      %867 = vdwg.mxu0
      %868 = vmatpush.msra.mxu0 0.0
      %869 = vmatpush.msra.mxu0 0.0
      %870 = vmatpush.msra.mxu0 0.0
      %871 = vmatpush.msra.mxu0 0.0
      %872 = vmatpush.msra.mxu0 0.0
      %873 = vmatpush.msra.mxu0 0.0
      %874 = vmatpush.msra.mxu0 0.0
      %875 = vmatpush.msra.mxu0 0.0
      %876 = vmatpush.msra.mxu0 0.0
      %877 = vmatpush.msra.mxu0 0.0
      %878 = vmatpush.msra.mxu0 0.0
      %879 = vmatpush.msra.mxu0 0.0
      %880 = vmatpush.msra.mxu0 0.0
      %881 = vmatpush.msra.mxu0 0.0
      %882 = vmatpush.msra.mxu0 0.0
      %883 = vmatpush.msra.mxu0 %v749
      %884 = vmatmul.f32.gmra.mxu0 %v651
      %v885 = vpop.f32.mrf.mxu0
      %v886 = vadd.f32 0.0, %v885
      %887 = vmatmul.f32.gmra.mxu0 %v654
      %v888 = vpop.f32.mrf.mxu0
      %v889 = vadd.f32 0.0, %v888
      %890 = vmatmul.f32.gmra.mxu0 %v657
      %v891 = vpop.f32.mrf.mxu0
      %v892 = vadd.f32 0.0, %v891
      %893 = vmatmul.f32.gmra.mxu0 %v660
      %v894 = vpop.f32.mrf.mxu0
      %v895 = vadd.f32 0.0, %v894
      %896 = vmatmul.f32.gmra.mxu0 %v663
      %v897 = vpop.f32.mrf.mxu0
      %v898 = vadd.f32 0.0, %v897
      %899 = vmatmul.f32.gmra.mxu0 %v666
      %v900 = vpop.f32.mrf.mxu0
      %v901 = vadd.f32 0.0, %v900
      %902 = vmatmul.f32.gmra.mxu0 %v669
      %v903 = vpop.f32.mrf.mxu0
      %v904 = vadd.f32 0.0, %v903
      %905 = vmatmul.f32.gmra.mxu0 %v672
      %v906 = vpop.f32.mrf.mxu0
      %v907 = vadd.f32 0.0, %v906
      %908 = vmatmul.f32.gmra.mxu0 %v675
      %v909 = vpop.f32.mrf.mxu0
      %v910 = vadd.f32 0.0, %v909
      %911 = vmatmul.f32.gmra.mxu0 %v678
      %v912 = vpop.f32.mrf.mxu0
      %v913 = vadd.f32 0.0, %v912
      %914 = vmatmul.f32.gmra.mxu0 %v681
      %v915 = vpop.f32.mrf.mxu0
      %v916 = vadd.f32 0.0, %v915
      %917 = vmatmul.f32.gmra.mxu0 %v684
      %v918 = vpop.f32.mrf.mxu0
      %v919 = vadd.f32 0.0, %v918
      %920 = vmatmul.f32.gmra.mxu0 %v687
      %v921 = vpop.f32.mrf.mxu0
      %v922 = vadd.f32 0.0, %v921
      %923 = vmatmul.f32.gmra.mxu0 %v690
      %v924 = vpop.f32.mrf.mxu0
      %v925 = vadd.f32 0.0, %v924
      %926 = vmatmul.f32.gmra.mxu0 %v693
      %v927 = vpop.f32.mrf.mxu0
      %v928 = vadd.f32 0.0, %v927
      %929 = vmatmul.f32.gmra.mxu0 %v696
      %v930 = vpop.f32.mrf.mxu0
      %v931 = vadd.f32 0.0, %v930
      %932 = vmatmul.f32.gmra.mxu0 %v699
      %v933 = vpop.f32.mrf.mxu0
      %v934 = vadd.f32 0.0, %v933
      %935 = vmatmul.f32.gmra.mxu0 %v702
      %v936 = vpop.f32.mrf.mxu0
      %v937 = vadd.f32 0.0, %v936
      %938 = vmatmul.f32.gmra.mxu0 %v705
      %v939 = vpop.f32.mrf.mxu0
      %v940 = vadd.f32 0.0, %v939
      %941 = vmatmul.f32.gmra.mxu0 %v708
      %v942 = vpop.f32.mrf.mxu0
      %v943 = vadd.f32 0.0, %v942
      %944 = vmatmul.f32.gmra.mxu0 %v711
      %v945 = vpop.f32.mrf.mxu0
      %v946 = vadd.f32 0.0, %v945
      %947 = vmatmul.f32.gmra.mxu0 %v714
      %v948 = vpop.f32.mrf.mxu0
      %v949 = vadd.f32 0.0, %v948
      %950 = vmatmul.f32.gmra.mxu0 %v717
      %v951 = vpop.f32.mrf.mxu0
      %v952 = vadd.f32 0.0, %v951
      %953 = vmatmul.f32.gmra.mxu0 %v720
      %v954 = vpop.f32.mrf.mxu0
      %v955 = vadd.f32 0.0, %v954
      %956 = vmatmul.f32.gmra.mxu0 %v723
      %v957 = vpop.f32.mrf.mxu0
      %v958 = vadd.f32 0.0, %v957
      %959 = vmatmul.f32.gmra.mxu0 %v726
      %v960 = vpop.f32.mrf.mxu0
      %v961 = vadd.f32 0.0, %v960
      %962 = vmatmul.f32.gmra.mxu0 %v729
      %v963 = vpop.f32.mrf.mxu0
      %v964 = vadd.f32 0.0, %v963
      %965 = vmatmul.f32.gmra.mxu0 %v732
      %v966 = vpop.f32.mrf.mxu0
      %v967 = vadd.f32 0.0, %v966
      %968 = vmatmul.f32.gmra.mxu0 %v735
      %v969 = vpop.f32.mrf.mxu0
      %v970 = vadd.f32 0.0, %v969
      %971 = vmatmul.f32.gmra.mxu0 %v738
      %v972 = vpop.f32.mrf.mxu0
      %v973 = vadd.f32 0.0, %v972
      %974 = vmatmul.f32.gmra.mxu0 %v741
      %v975 = vpop.f32.mrf.mxu0
      %v976 = vadd.f32 0.0, %v975
      %977 = vmatmul.f32.gmra.mxu0 %v744
      %v978 = vpop.f32.mrf.mxu0
      %v979 = vadd.f32 0.0, %v978
      %980 = vdwg.mxu0
      %981 = vmatpush.msra.mxu0 0.0
      %982 = vmatpush.msra.mxu0 0.0
      %983 = vmatpush.msra.mxu0 0.0
      %984 = vmatpush.msra.mxu0 0.0
      %985 = vmatpush.msra.mxu0 0.0
      %986 = vmatpush.msra.mxu0 0.0
      %987 = vmatpush.msra.mxu0 0.0
      %988 = vmatpush.msra.mxu0 0.0
      %989 = vmatpush.msra.mxu0 0.0
      %990 = vmatpush.msra.mxu0 0.0
      %991 = vmatpush.msra.mxu0 0.0
      %992 = vmatpush.msra.mxu0 0.0
      %993 = vmatpush.msra.mxu0 0.0
      %994 = vmatpush.msra.mxu0 0.0
      %995 = vmatpush.msra.mxu0 0.0
      %996 = vmatpush.msra.mxu0 %v751
      %997 = vmatmul.f32.gmra.mxu0 %v651
      %v998 = vpop.f32.mrf.mxu0
      %v999 = vadd.f32 0.0, %v998
      %1000 = vmatmul.f32.gmra.mxu0 %v654
      %v1001 = vpop.f32.mrf.mxu0
      %v1002 = vadd.f32 0.0, %v1001
      %1003 = vmatmul.f32.gmra.mxu0 %v657
      %v1004 = vpop.f32.mrf.mxu0
      %v1005 = vadd.f32 0.0, %v1004
      %1006 = vmatmul.f32.gmra.mxu0 %v660
      %v1007 = vpop.f32.mrf.mxu0
      %v1008 = vadd.f32 0.0, %v1007
      %1009 = vmatmul.f32.gmra.mxu0 %v663
      %v1010 = vpop.f32.mrf.mxu0
      %v1011 = vadd.f32 0.0, %v1010
      %1012 = vmatmul.f32.gmra.mxu0 %v666
      %v1013 = vpop.f32.mrf.mxu0
      %v1014 = vadd.f32 0.0, %v1013
      %1015 = vmatmul.f32.gmra.mxu0 %v669
      %v1016 = vpop.f32.mrf.mxu0
      %v1017 = vadd.f32 0.0, %v1016
      %1018 = vmatmul.f32.gmra.mxu0 %v672
      %v1019 = vpop.f32.mrf.mxu0
      %v1020 = vadd.f32 0.0, %v1019
      %1021 = vmatmul.f32.gmra.mxu0 %v675
      %v1022 = vpop.f32.mrf.mxu0
      %v1023 = vadd.f32 0.0, %v1022
      %1024 = vmatmul.f32.gmra.mxu0 %v678
      %v1025 = vpop.f32.mrf.mxu0
      %v1026 = vadd.f32 0.0, %v1025
      %1027 = vmatmul.f32.gmra.mxu0 %v681
      %v1028 = vpop.f32.mrf.mxu0
      %v1029 = vadd.f32 0.0, %v1028
      %1030 = vmatmul.f32.gmra.mxu0 %v684
      %v1031 = vpop.f32.mrf.mxu0
      %v1032 = vadd.f32 0.0, %v1031
      %1033 = vmatmul.f32.gmra.mxu0 %v687
      %v1034 = vpop.f32.mrf.mxu0
      %v1035 = vadd.f32 0.0, %v1034
      %1036 = vmatmul.f32.gmra.mxu0 %v690
      %v1037 = vpop.f32.mrf.mxu0
      %v1038 = vadd.f32 0.0, %v1037
      %1039 = vmatmul.f32.gmra.mxu0 %v693
      %v1040 = vpop.f32.mrf.mxu0
      %v1041 = vadd.f32 0.0, %v1040
      %1042 = vmatmul.f32.gmra.mxu0 %v696
      %v1043 = vpop.f32.mrf.mxu0
      %v1044 = vadd.f32 0.0, %v1043
      %1045 = vmatmul.f32.gmra.mxu0 %v699
      %v1046 = vpop.f32.mrf.mxu0
      %v1047 = vadd.f32 0.0, %v1046
      %1048 = vmatmul.f32.gmra.mxu0 %v702
      %v1049 = vpop.f32.mrf.mxu0
      %v1050 = vadd.f32 0.0, %v1049
      %1051 = vmatmul.f32.gmra.mxu0 %v705
      %v1052 = vpop.f32.mrf.mxu0
      %v1053 = vadd.f32 0.0, %v1052
      %1054 = vmatmul.f32.gmra.mxu0 %v708
      %v1055 = vpop.f32.mrf.mxu0
      %v1056 = vadd.f32 0.0, %v1055
      %1057 = vmatmul.f32.gmra.mxu0 %v711
      %v1058 = vpop.f32.mrf.mxu0
      %v1059 = vadd.f32 0.0, %v1058
      %1060 = vmatmul.f32.gmra.mxu0 %v714
      %v1061 = vpop.f32.mrf.mxu0
      %v1062 = vadd.f32 0.0, %v1061
      %1063 = vmatmul.f32.gmra.mxu0 %v717
      %v1064 = vpop.f32.mrf.mxu0
      %v1065 = vadd.f32 0.0, %v1064
      %1066 = vmatmul.f32.gmra.mxu0 %v720
      %v1067 = vpop.f32.mrf.mxu0
      %v1068 = vadd.f32 0.0, %v1067
      %1069 = vmatmul.f32.gmra.mxu0 %v723
      %v1070 = vpop.f32.mrf.mxu0
      %v1071 = vadd.f32 0.0, %v1070
      %1072 = vmatmul.f32.gmra.mxu0 %v726
      %v1073 = vpop.f32.mrf.mxu0
      %v1074 = vadd.f32 0.0, %v1073
      %1075 = vmatmul.f32.gmra.mxu0 %v729
      %v1076 = vpop.f32.mrf.mxu0
      %v1077 = vadd.f32 0.0, %v1076
      %1078 = vmatmul.f32.gmra.mxu0 %v732
      %v1079 = vpop.f32.mrf.mxu0
      %v1080 = vadd.f32 0.0, %v1079
      %1081 = vmatmul.f32.gmra.mxu0 %v735
      %v1082 = vpop.f32.mrf.mxu0
      %v1083 = vadd.f32 0.0, %v1082
      %1084 = vmatmul.f32.gmra.mxu0 %v738
      %v1085 = vpop.f32.mrf.mxu0
      %v1086 = vadd.f32 0.0, %v1085
      %1087 = vmatmul.f32.gmra.mxu0 %v741
      %v1088 = vpop.f32.mrf.mxu0
      %v1089 = vadd.f32 0.0, %v1088
      %1090 = vmatmul.f32.gmra.mxu0 %v744
      %v1091 = vpop.f32.mrf.mxu0
      %v1092 = vadd.f32 0.0, %v1091
      %1093 = vdwg.mxu0
      %1094 = vmatpush.msra.mxu0 0.0
      %1095 = vmatpush.msra.mxu0 0.0
      %1096 = vmatpush.msra.mxu0 0.0
      %1097 = vmatpush.msra.mxu0 0.0
      %1098 = vmatpush.msra.mxu0 0.0
      %1099 = vmatpush.msra.mxu0 0.0
      %1100 = vmatpush.msra.mxu0 0.0
      %1101 = vmatpush.msra.mxu0 0.0
      %1102 = vmatpush.msra.mxu0 0.0
      %1103 = vmatpush.msra.mxu0 0.0
      %1104 = vmatpush.msra.mxu0 0.0
      %1105 = vmatpush.msra.mxu0 0.0
      %1106 = vmatpush.msra.mxu0 0.0
      %1107 = vmatpush.msra.mxu0 0.0
      %1108 = vmatpush.msra.mxu0 0.0
      %1109 = vmatpush.msra.mxu0 %v753
      %1110 = vmatmul.f32.gmra.mxu0 %v651
      %v1111 = vpop.f32.mrf.mxu0
      %v1112 = vadd.f32 0.0, %v1111
      %1113 = vmatmul.f32.gmra.mxu0 %v654
      %v1114 = vpop.f32.mrf.mxu0
      %v1115 = vadd.f32 0.0, %v1114
      %1116 = vmatmul.f32.gmra.mxu0 %v657
      %v1117 = vpop.f32.mrf.mxu0
      %v1118 = vadd.f32 0.0, %v1117
      %1119 = vmatmul.f32.gmra.mxu0 %v660
      %v1120 = vpop.f32.mrf.mxu0
      %v1121 = vadd.f32 0.0, %v1120
      %1122 = vmatmul.f32.gmra.mxu0 %v663
      %v1123 = vpop.f32.mrf.mxu0
      %v1124 = vadd.f32 0.0, %v1123
      %1125 = vmatmul.f32.gmra.mxu0 %v666
      %v1126 = vpop.f32.mrf.mxu0
      %v1127 = vadd.f32 0.0, %v1126
      %1128 = vmatmul.f32.gmra.mxu0 %v669
      %v1129 = vpop.f32.mrf.mxu0
      %v1130 = vadd.f32 0.0, %v1129
      %1131 = vmatmul.f32.gmra.mxu0 %v672
      %v1132 = vpop.f32.mrf.mxu0
      %v1133 = vadd.f32 0.0, %v1132
      %1134 = vmatmul.f32.gmra.mxu0 %v675
      %v1135 = vpop.f32.mrf.mxu0
      %v1136 = vadd.f32 0.0, %v1135
      %1137 = vmatmul.f32.gmra.mxu0 %v678
      %v1138 = vpop.f32.mrf.mxu0
      %v1139 = vadd.f32 0.0, %v1138
      %1140 = vmatmul.f32.gmra.mxu0 %v681
      %v1141 = vpop.f32.mrf.mxu0
      %v1142 = vadd.f32 0.0, %v1141
      %1143 = vmatmul.f32.gmra.mxu0 %v684
      %v1144 = vpop.f32.mrf.mxu0
      %v1145 = vadd.f32 0.0, %v1144
      %1146 = vmatmul.f32.gmra.mxu0 %v687
      %v1147 = vpop.f32.mrf.mxu0
      %v1148 = vadd.f32 0.0, %v1147
      %1149 = vmatmul.f32.gmra.mxu0 %v690
      %v1150 = vpop.f32.mrf.mxu0
      %v1151 = vadd.f32 0.0, %v1150
      %1152 = vmatmul.f32.gmra.mxu0 %v693
      %v1153 = vpop.f32.mrf.mxu0
      %v1154 = vadd.f32 0.0, %v1153
      %1155 = vmatmul.f32.gmra.mxu0 %v696
      %v1156 = vpop.f32.mrf.mxu0
      %v1157 = vadd.f32 0.0, %v1156
      %1158 = vmatmul.f32.gmra.mxu0 %v699
      %v1159 = vpop.f32.mrf.mxu0
      %v1160 = vadd.f32 0.0, %v1159
      %1161 = vmatmul.f32.gmra.mxu0 %v702
      %v1162 = vpop.f32.mrf.mxu0
      %v1163 = vadd.f32 0.0, %v1162
      %1164 = vmatmul.f32.gmra.mxu0 %v705
      %v1165 = vpop.f32.mrf.mxu0
      %v1166 = vadd.f32 0.0, %v1165
      %1167 = vmatmul.f32.gmra.mxu0 %v708
      %v1168 = vpop.f32.mrf.mxu0
      %v1169 = vadd.f32 0.0, %v1168
      %1170 = vmatmul.f32.gmra.mxu0 %v711
      %v1171 = vpop.f32.mrf.mxu0
      %v1172 = vadd.f32 0.0, %v1171
      %1173 = vmatmul.f32.gmra.mxu0 %v714
      %v1174 = vpop.f32.mrf.mxu0
      %v1175 = vadd.f32 0.0, %v1174
      %1176 = vmatmul.f32.gmra.mxu0 %v717
      %v1177 = vpop.f32.mrf.mxu0
      %v1178 = vadd.f32 0.0, %v1177
      %1179 = vmatmul.f32.gmra.mxu0 %v720
      %v1180 = vpop.f32.mrf.mxu0
      %v1181 = vadd.f32 0.0, %v1180
      %1182 = vmatmul.f32.gmra.mxu0 %v723
      %v1183 = vpop.f32.mrf.mxu0
      %v1184 = vadd.f32 0.0, %v1183
      %1185 = vmatmul.f32.gmra.mxu0 %v726
      %v1186 = vpop.f32.mrf.mxu0
      %v1187 = vadd.f32 0.0, %v1186
      %1188 = vmatmul.f32.gmra.mxu0 %v729
      %v1189 = vpop.f32.mrf.mxu0
      %v1190 = vadd.f32 0.0, %v1189
      %1191 = vmatmul.f32.gmra.mxu0 %v732
      %v1192 = vpop.f32.mrf.mxu0
      %v1193 = vadd.f32 0.0, %v1192
      %1194 = vmatmul.f32.gmra.mxu0 %v735
      %v1195 = vpop.f32.mrf.mxu0
      %v1196 = vadd.f32 0.0, %v1195
      %1197 = vmatmul.f32.gmra.mxu0 %v738
      %v1198 = vpop.f32.mrf.mxu0
      %v1199 = vadd.f32 0.0, %v1198
      %1200 = vmatmul.f32.gmra.mxu0 %v741
      %v1201 = vpop.f32.mrf.mxu0
      %v1202 = vadd.f32 0.0, %v1201
      %1203 = vmatmul.f32.gmra.mxu0 %v744
      %v1204 = vpop.f32.mrf.mxu0
      %v1205 = vadd.f32 0.0, %v1204
      %1206 = vdwg.mxu0
      %v1207 = vpack.c.bf16 %v1002, %v999
      %v1208 = vpack.c.bf16 %v1115, %v1112
      %v1209 = vpack.c.bf16 %v1008, %v1005
      %v1210 = vpack.c.bf16 %v1121, %v1118
      %v1211 = vpack.c.bf16 %v1014, %v1011
      %v1212 = vpack.c.bf16 %v1127, %v1124
      %v1213 = vpack.c.bf16 %v1020, %v1017
      %v1214 = vpack.c.bf16 %v1133, %v1130
      %v1215 = vpack.c.bf16 %v1026, %v1023
      %v1216 = vpack.c.bf16 %v1139, %v1136
      %v1217 = vpack.c.bf16 %v1032, %v1029
      %v1218 = vpack.c.bf16 %v1145, %v1142
      %v1219 = vpack.c.bf16 %v1038, %v1035
      %v1220 = vpack.c.bf16 %v1151, %v1148
      %v1221 = vpack.c.bf16 %v1044, %v1041
      %v1222 = vpack.c.bf16 %v1157, %v1154
      %v1223 = vpack.c.bf16 %v1050, %v1047
      %v1224 = vpack.c.bf16 %v1163, %v1160
      %v1225 = vpack.c.bf16 %v1056, %v1053
      %v1226 = vpack.c.bf16 %v1169, %v1166
      %v1227 = vpack.c.bf16 %v1062, %v1059
      %v1228 = vpack.c.bf16 %v1175, %v1172
      %v1229 = vpack.c.bf16 %v1068, %v1065
      %v1230 = vpack.c.bf16 %v1181, %v1178
      %v1231 = vpack.c.bf16 %v1074, %v1071
      %v1232 = vpack.c.bf16 %v1187, %v1184
      %v1233 = vpack.c.bf16 %v1080, %v1077
      %v1234 = vpack.c.bf16 %v1193, %v1190
      %v1235 = vpack.c.bf16 %v1086, %v1083
      %v1236 = vpack.c.bf16 %v1199, %v1196
      %v1237 = vpack.c.bf16 %v1092, %v1089
      %v1238 = vpack.c.bf16 %v1205, %v1202
      %v1239 = vld [vmem:[%s2] sm:$0x3]
      %v1241 = vperm.slane %v1239, 0
      %v1242 = vperm.slane %v1239, 1
      %v1245 = vadd.f32 %v773, %v1241
      %v1246 = vadd.f32 %v886, %v1242
      %v1247 = vadd.f32 %v776, %v1241
      %v1248 = vadd.f32 %v889, %v1242
      %v1249 = vadd.f32 %v779, %v1241
      %v1250 = vadd.f32 %v892, %v1242
      %v1251 = vadd.f32 %v782, %v1241
      %v1252 = vadd.f32 %v895, %v1242
      %v1253 = vadd.f32 %v785, %v1241
      %v1254 = vadd.f32 %v898, %v1242
      %v1255 = vadd.f32 %v788, %v1241
      %v1256 = vadd.f32 %v901, %v1242
      %v1257 = vadd.f32 %v791, %v1241
      %v1258 = vadd.f32 %v904, %v1242
      %v1259 = vadd.f32 %v794, %v1241
      %v1260 = vadd.f32 %v907, %v1242
      %v1261 = vadd.f32 %v797, %v1241
      %v1262 = vadd.f32 %v910, %v1242
      %v1263 = vadd.f32 %v800, %v1241
      %v1264 = vadd.f32 %v913, %v1242
      %v1265 = vadd.f32 %v803, %v1241
      %v1266 = vadd.f32 %v916, %v1242
      %v1267 = vadd.f32 %v806, %v1241
      %v1268 = vadd.f32 %v919, %v1242
      %v1269 = vadd.f32 %v809, %v1241
      %v1270 = vadd.f32 %v922, %v1242
      %v1271 = vadd.f32 %v812, %v1241
      %v1272 = vadd.f32 %v925, %v1242
      %v1273 = vadd.f32 %v815, %v1241
      %v1274 = vadd.f32 %v928, %v1242
      %v1275 = vadd.f32 %v818, %v1241
      %v1276 = vadd.f32 %v931, %v1242
      %v1277 = vadd.f32 %v821, %v1241
      %v1278 = vadd.f32 %v934, %v1242
      %v1279 = vadd.f32 %v824, %v1241
      %v1280 = vadd.f32 %v937, %v1242
      %v1281 = vadd.f32 %v827, %v1241
      %v1282 = vadd.f32 %v940, %v1242
      %v1283 = vadd.f32 %v830, %v1241
      %v1284 = vadd.f32 %v943, %v1242
      %v1285 = vadd.f32 %v833, %v1241
      %v1286 = vadd.f32 %v946, %v1242
      %v1287 = vadd.f32 %v836, %v1241
      %v1288 = vadd.f32 %v949, %v1242
      %v1289 = vadd.f32 %v839, %v1241
      %v1290 = vadd.f32 %v952, %v1242
      %v1291 = vadd.f32 %v842, %v1241
      %v1292 = vadd.f32 %v955, %v1242
      %v1293 = vadd.f32 %v845, %v1241
      %v1294 = vadd.f32 %v958, %v1242
      %v1295 = vadd.f32 %v848, %v1241
      %v1296 = vadd.f32 %v961, %v1242
      %v1297 = vadd.f32 %v851, %v1241
      %v1298 = vadd.f32 %v964, %v1242
      %v1299 = vadd.f32 %v854, %v1241
      %v1300 = vadd.f32 %v967, %v1242
      %v1301 = vadd.f32 %v857, %v1241
      %v1302 = vadd.f32 %v970, %v1242
      %v1303 = vadd.f32 %v860, %v1241
      %v1304 = vadd.f32 %v973, %v1242
      %v1305 = vadd.f32 %v863, %v1241
      %v1306 = vadd.f32 %v976, %v1242
      %v1307 = vadd.f32 %v866, %v1241
      %v1308 = vadd.f32 %v979, %v1242
      %v1309 = vpack.c.bf16 %v1246, %v1245
      %v1310 = vpack.c.bf16 %v1248, %v1247
      %v1311 = vpack.c.bf16 %v1250, %v1249
      %v1312 = vpack.c.bf16 %v1252, %v1251
      %v1313 = vpack.c.bf16 %v1254, %v1253
      %v1314 = vpack.c.bf16 %v1256, %v1255
      %v1315 = vpack.c.bf16 %v1258, %v1257
      %v1316 = vpack.c.bf16 %v1260, %v1259
      %v1317 = vpack.c.bf16 %v1262, %v1261
      %v1318 = vpack.c.bf16 %v1264, %v1263
      %v1319 = vpack.c.bf16 %v1266, %v1265
      %v1320 = vpack.c.bf16 %v1268, %v1267
      %v1321 = vpack.c.bf16 %v1270, %v1269
      %v1322 = vpack.c.bf16 %v1272, %v1271
      %v1323 = vpack.c.bf16 %v1274, %v1273
      %v1324 = vpack.c.bf16 %v1276, %v1275
      %v1325 = vpack.c.bf16 %v1278, %v1277
      %v1326 = vpack.c.bf16 %v1280, %v1279
      %v1327 = vpack.c.bf16 %v1282, %v1281
      %v1328 = vpack.c.bf16 %v1284, %v1283
      %v1329 = vpack.c.bf16 %v1286, %v1285
      %v1330 = vpack.c.bf16 %v1288, %v1287
      %v1331 = vpack.c.bf16 %v1290, %v1289
      %v1332 = vpack.c.bf16 %v1292, %v1291
      %v1333 = vpack.c.bf16 %v1294, %v1293
      %v1334 = vpack.c.bf16 %v1296, %v1295
      %v1335 = vpack.c.bf16 %v1298, %v1297
      %v1336 = vpack.c.bf16 %v1300, %v1299
      %v1337 = vpack.c.bf16 %v1302, %v1301
      %v1338 = vpack.c.bf16 %v1304, %v1303
      %v1339 = vpack.c.bf16 %v1306, %v1305
      %v1340 = vpack.c.bf16 %v1308, %v1307
      %v1341 = vunpack.c.l.bf16 %v1309
      %v1342 = vunpack.c.h.bf16 %v1309
      %v1343 = vunpack.c.l.bf16 %v1310
      %v1344 = vunpack.c.h.bf16 %v1310
      %v1345 = vunpack.c.l.bf16 %v1311
      %v1346 = vunpack.c.h.bf16 %v1311
      %v1347 = vunpack.c.l.bf16 %v1312
      %v1348 = vunpack.c.h.bf16 %v1312
      %v1349 = vunpack.c.l.bf16 %v1313
      %v1350 = vunpack.c.h.bf16 %v1313
      %v1351 = vunpack.c.l.bf16 %v1314
      %v1352 = vunpack.c.h.bf16 %v1314
      %v1353 = vunpack.c.l.bf16 %v1315
      %v1354 = vunpack.c.h.bf16 %v1315
      %v1355 = vunpack.c.l.bf16 %v1316
      %v1356 = vunpack.c.h.bf16 %v1316
      %v1357 = vunpack.c.l.bf16 %v1317
      %v1358 = vunpack.c.h.bf16 %v1317
      %v1359 = vunpack.c.l.bf16 %v1318
      %v1360 = vunpack.c.h.bf16 %v1318
      %v1361 = vunpack.c.l.bf16 %v1319
      %v1362 = vunpack.c.h.bf16 %v1319
      %v1363 = vunpack.c.l.bf16 %v1320
      %v1364 = vunpack.c.h.bf16 %v1320
      %v1365 = vunpack.c.l.bf16 %v1321
      %v1366 = vunpack.c.h.bf16 %v1321
      %v1367 = vunpack.c.l.bf16 %v1322
      %v1368 = vunpack.c.h.bf16 %v1322
      %v1369 = vunpack.c.l.bf16 %v1323
      %v1370 = vunpack.c.h.bf16 %v1323
      %v1371 = vunpack.c.l.bf16 %v1324
      %v1372 = vunpack.c.h.bf16 %v1324
      %v1373 = vunpack.c.l.bf16 %v1325
      %v1374 = vunpack.c.h.bf16 %v1325
      %v1375 = vunpack.c.l.bf16 %v1326
      %v1376 = vunpack.c.h.bf16 %v1326
      %v1377 = vunpack.c.l.bf16 %v1327
      %v1378 = vunpack.c.h.bf16 %v1327
      %v1379 = vunpack.c.l.bf16 %v1328
      %v1380 = vunpack.c.h.bf16 %v1328
      %v1381 = vunpack.c.l.bf16 %v1329
      %v1382 = vunpack.c.h.bf16 %v1329
      %v1383 = vunpack.c.l.bf16 %v1330
      %v1384 = vunpack.c.h.bf16 %v1330
      %v1385 = vunpack.c.l.bf16 %v1331
      %v1386 = vunpack.c.h.bf16 %v1331
      %v1387 = vunpack.c.l.bf16 %v1332
      %v1388 = vunpack.c.h.bf16 %v1332
      %v1389 = vunpack.c.l.bf16 %v1333
      %v1390 = vunpack.c.h.bf16 %v1333
      %v1391 = vunpack.c.l.bf16 %v1334
      %v1392 = vunpack.c.h.bf16 %v1334
      %v1393 = vunpack.c.l.bf16 %v1335
      %v1394 = vunpack.c.h.bf16 %v1335
      %v1395 = vunpack.c.l.bf16 %v1336
      %v1396 = vunpack.c.h.bf16 %v1336
      %v1397 = vunpack.c.l.bf16 %v1337
      %v1398 = vunpack.c.h.bf16 %v1337
      %v1399 = vunpack.c.l.bf16 %v1338
      %v1400 = vunpack.c.h.bf16 %v1338
      %v1401 = vunpack.c.l.bf16 %v1339
      %v1402 = vunpack.c.h.bf16 %v1339
      %v1403 = vunpack.c.l.bf16 %v1340
      %v1404 = vunpack.c.h.bf16 %v1340
      %v1405 = vmax.f32 %v1341, 0.0
      %v1406 = vmax.f32 %v1342, 0.0
      %v1407 = vmax.f32 %v1343, 0.0
      %v1408 = vmax.f32 %v1344, 0.0
      %v1409 = vmax.f32 %v1345, 0.0
      %v1410 = vmax.f32 %v1346, 0.0
      %v1411 = vmax.f32 %v1347, 0.0
      %v1412 = vmax.f32 %v1348, 0.0
      %v1413 = vmax.f32 %v1349, 0.0
      %v1414 = vmax.f32 %v1350, 0.0
      %v1415 = vmax.f32 %v1351, 0.0
      %v1416 = vmax.f32 %v1352, 0.0
      %v1417 = vmax.f32 %v1353, 0.0
      %v1418 = vmax.f32 %v1354, 0.0
      %v1419 = vmax.f32 %v1355, 0.0
      %v1420 = vmax.f32 %v1356, 0.0
      %v1421 = vmax.f32 %v1357, 0.0
      %v1422 = vmax.f32 %v1358, 0.0
      %v1423 = vmax.f32 %v1359, 0.0
      %v1424 = vmax.f32 %v1360, 0.0
      %v1425 = vmax.f32 %v1361, 0.0
      %v1426 = vmax.f32 %v1362, 0.0
      %v1427 = vmax.f32 %v1363, 0.0
      %v1428 = vmax.f32 %v1364, 0.0
      %v1429 = vmax.f32 %v1365, 0.0
      %v1430 = vmax.f32 %v1366, 0.0
      %v1431 = vmax.f32 %v1367, 0.0
      %v1432 = vmax.f32 %v1368, 0.0
      %v1433 = vmax.f32 %v1369, 0.0
      %v1434 = vmax.f32 %v1370, 0.0
      %v1435 = vmax.f32 %v1371, 0.0
      %v1436 = vmax.f32 %v1372, 0.0
      %v1437 = vmax.f32 %v1373, 0.0
      %v1438 = vmax.f32 %v1374, 0.0
      %v1439 = vmax.f32 %v1375, 0.0
      %v1440 = vmax.f32 %v1376, 0.0
      %v1441 = vmax.f32 %v1377, 0.0
      %v1442 = vmax.f32 %v1378, 0.0
      %v1443 = vmax.f32 %v1379, 0.0
      %v1444 = vmax.f32 %v1380, 0.0
      %v1445 = vmax.f32 %v1381, 0.0
      %v1446 = vmax.f32 %v1382, 0.0
      %v1447 = vmax.f32 %v1383, 0.0
      %v1448 = vmax.f32 %v1384, 0.0
      %v1449 = vmax.f32 %v1385, 0.0
      %v1450 = vmax.f32 %v1386, 0.0
      %v1451 = vmax.f32 %v1387, 0.0
      %v1452 = vmax.f32 %v1388, 0.0
      %v1453 = vmax.f32 %v1389, 0.0
      %v1454 = vmax.f32 %v1390, 0.0
      %v1455 = vmax.f32 %v1391, 0.0
      %v1456 = vmax.f32 %v1392, 0.0
      %v1457 = vmax.f32 %v1393, 0.0
      %v1458 = vmax.f32 %v1394, 0.0
      %v1459 = vmax.f32 %v1395, 0.0
      %v1460 = vmax.f32 %v1396, 0.0
      %v1461 = vmax.f32 %v1397, 0.0
      %v1462 = vmax.f32 %v1398, 0.0
      %v1463 = vmax.f32 %v1399, 0.0
      %v1464 = vmax.f32 %v1400, 0.0
      %v1465 = vmax.f32 %v1401, 0.0
      %v1466 = vmax.f32 %v1402, 0.0
      %v1467 = vmax.f32 %v1403, 0.0
      %v1468 = vmax.f32 %v1404, 0.0
      %v1469 = vpack.c.bf16 %v1407, %v1405
      %v1470 = vpack.c.bf16 %v1408, %v1406
      %v1471 = vpack.c.bf16 %v1411, %v1409
      %v1472 = vpack.c.bf16 %v1412, %v1410
      %v1473 = vpack.c.bf16 %v1415, %v1413
      %v1474 = vpack.c.bf16 %v1416, %v1414
      %v1475 = vpack.c.bf16 %v1419, %v1417
      %v1476 = vpack.c.bf16 %v1420, %v1418
      %v1477 = vpack.c.bf16 %v1423, %v1421
      %v1478 = vpack.c.bf16 %v1424, %v1422
      %v1479 = vpack.c.bf16 %v1427, %v1425
      %v1480 = vpack.c.bf16 %v1428, %v1426
      %v1481 = vpack.c.bf16 %v1431, %v1429
      %v1482 = vpack.c.bf16 %v1432, %v1430
      %v1483 = vpack.c.bf16 %v1435, %v1433
      %v1484 = vpack.c.bf16 %v1436, %v1434
      %v1485 = vpack.c.bf16 %v1439, %v1437
      %v1486 = vpack.c.bf16 %v1440, %v1438
      %v1487 = vpack.c.bf16 %v1443, %v1441
      %v1488 = vpack.c.bf16 %v1444, %v1442
      %v1489 = vpack.c.bf16 %v1447, %v1445
      %v1490 = vpack.c.bf16 %v1448, %v1446
      %v1491 = vpack.c.bf16 %v1451, %v1449
      %v1492 = vpack.c.bf16 %v1452, %v1450
      %v1493 = vpack.c.bf16 %v1455, %v1453
      %v1494 = vpack.c.bf16 %v1456, %v1454
      %v1495 = vpack.c.bf16 %v1459, %v1457
      %v1496 = vpack.c.bf16 %v1460, %v1458
      %v1497 = vpack.c.bf16 %v1463, %v1461
      %v1498 = vpack.c.bf16 %v1464, %v1462
      %v1499 = vpack.c.bf16 %v1467, %v1465
      %v1500 = vpack.c.bf16 %v1468, %v1466
      %v1501 = vld [vmem:[%s3] sm:$0xff]
      %v1502 = vld [vmem:[%s3 + $0x8] sm:$0xff]
      %v1503 = vld [vmem:[%s3 + $0x10] sm:$0xff]
      %v1504 = vld [vmem:[%s3 + $0x18] sm:$0xff]
      %v1505 = vld [vmem:[%s3 + $0x20] sm:$0xff]
      %v1506 = vld [vmem:[%s3 + $0x28] sm:$0xff]
      %v1507 = vld [vmem:[%s3 + $0x30] sm:$0xff]
      %v1508 = vld [vmem:[%s3 + $0x38] sm:$0xff]
      %v1509 = vld [vmem:[%s3 + $0x40] sm:$0xff]
      %v1510 = vld [vmem:[%s3 + $0x48] sm:$0xff]
      %v1511 = vld [vmem:[%s3 + $0x50] sm:$0xff]
      %v1512 = vld [vmem:[%s3 + $0x58] sm:$0xff]
      %v1513 = vld [vmem:[%s3 + $0x60] sm:$0xff]
      %v1514 = vld [vmem:[%s3 + $0x68] sm:$0xff]
      %v1515 = vld [vmem:[%s3 + $0x70] sm:$0xff]
      %v1516 = vld [vmem:[%s3 + $0x78] sm:$0xff]
      %v1517 = vld [vmem:[%s3 + $0x80] sm:$0xff]
      %v1518 = vld [vmem:[%s3 + $0x88] sm:$0xff]
      %v1519 = vld [vmem:[%s3 + $0x90] sm:$0xff]
      %v1520 = vld [vmem:[%s3 + $0x98] sm:$0xff]
      %v1521 = vld [vmem:[%s3 + $0xa0] sm:$0xff]
      %v1522 = vld [vmem:[%s3 + $0xa8] sm:$0xff]
      %v1523 = vld [vmem:[%s3 + $0xb0] sm:$0xff]
      %v1524 = vld [vmem:[%s3 + $0xb8] sm:$0xff]
      %v1525 = vld [vmem:[%s3 + $0xc0] sm:$0xff]
      %v1526 = vld [vmem:[%s3 + $0xc8] sm:$0xff]
      %v1527 = vld [vmem:[%s3 + $0xd0] sm:$0xff]
      %v1528 = vld [vmem:[%s3 + $0xd8] sm:$0xff]
      %v1529 = vld [vmem:[%s3 + $0xe0] sm:$0xff]
      %v1530 = vld [vmem:[%s3 + $0xe8] sm:$0xff]
      %v1531 = vld [vmem:[%s3 + $0xf0] sm:$0xff]
      %v1532 = vld [vmem:[%s3 + $0xf8] sm:$0xff]
      %v1533 = vld [vmem:[%s4] sm:$0x3]
      %v1535 = vperm.slane %v1533, 0
      %v1536 = vperm.slane %v1533, 1
      %v1571 = vunpack.c.l.b16 %v1501
      %v1572 = vunpack.c.h.b16 %v1501
      %v1573 = vunpack.c.l.b16 %v1502
      %v1574 = vunpack.c.h.b16 %v1502
      %v1575 = vunpack.c.l.b16 %v1503
      %v1576 = vunpack.c.h.b16 %v1503
      %v1577 = vunpack.c.l.b16 %v1504
      %v1578 = vunpack.c.h.b16 %v1504
      %v1579 = vunpack.c.l.b16 %v1505
      %v1580 = vunpack.c.h.b16 %v1505
      %v1581 = vunpack.c.l.b16 %v1506
      %v1582 = vunpack.c.h.b16 %v1506
      %v1583 = vunpack.c.l.b16 %v1507
      %v1584 = vunpack.c.h.b16 %v1507
      %v1585 = vunpack.c.l.b16 %v1508
      %v1586 = vunpack.c.h.b16 %v1508
      %v1587 = vunpack.c.l.b16 %v1509
      %v1588 = vunpack.c.h.b16 %v1509
      %v1589 = vunpack.c.l.b16 %v1510
      %v1590 = vunpack.c.h.b16 %v1510
      %v1591 = vunpack.c.l.b16 %v1511
      %v1592 = vunpack.c.h.b16 %v1511
      %v1593 = vunpack.c.l.b16 %v1512
      %v1594 = vunpack.c.h.b16 %v1512
      %v1595 = vunpack.c.l.b16 %v1513
      %v1596 = vunpack.c.h.b16 %v1513
      %v1597 = vunpack.c.l.b16 %v1514
      %v1598 = vunpack.c.h.b16 %v1514
      %v1599 = vunpack.c.l.b16 %v1515
      %v1600 = vunpack.c.h.b16 %v1515
      %v1601 = vunpack.c.l.b16 %v1516
      %v1602 = vunpack.c.h.b16 %v1516
      %v1603 = vunpack.c.l.b16 %v1517
      %v1604 = vunpack.c.h.b16 %v1517
      %v1605 = vunpack.c.l.b16 %v1518
      %v1606 = vunpack.c.h.b16 %v1518
      %v1607 = vunpack.c.l.b16 %v1519
      %v1608 = vunpack.c.h.b16 %v1519
      %v1609 = vunpack.c.l.b16 %v1520
      %v1610 = vunpack.c.h.b16 %v1520
      %v1611 = vunpack.c.l.b16 %v1521
      %v1612 = vunpack.c.h.b16 %v1521
      %v1613 = vunpack.c.l.b16 %v1522
      %v1614 = vunpack.c.h.b16 %v1522
      %v1615 = vunpack.c.l.b16 %v1523
      %v1616 = vunpack.c.h.b16 %v1523
      %v1617 = vunpack.c.l.b16 %v1524
      %v1618 = vunpack.c.h.b16 %v1524
      %v1619 = vunpack.c.l.b16 %v1525
      %v1620 = vunpack.c.h.b16 %v1525
      %v1621 = vunpack.c.l.b16 %v1526
      %v1622 = vunpack.c.h.b16 %v1526
      %v1623 = vunpack.c.l.b16 %v1527
      %v1624 = vunpack.c.h.b16 %v1527
      %v1625 = vunpack.c.l.b16 %v1528
      %v1626 = vunpack.c.h.b16 %v1528
      %v1627 = vunpack.c.l.b16 %v1529
      %v1628 = vunpack.c.h.b16 %v1529
      %v1629 = vunpack.c.l.b16 %v1530
      %v1630 = vunpack.c.h.b16 %v1530
      %v1631 = vunpack.c.l.b16 %v1531
      %v1632 = vunpack.c.h.b16 %v1531
      %v1633 = vunpack.c.l.b16 %v1532
      %v1634 = vunpack.c.h.b16 %v1532
      %v1635 = vpack.c.b16 %v1573, %v1571
      %v1636 = vpack.c.b16 %v1574, %v1572
      %v1637 = vpack.c.b16 %v1577, %v1575
      %v1638 = vpack.c.b16 %v1578, %v1576
      %v1639 = vpack.c.b16 %v1581, %v1579
      %v1640 = vpack.c.b16 %v1582, %v1580
      %v1641 = vpack.c.b16 %v1585, %v1583
      %v1642 = vpack.c.b16 %v1586, %v1584
      %v1643 = vpack.c.b16 %v1589, %v1587
      %v1644 = vpack.c.b16 %v1590, %v1588
      %v1645 = vpack.c.b16 %v1593, %v1591
      %v1646 = vpack.c.b16 %v1594, %v1592
      %v1647 = vpack.c.b16 %v1597, %v1595
      %v1648 = vpack.c.b16 %v1598, %v1596
      %v1649 = vpack.c.b16 %v1601, %v1599
      %v1650 = vpack.c.b16 %v1602, %v1600
      %v1651 = vpack.c.b16 %v1605, %v1603
      %v1652 = vpack.c.b16 %v1606, %v1604
      %v1653 = vpack.c.b16 %v1609, %v1607
      %v1654 = vpack.c.b16 %v1610, %v1608
      %v1655 = vpack.c.b16 %v1613, %v1611
      %v1656 = vpack.c.b16 %v1614, %v1612
      %v1657 = vpack.c.b16 %v1617, %v1615
      %v1658 = vpack.c.b16 %v1618, %v1616
      %v1659 = vpack.c.b16 %v1621, %v1619
      %v1660 = vpack.c.b16 %v1622, %v1620
      %v1661 = vpack.c.b16 %v1625, %v1623
      %v1662 = vpack.c.b16 %v1626, %v1624
      %v1663 = vpack.c.b16 %v1629, %v1627
      %v1664 = vpack.c.b16 %v1630, %v1628
      %v1665 = vpack.c.b16 %v1633, %v1631
      %v1666 = vpack.c.b16 %v1634, %v1632
      %1699 = vmatpush.bf16.msra.mxu0 %v1649
      %1700 = vmatpush.bf16.msra.mxu0 %v1647
      %1701 = vmatpush.bf16.msra.mxu0 %v1645
      %1702 = vmatpush.bf16.msra.mxu0 %v1643
      %1703 = vmatpush.bf16.msra.mxu0 %v1641
      %1704 = vmatpush.bf16.msra.mxu0 %v1639
      %1705 = vmatpush.bf16.msra.mxu0 %v1637
      %1706 = vmatpush.bf16.msra.mxu0 %v1635
      %1707 = vmatmul.bf16.gmra.mxu0 %v1469
      %v1708 = vpop.f32.mrf.mxu0
      %v1709 = vadd.f32 %v1535, %v1708
      %v1710 = vpop.f32.mrf.mxu0
      %v1711 = vadd.f32 %v1535, %v1710
      %1712 = vmatmul.bf16.gmra.mxu0 %v1471
      %v1713 = vpop.f32.mrf.mxu0
      %v1714 = vadd.f32 %v1535, %v1713
      %v1715 = vpop.f32.mrf.mxu0
      %v1716 = vadd.f32 %v1535, %v1715
      %1717 = vmatmul.bf16.gmra.mxu0 %v1473
      %v1718 = vpop.f32.mrf.mxu0
      %v1719 = vadd.f32 %v1535, %v1718
      %v1720 = vpop.f32.mrf.mxu0
      %v1721 = vadd.f32 %v1535, %v1720
      %1722 = vmatmul.bf16.gmra.mxu0 %v1475
      %v1723 = vpop.f32.mrf.mxu0
      %v1724 = vadd.f32 %v1535, %v1723
      %v1725 = vpop.f32.mrf.mxu0
      %v1726 = vadd.f32 %v1535, %v1725
      %1727 = vmatmul.bf16.gmra.mxu0 %v1477
      %v1728 = vpop.f32.mrf.mxu0
      %v1729 = vadd.f32 %v1535, %v1728
      %v1730 = vpop.f32.mrf.mxu0
      %v1731 = vadd.f32 %v1535, %v1730
      %1732 = vmatmul.bf16.gmra.mxu0 %v1479
      %v1733 = vpop.f32.mrf.mxu0
      %v1734 = vadd.f32 %v1535, %v1733
      %v1735 = vpop.f32.mrf.mxu0
      %v1736 = vadd.f32 %v1535, %v1735
      %1737 = vmatmul.bf16.gmra.mxu0 %v1481
      %v1738 = vpop.f32.mrf.mxu0
      %v1739 = vadd.f32 %v1535, %v1738
      %v1740 = vpop.f32.mrf.mxu0
      %v1741 = vadd.f32 %v1535, %v1740
      %1742 = vmatmul.bf16.gmra.mxu0 %v1483
      %v1743 = vpop.f32.mrf.mxu0
      %v1744 = vadd.f32 %v1535, %v1743
      %v1745 = vpop.f32.mrf.mxu0
      %v1746 = vadd.f32 %v1535, %v1745
      %1747 = vmatmul.bf16.gmra.mxu0 %v1485
      %v1748 = vpop.f32.mrf.mxu0
      %v1749 = vadd.f32 %v1535, %v1748
      %v1750 = vpop.f32.mrf.mxu0
      %v1751 = vadd.f32 %v1535, %v1750
      %1752 = vmatmul.bf16.gmra.mxu0 %v1487
      %v1753 = vpop.f32.mrf.mxu0
      %v1754 = vadd.f32 %v1535, %v1753
      %v1755 = vpop.f32.mrf.mxu0
      %v1756 = vadd.f32 %v1535, %v1755
      %1757 = vmatmul.bf16.gmra.mxu0 %v1489
      %v1758 = vpop.f32.mrf.mxu0
      %v1759 = vadd.f32 %v1535, %v1758
      %v1760 = vpop.f32.mrf.mxu0
      %v1761 = vadd.f32 %v1535, %v1760
      %1762 = vmatmul.bf16.gmra.mxu0 %v1491
      %v1763 = vpop.f32.mrf.mxu0
      %v1764 = vadd.f32 %v1535, %v1763
      %v1765 = vpop.f32.mrf.mxu0
      %v1766 = vadd.f32 %v1535, %v1765
      %1767 = vmatmul.bf16.gmra.mxu0 %v1493
      %v1768 = vpop.f32.mrf.mxu0
      %v1769 = vadd.f32 %v1535, %v1768
      %v1770 = vpop.f32.mrf.mxu0
      %v1771 = vadd.f32 %v1535, %v1770
      %1772 = vmatmul.bf16.gmra.mxu0 %v1495
      %v1773 = vpop.f32.mrf.mxu0
      %v1774 = vadd.f32 %v1535, %v1773
      %v1775 = vpop.f32.mrf.mxu0
      %v1776 = vadd.f32 %v1535, %v1775
      %1777 = vmatmul.bf16.gmra.mxu0 %v1497
      %v1778 = vpop.f32.mrf.mxu0
      %v1779 = vadd.f32 %v1535, %v1778
      %v1780 = vpop.f32.mrf.mxu0
      %v1781 = vadd.f32 %v1535, %v1780
      %1782 = vmatmul.bf16.gmra.mxu0 %v1499
      %v1783 = vpop.f32.mrf.mxu0
      %v1784 = vadd.f32 %v1535, %v1783
      %v1785 = vpop.f32.mrf.mxu0
      %v1786 = vadd.f32 %v1535, %v1785
      %1787 = vdwg.mxu0
      %1788 = vmatpush.bf16.msra.mxu0 %v1665
      %1789 = vmatpush.bf16.msra.mxu0 %v1663
      %1790 = vmatpush.bf16.msra.mxu0 %v1661
      %1791 = vmatpush.bf16.msra.mxu0 %v1659
      %1792 = vmatpush.bf16.msra.mxu0 %v1657
      %1793 = vmatpush.bf16.msra.mxu0 %v1655
      %1794 = vmatpush.bf16.msra.mxu0 %v1653
      %1795 = vmatpush.bf16.msra.mxu0 %v1651
      %1796 = vmatmul.bf16.gmra.mxu0 %v1470
      %v1797 = vpop.f32.mrf.mxu0
      %v1798 = vadd.f32 %v1709, %v1797
      %v1799 = vpop.f32.mrf.mxu0
      %v1800 = vadd.f32 %v1711, %v1799
      %1801 = vmatmul.bf16.gmra.mxu0 %v1472
      %v1802 = vpop.f32.mrf.mxu0
      %v1803 = vadd.f32 %v1714, %v1802
      %v1804 = vpop.f32.mrf.mxu0
      %v1805 = vadd.f32 %v1716, %v1804
      %1806 = vmatmul.bf16.gmra.mxu0 %v1474
      %v1807 = vpop.f32.mrf.mxu0
      %v1808 = vadd.f32 %v1719, %v1807
      %v1809 = vpop.f32.mrf.mxu0
      %v1810 = vadd.f32 %v1721, %v1809
      %1811 = vmatmul.bf16.gmra.mxu0 %v1476
      %v1812 = vpop.f32.mrf.mxu0
      %v1813 = vadd.f32 %v1724, %v1812
      %v1814 = vpop.f32.mrf.mxu0
      %v1815 = vadd.f32 %v1726, %v1814
      %1816 = vmatmul.bf16.gmra.mxu0 %v1478
      %v1817 = vpop.f32.mrf.mxu0
      %v1818 = vadd.f32 %v1729, %v1817
      %v1819 = vpop.f32.mrf.mxu0
      %v1820 = vadd.f32 %v1731, %v1819
      %1821 = vmatmul.bf16.gmra.mxu0 %v1480
      %v1822 = vpop.f32.mrf.mxu0
      %v1823 = vadd.f32 %v1734, %v1822
      %v1824 = vpop.f32.mrf.mxu0
      %v1825 = vadd.f32 %v1736, %v1824
      %1826 = vmatmul.bf16.gmra.mxu0 %v1482
      %v1827 = vpop.f32.mrf.mxu0
      %v1828 = vadd.f32 %v1739, %v1827
      %v1829 = vpop.f32.mrf.mxu0
      %v1830 = vadd.f32 %v1741, %v1829
      %1831 = vmatmul.bf16.gmra.mxu0 %v1484
      %v1832 = vpop.f32.mrf.mxu0
      %v1833 = vadd.f32 %v1744, %v1832
      %v1834 = vpop.f32.mrf.mxu0
      %v1835 = vadd.f32 %v1746, %v1834
      %1836 = vmatmul.bf16.gmra.mxu0 %v1486
      %v1837 = vpop.f32.mrf.mxu0
      %v1838 = vadd.f32 %v1749, %v1837
      %v1839 = vpop.f32.mrf.mxu0
      %v1840 = vadd.f32 %v1751, %v1839
      %1841 = vmatmul.bf16.gmra.mxu0 %v1488
      %v1842 = vpop.f32.mrf.mxu0
      %v1843 = vadd.f32 %v1754, %v1842
      %v1844 = vpop.f32.mrf.mxu0
      %v1845 = vadd.f32 %v1756, %v1844
      %1846 = vmatmul.bf16.gmra.mxu0 %v1490
      %v1847 = vpop.f32.mrf.mxu0
      %v1848 = vadd.f32 %v1759, %v1847
      %v1849 = vpop.f32.mrf.mxu0
      %v1850 = vadd.f32 %v1761, %v1849
      %1851 = vmatmul.bf16.gmra.mxu0 %v1492
      %v1852 = vpop.f32.mrf.mxu0
      %v1853 = vadd.f32 %v1764, %v1852
      %v1854 = vpop.f32.mrf.mxu0
      %v1855 = vadd.f32 %v1766, %v1854
      %1856 = vmatmul.bf16.gmra.mxu0 %v1494
      %v1857 = vpop.f32.mrf.mxu0
      %v1858 = vadd.f32 %v1769, %v1857
      %v1859 = vpop.f32.mrf.mxu0
      %v1860 = vadd.f32 %v1771, %v1859
      %1861 = vmatmul.bf16.gmra.mxu0 %v1496
      %v1862 = vpop.f32.mrf.mxu0
      %v1863 = vadd.f32 %v1774, %v1862
      %v1864 = vpop.f32.mrf.mxu0
      %v1865 = vadd.f32 %v1776, %v1864
      %1866 = vmatmul.bf16.gmra.mxu0 %v1498
      %v1867 = vpop.f32.mrf.mxu0
      %v1868 = vadd.f32 %v1779, %v1867
      %v1869 = vpop.f32.mrf.mxu0
      %v1870 = vadd.f32 %v1781, %v1869
      %1871 = vmatmul.bf16.gmra.mxu0 %v1500
      %v1872 = vpop.f32.mrf.mxu0
      %v1873 = vadd.f32 %v1784, %v1872
      %v1874 = vpop.f32.mrf.mxu0
      %v1875 = vadd.f32 %v1786, %v1874
      %1876 = vdwg.mxu0
      %1877 = vmatpush.bf16.msra.mxu0 %v1650
      %1878 = vmatpush.bf16.msra.mxu0 %v1648
      %1879 = vmatpush.bf16.msra.mxu0 %v1646
      %1880 = vmatpush.bf16.msra.mxu0 %v1644
      %1881 = vmatpush.bf16.msra.mxu0 %v1642
      %1882 = vmatpush.bf16.msra.mxu0 %v1640
      %1883 = vmatpush.bf16.msra.mxu0 %v1638
      %1884 = vmatpush.bf16.msra.mxu0 %v1636
      %1885 = vmatmul.bf16.gmra.mxu0 %v1469
      %v1886 = vpop.f32.mrf.mxu0
      %v1887 = vadd.f32 %v1536, %v1886
      %v1888 = vpop.f32.mrf.mxu0
      %v1889 = vadd.f32 %v1536, %v1888
      %1890 = vmatmul.bf16.gmra.mxu0 %v1471
      %v1891 = vpop.f32.mrf.mxu0
      %v1892 = vadd.f32 %v1536, %v1891
      %v1893 = vpop.f32.mrf.mxu0
      %v1894 = vadd.f32 %v1536, %v1893
      %1895 = vmatmul.bf16.gmra.mxu0 %v1473
      %v1896 = vpop.f32.mrf.mxu0
      %v1897 = vadd.f32 %v1536, %v1896
      %v1898 = vpop.f32.mrf.mxu0
      %v1899 = vadd.f32 %v1536, %v1898
      %1900 = vmatmul.bf16.gmra.mxu0 %v1475
      %v1901 = vpop.f32.mrf.mxu0
      %v1902 = vadd.f32 %v1536, %v1901
      %v1903 = vpop.f32.mrf.mxu0
      %v1904 = vadd.f32 %v1536, %v1903
      %1905 = vmatmul.bf16.gmra.mxu0 %v1477
      %v1906 = vpop.f32.mrf.mxu0
      %v1907 = vadd.f32 %v1536, %v1906
      %v1908 = vpop.f32.mrf.mxu0
      %v1909 = vadd.f32 %v1536, %v1908
      %1910 = vmatmul.bf16.gmra.mxu0 %v1479
      %v1911 = vpop.f32.mrf.mxu0
      %v1912 = vadd.f32 %v1536, %v1911
      %v1913 = vpop.f32.mrf.mxu0
      %v1914 = vadd.f32 %v1536, %v1913
      %1915 = vmatmul.bf16.gmra.mxu0 %v1481
      %v1916 = vpop.f32.mrf.mxu0
      %v1917 = vadd.f32 %v1536, %v1916
      %v1918 = vpop.f32.mrf.mxu0
      %v1919 = vadd.f32 %v1536, %v1918
      %1920 = vmatmul.bf16.gmra.mxu0 %v1483
      %v1921 = vpop.f32.mrf.mxu0
      %v1922 = vadd.f32 %v1536, %v1921
      %v1923 = vpop.f32.mrf.mxu0
      %v1924 = vadd.f32 %v1536, %v1923
      %1925 = vmatmul.bf16.gmra.mxu0 %v1485
      %v1926 = vpop.f32.mrf.mxu0
      %v1927 = vadd.f32 %v1536, %v1926
      %v1928 = vpop.f32.mrf.mxu0
      %v1929 = vadd.f32 %v1536, %v1928
      %1930 = vmatmul.bf16.gmra.mxu0 %v1487
      %v1931 = vpop.f32.mrf.mxu0
      %v1932 = vadd.f32 %v1536, %v1931
      %v1933 = vpop.f32.mrf.mxu0
      %v1934 = vadd.f32 %v1536, %v1933
      %1935 = vmatmul.bf16.gmra.mxu0 %v1489
      %v1936 = vpop.f32.mrf.mxu0
      %v1937 = vadd.f32 %v1536, %v1936
      %v1938 = vpop.f32.mrf.mxu0
      %v1939 = vadd.f32 %v1536, %v1938
      %1940 = vmatmul.bf16.gmra.mxu0 %v1491
      %v1941 = vpop.f32.mrf.mxu0
      %v1942 = vadd.f32 %v1536, %v1941
      %v1943 = vpop.f32.mrf.mxu0
      %v1944 = vadd.f32 %v1536, %v1943
      %1945 = vmatmul.bf16.gmra.mxu0 %v1493
      %v1946 = vpop.f32.mrf.mxu0
      %v1947 = vadd.f32 %v1536, %v1946
      %v1948 = vpop.f32.mrf.mxu0
      %v1949 = vadd.f32 %v1536, %v1948
      %1950 = vmatmul.bf16.gmra.mxu0 %v1495
      %v1951 = vpop.f32.mrf.mxu0
      %v1952 = vadd.f32 %v1536, %v1951
      %v1953 = vpop.f32.mrf.mxu0
      %v1954 = vadd.f32 %v1536, %v1953
      %1955 = vmatmul.bf16.gmra.mxu0 %v1497
      %v1956 = vpop.f32.mrf.mxu0
      %v1957 = vadd.f32 %v1536, %v1956
      %v1958 = vpop.f32.mrf.mxu0
      %v1959 = vadd.f32 %v1536, %v1958
      %1960 = vmatmul.bf16.gmra.mxu0 %v1499
      %v1961 = vpop.f32.mrf.mxu0
      %v1962 = vadd.f32 %v1536, %v1961
      %v1963 = vpop.f32.mrf.mxu0
      %v1964 = vadd.f32 %v1536, %v1963
      %1965 = vdwg.mxu0
      %1966 = vmatpush.bf16.msra.mxu0 %v1666
      %1967 = vmatpush.bf16.msra.mxu0 %v1664
      %1968 = vmatpush.bf16.msra.mxu0 %v1662
      %1969 = vmatpush.bf16.msra.mxu0 %v1660
      %1970 = vmatpush.bf16.msra.mxu0 %v1658
      %1971 = vmatpush.bf16.msra.mxu0 %v1656
      %1972 = vmatpush.bf16.msra.mxu0 %v1654
      %1973 = vmatpush.bf16.msra.mxu0 %v1652
      %1974 = vmatmul.bf16.gmra.mxu0 %v1470
      %v1975 = vpop.f32.mrf.mxu0
      %v1976 = vadd.f32 %v1887, %v1975
      %v1977 = vpop.f32.mrf.mxu0
      %v1978 = vadd.f32 %v1889, %v1977
      %1979 = vmatmul.bf16.gmra.mxu0 %v1472
      %v1980 = vpop.f32.mrf.mxu0
      %v1981 = vadd.f32 %v1892, %v1980
      %v1982 = vpop.f32.mrf.mxu0
      %v1983 = vadd.f32 %v1894, %v1982
      %1984 = vmatmul.bf16.gmra.mxu0 %v1474
      %v1985 = vpop.f32.mrf.mxu0
      %v1986 = vadd.f32 %v1897, %v1985
      %v1987 = vpop.f32.mrf.mxu0
      %v1988 = vadd.f32 %v1899, %v1987
      %1989 = vmatmul.bf16.gmra.mxu0 %v1476
      %v1990 = vpop.f32.mrf.mxu0
      %v1991 = vadd.f32 %v1902, %v1990
      %v1992 = vpop.f32.mrf.mxu0
      %v1993 = vadd.f32 %v1904, %v1992
      %1994 = vmatmul.bf16.gmra.mxu0 %v1478
      %v1995 = vpop.f32.mrf.mxu0
      %v1996 = vadd.f32 %v1907, %v1995
      %v1997 = vpop.f32.mrf.mxu0
      %v1998 = vadd.f32 %v1909, %v1997
      %1999 = vmatmul.bf16.gmra.mxu0 %v1480
      %v2000 = vpop.f32.mrf.mxu0
      %v2001 = vadd.f32 %v1912, %v2000
      %v2002 = vpop.f32.mrf.mxu0
      %v2003 = vadd.f32 %v1914, %v2002
      %2004 = vmatmul.bf16.gmra.mxu0 %v1482
      %v2005 = vpop.f32.mrf.mxu0
      %v2006 = vadd.f32 %v1917, %v2005
      %v2007 = vpop.f32.mrf.mxu0
      %v2008 = vadd.f32 %v1919, %v2007
      %2009 = vmatmul.bf16.gmra.mxu0 %v1484
      %v2010 = vpop.f32.mrf.mxu0
      %v2011 = vadd.f32 %v1922, %v2010
      %v2012 = vpop.f32.mrf.mxu0
      %v2013 = vadd.f32 %v1924, %v2012
      %2014 = vmatmul.bf16.gmra.mxu0 %v1486
      %v2015 = vpop.f32.mrf.mxu0
      %v2016 = vadd.f32 %v1927, %v2015
      %v2017 = vpop.f32.mrf.mxu0
      %v2018 = vadd.f32 %v1929, %v2017
      %2019 = vmatmul.bf16.gmra.mxu0 %v1488
      %v2020 = vpop.f32.mrf.mxu0
      %v2021 = vadd.f32 %v1932, %v2020
      %v2022 = vpop.f32.mrf.mxu0
      %v2023 = vadd.f32 %v1934, %v2022
      %2024 = vmatmul.bf16.gmra.mxu0 %v1490
      %v2025 = vpop.f32.mrf.mxu0
      %v2026 = vadd.f32 %v1937, %v2025
      %v2027 = vpop.f32.mrf.mxu0
      %v2028 = vadd.f32 %v1939, %v2027
      %2029 = vmatmul.bf16.gmra.mxu0 %v1492
      %v2030 = vpop.f32.mrf.mxu0
      %v2031 = vadd.f32 %v1942, %v2030
      %v2032 = vpop.f32.mrf.mxu0
      %v2033 = vadd.f32 %v1944, %v2032
      %2034 = vmatmul.bf16.gmra.mxu0 %v1494
      %v2035 = vpop.f32.mrf.mxu0
      %v2036 = vadd.f32 %v1947, %v2035
      %v2037 = vpop.f32.mrf.mxu0
      %v2038 = vadd.f32 %v1949, %v2037
      %2039 = vmatmul.bf16.gmra.mxu0 %v1496
      %v2040 = vpop.f32.mrf.mxu0
      %v2041 = vadd.f32 %v1952, %v2040
      %v2042 = vpop.f32.mrf.mxu0
      %v2043 = vadd.f32 %v1954, %v2042
      %2044 = vmatmul.bf16.gmra.mxu0 %v1498
      %v2045 = vpop.f32.mrf.mxu0
      %v2046 = vadd.f32 %v1957, %v2045
      %v2047 = vpop.f32.mrf.mxu0
      %v2048 = vadd.f32 %v1959, %v2047
      %2049 = vmatmul.bf16.gmra.mxu0 %v1500
      %v2050 = vpop.f32.mrf.mxu0
      %v2051 = vadd.f32 %v1962, %v2050
      %v2052 = vpop.f32.mrf.mxu0
      %v2053 = vadd.f32 %v1964, %v2052
      %2054 = vdwg.mxu0
      %v2055 = vpack.c.bf16 %v1976, %v1798
      %v2056 = vpack.c.bf16 %v1978, %v1800
      %v2057 = vpack.c.bf16 %v1981, %v1803
      %v2058 = vpack.c.bf16 %v1983, %v1805
      %v2059 = vpack.c.bf16 %v1986, %v1808
      %v2060 = vpack.c.bf16 %v1988, %v1810
      %v2061 = vpack.c.bf16 %v1991, %v1813
      %v2062 = vpack.c.bf16 %v1993, %v1815
      %v2063 = vpack.c.bf16 %v1996, %v1818
      %v2064 = vpack.c.bf16 %v1998, %v1820
      %v2065 = vpack.c.bf16 %v2001, %v1823
      %v2066 = vpack.c.bf16 %v2003, %v1825
      %v2067 = vpack.c.bf16 %v2006, %v1828
      %v2068 = vpack.c.bf16 %v2008, %v1830
      %v2069 = vpack.c.bf16 %v2011, %v1833
      %v2070 = vpack.c.bf16 %v2013, %v1835
      %v2071 = vpack.c.bf16 %v2016, %v1838
      %v2072 = vpack.c.bf16 %v2018, %v1840
      %v2073 = vpack.c.bf16 %v2021, %v1843
      %v2074 = vpack.c.bf16 %v2023, %v1845
      %v2075 = vpack.c.bf16 %v2026, %v1848
      %v2076 = vpack.c.bf16 %v2028, %v1850
      %v2077 = vpack.c.bf16 %v2031, %v1853
      %v2078 = vpack.c.bf16 %v2033, %v1855
      %v2079 = vpack.c.bf16 %v2036, %v1858
      %v2080 = vpack.c.bf16 %v2038, %v1860
      %v2081 = vpack.c.bf16 %v2041, %v1863
      %v2082 = vpack.c.bf16 %v2043, %v1865
      %v2083 = vpack.c.bf16 %v2046, %v1868
      %v2084 = vpack.c.bf16 %v2048, %v1870
      %v2085 = vpack.c.bf16 %v2051, %v1873
      %v2086 = vpack.c.bf16 %v2053, %v1875
      %v2087 = vunpack.c.l.bf16 %v2055
      %v2088 = vunpack.c.h.bf16 %v2055
      %v2089 = vunpack.c.l.bf16 %v2056
      %v2090 = vunpack.c.h.bf16 %v2056
      %v2091 = vunpack.c.l.bf16 %v2057
      %v2092 = vunpack.c.h.bf16 %v2057
      %v2093 = vunpack.c.l.bf16 %v2058
      %v2094 = vunpack.c.h.bf16 %v2058
      %v2095 = vunpack.c.l.bf16 %v2059
      %v2096 = vunpack.c.h.bf16 %v2059
      %v2097 = vunpack.c.l.bf16 %v2060
      %v2098 = vunpack.c.h.bf16 %v2060
      %v2099 = vunpack.c.l.bf16 %v2061
      %v2100 = vunpack.c.h.bf16 %v2061
      %v2101 = vunpack.c.l.bf16 %v2062
      %v2102 = vunpack.c.h.bf16 %v2062
      %v2103 = vunpack.c.l.bf16 %v2063
      %v2104 = vunpack.c.h.bf16 %v2063
      %v2105 = vunpack.c.l.bf16 %v2064
      %v2106 = vunpack.c.h.bf16 %v2064
      %v2107 = vunpack.c.l.bf16 %v2065
      %v2108 = vunpack.c.h.bf16 %v2065
      %v2109 = vunpack.c.l.bf16 %v2066
      %v2110 = vunpack.c.h.bf16 %v2066
      %v2111 = vunpack.c.l.bf16 %v2067
      %v2112 = vunpack.c.h.bf16 %v2067
      %v2113 = vunpack.c.l.bf16 %v2068
      %v2114 = vunpack.c.h.bf16 %v2068
      %v2115 = vunpack.c.l.bf16 %v2069
      %v2116 = vunpack.c.h.bf16 %v2069
      %v2117 = vunpack.c.l.bf16 %v2070
      %v2118 = vunpack.c.h.bf16 %v2070
      %v2119 = vunpack.c.l.bf16 %v2071
      %v2120 = vunpack.c.h.bf16 %v2071
      %v2121 = vunpack.c.l.bf16 %v2072
      %v2122 = vunpack.c.h.bf16 %v2072
      %v2123 = vunpack.c.l.bf16 %v2073
      %v2124 = vunpack.c.h.bf16 %v2073
      %v2125 = vunpack.c.l.bf16 %v2074
      %v2126 = vunpack.c.h.bf16 %v2074
      %v2127 = vunpack.c.l.bf16 %v2075
      %v2128 = vunpack.c.h.bf16 %v2075
      %v2129 = vunpack.c.l.bf16 %v2076
      %v2130 = vunpack.c.h.bf16 %v2076
      %v2131 = vunpack.c.l.bf16 %v2077
      %v2132 = vunpack.c.h.bf16 %v2077
      %v2133 = vunpack.c.l.bf16 %v2078
      %v2134 = vunpack.c.h.bf16 %v2078
      %v2135 = vunpack.c.l.bf16 %v2079
      %v2136 = vunpack.c.h.bf16 %v2079
      %v2137 = vunpack.c.l.bf16 %v2080
      %v2138 = vunpack.c.h.bf16 %v2080
      %v2139 = vunpack.c.l.bf16 %v2081
      %v2140 = vunpack.c.h.bf16 %v2081
      %v2141 = vunpack.c.l.bf16 %v2082
      %v2142 = vunpack.c.h.bf16 %v2082
      %v2143 = vunpack.c.l.bf16 %v2083
      %v2144 = vunpack.c.h.bf16 %v2083
      %v2145 = vunpack.c.l.bf16 %v2084
      %v2146 = vunpack.c.h.bf16 %v2084
      %v2147 = vunpack.c.l.bf16 %v2085
      %v2148 = vunpack.c.h.bf16 %v2085
      %v2149 = vunpack.c.l.bf16 %v2086
      %v2150 = vunpack.c.h.bf16 %v2086
      %v2151 = vmax.f32 %v2087, 0.0
      %v2152 = vmax.f32 %v2088, 0.0
      %v2153 = vmax.f32 %v2089, 0.0
      %v2154 = vmax.f32 %v2090, 0.0
      %v2155 = vmax.f32 %v2091, 0.0
      %v2156 = vmax.f32 %v2092, 0.0
      %v2157 = vmax.f32 %v2093, 0.0
      %v2158 = vmax.f32 %v2094, 0.0
      %v2159 = vmax.f32 %v2095, 0.0
      %v2160 = vmax.f32 %v2096, 0.0
      %v2161 = vmax.f32 %v2097, 0.0
      %v2162 = vmax.f32 %v2098, 0.0
      %v2163 = vmax.f32 %v2099, 0.0
      %v2164 = vmax.f32 %v2100, 0.0
      %v2165 = vmax.f32 %v2101, 0.0
      %v2166 = vmax.f32 %v2102, 0.0
      %v2167 = vmax.f32 %v2103, 0.0
      %v2168 = vmax.f32 %v2104, 0.0
      %v2169 = vmax.f32 %v2105, 0.0
      %v2170 = vmax.f32 %v2106, 0.0
      %v2171 = vmax.f32 %v2107, 0.0
      %v2172 = vmax.f32 %v2108, 0.0
      %v2173 = vmax.f32 %v2109, 0.0
      %v2174 = vmax.f32 %v2110, 0.0
      %v2175 = vmax.f32 %v2111, 0.0
      %v2176 = vmax.f32 %v2112, 0.0
      %v2177 = vmax.f32 %v2113, 0.0
      %v2178 = vmax.f32 %v2114, 0.0
      %v2179 = vmax.f32 %v2115, 0.0
      %v2180 = vmax.f32 %v2116, 0.0
      %v2181 = vmax.f32 %v2117, 0.0
      %v2182 = vmax.f32 %v2118, 0.0
      %v2183 = vmax.f32 %v2119, 0.0
      %v2184 = vmax.f32 %v2120, 0.0
      %v2185 = vmax.f32 %v2121, 0.0
      %v2186 = vmax.f32 %v2122, 0.0
      %v2187 = vmax.f32 %v2123, 0.0
      %v2188 = vmax.f32 %v2124, 0.0
      %v2189 = vmax.f32 %v2125, 0.0
      %v2190 = vmax.f32 %v2126, 0.0
      %v2191 = vmax.f32 %v2127, 0.0
      %v2192 = vmax.f32 %v2128, 0.0
      %v2193 = vmax.f32 %v2129, 0.0
      %v2194 = vmax.f32 %v2130, 0.0
      %v2195 = vmax.f32 %v2131, 0.0
      %v2196 = vmax.f32 %v2132, 0.0
      %v2197 = vmax.f32 %v2133, 0.0
      %v2198 = vmax.f32 %v2134, 0.0
      %v2199 = vmax.f32 %v2135, 0.0
      %v2200 = vmax.f32 %v2136, 0.0
      %v2201 = vmax.f32 %v2137, 0.0
      %v2202 = vmax.f32 %v2138, 0.0
      %v2203 = vmax.f32 %v2139, 0.0
      %v2204 = vmax.f32 %v2140, 0.0
      %v2205 = vmax.f32 %v2141, 0.0
      %v2206 = vmax.f32 %v2142, 0.0
      %v2207 = vmax.f32 %v2143, 0.0
      %v2208 = vmax.f32 %v2144, 0.0
      %v2209 = vmax.f32 %v2145, 0.0
      %v2210 = vmax.f32 %v2146, 0.0
      %v2211 = vmax.f32 %v2147, 0.0
      %v2212 = vmax.f32 %v2148, 0.0
      %v2213 = vmax.f32 %v2149, 0.0
      %v2214 = vmax.f32 %v2150, 0.0
      %v2215 = vpack.c.bf16 %v2153, %v2151
      %v2216 = vpack.c.bf16 %v2154, %v2152
      %v2217 = vpack.c.bf16 %v2157, %v2155
      %v2218 = vpack.c.bf16 %v2158, %v2156
      %v2219 = vpack.c.bf16 %v2161, %v2159
      %v2220 = vpack.c.bf16 %v2162, %v2160
      %v2221 = vpack.c.bf16 %v2165, %v2163
      %v2222 = vpack.c.bf16 %v2166, %v2164
      %v2223 = vpack.c.bf16 %v2169, %v2167
      %v2224 = vpack.c.bf16 %v2170, %v2168
      %v2225 = vpack.c.bf16 %v2173, %v2171
      %v2226 = vpack.c.bf16 %v2174, %v2172
      %v2227 = vpack.c.bf16 %v2177, %v2175
      %v2228 = vpack.c.bf16 %v2178, %v2176
      %v2229 = vpack.c.bf16 %v2181, %v2179
      %v2230 = vpack.c.bf16 %v2182, %v2180
      %v2231 = vpack.c.bf16 %v2185, %v2183
      %v2232 = vpack.c.bf16 %v2186, %v2184
      %v2233 = vpack.c.bf16 %v2189, %v2187
      %v2234 = vpack.c.bf16 %v2190, %v2188
      %v2235 = vpack.c.bf16 %v2193, %v2191
      %v2236 = vpack.c.bf16 %v2194, %v2192
      %v2237 = vpack.c.bf16 %v2197, %v2195
      %v2238 = vpack.c.bf16 %v2198, %v2196
      %v2239 = vpack.c.bf16 %v2201, %v2199
      %v2240 = vpack.c.bf16 %v2202, %v2200
      %v2241 = vpack.c.bf16 %v2205, %v2203
      %v2242 = vpack.c.bf16 %v2206, %v2204
      %v2243 = vpack.c.bf16 %v2209, %v2207
      %v2244 = vpack.c.bf16 %v2210, %v2208
      %v2245 = vpack.c.bf16 %v2213, %v2211
      %v2246 = vpack.c.bf16 %v2214, %v2212
      %v2247 = vld [vmem:[%s5] sm:$0xff]
      %v2248 = vld [vmem:[%s5 + $0x8] sm:$0xff]
      %v2249 = vld [vmem:[%s5 + $0x10] sm:$0xff]
      %v2250 = vld [vmem:[%s5 + $0x18] sm:$0xff]
      %v2251 = vld [vmem:[%s5 + $0x20] sm:$0xff]
      %v2252 = vld [vmem:[%s5 + $0x28] sm:$0xff]
      %v2253 = vld [vmem:[%s5 + $0x30] sm:$0xff]
      %v2254 = vld [vmem:[%s5 + $0x38] sm:$0xff]
      %v2255 = vld [vmem:[%s5 + $0x40] sm:$0xff]
      %v2256 = vld [vmem:[%s5 + $0x48] sm:$0xff]
      %v2257 = vld [vmem:[%s5 + $0x50] sm:$0xff]
      %v2258 = vld [vmem:[%s5 + $0x58] sm:$0xff]
      %v2259 = vld [vmem:[%s5 + $0x60] sm:$0xff]
      %v2260 = vld [vmem:[%s5 + $0x68] sm:$0xff]
      %v2261 = vld [vmem:[%s5 + $0x70] sm:$0xff]
      %v2262 = vld [vmem:[%s5 + $0x78] sm:$0xff]
      %v2263 = vld [vmem:[%s5 + $0x80] sm:$0xff]
      %v2264 = vld [vmem:[%s5 + $0x88] sm:$0xff]
      %v2265 = vld [vmem:[%s5 + $0x90] sm:$0xff]
      %v2266 = vld [vmem:[%s5 + $0x98] sm:$0xff]
      %v2267 = vld [vmem:[%s5 + $0xa0] sm:$0xff]
      %v2268 = vld [vmem:[%s5 + $0xa8] sm:$0xff]
      %v2269 = vld [vmem:[%s5 + $0xb0] sm:$0xff]
      %v2270 = vld [vmem:[%s5 + $0xb8] sm:$0xff]
      %v2271 = vld [vmem:[%s5 + $0xc0] sm:$0xff]
      %v2272 = vld [vmem:[%s5 + $0xc8] sm:$0xff]
      %v2273 = vld [vmem:[%s5 + $0xd0] sm:$0xff]
      %v2274 = vld [vmem:[%s5 + $0xd8] sm:$0xff]
      %v2275 = vld [vmem:[%s5 + $0xe0] sm:$0xff]
      %v2276 = vld [vmem:[%s5 + $0xe8] sm:$0xff]
      %v2277 = vld [vmem:[%s5 + $0xf0] sm:$0xff]
      %v2278 = vld [vmem:[%s5 + $0xf8] sm:$0xff]
      %v2279 = vld [vmem:[%s6] sm:$0x3]
      %v2281 = vperm.slane %v2279, 0
      %v2282 = vperm.slane %v2279, 1
      %v2317 = vunpack.c.l.b16 %v2247
      %v2318 = vunpack.c.h.b16 %v2247
      %v2319 = vunpack.c.l.b16 %v2248
      %v2320 = vunpack.c.h.b16 %v2248
      %v2321 = vunpack.c.l.b16 %v2249
      %v2322 = vunpack.c.h.b16 %v2249
      %v2323 = vunpack.c.l.b16 %v2250
      %v2324 = vunpack.c.h.b16 %v2250
      %v2325 = vunpack.c.l.b16 %v2251
      %v2326 = vunpack.c.h.b16 %v2251
      %v2327 = vunpack.c.l.b16 %v2252
      %v2328 = vunpack.c.h.b16 %v2252
      %v2329 = vunpack.c.l.b16 %v2253
      %v2330 = vunpack.c.h.b16 %v2253
      %v2331 = vunpack.c.l.b16 %v2254
      %v2332 = vunpack.c.h.b16 %v2254
      %v2333 = vunpack.c.l.b16 %v2255
      %v2334 = vunpack.c.h.b16 %v2255
      %v2335 = vunpack.c.l.b16 %v2256
      %v2336 = vunpack.c.h.b16 %v2256
      %v2337 = vunpack.c.l.b16 %v2257
      %v2338 = vunpack.c.h.b16 %v2257
      %v2339 = vunpack.c.l.b16 %v2258
      %v2340 = vunpack.c.h.b16 %v2258
      %v2341 = vunpack.c.l.b16 %v2259
      %v2342 = vunpack.c.h.b16 %v2259
      %v2343 = vunpack.c.l.b16 %v2260
      %v2344 = vunpack.c.h.b16 %v2260
      %v2345 = vunpack.c.l.b16 %v2261
      %v2346 = vunpack.c.h.b16 %v2261
      %v2347 = vunpack.c.l.b16 %v2262
      %v2348 = vunpack.c.h.b16 %v2262
      %v2349 = vunpack.c.l.b16 %v2263
      %v2350 = vunpack.c.h.b16 %v2263
      %v2351 = vunpack.c.l.b16 %v2264
      %v2352 = vunpack.c.h.b16 %v2264
      %v2353 = vunpack.c.l.b16 %v2265
      %v2354 = vunpack.c.h.b16 %v2265
      %v2355 = vunpack.c.l.b16 %v2266
      %v2356 = vunpack.c.h.b16 %v2266
      %v2357 = vunpack.c.l.b16 %v2267
      %v2358 = vunpack.c.h.b16 %v2267
      %v2359 = vunpack.c.l.b16 %v2268
      %v2360 = vunpack.c.h.b16 %v2268
      %v2361 = vunpack.c.l.b16 %v2269
      %v2362 = vunpack.c.h.b16 %v2269
      %v2363 = vunpack.c.l.b16 %v2270
      %v2364 = vunpack.c.h.b16 %v2270
      %v2365 = vunpack.c.l.b16 %v2271
      %v2366 = vunpack.c.h.b16 %v2271
      %v2367 = vunpack.c.l.b16 %v2272
      %v2368 = vunpack.c.h.b16 %v2272
      %v2369 = vunpack.c.l.b16 %v2273
      %v2370 = vunpack.c.h.b16 %v2273
      %v2371 = vunpack.c.l.b16 %v2274
      %v2372 = vunpack.c.h.b16 %v2274
      %v2373 = vunpack.c.l.b16 %v2275
      %v2374 = vunpack.c.h.b16 %v2275
      %v2375 = vunpack.c.l.b16 %v2276
      %v2376 = vunpack.c.h.b16 %v2276
      %v2377 = vunpack.c.l.b16 %v2277
      %v2378 = vunpack.c.h.b16 %v2277
      %v2379 = vunpack.c.l.b16 %v2278
      %v2380 = vunpack.c.h.b16 %v2278
      %v2381 = vpack.c.b16 %v2319, %v2317
      %v2382 = vpack.c.b16 %v2320, %v2318
      %v2383 = vpack.c.b16 %v2323, %v2321
      %v2384 = vpack.c.b16 %v2324, %v2322
      %v2385 = vpack.c.b16 %v2327, %v2325
      %v2386 = vpack.c.b16 %v2328, %v2326
      %v2387 = vpack.c.b16 %v2331, %v2329
      %v2388 = vpack.c.b16 %v2332, %v2330
      %v2389 = vpack.c.b16 %v2335, %v2333
      %v2390 = vpack.c.b16 %v2336, %v2334
      %v2391 = vpack.c.b16 %v2339, %v2337
      %v2392 = vpack.c.b16 %v2340, %v2338
      %v2393 = vpack.c.b16 %v2343, %v2341
      %v2394 = vpack.c.b16 %v2344, %v2342
      %v2395 = vpack.c.b16 %v2347, %v2345
      %v2396 = vpack.c.b16 %v2348, %v2346
      %v2397 = vpack.c.b16 %v2351, %v2349
      %v2398 = vpack.c.b16 %v2352, %v2350
      %v2399 = vpack.c.b16 %v2355, %v2353
      %v2400 = vpack.c.b16 %v2356, %v2354
      %v2401 = vpack.c.b16 %v2359, %v2357
      %v2402 = vpack.c.b16 %v2360, %v2358
      %v2403 = vpack.c.b16 %v2363, %v2361
      %v2404 = vpack.c.b16 %v2364, %v2362
      %v2405 = vpack.c.b16 %v2367, %v2365
      %v2406 = vpack.c.b16 %v2368, %v2366
      %v2407 = vpack.c.b16 %v2371, %v2369
      %v2408 = vpack.c.b16 %v2372, %v2370
      %v2409 = vpack.c.b16 %v2375, %v2373
      %v2410 = vpack.c.b16 %v2376, %v2374
      %v2411 = vpack.c.b16 %v2379, %v2377
      %v2412 = vpack.c.b16 %v2380, %v2378
      %2445 = vmatpush.bf16.msra.mxu0 %v2395
      %2446 = vmatpush.bf16.msra.mxu0 %v2393
      %2447 = vmatpush.bf16.msra.mxu0 %v2391
      %2448 = vmatpush.bf16.msra.mxu0 %v2389
      %2449 = vmatpush.bf16.msra.mxu0 %v2387
      %2450 = vmatpush.bf16.msra.mxu0 %v2385
      %2451 = vmatpush.bf16.msra.mxu0 %v2383
      %2452 = vmatpush.bf16.msra.mxu0 %v2381
      %2453 = vmatmul.bf16.gmra.mxu0 %v2215
      %v2454 = vpop.f32.mrf.mxu0
      %v2455 = vadd.f32 %v2281, %v2454
      %v2456 = vpop.f32.mrf.mxu0
      %v2457 = vadd.f32 %v2281, %v2456
      %2458 = vmatmul.bf16.gmra.mxu0 %v2217
      %v2459 = vpop.f32.mrf.mxu0
      %v2460 = vadd.f32 %v2281, %v2459
      %v2461 = vpop.f32.mrf.mxu0
      %v2462 = vadd.f32 %v2281, %v2461
      %2463 = vmatmul.bf16.gmra.mxu0 %v2219
      %v2464 = vpop.f32.mrf.mxu0
      %v2465 = vadd.f32 %v2281, %v2464
      %v2466 = vpop.f32.mrf.mxu0
      %v2467 = vadd.f32 %v2281, %v2466
      %2468 = vmatmul.bf16.gmra.mxu0 %v2221
      %v2469 = vpop.f32.mrf.mxu0
      %v2470 = vadd.f32 %v2281, %v2469
      %v2471 = vpop.f32.mrf.mxu0
      %v2472 = vadd.f32 %v2281, %v2471
      %2473 = vmatmul.bf16.gmra.mxu0 %v2223
      %v2474 = vpop.f32.mrf.mxu0
      %v2475 = vadd.f32 %v2281, %v2474
      %v2476 = vpop.f32.mrf.mxu0
      %v2477 = vadd.f32 %v2281, %v2476
      %2478 = vmatmul.bf16.gmra.mxu0 %v2225
      %v2479 = vpop.f32.mrf.mxu0
      %v2480 = vadd.f32 %v2281, %v2479
      %v2481 = vpop.f32.mrf.mxu0
      %v2482 = vadd.f32 %v2281, %v2481
      %2483 = vmatmul.bf16.gmra.mxu0 %v2227
      %v2484 = vpop.f32.mrf.mxu0
      %v2485 = vadd.f32 %v2281, %v2484
      %v2486 = vpop.f32.mrf.mxu0
      %v2487 = vadd.f32 %v2281, %v2486
      %2488 = vmatmul.bf16.gmra.mxu0 %v2229
      %v2489 = vpop.f32.mrf.mxu0
      %v2490 = vadd.f32 %v2281, %v2489
      %v2491 = vpop.f32.mrf.mxu0
      %v2492 = vadd.f32 %v2281, %v2491
      %2493 = vmatmul.bf16.gmra.mxu0 %v2231
      %v2494 = vpop.f32.mrf.mxu0
      %v2495 = vadd.f32 %v2281, %v2494
      %v2496 = vpop.f32.mrf.mxu0
      %v2497 = vadd.f32 %v2281, %v2496
      %2498 = vmatmul.bf16.gmra.mxu0 %v2233
      %v2499 = vpop.f32.mrf.mxu0
      %v2500 = vadd.f32 %v2281, %v2499
      %v2501 = vpop.f32.mrf.mxu0
      %v2502 = vadd.f32 %v2281, %v2501
      %2503 = vmatmul.bf16.gmra.mxu0 %v2235
      %v2504 = vpop.f32.mrf.mxu0
      %v2505 = vadd.f32 %v2281, %v2504
      %v2506 = vpop.f32.mrf.mxu0
      %v2507 = vadd.f32 %v2281, %v2506
      %2508 = vmatmul.bf16.gmra.mxu0 %v2237
      %v2509 = vpop.f32.mrf.mxu0
      %v2510 = vadd.f32 %v2281, %v2509
      %v2511 = vpop.f32.mrf.mxu0
      %v2512 = vadd.f32 %v2281, %v2511
      %2513 = vmatmul.bf16.gmra.mxu0 %v2239
      %v2514 = vpop.f32.mrf.mxu0
      %v2515 = vadd.f32 %v2281, %v2514
      %v2516 = vpop.f32.mrf.mxu0
      %v2517 = vadd.f32 %v2281, %v2516
      %2518 = vmatmul.bf16.gmra.mxu0 %v2241
      %v2519 = vpop.f32.mrf.mxu0
      %v2520 = vadd.f32 %v2281, %v2519
      %v2521 = vpop.f32.mrf.mxu0
      %v2522 = vadd.f32 %v2281, %v2521
      %2523 = vmatmul.bf16.gmra.mxu0 %v2243
      %v2524 = vpop.f32.mrf.mxu0
      %v2525 = vadd.f32 %v2281, %v2524
      %v2526 = vpop.f32.mrf.mxu0
      %v2527 = vadd.f32 %v2281, %v2526
      %2528 = vmatmul.bf16.gmra.mxu0 %v2245
      %v2529 = vpop.f32.mrf.mxu0
      %v2530 = vadd.f32 %v2281, %v2529
      %v2531 = vpop.f32.mrf.mxu0
      %v2532 = vadd.f32 %v2281, %v2531
      %2533 = vdwg.mxu0
      %2534 = vmatpush.bf16.msra.mxu0 %v2411
      %2535 = vmatpush.bf16.msra.mxu0 %v2409
      %2536 = vmatpush.bf16.msra.mxu0 %v2407
      %2537 = vmatpush.bf16.msra.mxu0 %v2405
      %2538 = vmatpush.bf16.msra.mxu0 %v2403
      %2539 = vmatpush.bf16.msra.mxu0 %v2401
      %2540 = vmatpush.bf16.msra.mxu0 %v2399
      %2541 = vmatpush.bf16.msra.mxu0 %v2397
      %2542 = vmatmul.bf16.gmra.mxu0 %v2216
      %v2543 = vpop.f32.mrf.mxu0
      %v2544 = vadd.f32 %v2455, %v2543
      %v2545 = vpop.f32.mrf.mxu0
      %v2546 = vadd.f32 %v2457, %v2545
      %2547 = vmatmul.bf16.gmra.mxu0 %v2218
      %v2548 = vpop.f32.mrf.mxu0
      %v2549 = vadd.f32 %v2460, %v2548
      %v2550 = vpop.f32.mrf.mxu0
      %v2551 = vadd.f32 %v2462, %v2550
      %2552 = vmatmul.bf16.gmra.mxu0 %v2220
      %v2553 = vpop.f32.mrf.mxu0
      %v2554 = vadd.f32 %v2465, %v2553
      %v2555 = vpop.f32.mrf.mxu0
      %v2556 = vadd.f32 %v2467, %v2555
      %2557 = vmatmul.bf16.gmra.mxu0 %v2222
      %v2558 = vpop.f32.mrf.mxu0
      %v2559 = vadd.f32 %v2470, %v2558
      %v2560 = vpop.f32.mrf.mxu0
      %v2561 = vadd.f32 %v2472, %v2560
      %2562 = vmatmul.bf16.gmra.mxu0 %v2224
      %v2563 = vpop.f32.mrf.mxu0
      %v2564 = vadd.f32 %v2475, %v2563
      %v2565 = vpop.f32.mrf.mxu0
      %v2566 = vadd.f32 %v2477, %v2565
      %2567 = vmatmul.bf16.gmra.mxu0 %v2226
      %v2568 = vpop.f32.mrf.mxu0
      %v2569 = vadd.f32 %v2480, %v2568
      %v2570 = vpop.f32.mrf.mxu0
      %v2571 = vadd.f32 %v2482, %v2570
      %2572 = vmatmul.bf16.gmra.mxu0 %v2228
      %v2573 = vpop.f32.mrf.mxu0
      %v2574 = vadd.f32 %v2485, %v2573
      %v2575 = vpop.f32.mrf.mxu0
      %v2576 = vadd.f32 %v2487, %v2575
      %2577 = vmatmul.bf16.gmra.mxu0 %v2230
      %v2578 = vpop.f32.mrf.mxu0
      %v2579 = vadd.f32 %v2490, %v2578
      %v2580 = vpop.f32.mrf.mxu0
      %v2581 = vadd.f32 %v2492, %v2580
      %2582 = vmatmul.bf16.gmra.mxu0 %v2232
      %v2583 = vpop.f32.mrf.mxu0
      %v2584 = vadd.f32 %v2495, %v2583
      %v2585 = vpop.f32.mrf.mxu0
      %v2586 = vadd.f32 %v2497, %v2585
      %2587 = vmatmul.bf16.gmra.mxu0 %v2234
      %v2588 = vpop.f32.mrf.mxu0
      %v2589 = vadd.f32 %v2500, %v2588
      %v2590 = vpop.f32.mrf.mxu0
      %v2591 = vadd.f32 %v2502, %v2590
      %2592 = vmatmul.bf16.gmra.mxu0 %v2236
      %v2593 = vpop.f32.mrf.mxu0
      %v2594 = vadd.f32 %v2505, %v2593
      %v2595 = vpop.f32.mrf.mxu0
      %v2596 = vadd.f32 %v2507, %v2595
      %2597 = vmatmul.bf16.gmra.mxu0 %v2238
      %v2598 = vpop.f32.mrf.mxu0
      %v2599 = vadd.f32 %v2510, %v2598
      %v2600 = vpop.f32.mrf.mxu0
      %v2601 = vadd.f32 %v2512, %v2600
      %2602 = vmatmul.bf16.gmra.mxu0 %v2240
      %v2603 = vpop.f32.mrf.mxu0
      %v2604 = vadd.f32 %v2515, %v2603
      %v2605 = vpop.f32.mrf.mxu0
      %v2606 = vadd.f32 %v2517, %v2605
      %2607 = vmatmul.bf16.gmra.mxu0 %v2242
      %v2608 = vpop.f32.mrf.mxu0
      %v2609 = vadd.f32 %v2520, %v2608
      %v2610 = vpop.f32.mrf.mxu0
      %v2611 = vadd.f32 %v2522, %v2610
      %2612 = vmatmul.bf16.gmra.mxu0 %v2244
      %v2613 = vpop.f32.mrf.mxu0
      %v2614 = vadd.f32 %v2525, %v2613
      %v2615 = vpop.f32.mrf.mxu0
      %v2616 = vadd.f32 %v2527, %v2615
      %2617 = vmatmul.bf16.gmra.mxu0 %v2246
      %v2618 = vpop.f32.mrf.mxu0
      %v2619 = vadd.f32 %v2530, %v2618
      %v2620 = vpop.f32.mrf.mxu0
      %v2621 = vadd.f32 %v2532, %v2620
      %2622 = vdwg.mxu0
      %2623 = vmatpush.bf16.msra.mxu0 %v2396
      %2624 = vmatpush.bf16.msra.mxu0 %v2394
      %2625 = vmatpush.bf16.msra.mxu0 %v2392
      %2626 = vmatpush.bf16.msra.mxu0 %v2390
      %2627 = vmatpush.bf16.msra.mxu0 %v2388
      %2628 = vmatpush.bf16.msra.mxu0 %v2386
      %2629 = vmatpush.bf16.msra.mxu0 %v2384
      %2630 = vmatpush.bf16.msra.mxu0 %v2382
      %2631 = vmatmul.bf16.gmra.mxu0 %v2215
      %v2632 = vpop.f32.mrf.mxu0
      %v2633 = vadd.f32 %v2282, %v2632
      %v2634 = vpop.f32.mrf.mxu0
      %v2635 = vadd.f32 %v2282, %v2634
      %2636 = vmatmul.bf16.gmra.mxu0 %v2217
      %v2637 = vpop.f32.mrf.mxu0
      %v2638 = vadd.f32 %v2282, %v2637
      %v2639 = vpop.f32.mrf.mxu0
      %v2640 = vadd.f32 %v2282, %v2639
      %2641 = vmatmul.bf16.gmra.mxu0 %v2219
      %v2642 = vpop.f32.mrf.mxu0
      %v2643 = vadd.f32 %v2282, %v2642
      %v2644 = vpop.f32.mrf.mxu0
      %v2645 = vadd.f32 %v2282, %v2644
      %2646 = vmatmul.bf16.gmra.mxu0 %v2221
      %v2647 = vpop.f32.mrf.mxu0
      %v2648 = vadd.f32 %v2282, %v2647
      %v2649 = vpop.f32.mrf.mxu0
      %v2650 = vadd.f32 %v2282, %v2649
      %2651 = vmatmul.bf16.gmra.mxu0 %v2223
      %v2652 = vpop.f32.mrf.mxu0
      %v2653 = vadd.f32 %v2282, %v2652
      %v2654 = vpop.f32.mrf.mxu0
      %v2655 = vadd.f32 %v2282, %v2654
      %2656 = vmatmul.bf16.gmra.mxu0 %v2225
      %v2657 = vpop.f32.mrf.mxu0
      %v2658 = vadd.f32 %v2282, %v2657
      %v2659 = vpop.f32.mrf.mxu0
      %v2660 = vadd.f32 %v2282, %v2659
      %2661 = vmatmul.bf16.gmra.mxu0 %v2227
      %v2662 = vpop.f32.mrf.mxu0
      %v2663 = vadd.f32 %v2282, %v2662
      %v2664 = vpop.f32.mrf.mxu0
      %v2665 = vadd.f32 %v2282, %v2664
      %2666 = vmatmul.bf16.gmra.mxu0 %v2229
      %v2667 = vpop.f32.mrf.mxu0
      %v2668 = vadd.f32 %v2282, %v2667
      %v2669 = vpop.f32.mrf.mxu0
      %v2670 = vadd.f32 %v2282, %v2669
      %2671 = vmatmul.bf16.gmra.mxu0 %v2231
      %v2672 = vpop.f32.mrf.mxu0
      %v2673 = vadd.f32 %v2282, %v2672
      %v2674 = vpop.f32.mrf.mxu0
      %v2675 = vadd.f32 %v2282, %v2674
      %2676 = vmatmul.bf16.gmra.mxu0 %v2233
      %v2677 = vpop.f32.mrf.mxu0
      %v2678 = vadd.f32 %v2282, %v2677
      %v2679 = vpop.f32.mrf.mxu0
      %v2680 = vadd.f32 %v2282, %v2679
      %2681 = vmatmul.bf16.gmra.mxu0 %v2235
      %v2682 = vpop.f32.mrf.mxu0
      %v2683 = vadd.f32 %v2282, %v2682
      %v2684 = vpop.f32.mrf.mxu0
      %v2685 = vadd.f32 %v2282, %v2684
      %2686 = vmatmul.bf16.gmra.mxu0 %v2237
      %v2687 = vpop.f32.mrf.mxu0
      %v2688 = vadd.f32 %v2282, %v2687
      %v2689 = vpop.f32.mrf.mxu0
      %v2690 = vadd.f32 %v2282, %v2689
      %2691 = vmatmul.bf16.gmra.mxu0 %v2239
      %v2692 = vpop.f32.mrf.mxu0
      %v2693 = vadd.f32 %v2282, %v2692
      %v2694 = vpop.f32.mrf.mxu0
      %v2695 = vadd.f32 %v2282, %v2694
      %2696 = vmatmul.bf16.gmra.mxu0 %v2241
      %v2697 = vpop.f32.mrf.mxu0
      %v2698 = vadd.f32 %v2282, %v2697
      %v2699 = vpop.f32.mrf.mxu0
      %v2700 = vadd.f32 %v2282, %v2699
      %2701 = vmatmul.bf16.gmra.mxu0 %v2243
      %v2702 = vpop.f32.mrf.mxu0
      %v2703 = vadd.f32 %v2282, %v2702
      %v2704 = vpop.f32.mrf.mxu0
      %v2705 = vadd.f32 %v2282, %v2704
      %2706 = vmatmul.bf16.gmra.mxu0 %v2245
      %v2707 = vpop.f32.mrf.mxu0
      %v2708 = vadd.f32 %v2282, %v2707
      %v2709 = vpop.f32.mrf.mxu0
      %v2710 = vadd.f32 %v2282, %v2709
      %2711 = vdwg.mxu0
      %2712 = vmatpush.bf16.msra.mxu0 %v2412
      %2713 = vmatpush.bf16.msra.mxu0 %v2410
      %2714 = vmatpush.bf16.msra.mxu0 %v2408
      %2715 = vmatpush.bf16.msra.mxu0 %v2406
      %2716 = vmatpush.bf16.msra.mxu0 %v2404
      %2717 = vmatpush.bf16.msra.mxu0 %v2402
      %2718 = vmatpush.bf16.msra.mxu0 %v2400
      %2719 = vmatpush.bf16.msra.mxu0 %v2398
      %2720 = vmatmul.bf16.gmra.mxu0 %v2216
      %v2721 = vpop.f32.mrf.mxu0
      %v2722 = vadd.f32 %v2633, %v2721
      %v2723 = vpop.f32.mrf.mxu0
      %v2724 = vadd.f32 %v2635, %v2723
      %2725 = vmatmul.bf16.gmra.mxu0 %v2218
      %v2726 = vpop.f32.mrf.mxu0
      %v2727 = vadd.f32 %v2638, %v2726
      %v2728 = vpop.f32.mrf.mxu0
      %v2729 = vadd.f32 %v2640, %v2728
      %2730 = vmatmul.bf16.gmra.mxu0 %v2220
      %v2731 = vpop.f32.mrf.mxu0
      %v2732 = vadd.f32 %v2643, %v2731
      %v2733 = vpop.f32.mrf.mxu0
      %v2734 = vadd.f32 %v2645, %v2733
      %2735 = vmatmul.bf16.gmra.mxu0 %v2222
      %v2736 = vpop.f32.mrf.mxu0
      %v2737 = vadd.f32 %v2648, %v2736
      %v2738 = vpop.f32.mrf.mxu0
      %v2739 = vadd.f32 %v2650, %v2738
      %2740 = vmatmul.bf16.gmra.mxu0 %v2224
      %v2741 = vpop.f32.mrf.mxu0
      %v2742 = vadd.f32 %v2653, %v2741
      %v2743 = vpop.f32.mrf.mxu0
      %v2744 = vadd.f32 %v2655, %v2743
      %2745 = vmatmul.bf16.gmra.mxu0 %v2226
      %v2746 = vpop.f32.mrf.mxu0
      %v2747 = vadd.f32 %v2658, %v2746
      %v2748 = vpop.f32.mrf.mxu0
      %v2749 = vadd.f32 %v2660, %v2748
      %2750 = vmatmul.bf16.gmra.mxu0 %v2228
      %v2751 = vpop.f32.mrf.mxu0
      %v2752 = vadd.f32 %v2663, %v2751
      %v2753 = vpop.f32.mrf.mxu0
      %v2754 = vadd.f32 %v2665, %v2753
      %2755 = vmatmul.bf16.gmra.mxu0 %v2230
      %v2756 = vpop.f32.mrf.mxu0
      %v2757 = vadd.f32 %v2668, %v2756
      %v2758 = vpop.f32.mrf.mxu0
      %v2759 = vadd.f32 %v2670, %v2758
      %2760 = vmatmul.bf16.gmra.mxu0 %v2232
      %v2761 = vpop.f32.mrf.mxu0
      %v2762 = vadd.f32 %v2673, %v2761
      %v2763 = vpop.f32.mrf.mxu0
      %v2764 = vadd.f32 %v2675, %v2763
      %2765 = vmatmul.bf16.gmra.mxu0 %v2234
      %v2766 = vpop.f32.mrf.mxu0
      %v2767 = vadd.f32 %v2678, %v2766
      %v2768 = vpop.f32.mrf.mxu0
      %v2769 = vadd.f32 %v2680, %v2768
      %2770 = vmatmul.bf16.gmra.mxu0 %v2236
      %v2771 = vpop.f32.mrf.mxu0
      %v2772 = vadd.f32 %v2683, %v2771
      %v2773 = vpop.f32.mrf.mxu0
      %v2774 = vadd.f32 %v2685, %v2773
      %2775 = vmatmul.bf16.gmra.mxu0 %v2238
      %v2776 = vpop.f32.mrf.mxu0
      %v2777 = vadd.f32 %v2688, %v2776
      %v2778 = vpop.f32.mrf.mxu0
      %v2779 = vadd.f32 %v2690, %v2778
      %2780 = vmatmul.bf16.gmra.mxu0 %v2240
      %v2781 = vpop.f32.mrf.mxu0
      %v2782 = vadd.f32 %v2693, %v2781
      %v2783 = vpop.f32.mrf.mxu0
      %v2784 = vadd.f32 %v2695, %v2783
      %2785 = vmatmul.bf16.gmra.mxu0 %v2242
      %v2786 = vpop.f32.mrf.mxu0
      %v2787 = vadd.f32 %v2698, %v2786
      %v2788 = vpop.f32.mrf.mxu0
      %v2789 = vadd.f32 %v2700, %v2788
      %2790 = vmatmul.bf16.gmra.mxu0 %v2244
      %v2791 = vpop.f32.mrf.mxu0
      %v2792 = vadd.f32 %v2703, %v2791
      %v2793 = vpop.f32.mrf.mxu0
      %v2794 = vadd.f32 %v2705, %v2793
      %2795 = vmatmul.bf16.gmra.mxu0 %v2246
      %v2796 = vpop.f32.mrf.mxu0
      %v2797 = vadd.f32 %v2708, %v2796
      %v2798 = vpop.f32.mrf.mxu0
      %v2799 = vadd.f32 %v2710, %v2798
      %2800 = vdwg.mxu0
      %v2801 = vpack.c.bf16 %v2722, %v2544
      %v2802 = vpack.c.bf16 %v2724, %v2546
      %v2803 = vpack.c.bf16 %v2727, %v2549
      %v2804 = vpack.c.bf16 %v2729, %v2551
      %v2805 = vpack.c.bf16 %v2732, %v2554
      %v2806 = vpack.c.bf16 %v2734, %v2556
      %v2807 = vpack.c.bf16 %v2737, %v2559
      %v2808 = vpack.c.bf16 %v2739, %v2561
      %v2809 = vpack.c.bf16 %v2742, %v2564
      %v2810 = vpack.c.bf16 %v2744, %v2566
      %v2811 = vpack.c.bf16 %v2747, %v2569
      %v2812 = vpack.c.bf16 %v2749, %v2571
      %v2813 = vpack.c.bf16 %v2752, %v2574
      %v2814 = vpack.c.bf16 %v2754, %v2576
      %v2815 = vpack.c.bf16 %v2757, %v2579
      %v2816 = vpack.c.bf16 %v2759, %v2581
      %v2817 = vpack.c.bf16 %v2762, %v2584
      %v2818 = vpack.c.bf16 %v2764, %v2586
      %v2819 = vpack.c.bf16 %v2767, %v2589
      %v2820 = vpack.c.bf16 %v2769, %v2591
      %v2821 = vpack.c.bf16 %v2772, %v2594
      %v2822 = vpack.c.bf16 %v2774, %v2596
      %v2823 = vpack.c.bf16 %v2777, %v2599
      %v2824 = vpack.c.bf16 %v2779, %v2601
      %v2825 = vpack.c.bf16 %v2782, %v2604
      %v2826 = vpack.c.bf16 %v2784, %v2606
      %v2827 = vpack.c.bf16 %v2787, %v2609
      %v2828 = vpack.c.bf16 %v2789, %v2611
      %v2829 = vpack.c.bf16 %v2792, %v2614
      %v2830 = vpack.c.bf16 %v2794, %v2616
      %v2831 = vpack.c.bf16 %v2797, %v2619
      %v2832 = vpack.c.bf16 %v2799, %v2621
      %v2833 = vunpack.c.l.bf16 %v2801
      %v2834 = vunpack.c.h.bf16 %v2801
      %v2835 = vunpack.c.l.bf16 %v2802
      %v2836 = vunpack.c.h.bf16 %v2802
      %v2837 = vunpack.c.l.bf16 %v2803
      %v2838 = vunpack.c.h.bf16 %v2803
      %v2839 = vunpack.c.l.bf16 %v2804
      %v2840 = vunpack.c.h.bf16 %v2804
      %v2841 = vunpack.c.l.bf16 %v2805
      %v2842 = vunpack.c.h.bf16 %v2805
      %v2843 = vunpack.c.l.bf16 %v2806
      %v2844 = vunpack.c.h.bf16 %v2806
      %v2845 = vunpack.c.l.bf16 %v2807
      %v2846 = vunpack.c.h.bf16 %v2807
      %v2847 = vunpack.c.l.bf16 %v2808
      %v2848 = vunpack.c.h.bf16 %v2808
      %v2849 = vunpack.c.l.bf16 %v2809
      %v2850 = vunpack.c.h.bf16 %v2809
      %v2851 = vunpack.c.l.bf16 %v2810
      %v2852 = vunpack.c.h.bf16 %v2810
      %v2853 = vunpack.c.l.bf16 %v2811
      %v2854 = vunpack.c.h.bf16 %v2811
      %v2855 = vunpack.c.l.bf16 %v2812
      %v2856 = vunpack.c.h.bf16 %v2812
      %v2857 = vunpack.c.l.bf16 %v2813
      %v2858 = vunpack.c.h.bf16 %v2813
      %v2859 = vunpack.c.l.bf16 %v2814
      %v2860 = vunpack.c.h.bf16 %v2814
      %v2861 = vunpack.c.l.bf16 %v2815
      %v2862 = vunpack.c.h.bf16 %v2815
      %v2863 = vunpack.c.l.bf16 %v2816
      %v2864 = vunpack.c.h.bf16 %v2816
      %v2865 = vunpack.c.l.bf16 %v2817
      %v2866 = vunpack.c.h.bf16 %v2817
      %v2867 = vunpack.c.l.bf16 %v2818
      %v2868 = vunpack.c.h.bf16 %v2818
      %v2869 = vunpack.c.l.bf16 %v2819
      %v2870 = vunpack.c.h.bf16 %v2819
      %v2871 = vunpack.c.l.bf16 %v2820
      %v2872 = vunpack.c.h.bf16 %v2820
      %v2873 = vunpack.c.l.bf16 %v2821
      %v2874 = vunpack.c.h.bf16 %v2821
      %v2875 = vunpack.c.l.bf16 %v2822
      %v2876 = vunpack.c.h.bf16 %v2822
      %v2877 = vunpack.c.l.bf16 %v2823
      %v2878 = vunpack.c.h.bf16 %v2823
      %v2879 = vunpack.c.l.bf16 %v2824
      %v2880 = vunpack.c.h.bf16 %v2824
      %v2881 = vunpack.c.l.bf16 %v2825
      %v2882 = vunpack.c.h.bf16 %v2825
      %v2883 = vunpack.c.l.bf16 %v2826
      %v2884 = vunpack.c.h.bf16 %v2826
      %v2885 = vunpack.c.l.bf16 %v2827
      %v2886 = vunpack.c.h.bf16 %v2827
      %v2887 = vunpack.c.l.bf16 %v2828
      %v2888 = vunpack.c.h.bf16 %v2828
      %v2889 = vunpack.c.l.bf16 %v2829
      %v2890 = vunpack.c.h.bf16 %v2829
      %v2891 = vunpack.c.l.bf16 %v2830
      %v2892 = vunpack.c.h.bf16 %v2830
      %v2893 = vunpack.c.l.bf16 %v2831
      %v2894 = vunpack.c.h.bf16 %v2831
      %v2895 = vunpack.c.l.bf16 %v2832
      %v2896 = vunpack.c.h.bf16 %v2832
      %v2897 = vmax.f32 %v2833, 0.0
      %v2898 = vmax.f32 %v2834, 0.0
      %v2899 = vmax.f32 %v2835, 0.0
      %v2900 = vmax.f32 %v2836, 0.0
      %v2901 = vmax.f32 %v2837, 0.0
      %v2902 = vmax.f32 %v2838, 0.0
      %v2903 = vmax.f32 %v2839, 0.0
      %v2904 = vmax.f32 %v2840, 0.0
      %v2905 = vmax.f32 %v2841, 0.0
      %v2906 = vmax.f32 %v2842, 0.0
      %v2907 = vmax.f32 %v2843, 0.0
      %v2908 = vmax.f32 %v2844, 0.0
      %v2909 = vmax.f32 %v2845, 0.0
      %v2910 = vmax.f32 %v2846, 0.0
      %v2911 = vmax.f32 %v2847, 0.0
      %v2912 = vmax.f32 %v2848, 0.0
      %v2913 = vmax.f32 %v2849, 0.0
      %v2914 = vmax.f32 %v2850, 0.0
      %v2915 = vmax.f32 %v2851, 0.0
      %v2916 = vmax.f32 %v2852, 0.0
      %v2917 = vmax.f32 %v2853, 0.0
      %v2918 = vmax.f32 %v2854, 0.0
      %v2919 = vmax.f32 %v2855, 0.0
      %v2920 = vmax.f32 %v2856, 0.0
      %v2921 = vmax.f32 %v2857, 0.0
      %v2922 = vmax.f32 %v2858, 0.0
      %v2923 = vmax.f32 %v2859, 0.0
      %v2924 = vmax.f32 %v2860, 0.0
      %v2925 = vmax.f32 %v2861, 0.0
      %v2926 = vmax.f32 %v2862, 0.0
      %v2927 = vmax.f32 %v2863, 0.0
      %v2928 = vmax.f32 %v2864, 0.0
      %v2929 = vmax.f32 %v2865, 0.0
      %v2930 = vmax.f32 %v2866, 0.0
      %v2931 = vmax.f32 %v2867, 0.0
      %v2932 = vmax.f32 %v2868, 0.0
      %v2933 = vmax.f32 %v2869, 0.0
      %v2934 = vmax.f32 %v2870, 0.0
      %v2935 = vmax.f32 %v2871, 0.0
      %v2936 = vmax.f32 %v2872, 0.0
      %v2937 = vmax.f32 %v2873, 0.0
      %v2938 = vmax.f32 %v2874, 0.0
      %v2939 = vmax.f32 %v2875, 0.0
      %v2940 = vmax.f32 %v2876, 0.0
      %v2941 = vmax.f32 %v2877, 0.0
      %v2942 = vmax.f32 %v2878, 0.0
      %v2943 = vmax.f32 %v2879, 0.0
      %v2944 = vmax.f32 %v2880, 0.0
      %v2945 = vmax.f32 %v2881, 0.0
      %v2946 = vmax.f32 %v2882, 0.0
      %v2947 = vmax.f32 %v2883, 0.0
      %v2948 = vmax.f32 %v2884, 0.0
      %v2949 = vmax.f32 %v2885, 0.0
      %v2950 = vmax.f32 %v2886, 0.0
      %v2951 = vmax.f32 %v2887, 0.0
      %v2952 = vmax.f32 %v2888, 0.0
      %v2953 = vmax.f32 %v2889, 0.0
      %v2954 = vmax.f32 %v2890, 0.0
      %v2955 = vmax.f32 %v2891, 0.0
      %v2956 = vmax.f32 %v2892, 0.0
      %v2957 = vmax.f32 %v2893, 0.0
      %v2958 = vmax.f32 %v2894, 0.0
      %v2959 = vmax.f32 %v2895, 0.0
      %v2960 = vmax.f32 %v2896, 0.0
      %v2961 = vpack.c.bf16 %v2899, %v2897
      %v2962 = vpack.c.bf16 %v2900, %v2898
      %v2963 = vpack.c.bf16 %v2903, %v2901
      %v2964 = vpack.c.bf16 %v2904, %v2902
      %v2965 = vpack.c.bf16 %v2907, %v2905
      %v2966 = vpack.c.bf16 %v2908, %v2906
      %v2967 = vpack.c.bf16 %v2911, %v2909
      %v2968 = vpack.c.bf16 %v2912, %v2910
      %v2969 = vpack.c.bf16 %v2915, %v2913
      %v2970 = vpack.c.bf16 %v2916, %v2914
      %v2971 = vpack.c.bf16 %v2919, %v2917
      %v2972 = vpack.c.bf16 %v2920, %v2918
      %v2973 = vpack.c.bf16 %v2923, %v2921
      %v2974 = vpack.c.bf16 %v2924, %v2922
      %v2975 = vpack.c.bf16 %v2927, %v2925
      %v2976 = vpack.c.bf16 %v2928, %v2926
      %v2977 = vpack.c.bf16 %v2931, %v2929
      %v2978 = vpack.c.bf16 %v2932, %v2930
      %v2979 = vpack.c.bf16 %v2935, %v2933
      %v2980 = vpack.c.bf16 %v2936, %v2934
      %v2981 = vpack.c.bf16 %v2939, %v2937
      %v2982 = vpack.c.bf16 %v2940, %v2938
      %v2983 = vpack.c.bf16 %v2943, %v2941
      %v2984 = vpack.c.bf16 %v2944, %v2942
      %v2985 = vpack.c.bf16 %v2947, %v2945
      %v2986 = vpack.c.bf16 %v2948, %v2946
      %v2987 = vpack.c.bf16 %v2951, %v2949
      %v2988 = vpack.c.bf16 %v2952, %v2950
      %v2989 = vpack.c.bf16 %v2955, %v2953
      %v2990 = vpack.c.bf16 %v2956, %v2954
      %v2991 = vpack.c.bf16 %v2959, %v2957
      %v2992 = vpack.c.bf16 %v2960, %v2958
      %v2993 = vld [vmem:[%s7] sm:$0xff]
      %v2994 = vld [vmem:[%s7 + $0x8] sm:$0xff]
      %v2995 = vld [vmem:[%s7 + $0x10] sm:$0xff]
      %v2996 = vld [vmem:[%s7 + $0x18] sm:$0xff]
      %v2997 = vld [vmem:[%s7 + $0x20] sm:$0xff]
      %v2998 = vld [vmem:[%s7 + $0x28] sm:$0xff]
      %v2999 = vld [vmem:[%s7 + $0x30] sm:$0xff]
      %v3000 = vld [vmem:[%s7 + $0x38] sm:$0xff]
      %v3001 = vld [vmem:[%s7 + $0x40] sm:$0xff]
      %v3002 = vld [vmem:[%s7 + $0x48] sm:$0xff]
      %v3003 = vld [vmem:[%s7 + $0x50] sm:$0xff]
      %v3004 = vld [vmem:[%s7 + $0x58] sm:$0xff]
      %v3005 = vld [vmem:[%s7 + $0x60] sm:$0xff]
      %v3006 = vld [vmem:[%s7 + $0x68] sm:$0xff]
      %v3007 = vld [vmem:[%s7 + $0x70] sm:$0xff]
      %v3008 = vld [vmem:[%s7 + $0x78] sm:$0xff]
      %v3009 = vld [vmem:[%s7 + $0x80] sm:$0xff]
      %v3010 = vld [vmem:[%s7 + $0x88] sm:$0xff]
      %v3011 = vld [vmem:[%s7 + $0x90] sm:$0xff]
      %v3012 = vld [vmem:[%s7 + $0x98] sm:$0xff]
      %v3013 = vld [vmem:[%s7 + $0xa0] sm:$0xff]
      %v3014 = vld [vmem:[%s7 + $0xa8] sm:$0xff]
      %v3015 = vld [vmem:[%s7 + $0xb0] sm:$0xff]
      %v3016 = vld [vmem:[%s7 + $0xb8] sm:$0xff]
      %v3017 = vld [vmem:[%s7 + $0xc0] sm:$0xff]
      %v3018 = vld [vmem:[%s7 + $0xc8] sm:$0xff]
      %v3019 = vld [vmem:[%s7 + $0xd0] sm:$0xff]
      %v3020 = vld [vmem:[%s7 + $0xd8] sm:$0xff]
      %v3021 = vld [vmem:[%s7 + $0xe0] sm:$0xff]
      %v3022 = vld [vmem:[%s7 + $0xe8] sm:$0xff]
      %v3023 = vld [vmem:[%s7 + $0xf0] sm:$0xff]
      %v3024 = vld [vmem:[%s7 + $0xf8] sm:$0xff]
      %v3025 = vld [vmem:[%s8] sm:$0x3]
      %v3027 = vperm.slane %v3025, 0
      %v3028 = vperm.slane %v3025, 1
      %v3063 = vunpack.c.l.b16 %v2993
      %v3064 = vunpack.c.h.b16 %v2993
      %v3065 = vunpack.c.l.b16 %v2994
      %v3066 = vunpack.c.h.b16 %v2994
      %v3067 = vunpack.c.l.b16 %v2995
      %v3068 = vunpack.c.h.b16 %v2995
      %v3069 = vunpack.c.l.b16 %v2996
      %v3070 = vunpack.c.h.b16 %v2996
      %v3071 = vunpack.c.l.b16 %v2997
      %v3072 = vunpack.c.h.b16 %v2997
      %v3073 = vunpack.c.l.b16 %v2998
      %v3074 = vunpack.c.h.b16 %v2998
      %v3075 = vunpack.c.l.b16 %v2999
      %v3076 = vunpack.c.h.b16 %v2999
      %v3077 = vunpack.c.l.b16 %v3000
      %v3078 = vunpack.c.h.b16 %v3000
      %v3079 = vunpack.c.l.b16 %v3001
      %v3080 = vunpack.c.h.b16 %v3001
      %v3081 = vunpack.c.l.b16 %v3002
      %v3082 = vunpack.c.h.b16 %v3002
      %v3083 = vunpack.c.l.b16 %v3003
      %v3084 = vunpack.c.h.b16 %v3003
      %v3085 = vunpack.c.l.b16 %v3004
      %v3086 = vunpack.c.h.b16 %v3004
      %v3087 = vunpack.c.l.b16 %v3005
      %v3088 = vunpack.c.h.b16 %v3005
      %v3089 = vunpack.c.l.b16 %v3006
      %v3090 = vunpack.c.h.b16 %v3006
      %v3091 = vunpack.c.l.b16 %v3007
      %v3092 = vunpack.c.h.b16 %v3007
      %v3093 = vunpack.c.l.b16 %v3008
      %v3094 = vunpack.c.h.b16 %v3008
      %v3095 = vunpack.c.l.b16 %v3009
      %v3096 = vunpack.c.h.b16 %v3009
      %v3097 = vunpack.c.l.b16 %v3010
      %v3098 = vunpack.c.h.b16 %v3010
      %v3099 = vunpack.c.l.b16 %v3011
      %v3100 = vunpack.c.h.b16 %v3011
      %v3101 = vunpack.c.l.b16 %v3012
      %v3102 = vunpack.c.h.b16 %v3012
      %v3103 = vunpack.c.l.b16 %v3013
      %v3104 = vunpack.c.h.b16 %v3013
      %v3105 = vunpack.c.l.b16 %v3014
      %v3106 = vunpack.c.h.b16 %v3014
      %v3107 = vunpack.c.l.b16 %v3015
      %v3108 = vunpack.c.h.b16 %v3015
      %v3109 = vunpack.c.l.b16 %v3016
      %v3110 = vunpack.c.h.b16 %v3016
      %v3111 = vunpack.c.l.b16 %v3017
      %v3112 = vunpack.c.h.b16 %v3017
      %v3113 = vunpack.c.l.b16 %v3018
      %v3114 = vunpack.c.h.b16 %v3018
      %v3115 = vunpack.c.l.b16 %v3019
      %v3116 = vunpack.c.h.b16 %v3019
      %v3117 = vunpack.c.l.b16 %v3020
      %v3118 = vunpack.c.h.b16 %v3020
      %v3119 = vunpack.c.l.b16 %v3021
      %v3120 = vunpack.c.h.b16 %v3021
      %v3121 = vunpack.c.l.b16 %v3022
      %v3122 = vunpack.c.h.b16 %v3022
      %v3123 = vunpack.c.l.b16 %v3023
      %v3124 = vunpack.c.h.b16 %v3023
      %v3125 = vunpack.c.l.b16 %v3024
      %v3126 = vunpack.c.h.b16 %v3024
      %v3127 = vpack.c.b16 %v3065, %v3063
      %v3128 = vpack.c.b16 %v3066, %v3064
      %v3129 = vpack.c.b16 %v3069, %v3067
      %v3130 = vpack.c.b16 %v3070, %v3068
      %v3131 = vpack.c.b16 %v3073, %v3071
      %v3132 = vpack.c.b16 %v3074, %v3072
      %v3133 = vpack.c.b16 %v3077, %v3075
      %v3134 = vpack.c.b16 %v3078, %v3076
      %v3135 = vpack.c.b16 %v3081, %v3079
      %v3136 = vpack.c.b16 %v3082, %v3080
      %v3137 = vpack.c.b16 %v3085, %v3083
      %v3138 = vpack.c.b16 %v3086, %v3084
      %v3139 = vpack.c.b16 %v3089, %v3087
      %v3140 = vpack.c.b16 %v3090, %v3088
      %v3141 = vpack.c.b16 %v3093, %v3091
      %v3142 = vpack.c.b16 %v3094, %v3092
      %v3143 = vpack.c.b16 %v3097, %v3095
      %v3144 = vpack.c.b16 %v3098, %v3096
      %v3145 = vpack.c.b16 %v3101, %v3099
      %v3146 = vpack.c.b16 %v3102, %v3100
      %v3147 = vpack.c.b16 %v3105, %v3103
      %v3148 = vpack.c.b16 %v3106, %v3104
      %v3149 = vpack.c.b16 %v3109, %v3107
      %v3150 = vpack.c.b16 %v3110, %v3108
      %v3151 = vpack.c.b16 %v3113, %v3111
      %v3152 = vpack.c.b16 %v3114, %v3112
      %v3153 = vpack.c.b16 %v3117, %v3115
      %v3154 = vpack.c.b16 %v3118, %v3116
      %v3155 = vpack.c.b16 %v3121, %v3119
      %v3156 = vpack.c.b16 %v3122, %v3120
      %v3157 = vpack.c.b16 %v3125, %v3123
      %v3158 = vpack.c.b16 %v3126, %v3124
      %3191 = vmatpush.bf16.msra.mxu0 %v3141
      %3192 = vmatpush.bf16.msra.mxu0 %v3139
      %3193 = vmatpush.bf16.msra.mxu0 %v3137
      %3194 = vmatpush.bf16.msra.mxu0 %v3135
      %3195 = vmatpush.bf16.msra.mxu0 %v3133
      %3196 = vmatpush.bf16.msra.mxu0 %v3131
      %3197 = vmatpush.bf16.msra.mxu0 %v3129
      %3198 = vmatpush.bf16.msra.mxu0 %v3127
      %3199 = vmatmul.bf16.gmra.mxu0 %v2961
      %v3200 = vpop.f32.mrf.mxu0
      %v3201 = vadd.f32 %v3027, %v3200
      %v3202 = vpop.f32.mrf.mxu0
      %v3203 = vadd.f32 %v3027, %v3202
      %3204 = vmatmul.bf16.gmra.mxu0 %v2963
      %v3205 = vpop.f32.mrf.mxu0
      %v3206 = vadd.f32 %v3027, %v3205
      %v3207 = vpop.f32.mrf.mxu0
      %v3208 = vadd.f32 %v3027, %v3207
      %3209 = vmatmul.bf16.gmra.mxu0 %v2965
      %v3210 = vpop.f32.mrf.mxu0
      %v3211 = vadd.f32 %v3027, %v3210
      %v3212 = vpop.f32.mrf.mxu0
      %v3213 = vadd.f32 %v3027, %v3212
      %3214 = vmatmul.bf16.gmra.mxu0 %v2967
      %v3215 = vpop.f32.mrf.mxu0
      %v3216 = vadd.f32 %v3027, %v3215
      %v3217 = vpop.f32.mrf.mxu0
      %v3218 = vadd.f32 %v3027, %v3217
      %3219 = vmatmul.bf16.gmra.mxu0 %v2969
      %v3220 = vpop.f32.mrf.mxu0
      %v3221 = vadd.f32 %v3027, %v3220
      %v3222 = vpop.f32.mrf.mxu0
      %v3223 = vadd.f32 %v3027, %v3222
      %3224 = vmatmul.bf16.gmra.mxu0 %v2971
      %v3225 = vpop.f32.mrf.mxu0
      %v3226 = vadd.f32 %v3027, %v3225
      %v3227 = vpop.f32.mrf.mxu0
      %v3228 = vadd.f32 %v3027, %v3227
      %3229 = vmatmul.bf16.gmra.mxu0 %v2973
      %v3230 = vpop.f32.mrf.mxu0
      %v3231 = vadd.f32 %v3027, %v3230
      %v3232 = vpop.f32.mrf.mxu0
      %v3233 = vadd.f32 %v3027, %v3232
      %3234 = vmatmul.bf16.gmra.mxu0 %v2975
      %v3235 = vpop.f32.mrf.mxu0
      %v3236 = vadd.f32 %v3027, %v3235
      %v3237 = vpop.f32.mrf.mxu0
      %v3238 = vadd.f32 %v3027, %v3237
      %3239 = vmatmul.bf16.gmra.mxu0 %v2977
      %v3240 = vpop.f32.mrf.mxu0
      %v3241 = vadd.f32 %v3027, %v3240
      %v3242 = vpop.f32.mrf.mxu0
      %v3243 = vadd.f32 %v3027, %v3242
      %3244 = vmatmul.bf16.gmra.mxu0 %v2979
      %v3245 = vpop.f32.mrf.mxu0
      %v3246 = vadd.f32 %v3027, %v3245
      %v3247 = vpop.f32.mrf.mxu0
      %v3248 = vadd.f32 %v3027, %v3247
      %3249 = vmatmul.bf16.gmra.mxu0 %v2981
      %v3250 = vpop.f32.mrf.mxu0
      %v3251 = vadd.f32 %v3027, %v3250
      %v3252 = vpop.f32.mrf.mxu0
      %v3253 = vadd.f32 %v3027, %v3252
      %3254 = vmatmul.bf16.gmra.mxu0 %v2983
      %v3255 = vpop.f32.mrf.mxu0
      %v3256 = vadd.f32 %v3027, %v3255
      %v3257 = vpop.f32.mrf.mxu0
      %v3258 = vadd.f32 %v3027, %v3257
      %3259 = vmatmul.bf16.gmra.mxu0 %v2985
      %v3260 = vpop.f32.mrf.mxu0
      %v3261 = vadd.f32 %v3027, %v3260
      %v3262 = vpop.f32.mrf.mxu0
      %v3263 = vadd.f32 %v3027, %v3262
      %3264 = vmatmul.bf16.gmra.mxu0 %v2987
      %v3265 = vpop.f32.mrf.mxu0
      %v3266 = vadd.f32 %v3027, %v3265
      %v3267 = vpop.f32.mrf.mxu0
      %v3268 = vadd.f32 %v3027, %v3267
      %3269 = vmatmul.bf16.gmra.mxu0 %v2989
      %v3270 = vpop.f32.mrf.mxu0
      %v3271 = vadd.f32 %v3027, %v3270
      %v3272 = vpop.f32.mrf.mxu0
      %v3273 = vadd.f32 %v3027, %v3272
      %3274 = vmatmul.bf16.gmra.mxu0 %v2991
      %v3275 = vpop.f32.mrf.mxu0
      %v3276 = vadd.f32 %v3027, %v3275
      %v3277 = vpop.f32.mrf.mxu0
      %v3278 = vadd.f32 %v3027, %v3277
      %3279 = vdwg.mxu0
      %3280 = vmatpush.bf16.msra.mxu0 %v3157
      %3281 = vmatpush.bf16.msra.mxu0 %v3155
      %3282 = vmatpush.bf16.msra.mxu0 %v3153
      %3283 = vmatpush.bf16.msra.mxu0 %v3151
      %3284 = vmatpush.bf16.msra.mxu0 %v3149
      %3285 = vmatpush.bf16.msra.mxu0 %v3147
      %3286 = vmatpush.bf16.msra.mxu0 %v3145
      %3287 = vmatpush.bf16.msra.mxu0 %v3143
      %3288 = vmatmul.bf16.gmra.mxu0 %v2962
      %v3289 = vpop.f32.mrf.mxu0
      %v3290 = vadd.f32 %v3201, %v3289
      %v3291 = vpop.f32.mrf.mxu0
      %v3292 = vadd.f32 %v3203, %v3291
      %3293 = vmatmul.bf16.gmra.mxu0 %v2964
      %v3294 = vpop.f32.mrf.mxu0
      %v3295 = vadd.f32 %v3206, %v3294
      %v3296 = vpop.f32.mrf.mxu0
      %v3297 = vadd.f32 %v3208, %v3296
      %3298 = vmatmul.bf16.gmra.mxu0 %v2966
      %v3299 = vpop.f32.mrf.mxu0
      %v3300 = vadd.f32 %v3211, %v3299
      %v3301 = vpop.f32.mrf.mxu0
      %v3302 = vadd.f32 %v3213, %v3301
      %3303 = vmatmul.bf16.gmra.mxu0 %v2968
      %v3304 = vpop.f32.mrf.mxu0
      %v3305 = vadd.f32 %v3216, %v3304
      %v3306 = vpop.f32.mrf.mxu0
      %v3307 = vadd.f32 %v3218, %v3306
      %3308 = vmatmul.bf16.gmra.mxu0 %v2970
      %v3309 = vpop.f32.mrf.mxu0
      %v3310 = vadd.f32 %v3221, %v3309
      %v3311 = vpop.f32.mrf.mxu0
      %v3312 = vadd.f32 %v3223, %v3311
      %3313 = vmatmul.bf16.gmra.mxu0 %v2972
      %v3314 = vpop.f32.mrf.mxu0
      %v3315 = vadd.f32 %v3226, %v3314
      %v3316 = vpop.f32.mrf.mxu0
      %v3317 = vadd.f32 %v3228, %v3316
      %3318 = vmatmul.bf16.gmra.mxu0 %v2974
      %v3319 = vpop.f32.mrf.mxu0
      %v3320 = vadd.f32 %v3231, %v3319
      %v3321 = vpop.f32.mrf.mxu0
      %v3322 = vadd.f32 %v3233, %v3321
      %3323 = vmatmul.bf16.gmra.mxu0 %v2976
      %v3324 = vpop.f32.mrf.mxu0
      %v3325 = vadd.f32 %v3236, %v3324
      %v3326 = vpop.f32.mrf.mxu0
      %v3327 = vadd.f32 %v3238, %v3326
      %3328 = vmatmul.bf16.gmra.mxu0 %v2978
      %v3329 = vpop.f32.mrf.mxu0
      %v3330 = vadd.f32 %v3241, %v3329
      %v3331 = vpop.f32.mrf.mxu0
      %v3332 = vadd.f32 %v3243, %v3331
      %3333 = vmatmul.bf16.gmra.mxu0 %v2980
      %v3334 = vpop.f32.mrf.mxu0
      %v3335 = vadd.f32 %v3246, %v3334
      %v3336 = vpop.f32.mrf.mxu0
      %v3337 = vadd.f32 %v3248, %v3336
      %3338 = vmatmul.bf16.gmra.mxu0 %v2982
      %v3339 = vpop.f32.mrf.mxu0
      %v3340 = vadd.f32 %v3251, %v3339
      %v3341 = vpop.f32.mrf.mxu0
      %v3342 = vadd.f32 %v3253, %v3341
      %3343 = vmatmul.bf16.gmra.mxu0 %v2984
      %v3344 = vpop.f32.mrf.mxu0
      %v3345 = vadd.f32 %v3256, %v3344
      %v3346 = vpop.f32.mrf.mxu0
      %v3347 = vadd.f32 %v3258, %v3346
      %3348 = vmatmul.bf16.gmra.mxu0 %v2986
      %v3349 = vpop.f32.mrf.mxu0
      %v3350 = vadd.f32 %v3261, %v3349
      %v3351 = vpop.f32.mrf.mxu0
      %v3352 = vadd.f32 %v3263, %v3351
      %3353 = vmatmul.bf16.gmra.mxu0 %v2988
      %v3354 = vpop.f32.mrf.mxu0
      %v3355 = vadd.f32 %v3266, %v3354
      %v3356 = vpop.f32.mrf.mxu0
      %v3357 = vadd.f32 %v3268, %v3356
      %3358 = vmatmul.bf16.gmra.mxu0 %v2990
      %v3359 = vpop.f32.mrf.mxu0
      %v3360 = vadd.f32 %v3271, %v3359
      %v3361 = vpop.f32.mrf.mxu0
      %v3362 = vadd.f32 %v3273, %v3361
      %3363 = vmatmul.bf16.gmra.mxu0 %v2992
      %v3364 = vpop.f32.mrf.mxu0
      %v3365 = vadd.f32 %v3276, %v3364
      %v3366 = vpop.f32.mrf.mxu0
      %v3367 = vadd.f32 %v3278, %v3366
      %3368 = vdwg.mxu0
      %3369 = vmatpush.bf16.msra.mxu0 %v3142
      %3370 = vmatpush.bf16.msra.mxu0 %v3140
      %3371 = vmatpush.bf16.msra.mxu0 %v3138
      %3372 = vmatpush.bf16.msra.mxu0 %v3136
      %3373 = vmatpush.bf16.msra.mxu0 %v3134
      %3374 = vmatpush.bf16.msra.mxu0 %v3132
      %3375 = vmatpush.bf16.msra.mxu0 %v3130
      %3376 = vmatpush.bf16.msra.mxu0 %v3128
      %3377 = vmatmul.bf16.gmra.mxu0 %v2961
      %v3378 = vpop.f32.mrf.mxu0
      %v3379 = vadd.f32 %v3028, %v3378
      %v3380 = vpop.f32.mrf.mxu0
      %v3381 = vadd.f32 %v3028, %v3380
      %3382 = vmatmul.bf16.gmra.mxu0 %v2963
      %v3383 = vpop.f32.mrf.mxu0
      %v3384 = vadd.f32 %v3028, %v3383
      %v3385 = vpop.f32.mrf.mxu0
      %v3386 = vadd.f32 %v3028, %v3385
      %3387 = vmatmul.bf16.gmra.mxu0 %v2965
      %v3388 = vpop.f32.mrf.mxu0
      %v3389 = vadd.f32 %v3028, %v3388
      %v3390 = vpop.f32.mrf.mxu0
      %v3391 = vadd.f32 %v3028, %v3390
      %3392 = vmatmul.bf16.gmra.mxu0 %v2967
      %v3393 = vpop.f32.mrf.mxu0
      %v3394 = vadd.f32 %v3028, %v3393
      %v3395 = vpop.f32.mrf.mxu0
      %v3396 = vadd.f32 %v3028, %v3395
      %3397 = vmatmul.bf16.gmra.mxu0 %v2969
      %v3398 = vpop.f32.mrf.mxu0
      %v3399 = vadd.f32 %v3028, %v3398
      %v3400 = vpop.f32.mrf.mxu0
      %v3401 = vadd.f32 %v3028, %v3400
      %3402 = vmatmul.bf16.gmra.mxu0 %v2971
      %v3403 = vpop.f32.mrf.mxu0
      %v3404 = vadd.f32 %v3028, %v3403
      %v3405 = vpop.f32.mrf.mxu0
      %v3406 = vadd.f32 %v3028, %v3405
      %3407 = vmatmul.bf16.gmra.mxu0 %v2973
      %v3408 = vpop.f32.mrf.mxu0
      %v3409 = vadd.f32 %v3028, %v3408
      %v3410 = vpop.f32.mrf.mxu0
      %v3411 = vadd.f32 %v3028, %v3410
      %3412 = vmatmul.bf16.gmra.mxu0 %v2975
      %v3413 = vpop.f32.mrf.mxu0
      %v3414 = vadd.f32 %v3028, %v3413
      %v3415 = vpop.f32.mrf.mxu0
      %v3416 = vadd.f32 %v3028, %v3415
      %3417 = vmatmul.bf16.gmra.mxu0 %v2977
      %v3418 = vpop.f32.mrf.mxu0
      %v3419 = vadd.f32 %v3028, %v3418
      %v3420 = vpop.f32.mrf.mxu0
      %v3421 = vadd.f32 %v3028, %v3420
      %3422 = vmatmul.bf16.gmra.mxu0 %v2979
      %v3423 = vpop.f32.mrf.mxu0
      %v3424 = vadd.f32 %v3028, %v3423
      %v3425 = vpop.f32.mrf.mxu0
      %v3426 = vadd.f32 %v3028, %v3425
      %3427 = vmatmul.bf16.gmra.mxu0 %v2981
      %v3428 = vpop.f32.mrf.mxu0
      %v3429 = vadd.f32 %v3028, %v3428
      %v3430 = vpop.f32.mrf.mxu0
      %v3431 = vadd.f32 %v3028, %v3430
      %3432 = vmatmul.bf16.gmra.mxu0 %v2983
      %v3433 = vpop.f32.mrf.mxu0
      %v3434 = vadd.f32 %v3028, %v3433
      %v3435 = vpop.f32.mrf.mxu0
      %v3436 = vadd.f32 %v3028, %v3435
      %3437 = vmatmul.bf16.gmra.mxu0 %v2985
      %v3438 = vpop.f32.mrf.mxu0
      %v3439 = vadd.f32 %v3028, %v3438
      %v3440 = vpop.f32.mrf.mxu0
      %v3441 = vadd.f32 %v3028, %v3440
      %3442 = vmatmul.bf16.gmra.mxu0 %v2987
      %v3443 = vpop.f32.mrf.mxu0
      %v3444 = vadd.f32 %v3028, %v3443
      %v3445 = vpop.f32.mrf.mxu0
      %v3446 = vadd.f32 %v3028, %v3445
      %3447 = vmatmul.bf16.gmra.mxu0 %v2989
      %v3448 = vpop.f32.mrf.mxu0
      %v3449 = vadd.f32 %v3028, %v3448
      %v3450 = vpop.f32.mrf.mxu0
      %v3451 = vadd.f32 %v3028, %v3450
      %3452 = vmatmul.bf16.gmra.mxu0 %v2991
      %v3453 = vpop.f32.mrf.mxu0
      %v3454 = vadd.f32 %v3028, %v3453
      %v3455 = vpop.f32.mrf.mxu0
      %v3456 = vadd.f32 %v3028, %v3455
      %3457 = vdwg.mxu0
      %3458 = vmatpush.bf16.msra.mxu0 %v3158
      %3459 = vmatpush.bf16.msra.mxu0 %v3156
      %3460 = vmatpush.bf16.msra.mxu0 %v3154
      %3461 = vmatpush.bf16.msra.mxu0 %v3152
      %3462 = vmatpush.bf16.msra.mxu0 %v3150
      %3463 = vmatpush.bf16.msra.mxu0 %v3148
      %3464 = vmatpush.bf16.msra.mxu0 %v3146
      %3465 = vmatpush.bf16.msra.mxu0 %v3144
      %3466 = vmatmul.bf16.gmra.mxu0 %v2962
      %v3467 = vpop.f32.mrf.mxu0
      %v3468 = vadd.f32 %v3379, %v3467
      %v3469 = vpop.f32.mrf.mxu0
      %v3470 = vadd.f32 %v3381, %v3469
      %3471 = vmatmul.bf16.gmra.mxu0 %v2964
      %v3472 = vpop.f32.mrf.mxu0
      %v3473 = vadd.f32 %v3384, %v3472
      %v3474 = vpop.f32.mrf.mxu0
      %v3475 = vadd.f32 %v3386, %v3474
      %3476 = vmatmul.bf16.gmra.mxu0 %v2966
      %v3477 = vpop.f32.mrf.mxu0
      %v3478 = vadd.f32 %v3389, %v3477
      %v3479 = vpop.f32.mrf.mxu0
      %v3480 = vadd.f32 %v3391, %v3479
      %3481 = vmatmul.bf16.gmra.mxu0 %v2968
      %v3482 = vpop.f32.mrf.mxu0
      %v3483 = vadd.f32 %v3394, %v3482
      %v3484 = vpop.f32.mrf.mxu0
      %v3485 = vadd.f32 %v3396, %v3484
      %3486 = vmatmul.bf16.gmra.mxu0 %v2970
      %v3487 = vpop.f32.mrf.mxu0
      %v3488 = vadd.f32 %v3399, %v3487
      %v3489 = vpop.f32.mrf.mxu0
      %v3490 = vadd.f32 %v3401, %v3489
      %3491 = vmatmul.bf16.gmra.mxu0 %v2972
      %v3492 = vpop.f32.mrf.mxu0
      %v3493 = vadd.f32 %v3404, %v3492
      %v3494 = vpop.f32.mrf.mxu0
      %v3495 = vadd.f32 %v3406, %v3494
      %3496 = vmatmul.bf16.gmra.mxu0 %v2974
      %v3497 = vpop.f32.mrf.mxu0
      %v3498 = vadd.f32 %v3409, %v3497
      %v3499 = vpop.f32.mrf.mxu0
      %v3500 = vadd.f32 %v3411, %v3499
      %3501 = vmatmul.bf16.gmra.mxu0 %v2976
      %v3502 = vpop.f32.mrf.mxu0
      %v3503 = vadd.f32 %v3414, %v3502
      %v3504 = vpop.f32.mrf.mxu0
      %v3505 = vadd.f32 %v3416, %v3504
      %3506 = vmatmul.bf16.gmra.mxu0 %v2978
      %v3507 = vpop.f32.mrf.mxu0
      %v3508 = vadd.f32 %v3419, %v3507
      %v3509 = vpop.f32.mrf.mxu0
      %v3510 = vadd.f32 %v3421, %v3509
      %3511 = vmatmul.bf16.gmra.mxu0 %v2980
      %v3512 = vpop.f32.mrf.mxu0
      %v3513 = vadd.f32 %v3424, %v3512
      %v3514 = vpop.f32.mrf.mxu0
      %v3515 = vadd.f32 %v3426, %v3514
      %3516 = vmatmul.bf16.gmra.mxu0 %v2982
      %v3517 = vpop.f32.mrf.mxu0
      %v3518 = vadd.f32 %v3429, %v3517
      %v3519 = vpop.f32.mrf.mxu0
      %v3520 = vadd.f32 %v3431, %v3519
      %3521 = vmatmul.bf16.gmra.mxu0 %v2984
      %v3522 = vpop.f32.mrf.mxu0
      %v3523 = vadd.f32 %v3434, %v3522
      %v3524 = vpop.f32.mrf.mxu0
      %v3525 = vadd.f32 %v3436, %v3524
      %3526 = vmatmul.bf16.gmra.mxu0 %v2986
      %v3527 = vpop.f32.mrf.mxu0
      %v3528 = vadd.f32 %v3439, %v3527
      %v3529 = vpop.f32.mrf.mxu0
      %v3530 = vadd.f32 %v3441, %v3529
      %3531 = vmatmul.bf16.gmra.mxu0 %v2988
      %v3532 = vpop.f32.mrf.mxu0
      %v3533 = vadd.f32 %v3444, %v3532
      %v3534 = vpop.f32.mrf.mxu0
      %v3535 = vadd.f32 %v3446, %v3534
      %3536 = vmatmul.bf16.gmra.mxu0 %v2990
      %v3537 = vpop.f32.mrf.mxu0
      %v3538 = vadd.f32 %v3449, %v3537
      %v3539 = vpop.f32.mrf.mxu0
      %v3540 = vadd.f32 %v3451, %v3539
      %3541 = vmatmul.bf16.gmra.mxu0 %v2992
      %v3542 = vpop.f32.mrf.mxu0
      %v3543 = vadd.f32 %v3454, %v3542
      %v3544 = vpop.f32.mrf.mxu0
      %v3545 = vadd.f32 %v3456, %v3544
      %3546 = vdwg.mxu0
      %v3547 = vpack.c.bf16 %v3468, %v3290
      %v3548 = vpack.c.bf16 %v3470, %v3292
      %v3549 = vpack.c.bf16 %v3473, %v3295
      %v3550 = vpack.c.bf16 %v3475, %v3297
      %v3551 = vpack.c.bf16 %v3478, %v3300
      %v3552 = vpack.c.bf16 %v3480, %v3302
      %v3553 = vpack.c.bf16 %v3483, %v3305
      %v3554 = vpack.c.bf16 %v3485, %v3307
      %v3555 = vpack.c.bf16 %v3488, %v3310
      %v3556 = vpack.c.bf16 %v3490, %v3312
      %v3557 = vpack.c.bf16 %v3493, %v3315
      %v3558 = vpack.c.bf16 %v3495, %v3317
      %v3559 = vpack.c.bf16 %v3498, %v3320
      %v3560 = vpack.c.bf16 %v3500, %v3322
      %v3561 = vpack.c.bf16 %v3503, %v3325
      %v3562 = vpack.c.bf16 %v3505, %v3327
      %v3563 = vpack.c.bf16 %v3508, %v3330
      %v3564 = vpack.c.bf16 %v3510, %v3332
      %v3565 = vpack.c.bf16 %v3513, %v3335
      %v3566 = vpack.c.bf16 %v3515, %v3337
      %v3567 = vpack.c.bf16 %v3518, %v3340
      %v3568 = vpack.c.bf16 %v3520, %v3342
      %v3569 = vpack.c.bf16 %v3523, %v3345
      %v3570 = vpack.c.bf16 %v3525, %v3347
      %v3571 = vpack.c.bf16 %v3528, %v3350
      %v3572 = vpack.c.bf16 %v3530, %v3352
      %v3573 = vpack.c.bf16 %v3533, %v3355
      %v3574 = vpack.c.bf16 %v3535, %v3357
      %v3575 = vpack.c.bf16 %v3538, %v3360
      %v3576 = vpack.c.bf16 %v3540, %v3362
      %v3577 = vpack.c.bf16 %v3543, %v3365
      %v3578 = vpack.c.bf16 %v3545, %v3367
      %v3579 = vunpack.c.l.bf16 %v3547
      %v3580 = vunpack.c.h.bf16 %v3547
      %v3581 = vunpack.c.l.bf16 %v3548
      %v3582 = vunpack.c.h.bf16 %v3548
      %v3583 = vunpack.c.l.bf16 %v3549
      %v3584 = vunpack.c.h.bf16 %v3549
      %v3585 = vunpack.c.l.bf16 %v3550
      %v3586 = vunpack.c.h.bf16 %v3550
      %v3587 = vunpack.c.l.bf16 %v3551
      %v3588 = vunpack.c.h.bf16 %v3551
      %v3589 = vunpack.c.l.bf16 %v3552
      %v3590 = vunpack.c.h.bf16 %v3552
      %v3591 = vunpack.c.l.bf16 %v3553
      %v3592 = vunpack.c.h.bf16 %v3553
      %v3593 = vunpack.c.l.bf16 %v3554
      %v3594 = vunpack.c.h.bf16 %v3554
      %v3595 = vunpack.c.l.bf16 %v3555
      %v3596 = vunpack.c.h.bf16 %v3555
      %v3597 = vunpack.c.l.bf16 %v3556
      %v3598 = vunpack.c.h.bf16 %v3556
      %v3599 = vunpack.c.l.bf16 %v3557
      %v3600 = vunpack.c.h.bf16 %v3557
      %v3601 = vunpack.c.l.bf16 %v3558
      %v3602 = vunpack.c.h.bf16 %v3558
      %v3603 = vunpack.c.l.bf16 %v3559
      %v3604 = vunpack.c.h.bf16 %v3559
      %v3605 = vunpack.c.l.bf16 %v3560
      %v3606 = vunpack.c.h.bf16 %v3560
      %v3607 = vunpack.c.l.bf16 %v3561
      %v3608 = vunpack.c.h.bf16 %v3561
      %v3609 = vunpack.c.l.bf16 %v3562
      %v3610 = vunpack.c.h.bf16 %v3562
      %v3611 = vunpack.c.l.bf16 %v3563
      %v3612 = vunpack.c.h.bf16 %v3563
      %v3613 = vunpack.c.l.bf16 %v3564
      %v3614 = vunpack.c.h.bf16 %v3564
      %v3615 = vunpack.c.l.bf16 %v3565
      %v3616 = vunpack.c.h.bf16 %v3565
      %v3617 = vunpack.c.l.bf16 %v3566
      %v3618 = vunpack.c.h.bf16 %v3566
      %v3619 = vunpack.c.l.bf16 %v3567
      %v3620 = vunpack.c.h.bf16 %v3567
      %v3621 = vunpack.c.l.bf16 %v3568
      %v3622 = vunpack.c.h.bf16 %v3568
      %v3623 = vunpack.c.l.bf16 %v3569
      %v3624 = vunpack.c.h.bf16 %v3569
      %v3625 = vunpack.c.l.bf16 %v3570
      %v3626 = vunpack.c.h.bf16 %v3570
      %v3627 = vunpack.c.l.bf16 %v3571
      %v3628 = vunpack.c.h.bf16 %v3571
      %v3629 = vunpack.c.l.bf16 %v3572
      %v3630 = vunpack.c.h.bf16 %v3572
      %v3631 = vunpack.c.l.bf16 %v3573
      %v3632 = vunpack.c.h.bf16 %v3573
      %v3633 = vunpack.c.l.bf16 %v3574
      %v3634 = vunpack.c.h.bf16 %v3574
      %v3635 = vunpack.c.l.bf16 %v3575
      %v3636 = vunpack.c.h.bf16 %v3575
      %v3637 = vunpack.c.l.bf16 %v3576
      %v3638 = vunpack.c.h.bf16 %v3576
      %v3639 = vunpack.c.l.bf16 %v3577
      %v3640 = vunpack.c.h.bf16 %v3577
      %v3641 = vunpack.c.l.bf16 %v3578
      %v3642 = vunpack.c.h.bf16 %v3578
      %v3643 = vmax.f32 %v3579, 0.0
      %v3644 = vmax.f32 %v3580, 0.0
      %v3645 = vmax.f32 %v3581, 0.0
      %v3646 = vmax.f32 %v3582, 0.0
      %v3647 = vmax.f32 %v3583, 0.0
      %v3648 = vmax.f32 %v3584, 0.0
      %v3649 = vmax.f32 %v3585, 0.0
      %v3650 = vmax.f32 %v3586, 0.0
      %v3651 = vmax.f32 %v3587, 0.0
      %v3652 = vmax.f32 %v3588, 0.0
      %v3653 = vmax.f32 %v3589, 0.0
      %v3654 = vmax.f32 %v3590, 0.0
      %v3655 = vmax.f32 %v3591, 0.0
      %v3656 = vmax.f32 %v3592, 0.0
      %v3657 = vmax.f32 %v3593, 0.0
      %v3658 = vmax.f32 %v3594, 0.0
      %v3659 = vmax.f32 %v3595, 0.0
      %v3660 = vmax.f32 %v3596, 0.0
      %v3661 = vmax.f32 %v3597, 0.0
      %v3662 = vmax.f32 %v3598, 0.0
      %v3663 = vmax.f32 %v3599, 0.0
      %v3664 = vmax.f32 %v3600, 0.0
      %v3665 = vmax.f32 %v3601, 0.0
      %v3666 = vmax.f32 %v3602, 0.0
      %v3667 = vmax.f32 %v3603, 0.0
      %v3668 = vmax.f32 %v3604, 0.0
      %v3669 = vmax.f32 %v3605, 0.0
      %v3670 = vmax.f32 %v3606, 0.0
      %v3671 = vmax.f32 %v3607, 0.0
      %v3672 = vmax.f32 %v3608, 0.0
      %v3673 = vmax.f32 %v3609, 0.0
      %v3674 = vmax.f32 %v3610, 0.0
      %v3675 = vmax.f32 %v3611, 0.0
      %v3676 = vmax.f32 %v3612, 0.0
      %v3677 = vmax.f32 %v3613, 0.0
      %v3678 = vmax.f32 %v3614, 0.0
      %v3679 = vmax.f32 %v3615, 0.0
      %v3680 = vmax.f32 %v3616, 0.0
      %v3681 = vmax.f32 %v3617, 0.0
      %v3682 = vmax.f32 %v3618, 0.0
      %v3683 = vmax.f32 %v3619, 0.0
      %v3684 = vmax.f32 %v3620, 0.0
      %v3685 = vmax.f32 %v3621, 0.0
      %v3686 = vmax.f32 %v3622, 0.0
      %v3687 = vmax.f32 %v3623, 0.0
      %v3688 = vmax.f32 %v3624, 0.0
      %v3689 = vmax.f32 %v3625, 0.0
      %v3690 = vmax.f32 %v3626, 0.0
      %v3691 = vmax.f32 %v3627, 0.0
      %v3692 = vmax.f32 %v3628, 0.0
      %v3693 = vmax.f32 %v3629, 0.0
      %v3694 = vmax.f32 %v3630, 0.0
      %v3695 = vmax.f32 %v3631, 0.0
      %v3696 = vmax.f32 %v3632, 0.0
      %v3697 = vmax.f32 %v3633, 0.0
      %v3698 = vmax.f32 %v3634, 0.0
      %v3699 = vmax.f32 %v3635, 0.0
      %v3700 = vmax.f32 %v3636, 0.0
      %v3701 = vmax.f32 %v3637, 0.0
      %v3702 = vmax.f32 %v3638, 0.0
      %v3703 = vmax.f32 %v3639, 0.0
      %v3704 = vmax.f32 %v3640, 0.0
      %v3705 = vmax.f32 %v3641, 0.0
      %v3706 = vmax.f32 %v3642, 0.0
      %v3707 = vpack.c.bf16 %v3645, %v3643
      %v3708 = vpack.c.bf16 %v3646, %v3644
      %v3709 = vpack.c.bf16 %v3649, %v3647
      %v3710 = vpack.c.bf16 %v3650, %v3648
      %v3711 = vpack.c.bf16 %v3653, %v3651
      %v3712 = vpack.c.bf16 %v3654, %v3652
      %v3713 = vpack.c.bf16 %v3657, %v3655
      %v3714 = vpack.c.bf16 %v3658, %v3656
      %v3715 = vpack.c.bf16 %v3661, %v3659
      %v3716 = vpack.c.bf16 %v3662, %v3660
      %v3717 = vpack.c.bf16 %v3665, %v3663
      %v3718 = vpack.c.bf16 %v3666, %v3664
      %v3719 = vpack.c.bf16 %v3669, %v3667
      %v3720 = vpack.c.bf16 %v3670, %v3668
      %v3721 = vpack.c.bf16 %v3673, %v3671
      %v3722 = vpack.c.bf16 %v3674, %v3672
      %v3723 = vpack.c.bf16 %v3677, %v3675
      %v3724 = vpack.c.bf16 %v3678, %v3676
      %v3725 = vpack.c.bf16 %v3681, %v3679
      %v3726 = vpack.c.bf16 %v3682, %v3680
      %v3727 = vpack.c.bf16 %v3685, %v3683
      %v3728 = vpack.c.bf16 %v3686, %v3684
      %v3729 = vpack.c.bf16 %v3689, %v3687
      %v3730 = vpack.c.bf16 %v3690, %v3688
      %v3731 = vpack.c.bf16 %v3693, %v3691
      %v3732 = vpack.c.bf16 %v3694, %v3692
      %v3733 = vpack.c.bf16 %v3697, %v3695
      %v3734 = vpack.c.bf16 %v3698, %v3696
      %v3735 = vpack.c.bf16 %v3701, %v3699
      %v3736 = vpack.c.bf16 %v3702, %v3700
      %v3737 = vpack.c.bf16 %v3705, %v3703
      %v3738 = vpack.c.bf16 %v3706, %v3704
      %v3739 = vld [vmem:[%s9] sm:$0xff]
      %v3740 = vld [vmem:[%s9 + $0x8] sm:$0xff]
      %v3741 = vld [vmem:[%s9 + $0x10] sm:$0xff]
      %v3742 = vld [vmem:[%s9 + $0x18] sm:$0xff]
      %v3743 = vld [vmem:[%s9 + $0x20] sm:$0xff]
      %v3744 = vld [vmem:[%s9 + $0x28] sm:$0xff]
      %v3745 = vld [vmem:[%s9 + $0x30] sm:$0xff]
      %v3746 = vld [vmem:[%s9 + $0x38] sm:$0xff]
      %v3747 = vld [vmem:[%s9 + $0x40] sm:$0xff]
      %v3748 = vld [vmem:[%s9 + $0x48] sm:$0xff]
      %v3749 = vld [vmem:[%s9 + $0x50] sm:$0xff]
      %v3750 = vld [vmem:[%s9 + $0x58] sm:$0xff]
      %v3751 = vld [vmem:[%s9 + $0x60] sm:$0xff]
      %v3752 = vld [vmem:[%s9 + $0x68] sm:$0xff]
      %v3753 = vld [vmem:[%s9 + $0x70] sm:$0xff]
      %v3754 = vld [vmem:[%s9 + $0x78] sm:$0xff]
      %v3755 = vld [vmem:[%s9 + $0x80] sm:$0xff]
      %v3756 = vld [vmem:[%s9 + $0x88] sm:$0xff]
      %v3757 = vld [vmem:[%s9 + $0x90] sm:$0xff]
      %v3758 = vld [vmem:[%s9 + $0x98] sm:$0xff]
      %v3759 = vld [vmem:[%s9 + $0xa0] sm:$0xff]
      %v3760 = vld [vmem:[%s9 + $0xa8] sm:$0xff]
      %v3761 = vld [vmem:[%s9 + $0xb0] sm:$0xff]
      %v3762 = vld [vmem:[%s9 + $0xb8] sm:$0xff]
      %v3763 = vld [vmem:[%s9 + $0xc0] sm:$0xff]
      %v3764 = vld [vmem:[%s9 + $0xc8] sm:$0xff]
      %v3765 = vld [vmem:[%s9 + $0xd0] sm:$0xff]
      %v3766 = vld [vmem:[%s9 + $0xd8] sm:$0xff]
      %v3767 = vld [vmem:[%s9 + $0xe0] sm:$0xff]
      %v3768 = vld [vmem:[%s9 + $0xe8] sm:$0xff]
      %v3769 = vld [vmem:[%s9 + $0xf0] sm:$0xff]
      %v3770 = vld [vmem:[%s9 + $0xf8] sm:$0xff]
      %v3771 = vld [vmem:[%s10] sm:$0x3]
      %v3773 = vperm.slane %v3771, 0
      %v3774 = vperm.slane %v3771, 1
      %v3809 = vunpack.c.l.b16 %v3739
      %v3810 = vunpack.c.h.b16 %v3739
      %v3811 = vunpack.c.l.b16 %v3740
      %v3812 = vunpack.c.h.b16 %v3740
      %v3813 = vunpack.c.l.b16 %v3741
      %v3814 = vunpack.c.h.b16 %v3741
      %v3815 = vunpack.c.l.b16 %v3742
      %v3816 = vunpack.c.h.b16 %v3742
      %v3817 = vunpack.c.l.b16 %v3743
      %v3818 = vunpack.c.h.b16 %v3743
      %v3819 = vunpack.c.l.b16 %v3744
      %v3820 = vunpack.c.h.b16 %v3744
      %v3821 = vunpack.c.l.b16 %v3745
      %v3822 = vunpack.c.h.b16 %v3745
      %v3823 = vunpack.c.l.b16 %v3746
      %v3824 = vunpack.c.h.b16 %v3746
      %v3825 = vunpack.c.l.b16 %v3747
      %v3826 = vunpack.c.h.b16 %v3747
      %v3827 = vunpack.c.l.b16 %v3748
      %v3828 = vunpack.c.h.b16 %v3748
      %v3829 = vunpack.c.l.b16 %v3749
      %v3830 = vunpack.c.h.b16 %v3749
      %v3831 = vunpack.c.l.b16 %v3750
      %v3832 = vunpack.c.h.b16 %v3750
      %v3833 = vunpack.c.l.b16 %v3751
      %v3834 = vunpack.c.h.b16 %v3751
      %v3835 = vunpack.c.l.b16 %v3752
      %v3836 = vunpack.c.h.b16 %v3752
      %v3837 = vunpack.c.l.b16 %v3753
      %v3838 = vunpack.c.h.b16 %v3753
      %v3839 = vunpack.c.l.b16 %v3754
      %v3840 = vunpack.c.h.b16 %v3754
      %v3841 = vunpack.c.l.b16 %v3755
      %v3842 = vunpack.c.h.b16 %v3755
      %v3843 = vunpack.c.l.b16 %v3756
      %v3844 = vunpack.c.h.b16 %v3756
      %v3845 = vunpack.c.l.b16 %v3757
      %v3846 = vunpack.c.h.b16 %v3757
      %v3847 = vunpack.c.l.b16 %v3758
      %v3848 = vunpack.c.h.b16 %v3758
      %v3849 = vunpack.c.l.b16 %v3759
      %v3850 = vunpack.c.h.b16 %v3759
      %v3851 = vunpack.c.l.b16 %v3760
      %v3852 = vunpack.c.h.b16 %v3760
      %v3853 = vunpack.c.l.b16 %v3761
      %v3854 = vunpack.c.h.b16 %v3761
      %v3855 = vunpack.c.l.b16 %v3762
      %v3856 = vunpack.c.h.b16 %v3762
      %v3857 = vunpack.c.l.b16 %v3763
      %v3858 = vunpack.c.h.b16 %v3763
      %v3859 = vunpack.c.l.b16 %v3764
      %v3860 = vunpack.c.h.b16 %v3764
      %v3861 = vunpack.c.l.b16 %v3765
      %v3862 = vunpack.c.h.b16 %v3765
      %v3863 = vunpack.c.l.b16 %v3766
      %v3864 = vunpack.c.h.b16 %v3766
      %v3865 = vunpack.c.l.b16 %v3767
      %v3866 = vunpack.c.h.b16 %v3767
      %v3867 = vunpack.c.l.b16 %v3768
      %v3868 = vunpack.c.h.b16 %v3768
      %v3869 = vunpack.c.l.b16 %v3769
      %v3870 = vunpack.c.h.b16 %v3769
      %v3871 = vunpack.c.l.b16 %v3770
      %v3872 = vunpack.c.h.b16 %v3770
      %v3873 = vpack.c.b16 %v3811, %v3809
      %v3874 = vpack.c.b16 %v3812, %v3810
      %v3875 = vpack.c.b16 %v3815, %v3813
      %v3876 = vpack.c.b16 %v3816, %v3814
      %v3877 = vpack.c.b16 %v3819, %v3817
      %v3878 = vpack.c.b16 %v3820, %v3818
      %v3879 = vpack.c.b16 %v3823, %v3821
      %v3880 = vpack.c.b16 %v3824, %v3822
      %v3881 = vpack.c.b16 %v3827, %v3825
      %v3882 = vpack.c.b16 %v3828, %v3826
      %v3883 = vpack.c.b16 %v3831, %v3829
      %v3884 = vpack.c.b16 %v3832, %v3830
      %v3885 = vpack.c.b16 %v3835, %v3833
      %v3886 = vpack.c.b16 %v3836, %v3834
      %v3887 = vpack.c.b16 %v3839, %v3837
      %v3888 = vpack.c.b16 %v3840, %v3838
      %v3889 = vpack.c.b16 %v3843, %v3841
      %v3890 = vpack.c.b16 %v3844, %v3842
      %v3891 = vpack.c.b16 %v3847, %v3845
      %v3892 = vpack.c.b16 %v3848, %v3846
      %v3893 = vpack.c.b16 %v3851, %v3849
      %v3894 = vpack.c.b16 %v3852, %v3850
      %v3895 = vpack.c.b16 %v3855, %v3853
      %v3896 = vpack.c.b16 %v3856, %v3854
      %v3897 = vpack.c.b16 %v3859, %v3857
      %v3898 = vpack.c.b16 %v3860, %v3858
      %v3899 = vpack.c.b16 %v3863, %v3861
      %v3900 = vpack.c.b16 %v3864, %v3862
      %v3901 = vpack.c.b16 %v3867, %v3865
      %v3902 = vpack.c.b16 %v3868, %v3866
      %v3903 = vpack.c.b16 %v3871, %v3869
      %v3904 = vpack.c.b16 %v3872, %v3870
      %3937 = vmatpush.bf16.msra.mxu0 %v3887
      %3938 = vmatpush.bf16.msra.mxu0 %v3885
      %3939 = vmatpush.bf16.msra.mxu0 %v3883
      %3940 = vmatpush.bf16.msra.mxu0 %v3881
      %3941 = vmatpush.bf16.msra.mxu0 %v3879
      %3942 = vmatpush.bf16.msra.mxu0 %v3877
      %3943 = vmatpush.bf16.msra.mxu0 %v3875
      %3944 = vmatpush.bf16.msra.mxu0 %v3873
      %3945 = vmatmul.bf16.gmra.mxu0 %v3707
      %v3946 = vpop.f32.mrf.mxu0
      %v3947 = vadd.f32 %v3773, %v3946
      %v3948 = vpop.f32.mrf.mxu0
      %v3949 = vadd.f32 %v3773, %v3948
      %3950 = vmatmul.bf16.gmra.mxu0 %v3709
      %v3951 = vpop.f32.mrf.mxu0
      %v3952 = vadd.f32 %v3773, %v3951
      %v3953 = vpop.f32.mrf.mxu0
      %v3954 = vadd.f32 %v3773, %v3953
      %3955 = vmatmul.bf16.gmra.mxu0 %v3711
      %v3956 = vpop.f32.mrf.mxu0
      %v3957 = vadd.f32 %v3773, %v3956
      %v3958 = vpop.f32.mrf.mxu0
      %v3959 = vadd.f32 %v3773, %v3958
      %3960 = vmatmul.bf16.gmra.mxu0 %v3713
      %v3961 = vpop.f32.mrf.mxu0
      %v3962 = vadd.f32 %v3773, %v3961
      %v3963 = vpop.f32.mrf.mxu0
      %v3964 = vadd.f32 %v3773, %v3963
      %3965 = vmatmul.bf16.gmra.mxu0 %v3715
      %v3966 = vpop.f32.mrf.mxu0
      %v3967 = vadd.f32 %v3773, %v3966
      %v3968 = vpop.f32.mrf.mxu0
      %v3969 = vadd.f32 %v3773, %v3968
      %3970 = vmatmul.bf16.gmra.mxu0 %v3717
      %v3971 = vpop.f32.mrf.mxu0
      %v3972 = vadd.f32 %v3773, %v3971
      %v3973 = vpop.f32.mrf.mxu0
      %v3974 = vadd.f32 %v3773, %v3973
      %3975 = vmatmul.bf16.gmra.mxu0 %v3719
      %v3976 = vpop.f32.mrf.mxu0
      %v3977 = vadd.f32 %v3773, %v3976
      %v3978 = vpop.f32.mrf.mxu0
      %v3979 = vadd.f32 %v3773, %v3978
      %3980 = vmatmul.bf16.gmra.mxu0 %v3721
      %v3981 = vpop.f32.mrf.mxu0
      %v3982 = vadd.f32 %v3773, %v3981
      %v3983 = vpop.f32.mrf.mxu0
      %v3984 = vadd.f32 %v3773, %v3983
      %3985 = vmatmul.bf16.gmra.mxu0 %v3723
      %v3986 = vpop.f32.mrf.mxu0
      %v3987 = vadd.f32 %v3773, %v3986
      %v3988 = vpop.f32.mrf.mxu0
      %v3989 = vadd.f32 %v3773, %v3988
      %3990 = vmatmul.bf16.gmra.mxu0 %v3725
      %v3991 = vpop.f32.mrf.mxu0
      %v3992 = vadd.f32 %v3773, %v3991
      %v3993 = vpop.f32.mrf.mxu0
      %v3994 = vadd.f32 %v3773, %v3993
      %3995 = vmatmul.bf16.gmra.mxu0 %v3727
      %v3996 = vpop.f32.mrf.mxu0
      %v3997 = vadd.f32 %v3773, %v3996
      %v3998 = vpop.f32.mrf.mxu0
      %v3999 = vadd.f32 %v3773, %v3998
      %4000 = vmatmul.bf16.gmra.mxu0 %v3729
      %v4001 = vpop.f32.mrf.mxu0
      %v4002 = vadd.f32 %v3773, %v4001
      %v4003 = vpop.f32.mrf.mxu0
      %v4004 = vadd.f32 %v3773, %v4003
      %4005 = vmatmul.bf16.gmra.mxu0 %v3731
      %v4006 = vpop.f32.mrf.mxu0
      %v4007 = vadd.f32 %v3773, %v4006
      %v4008 = vpop.f32.mrf.mxu0
      %v4009 = vadd.f32 %v3773, %v4008
      %4010 = vmatmul.bf16.gmra.mxu0 %v3733
      %v4011 = vpop.f32.mrf.mxu0
      %v4012 = vadd.f32 %v3773, %v4011
      %v4013 = vpop.f32.mrf.mxu0
      %v4014 = vadd.f32 %v3773, %v4013
      %4015 = vmatmul.bf16.gmra.mxu0 %v3735
      %v4016 = vpop.f32.mrf.mxu0
      %v4017 = vadd.f32 %v3773, %v4016
      %v4018 = vpop.f32.mrf.mxu0
      %v4019 = vadd.f32 %v3773, %v4018
      %4020 = vmatmul.bf16.gmra.mxu0 %v3737
      %v4021 = vpop.f32.mrf.mxu0
      %v4022 = vadd.f32 %v3773, %v4021
      %v4023 = vpop.f32.mrf.mxu0
      %v4024 = vadd.f32 %v3773, %v4023
      %4025 = vdwg.mxu0
      %4026 = vmatpush.bf16.msra.mxu0 %v3903
      %4027 = vmatpush.bf16.msra.mxu0 %v3901
      %4028 = vmatpush.bf16.msra.mxu0 %v3899
      %4029 = vmatpush.bf16.msra.mxu0 %v3897
      %4030 = vmatpush.bf16.msra.mxu0 %v3895
      %4031 = vmatpush.bf16.msra.mxu0 %v3893
      %4032 = vmatpush.bf16.msra.mxu0 %v3891
      %4033 = vmatpush.bf16.msra.mxu0 %v3889
      %4034 = vmatmul.bf16.gmra.mxu0 %v3708
      %v4035 = vpop.f32.mrf.mxu0
      %v4036 = vadd.f32 %v3947, %v4035
      %v4037 = vpop.f32.mrf.mxu0
      %v4038 = vadd.f32 %v3949, %v4037
      %4039 = vmatmul.bf16.gmra.mxu0 %v3710
      %v4040 = vpop.f32.mrf.mxu0
      %v4041 = vadd.f32 %v3952, %v4040
      %v4042 = vpop.f32.mrf.mxu0
      %v4043 = vadd.f32 %v3954, %v4042
      %4044 = vmatmul.bf16.gmra.mxu0 %v3712
      %v4045 = vpop.f32.mrf.mxu0
      %v4046 = vadd.f32 %v3957, %v4045
      %v4047 = vpop.f32.mrf.mxu0
      %v4048 = vadd.f32 %v3959, %v4047
      %4049 = vmatmul.bf16.gmra.mxu0 %v3714
      %v4050 = vpop.f32.mrf.mxu0
      %v4051 = vadd.f32 %v3962, %v4050
      %v4052 = vpop.f32.mrf.mxu0
      %v4053 = vadd.f32 %v3964, %v4052
      %4054 = vmatmul.bf16.gmra.mxu0 %v3716
      %v4055 = vpop.f32.mrf.mxu0
      %v4056 = vadd.f32 %v3967, %v4055
      %v4057 = vpop.f32.mrf.mxu0
      %v4058 = vadd.f32 %v3969, %v4057
      %4059 = vmatmul.bf16.gmra.mxu0 %v3718
      %v4060 = vpop.f32.mrf.mxu0
      %v4061 = vadd.f32 %v3972, %v4060
      %v4062 = vpop.f32.mrf.mxu0
      %v4063 = vadd.f32 %v3974, %v4062
      %4064 = vmatmul.bf16.gmra.mxu0 %v3720
      %v4065 = vpop.f32.mrf.mxu0
      %v4066 = vadd.f32 %v3977, %v4065
      %v4067 = vpop.f32.mrf.mxu0
      %v4068 = vadd.f32 %v3979, %v4067
      %4069 = vmatmul.bf16.gmra.mxu0 %v3722
      %v4070 = vpop.f32.mrf.mxu0
      %v4071 = vadd.f32 %v3982, %v4070
      %v4072 = vpop.f32.mrf.mxu0
      %v4073 = vadd.f32 %v3984, %v4072
      %4074 = vmatmul.bf16.gmra.mxu0 %v3724
      %v4075 = vpop.f32.mrf.mxu0
      %v4076 = vadd.f32 %v3987, %v4075
      %v4077 = vpop.f32.mrf.mxu0
      %v4078 = vadd.f32 %v3989, %v4077
      %4079 = vmatmul.bf16.gmra.mxu0 %v3726
      %v4080 = vpop.f32.mrf.mxu0
      %v4081 = vadd.f32 %v3992, %v4080
      %v4082 = vpop.f32.mrf.mxu0
      %v4083 = vadd.f32 %v3994, %v4082
      %4084 = vmatmul.bf16.gmra.mxu0 %v3728
      %v4085 = vpop.f32.mrf.mxu0
      %v4086 = vadd.f32 %v3997, %v4085
      %v4087 = vpop.f32.mrf.mxu0
      %v4088 = vadd.f32 %v3999, %v4087
      %4089 = vmatmul.bf16.gmra.mxu0 %v3730
      %v4090 = vpop.f32.mrf.mxu0
      %v4091 = vadd.f32 %v4002, %v4090
      %v4092 = vpop.f32.mrf.mxu0
      %v4093 = vadd.f32 %v4004, %v4092
      %4094 = vmatmul.bf16.gmra.mxu0 %v3732
      %v4095 = vpop.f32.mrf.mxu0
      %v4096 = vadd.f32 %v4007, %v4095
      %v4097 = vpop.f32.mrf.mxu0
      %v4098 = vadd.f32 %v4009, %v4097
      %4099 = vmatmul.bf16.gmra.mxu0 %v3734
      %v4100 = vpop.f32.mrf.mxu0
      %v4101 = vadd.f32 %v4012, %v4100
      %v4102 = vpop.f32.mrf.mxu0
      %v4103 = vadd.f32 %v4014, %v4102
      %4104 = vmatmul.bf16.gmra.mxu0 %v3736
      %v4105 = vpop.f32.mrf.mxu0
      %v4106 = vadd.f32 %v4017, %v4105
      %v4107 = vpop.f32.mrf.mxu0
      %v4108 = vadd.f32 %v4019, %v4107
      %4109 = vmatmul.bf16.gmra.mxu0 %v3738
      %v4110 = vpop.f32.mrf.mxu0
      %v4111 = vadd.f32 %v4022, %v4110
      %v4112 = vpop.f32.mrf.mxu0
      %v4113 = vadd.f32 %v4024, %v4112
      %4114 = vdwg.mxu0
      %4115 = vmatpush.bf16.msra.mxu0 %v3888
      %4116 = vmatpush.bf16.msra.mxu0 %v3886
      %4117 = vmatpush.bf16.msra.mxu0 %v3884
      %4118 = vmatpush.bf16.msra.mxu0 %v3882
      %4119 = vmatpush.bf16.msra.mxu0 %v3880
      %4120 = vmatpush.bf16.msra.mxu0 %v3878
      %4121 = vmatpush.bf16.msra.mxu0 %v3876
      %4122 = vmatpush.bf16.msra.mxu0 %v3874
      %4123 = vmatmul.bf16.gmra.mxu0 %v3707
      %v4124 = vpop.f32.mrf.mxu0
      %v4125 = vadd.f32 %v3774, %v4124
      %v4126 = vpop.f32.mrf.mxu0
      %v4127 = vadd.f32 %v3774, %v4126
      %4128 = vmatmul.bf16.gmra.mxu0 %v3709
      %v4129 = vpop.f32.mrf.mxu0
      %v4130 = vadd.f32 %v3774, %v4129
      %v4131 = vpop.f32.mrf.mxu0
      %v4132 = vadd.f32 %v3774, %v4131
      %4133 = vmatmul.bf16.gmra.mxu0 %v3711
      %v4134 = vpop.f32.mrf.mxu0
      %v4135 = vadd.f32 %v3774, %v4134
      %v4136 = vpop.f32.mrf.mxu0
      %v4137 = vadd.f32 %v3774, %v4136
      %4138 = vmatmul.bf16.gmra.mxu0 %v3713
      %v4139 = vpop.f32.mrf.mxu0
      %v4140 = vadd.f32 %v3774, %v4139
      %v4141 = vpop.f32.mrf.mxu0
      %v4142 = vadd.f32 %v3774, %v4141
      %4143 = vmatmul.bf16.gmra.mxu0 %v3715
      %v4144 = vpop.f32.mrf.mxu0
      %v4145 = vadd.f32 %v3774, %v4144
      %v4146 = vpop.f32.mrf.mxu0
      %v4147 = vadd.f32 %v3774, %v4146
      %4148 = vmatmul.bf16.gmra.mxu0 %v3717
      %v4149 = vpop.f32.mrf.mxu0
      %v4150 = vadd.f32 %v3774, %v4149
      %v4151 = vpop.f32.mrf.mxu0
      %v4152 = vadd.f32 %v3774, %v4151
      %4153 = vmatmul.bf16.gmra.mxu0 %v3719
      %v4154 = vpop.f32.mrf.mxu0
      %v4155 = vadd.f32 %v3774, %v4154
      %v4156 = vpop.f32.mrf.mxu0
      %v4157 = vadd.f32 %v3774, %v4156
      %4158 = vmatmul.bf16.gmra.mxu0 %v3721
      %v4159 = vpop.f32.mrf.mxu0
      %v4160 = vadd.f32 %v3774, %v4159
      %v4161 = vpop.f32.mrf.mxu0
      %v4162 = vadd.f32 %v3774, %v4161
      %4163 = vmatmul.bf16.gmra.mxu0 %v3723
      %v4164 = vpop.f32.mrf.mxu0
      %v4165 = vadd.f32 %v3774, %v4164
      %v4166 = vpop.f32.mrf.mxu0
      %v4167 = vadd.f32 %v3774, %v4166
      %4168 = vmatmul.bf16.gmra.mxu0 %v3725
      %v4169 = vpop.f32.mrf.mxu0
      %v4170 = vadd.f32 %v3774, %v4169
      %v4171 = vpop.f32.mrf.mxu0
      %v4172 = vadd.f32 %v3774, %v4171
      %4173 = vmatmul.bf16.gmra.mxu0 %v3727
      %v4174 = vpop.f32.mrf.mxu0
      %v4175 = vadd.f32 %v3774, %v4174
      %v4176 = vpop.f32.mrf.mxu0
      %v4177 = vadd.f32 %v3774, %v4176
      %4178 = vmatmul.bf16.gmra.mxu0 %v3729
      %v4179 = vpop.f32.mrf.mxu0
      %v4180 = vadd.f32 %v3774, %v4179
      %v4181 = vpop.f32.mrf.mxu0
      %v4182 = vadd.f32 %v3774, %v4181
      %4183 = vmatmul.bf16.gmra.mxu0 %v3731
      %v4184 = vpop.f32.mrf.mxu0
      %v4185 = vadd.f32 %v3774, %v4184
      %v4186 = vpop.f32.mrf.mxu0
      %v4187 = vadd.f32 %v3774, %v4186
      %4188 = vmatmul.bf16.gmra.mxu0 %v3733
      %v4189 = vpop.f32.mrf.mxu0
      %v4190 = vadd.f32 %v3774, %v4189
      %v4191 = vpop.f32.mrf.mxu0
      %v4192 = vadd.f32 %v3774, %v4191
      %4193 = vmatmul.bf16.gmra.mxu0 %v3735
      %v4194 = vpop.f32.mrf.mxu0
      %v4195 = vadd.f32 %v3774, %v4194
      %v4196 = vpop.f32.mrf.mxu0
      %v4197 = vadd.f32 %v3774, %v4196
      %4198 = vmatmul.bf16.gmra.mxu0 %v3737
      %v4199 = vpop.f32.mrf.mxu0
      %v4200 = vadd.f32 %v3774, %v4199
      %v4201 = vpop.f32.mrf.mxu0
      %v4202 = vadd.f32 %v3774, %v4201
      %4203 = vdwg.mxu0
      %4204 = vmatpush.bf16.msra.mxu0 %v3904
      %4205 = vmatpush.bf16.msra.mxu0 %v3902
      %4206 = vmatpush.bf16.msra.mxu0 %v3900
      %4207 = vmatpush.bf16.msra.mxu0 %v3898
      %4208 = vmatpush.bf16.msra.mxu0 %v3896
      %4209 = vmatpush.bf16.msra.mxu0 %v3894
      %4210 = vmatpush.bf16.msra.mxu0 %v3892
      %4211 = vmatpush.bf16.msra.mxu0 %v3890
      %4212 = vmatmul.bf16.gmra.mxu0 %v3708
      %v4213 = vpop.f32.mrf.mxu0
      %v4214 = vadd.f32 %v4125, %v4213
      %v4215 = vpop.f32.mrf.mxu0
      %v4216 = vadd.f32 %v4127, %v4215
      %4217 = vmatmul.bf16.gmra.mxu0 %v3710
      %v4218 = vpop.f32.mrf.mxu0
      %v4219 = vadd.f32 %v4130, %v4218
      %v4220 = vpop.f32.mrf.mxu0
      %v4221 = vadd.f32 %v4132, %v4220
      %4222 = vmatmul.bf16.gmra.mxu0 %v3712
      %v4223 = vpop.f32.mrf.mxu0
      %v4224 = vadd.f32 %v4135, %v4223
      %v4225 = vpop.f32.mrf.mxu0
      %v4226 = vadd.f32 %v4137, %v4225
      %4227 = vmatmul.bf16.gmra.mxu0 %v3714
      %v4228 = vpop.f32.mrf.mxu0
      %v4229 = vadd.f32 %v4140, %v4228
      %v4230 = vpop.f32.mrf.mxu0
      %v4231 = vadd.f32 %v4142, %v4230
      %4232 = vmatmul.bf16.gmra.mxu0 %v3716
      %v4233 = vpop.f32.mrf.mxu0
      %v4234 = vadd.f32 %v4145, %v4233
      %v4235 = vpop.f32.mrf.mxu0
      %v4236 = vadd.f32 %v4147, %v4235
      %4237 = vmatmul.bf16.gmra.mxu0 %v3718
      %v4238 = vpop.f32.mrf.mxu0
      %v4239 = vadd.f32 %v4150, %v4238
      %v4240 = vpop.f32.mrf.mxu0
      %v4241 = vadd.f32 %v4152, %v4240
      %4242 = vmatmul.bf16.gmra.mxu0 %v3720
      %v4243 = vpop.f32.mrf.mxu0
      %v4244 = vadd.f32 %v4155, %v4243
      %v4245 = vpop.f32.mrf.mxu0
      %v4246 = vadd.f32 %v4157, %v4245
      %4247 = vmatmul.bf16.gmra.mxu0 %v3722
      %v4248 = vpop.f32.mrf.mxu0
      %v4249 = vadd.f32 %v4160, %v4248
      %v4250 = vpop.f32.mrf.mxu0
      %v4251 = vadd.f32 %v4162, %v4250
      %4252 = vmatmul.bf16.gmra.mxu0 %v3724
      %v4253 = vpop.f32.mrf.mxu0
      %v4254 = vadd.f32 %v4165, %v4253
      %v4255 = vpop.f32.mrf.mxu0
      %v4256 = vadd.f32 %v4167, %v4255
      %4257 = vmatmul.bf16.gmra.mxu0 %v3726
      %v4258 = vpop.f32.mrf.mxu0
      %v4259 = vadd.f32 %v4170, %v4258
      %v4260 = vpop.f32.mrf.mxu0
      %v4261 = vadd.f32 %v4172, %v4260
      %4262 = vmatmul.bf16.gmra.mxu0 %v3728
      %v4263 = vpop.f32.mrf.mxu0
      %v4264 = vadd.f32 %v4175, %v4263
      %v4265 = vpop.f32.mrf.mxu0
      %v4266 = vadd.f32 %v4177, %v4265
      %4267 = vmatmul.bf16.gmra.mxu0 %v3730
      %v4268 = vpop.f32.mrf.mxu0
      %v4269 = vadd.f32 %v4180, %v4268
      %v4270 = vpop.f32.mrf.mxu0
      %v4271 = vadd.f32 %v4182, %v4270
      %4272 = vmatmul.bf16.gmra.mxu0 %v3732
      %v4273 = vpop.f32.mrf.mxu0
      %v4274 = vadd.f32 %v4185, %v4273
      %v4275 = vpop.f32.mrf.mxu0
      %v4276 = vadd.f32 %v4187, %v4275
      %4277 = vmatmul.bf16.gmra.mxu0 %v3734
      %v4278 = vpop.f32.mrf.mxu0
      %v4279 = vadd.f32 %v4190, %v4278
      %v4280 = vpop.f32.mrf.mxu0
      %v4281 = vadd.f32 %v4192, %v4280
      %4282 = vmatmul.bf16.gmra.mxu0 %v3736
      %v4283 = vpop.f32.mrf.mxu0
      %v4284 = vadd.f32 %v4195, %v4283
      %v4285 = vpop.f32.mrf.mxu0
      %v4286 = vadd.f32 %v4197, %v4285
      %4287 = vmatmul.bf16.gmra.mxu0 %v3738
      %v4288 = vpop.f32.mrf.mxu0
      %v4289 = vadd.f32 %v4200, %v4288
      %v4290 = vpop.f32.mrf.mxu0
      %v4291 = vadd.f32 %v4202, %v4290
      %4292 = vdwg.mxu0
      %v4293 = vpack.c.bf16 %v4214, %v4036
      %v4294 = vpack.c.bf16 %v4216, %v4038
      %v4295 = vpack.c.bf16 %v4219, %v4041
      %v4296 = vpack.c.bf16 %v4221, %v4043
      %v4297 = vpack.c.bf16 %v4224, %v4046
      %v4298 = vpack.c.bf16 %v4226, %v4048
      %v4299 = vpack.c.bf16 %v4229, %v4051
      %v4300 = vpack.c.bf16 %v4231, %v4053
      %v4301 = vpack.c.bf16 %v4234, %v4056
      %v4302 = vpack.c.bf16 %v4236, %v4058
      %v4303 = vpack.c.bf16 %v4239, %v4061
      %v4304 = vpack.c.bf16 %v4241, %v4063
      %v4305 = vpack.c.bf16 %v4244, %v4066
      %v4306 = vpack.c.bf16 %v4246, %v4068
      %v4307 = vpack.c.bf16 %v4249, %v4071
      %v4308 = vpack.c.bf16 %v4251, %v4073
      %v4309 = vpack.c.bf16 %v4254, %v4076
      %v4310 = vpack.c.bf16 %v4256, %v4078
      %v4311 = vpack.c.bf16 %v4259, %v4081
      %v4312 = vpack.c.bf16 %v4261, %v4083
      %v4313 = vpack.c.bf16 %v4264, %v4086
      %v4314 = vpack.c.bf16 %v4266, %v4088
      %v4315 = vpack.c.bf16 %v4269, %v4091
      %v4316 = vpack.c.bf16 %v4271, %v4093
      %v4317 = vpack.c.bf16 %v4274, %v4096
      %v4318 = vpack.c.bf16 %v4276, %v4098
      %v4319 = vpack.c.bf16 %v4279, %v4101
      %v4320 = vpack.c.bf16 %v4281, %v4103
      %v4321 = vpack.c.bf16 %v4284, %v4106
      %v4322 = vpack.c.bf16 %v4286, %v4108
      %v4323 = vpack.c.bf16 %v4289, %v4111
      %v4324 = vpack.c.bf16 %v4291, %v4113
      %v4325 = vunpack.c.l.bf16 %v4293
      %v4326 = vunpack.c.h.bf16 %v4293
      %v4327 = vunpack.c.l.bf16 %v4294
      %v4328 = vunpack.c.h.bf16 %v4294
      %v4329 = vunpack.c.l.bf16 %v4295
      %v4330 = vunpack.c.h.bf16 %v4295
      %v4331 = vunpack.c.l.bf16 %v4296
      %v4332 = vunpack.c.h.bf16 %v4296
      %v4333 = vunpack.c.l.bf16 %v4297
      %v4334 = vunpack.c.h.bf16 %v4297
      %v4335 = vunpack.c.l.bf16 %v4298
      %v4336 = vunpack.c.h.bf16 %v4298
      %v4337 = vunpack.c.l.bf16 %v4299
      %v4338 = vunpack.c.h.bf16 %v4299
      %v4339 = vunpack.c.l.bf16 %v4300
      %v4340 = vunpack.c.h.bf16 %v4300
      %v4341 = vunpack.c.l.bf16 %v4301
      %v4342 = vunpack.c.h.bf16 %v4301
      %v4343 = vunpack.c.l.bf16 %v4302
      %v4344 = vunpack.c.h.bf16 %v4302
      %v4345 = vunpack.c.l.bf16 %v4303
      %v4346 = vunpack.c.h.bf16 %v4303
      %v4347 = vunpack.c.l.bf16 %v4304
      %v4348 = vunpack.c.h.bf16 %v4304
      %v4349 = vunpack.c.l.bf16 %v4305
      %v4350 = vunpack.c.h.bf16 %v4305
      %v4351 = vunpack.c.l.bf16 %v4306
      %v4352 = vunpack.c.h.bf16 %v4306
      %v4353 = vunpack.c.l.bf16 %v4307
      %v4354 = vunpack.c.h.bf16 %v4307
      %v4355 = vunpack.c.l.bf16 %v4308
      %v4356 = vunpack.c.h.bf16 %v4308
      %v4357 = vunpack.c.l.bf16 %v4309
      %v4358 = vunpack.c.h.bf16 %v4309
      %v4359 = vunpack.c.l.bf16 %v4310
      %v4360 = vunpack.c.h.bf16 %v4310
      %v4361 = vunpack.c.l.bf16 %v4311
      %v4362 = vunpack.c.h.bf16 %v4311
      %v4363 = vunpack.c.l.bf16 %v4312
      %v4364 = vunpack.c.h.bf16 %v4312
      %v4365 = vunpack.c.l.bf16 %v4313
      %v4366 = vunpack.c.h.bf16 %v4313
      %v4367 = vunpack.c.l.bf16 %v4314
      %v4368 = vunpack.c.h.bf16 %v4314
      %v4369 = vunpack.c.l.bf16 %v4315
      %v4370 = vunpack.c.h.bf16 %v4315
      %v4371 = vunpack.c.l.bf16 %v4316
      %v4372 = vunpack.c.h.bf16 %v4316
      %v4373 = vunpack.c.l.bf16 %v4317
      %v4374 = vunpack.c.h.bf16 %v4317
      %v4375 = vunpack.c.l.bf16 %v4318
      %v4376 = vunpack.c.h.bf16 %v4318
      %v4377 = vunpack.c.l.bf16 %v4319
      %v4378 = vunpack.c.h.bf16 %v4319
      %v4379 = vunpack.c.l.bf16 %v4320
      %v4380 = vunpack.c.h.bf16 %v4320
      %v4381 = vunpack.c.l.bf16 %v4321
      %v4382 = vunpack.c.h.bf16 %v4321
      %v4383 = vunpack.c.l.bf16 %v4322
      %v4384 = vunpack.c.h.bf16 %v4322
      %v4385 = vunpack.c.l.bf16 %v4323
      %v4386 = vunpack.c.h.bf16 %v4323
      %v4387 = vunpack.c.l.bf16 %v4324
      %v4388 = vunpack.c.h.bf16 %v4324
      %v4389 = vmax.f32 %v4325, 0.0
      %v4390 = vmax.f32 %v4326, 0.0
      %v4391 = vmax.f32 %v4327, 0.0
      %v4392 = vmax.f32 %v4328, 0.0
      %v4393 = vmax.f32 %v4329, 0.0
      %v4394 = vmax.f32 %v4330, 0.0
      %v4395 = vmax.f32 %v4331, 0.0
      %v4396 = vmax.f32 %v4332, 0.0
      %v4397 = vmax.f32 %v4333, 0.0
      %v4398 = vmax.f32 %v4334, 0.0
      %v4399 = vmax.f32 %v4335, 0.0
      %v4400 = vmax.f32 %v4336, 0.0
      %v4401 = vmax.f32 %v4337, 0.0
      %v4402 = vmax.f32 %v4338, 0.0
      %v4403 = vmax.f32 %v4339, 0.0
      %v4404 = vmax.f32 %v4340, 0.0
      %v4405 = vmax.f32 %v4341, 0.0
      %v4406 = vmax.f32 %v4342, 0.0
      %v4407 = vmax.f32 %v4343, 0.0
      %v4408 = vmax.f32 %v4344, 0.0
      %v4409 = vmax.f32 %v4345, 0.0
      %v4410 = vmax.f32 %v4346, 0.0
      %v4411 = vmax.f32 %v4347, 0.0
      %v4412 = vmax.f32 %v4348, 0.0
      %v4413 = vmax.f32 %v4349, 0.0
      %v4414 = vmax.f32 %v4350, 0.0
      %v4415 = vmax.f32 %v4351, 0.0
      %v4416 = vmax.f32 %v4352, 0.0
      %v4417 = vmax.f32 %v4353, 0.0
      %v4418 = vmax.f32 %v4354, 0.0
      %v4419 = vmax.f32 %v4355, 0.0
      %v4420 = vmax.f32 %v4356, 0.0
      %v4421 = vmax.f32 %v4357, 0.0
      %v4422 = vmax.f32 %v4358, 0.0
      %v4423 = vmax.f32 %v4359, 0.0
      %v4424 = vmax.f32 %v4360, 0.0
      %v4425 = vmax.f32 %v4361, 0.0
      %v4426 = vmax.f32 %v4362, 0.0
      %v4427 = vmax.f32 %v4363, 0.0
      %v4428 = vmax.f32 %v4364, 0.0
      %v4429 = vmax.f32 %v4365, 0.0
      %v4430 = vmax.f32 %v4366, 0.0
      %v4431 = vmax.f32 %v4367, 0.0
      %v4432 = vmax.f32 %v4368, 0.0
      %v4433 = vmax.f32 %v4369, 0.0
      %v4434 = vmax.f32 %v4370, 0.0
      %v4435 = vmax.f32 %v4371, 0.0
      %v4436 = vmax.f32 %v4372, 0.0
      %v4437 = vmax.f32 %v4373, 0.0
      %v4438 = vmax.f32 %v4374, 0.0
      %v4439 = vmax.f32 %v4375, 0.0
      %v4440 = vmax.f32 %v4376, 0.0
      %v4441 = vmax.f32 %v4377, 0.0
      %v4442 = vmax.f32 %v4378, 0.0
      %v4443 = vmax.f32 %v4379, 0.0
      %v4444 = vmax.f32 %v4380, 0.0
      %v4445 = vmax.f32 %v4381, 0.0
      %v4446 = vmax.f32 %v4382, 0.0
      %v4447 = vmax.f32 %v4383, 0.0
      %v4448 = vmax.f32 %v4384, 0.0
      %v4449 = vmax.f32 %v4385, 0.0
      %v4450 = vmax.f32 %v4386, 0.0
      %v4451 = vmax.f32 %v4387, 0.0
      %v4452 = vmax.f32 %v4388, 0.0
      %v4453 = vpack.c.bf16 %v4391, %v4389
      %v4454 = vpack.c.bf16 %v4392, %v4390
      %v4455 = vpack.c.bf16 %v4395, %v4393
      %v4456 = vpack.c.bf16 %v4396, %v4394
      %v4457 = vpack.c.bf16 %v4399, %v4397
      %v4458 = vpack.c.bf16 %v4400, %v4398
      %v4459 = vpack.c.bf16 %v4403, %v4401
      %v4460 = vpack.c.bf16 %v4404, %v4402
      %v4461 = vpack.c.bf16 %v4407, %v4405
      %v4462 = vpack.c.bf16 %v4408, %v4406
      %v4463 = vpack.c.bf16 %v4411, %v4409
      %v4464 = vpack.c.bf16 %v4412, %v4410
      %v4465 = vpack.c.bf16 %v4415, %v4413
      %v4466 = vpack.c.bf16 %v4416, %v4414
      %v4467 = vpack.c.bf16 %v4419, %v4417
      %v4468 = vpack.c.bf16 %v4420, %v4418
      %v4469 = vpack.c.bf16 %v4423, %v4421
      %v4470 = vpack.c.bf16 %v4424, %v4422
      %v4471 = vpack.c.bf16 %v4427, %v4425
      %v4472 = vpack.c.bf16 %v4428, %v4426
      %v4473 = vpack.c.bf16 %v4431, %v4429
      %v4474 = vpack.c.bf16 %v4432, %v4430
      %v4475 = vpack.c.bf16 %v4435, %v4433
      %v4476 = vpack.c.bf16 %v4436, %v4434
      %v4477 = vpack.c.bf16 %v4439, %v4437
      %v4478 = vpack.c.bf16 %v4440, %v4438
      %v4479 = vpack.c.bf16 %v4443, %v4441
      %v4480 = vpack.c.bf16 %v4444, %v4442
      %v4481 = vpack.c.bf16 %v4447, %v4445
      %v4482 = vpack.c.bf16 %v4448, %v4446
      %v4483 = vpack.c.bf16 %v4451, %v4449
      %v4484 = vpack.c.bf16 %v4452, %v4450
      %v4485 = vld [vmem:[%s11] sm:$0xff]
      %v4486 = vld [vmem:[%s11 + $0x8] sm:$0xff]
      %v4487 = vld [vmem:[%s11 + $0x10] sm:$0xff]
      %v4488 = vld [vmem:[%s11 + $0x18] sm:$0xff]
      %v4489 = vld [vmem:[%s11 + $0x20] sm:$0xff]
      %v4490 = vld [vmem:[%s11 + $0x28] sm:$0xff]
      %v4491 = vld [vmem:[%s11 + $0x30] sm:$0xff]
      %v4492 = vld [vmem:[%s11 + $0x38] sm:$0xff]
      %v4493 = vld [vmem:[%s11 + $0x40] sm:$0xff]
      %v4494 = vld [vmem:[%s11 + $0x48] sm:$0xff]
      %v4495 = vld [vmem:[%s11 + $0x50] sm:$0xff]
      %v4496 = vld [vmem:[%s11 + $0x58] sm:$0xff]
      %v4497 = vld [vmem:[%s11 + $0x60] sm:$0xff]
      %v4498 = vld [vmem:[%s11 + $0x68] sm:$0xff]
      %v4499 = vld [vmem:[%s11 + $0x70] sm:$0xff]
      %v4500 = vld [vmem:[%s11 + $0x78] sm:$0xff]
      %v4501 = vld [vmem:[%s11 + $0x80] sm:$0xff]
      %v4502 = vld [vmem:[%s11 + $0x88] sm:$0xff]
      %v4503 = vld [vmem:[%s11 + $0x90] sm:$0xff]
      %v4504 = vld [vmem:[%s11 + $0x98] sm:$0xff]
      %v4505 = vld [vmem:[%s11 + $0xa0] sm:$0xff]
      %v4506 = vld [vmem:[%s11 + $0xa8] sm:$0xff]
      %v4507 = vld [vmem:[%s11 + $0xb0] sm:$0xff]
      %v4508 = vld [vmem:[%s11 + $0xb8] sm:$0xff]
      %v4509 = vld [vmem:[%s11 + $0xc0] sm:$0xff]
      %v4510 = vld [vmem:[%s11 + $0xc8] sm:$0xff]
      %v4511 = vld [vmem:[%s11 + $0xd0] sm:$0xff]
      %v4512 = vld [vmem:[%s11 + $0xd8] sm:$0xff]
      %v4513 = vld [vmem:[%s11 + $0xe0] sm:$0xff]
      %v4514 = vld [vmem:[%s11 + $0xe8] sm:$0xff]
      %v4515 = vld [vmem:[%s11 + $0xf0] sm:$0xff]
      %v4516 = vld [vmem:[%s11 + $0xf8] sm:$0xff]
      %v4517 = vunpack.c.l.bf16 %v1207
      %v4518 = vunpack.c.l.bf16 %v1208
      %v4519 = vunpack.c.h.bf16 %v1207
      %v4520 = vunpack.c.h.bf16 %v1208
      %v4521 = vunpack.c.l.bf16 %v1209
      %v4522 = vunpack.c.l.bf16 %v1210
      %v4523 = vunpack.c.h.bf16 %v1209
      %v4524 = vunpack.c.h.bf16 %v1210
      %v4525 = vunpack.c.l.bf16 %v1211
      %v4526 = vunpack.c.l.bf16 %v1212
      %v4527 = vunpack.c.h.bf16 %v1211
      %v4528 = vunpack.c.h.bf16 %v1212
      %v4529 = vunpack.c.l.bf16 %v1213
      %v4530 = vunpack.c.l.bf16 %v1214
      %v4531 = vunpack.c.h.bf16 %v1213
      %v4532 = vunpack.c.h.bf16 %v1214
      %v4533 = vunpack.c.l.bf16 %v1215
      %v4534 = vunpack.c.l.bf16 %v1216
      %v4535 = vunpack.c.h.bf16 %v1215
      %v4536 = vunpack.c.h.bf16 %v1216
      %v4537 = vunpack.c.l.bf16 %v1217
      %v4538 = vunpack.c.l.bf16 %v1218
      %v4539 = vunpack.c.h.bf16 %v1217
      %v4540 = vunpack.c.h.bf16 %v1218
      %v4541 = vunpack.c.l.bf16 %v1219
      %v4542 = vunpack.c.l.bf16 %v1220
      %v4543 = vunpack.c.h.bf16 %v1219
      %v4544 = vunpack.c.h.bf16 %v1220
      %v4545 = vunpack.c.l.bf16 %v1221
      %v4546 = vunpack.c.l.bf16 %v1222
      %v4547 = vunpack.c.h.bf16 %v1221
      %v4548 = vunpack.c.h.bf16 %v1222
      %v4549 = vunpack.c.l.bf16 %v1223
      %v4550 = vunpack.c.l.bf16 %v1224
      %v4551 = vunpack.c.h.bf16 %v1223
      %v4552 = vunpack.c.h.bf16 %v1224
      %v4553 = vunpack.c.l.bf16 %v1225
      %v4554 = vunpack.c.l.bf16 %v1226
      %v4555 = vunpack.c.h.bf16 %v1225
      %v4556 = vunpack.c.h.bf16 %v1226
      %v4557 = vunpack.c.l.bf16 %v1227
      %v4558 = vunpack.c.l.bf16 %v1228
      %v4559 = vunpack.c.h.bf16 %v1227
      %v4560 = vunpack.c.h.bf16 %v1228
      %v4561 = vunpack.c.l.bf16 %v1229
      %v4562 = vunpack.c.l.bf16 %v1230
      %v4563 = vunpack.c.h.bf16 %v1229
      %v4564 = vunpack.c.h.bf16 %v1230
      %v4565 = vunpack.c.l.bf16 %v1231
      %v4566 = vunpack.c.l.bf16 %v1232
      %v4567 = vunpack.c.h.bf16 %v1231
      %v4568 = vunpack.c.h.bf16 %v1232
      %v4569 = vunpack.c.l.bf16 %v1233
      %v4570 = vunpack.c.l.bf16 %v1234
      %v4571 = vunpack.c.h.bf16 %v1233
      %v4572 = vunpack.c.h.bf16 %v1234
      %v4573 = vunpack.c.l.bf16 %v1235
      %v4574 = vunpack.c.l.bf16 %v1236
      %v4575 = vunpack.c.h.bf16 %v1235
      %v4576 = vunpack.c.h.bf16 %v1236
      %v4577 = vunpack.c.l.bf16 %v1237
      %v4578 = vunpack.c.l.bf16 %v1238
      %v4579 = vunpack.c.h.bf16 %v1237
      %v4580 = vunpack.c.h.bf16 %v1238
      %v4613 = vunpack.c.l.b16 %v4485
      %v4614 = vunpack.c.h.b16 %v4485
      %v4615 = vunpack.c.l.b16 %v4486
      %v4616 = vunpack.c.h.b16 %v4486
      %v4617 = vunpack.c.l.b16 %v4487
      %v4618 = vunpack.c.h.b16 %v4487
      %v4619 = vunpack.c.l.b16 %v4488
      %v4620 = vunpack.c.h.b16 %v4488
      %v4621 = vunpack.c.l.b16 %v4489
      %v4622 = vunpack.c.h.b16 %v4489
      %v4623 = vunpack.c.l.b16 %v4490
      %v4624 = vunpack.c.h.b16 %v4490
      %v4625 = vunpack.c.l.b16 %v4491
      %v4626 = vunpack.c.h.b16 %v4491
      %v4627 = vunpack.c.l.b16 %v4492
      %v4628 = vunpack.c.h.b16 %v4492
      %v4629 = vunpack.c.l.b16 %v4493
      %v4630 = vunpack.c.h.b16 %v4493
      %v4631 = vunpack.c.l.b16 %v4494
      %v4632 = vunpack.c.h.b16 %v4494
      %v4633 = vunpack.c.l.b16 %v4495
      %v4634 = vunpack.c.h.b16 %v4495
      %v4635 = vunpack.c.l.b16 %v4496
      %v4636 = vunpack.c.h.b16 %v4496
      %v4637 = vunpack.c.l.b16 %v4497
      %v4638 = vunpack.c.h.b16 %v4497
      %v4639 = vunpack.c.l.b16 %v4498
      %v4640 = vunpack.c.h.b16 %v4498
      %v4641 = vunpack.c.l.b16 %v4499
      %v4642 = vunpack.c.h.b16 %v4499
      %v4643 = vunpack.c.l.b16 %v4500
      %v4644 = vunpack.c.h.b16 %v4500
      %v4645 = vunpack.c.l.b16 %v4501
      %v4646 = vunpack.c.h.b16 %v4501
      %v4647 = vunpack.c.l.b16 %v4502
      %v4648 = vunpack.c.h.b16 %v4502
      %v4649 = vunpack.c.l.b16 %v4503
      %v4650 = vunpack.c.h.b16 %v4503
      %v4651 = vunpack.c.l.b16 %v4504
      %v4652 = vunpack.c.h.b16 %v4504
      %v4653 = vunpack.c.l.b16 %v4505
      %v4654 = vunpack.c.h.b16 %v4505
      %v4655 = vunpack.c.l.b16 %v4506
      %v4656 = vunpack.c.h.b16 %v4506
      %v4657 = vunpack.c.l.b16 %v4507
      %v4658 = vunpack.c.h.b16 %v4507
      %v4659 = vunpack.c.l.b16 %v4508
      %v4660 = vunpack.c.h.b16 %v4508
      %v4661 = vunpack.c.l.b16 %v4509
      %v4662 = vunpack.c.h.b16 %v4509
      %v4663 = vunpack.c.l.b16 %v4510
      %v4664 = vunpack.c.h.b16 %v4510
      %v4665 = vunpack.c.l.b16 %v4511
      %v4666 = vunpack.c.h.b16 %v4511
      %v4667 = vunpack.c.l.b16 %v4512
      %v4668 = vunpack.c.h.b16 %v4512
      %v4669 = vunpack.c.l.b16 %v4513
      %v4670 = vunpack.c.h.b16 %v4513
      %v4671 = vunpack.c.l.b16 %v4514
      %v4672 = vunpack.c.h.b16 %v4514
      %v4673 = vunpack.c.l.b16 %v4515
      %v4674 = vunpack.c.h.b16 %v4515
      %v4675 = vunpack.c.l.b16 %v4516
      %v4676 = vunpack.c.h.b16 %v4516
      %v4677 = vpack.c.b16 %v4615, %v4613
      %v4678 = vpack.c.b16 %v4616, %v4614
      %v4679 = vpack.c.b16 %v4619, %v4617
      %v4680 = vpack.c.b16 %v4620, %v4618
      %v4681 = vpack.c.b16 %v4623, %v4621
      %v4682 = vpack.c.b16 %v4624, %v4622
      %v4683 = vpack.c.b16 %v4627, %v4625
      %v4684 = vpack.c.b16 %v4628, %v4626
      %v4685 = vpack.c.b16 %v4631, %v4629
      %v4686 = vpack.c.b16 %v4632, %v4630
      %v4687 = vpack.c.b16 %v4635, %v4633
      %v4688 = vpack.c.b16 %v4636, %v4634
      %v4689 = vpack.c.b16 %v4639, %v4637
      %v4690 = vpack.c.b16 %v4640, %v4638
      %v4691 = vpack.c.b16 %v4643, %v4641
      %v4692 = vpack.c.b16 %v4644, %v4642
      %v4693 = vpack.c.b16 %v4647, %v4645
      %v4694 = vpack.c.b16 %v4648, %v4646
      %v4695 = vpack.c.b16 %v4651, %v4649
      %v4696 = vpack.c.b16 %v4652, %v4650
      %v4697 = vpack.c.b16 %v4655, %v4653
      %v4698 = vpack.c.b16 %v4656, %v4654
      %v4699 = vpack.c.b16 %v4659, %v4657
      %v4700 = vpack.c.b16 %v4660, %v4658
      %v4701 = vpack.c.b16 %v4663, %v4661
      %v4702 = vpack.c.b16 %v4664, %v4662
      %v4703 = vpack.c.b16 %v4667, %v4665
      %v4704 = vpack.c.b16 %v4668, %v4666
      %v4705 = vpack.c.b16 %v4671, %v4669
      %v4706 = vpack.c.b16 %v4672, %v4670
      %v4707 = vpack.c.b16 %v4675, %v4673
      %v4708 = vpack.c.b16 %v4676, %v4674
      %4741 = vmatpush.bf16.msra.mxu0 %v4691
      %4742 = vmatpush.bf16.msra.mxu0 %v4689
      %4743 = vmatpush.bf16.msra.mxu0 %v4687
      %4744 = vmatpush.bf16.msra.mxu0 %v4685
      %4745 = vmatpush.bf16.msra.mxu0 %v4683
      %4746 = vmatpush.bf16.msra.mxu0 %v4681
      %4747 = vmatpush.bf16.msra.mxu0 %v4679
      %4748 = vmatpush.bf16.msra.mxu0 %v4677
      %4749 = vmatmul.bf16.gmra.mxu0 %v4453
      %v4750 = vpop.f32.mrf.mxu0
      %v4751 = vadd.f32 %v4517, %v4750
      %v4752 = vpop.f32.mrf.mxu0
      %v4753 = vadd.f32 %v4519, %v4752
      %4754 = vmatmul.bf16.gmra.mxu0 %v4455
      %v4755 = vpop.f32.mrf.mxu0
      %v4756 = vadd.f32 %v4521, %v4755
      %v4757 = vpop.f32.mrf.mxu0
      %v4758 = vadd.f32 %v4523, %v4757
      %4759 = vmatmul.bf16.gmra.mxu0 %v4457
      %v4760 = vpop.f32.mrf.mxu0
      %v4761 = vadd.f32 %v4525, %v4760
      %v4762 = vpop.f32.mrf.mxu0
      %v4763 = vadd.f32 %v4527, %v4762
      %4764 = vmatmul.bf16.gmra.mxu0 %v4459
      %v4765 = vpop.f32.mrf.mxu0
      %v4766 = vadd.f32 %v4529, %v4765
      %v4767 = vpop.f32.mrf.mxu0
      %v4768 = vadd.f32 %v4531, %v4767
      %4769 = vmatmul.bf16.gmra.mxu0 %v4461
      %v4770 = vpop.f32.mrf.mxu0
      %v4771 = vadd.f32 %v4533, %v4770
      %v4772 = vpop.f32.mrf.mxu0
      %v4773 = vadd.f32 %v4535, %v4772
      %4774 = vmatmul.bf16.gmra.mxu0 %v4463
      %v4775 = vpop.f32.mrf.mxu0
      %v4776 = vadd.f32 %v4537, %v4775
      %v4777 = vpop.f32.mrf.mxu0
      %v4778 = vadd.f32 %v4539, %v4777
      %4779 = vmatmul.bf16.gmra.mxu0 %v4465
      %v4780 = vpop.f32.mrf.mxu0
      %v4781 = vadd.f32 %v4541, %v4780
      %v4782 = vpop.f32.mrf.mxu0
      %v4783 = vadd.f32 %v4543, %v4782
      %4784 = vmatmul.bf16.gmra.mxu0 %v4467
      %v4785 = vpop.f32.mrf.mxu0
      %v4786 = vadd.f32 %v4545, %v4785
      %v4787 = vpop.f32.mrf.mxu0
      %v4788 = vadd.f32 %v4547, %v4787
      %4789 = vmatmul.bf16.gmra.mxu0 %v4469
      %v4790 = vpop.f32.mrf.mxu0
      %v4791 = vadd.f32 %v4549, %v4790
      %v4792 = vpop.f32.mrf.mxu0
      %v4793 = vadd.f32 %v4551, %v4792
      %4794 = vmatmul.bf16.gmra.mxu0 %v4471
      %v4795 = vpop.f32.mrf.mxu0
      %v4796 = vadd.f32 %v4553, %v4795
      %v4797 = vpop.f32.mrf.mxu0
      %v4798 = vadd.f32 %v4555, %v4797
      %4799 = vmatmul.bf16.gmra.mxu0 %v4473
      %v4800 = vpop.f32.mrf.mxu0
      %v4801 = vadd.f32 %v4557, %v4800
      %v4802 = vpop.f32.mrf.mxu0
      %v4803 = vadd.f32 %v4559, %v4802
      %4804 = vmatmul.bf16.gmra.mxu0 %v4475
      %v4805 = vpop.f32.mrf.mxu0
      %v4806 = vadd.f32 %v4561, %v4805
      %v4807 = vpop.f32.mrf.mxu0
      %v4808 = vadd.f32 %v4563, %v4807
      %4809 = vmatmul.bf16.gmra.mxu0 %v4477
      %v4810 = vpop.f32.mrf.mxu0
      %v4811 = vadd.f32 %v4565, %v4810
      %v4812 = vpop.f32.mrf.mxu0
      %v4813 = vadd.f32 %v4567, %v4812
      %4814 = vmatmul.bf16.gmra.mxu0 %v4479
      %v4815 = vpop.f32.mrf.mxu0
      %v4816 = vadd.f32 %v4569, %v4815
      %v4817 = vpop.f32.mrf.mxu0
      %v4818 = vadd.f32 %v4571, %v4817
      %4819 = vmatmul.bf16.gmra.mxu0 %v4481
      %v4820 = vpop.f32.mrf.mxu0
      %v4821 = vadd.f32 %v4573, %v4820
      %v4822 = vpop.f32.mrf.mxu0
      %v4823 = vadd.f32 %v4575, %v4822
      %4824 = vmatmul.bf16.gmra.mxu0 %v4483
      %v4825 = vpop.f32.mrf.mxu0
      %v4826 = vadd.f32 %v4577, %v4825
      %v4827 = vpop.f32.mrf.mxu0
      %v4828 = vadd.f32 %v4579, %v4827
      %4829 = vdwg.mxu0
      %4830 = vmatpush.bf16.msra.mxu0 %v4707
      %4831 = vmatpush.bf16.msra.mxu0 %v4705
      %4832 = vmatpush.bf16.msra.mxu0 %v4703
      %4833 = vmatpush.bf16.msra.mxu0 %v4701
      %4834 = vmatpush.bf16.msra.mxu0 %v4699
      %4835 = vmatpush.bf16.msra.mxu0 %v4697
      %4836 = vmatpush.bf16.msra.mxu0 %v4695
      %4837 = vmatpush.bf16.msra.mxu0 %v4693
      %4838 = vmatmul.bf16.gmra.mxu0 %v4454
      %v4839 = vpop.f32.mrf.mxu0
      %v4840 = vadd.f32 %v4751, %v4839
      %v4841 = vpop.f32.mrf.mxu0
      %v4842 = vadd.f32 %v4753, %v4841
      %4843 = vmatmul.bf16.gmra.mxu0 %v4456
      %v4844 = vpop.f32.mrf.mxu0
      %v4845 = vadd.f32 %v4756, %v4844
      %v4846 = vpop.f32.mrf.mxu0
      %v4847 = vadd.f32 %v4758, %v4846
      %4848 = vmatmul.bf16.gmra.mxu0 %v4458
      %v4849 = vpop.f32.mrf.mxu0
      %v4850 = vadd.f32 %v4761, %v4849
      %v4851 = vpop.f32.mrf.mxu0
      %v4852 = vadd.f32 %v4763, %v4851
      %4853 = vmatmul.bf16.gmra.mxu0 %v4460
      %v4854 = vpop.f32.mrf.mxu0
      %v4855 = vadd.f32 %v4766, %v4854
      %v4856 = vpop.f32.mrf.mxu0
      %v4857 = vadd.f32 %v4768, %v4856
      %4858 = vmatmul.bf16.gmra.mxu0 %v4462
      %v4859 = vpop.f32.mrf.mxu0
      %v4860 = vadd.f32 %v4771, %v4859
      %v4861 = vpop.f32.mrf.mxu0
      %v4862 = vadd.f32 %v4773, %v4861
      %4863 = vmatmul.bf16.gmra.mxu0 %v4464
      %v4864 = vpop.f32.mrf.mxu0
      %v4865 = vadd.f32 %v4776, %v4864
      %v4866 = vpop.f32.mrf.mxu0
      %v4867 = vadd.f32 %v4778, %v4866
      %4868 = vmatmul.bf16.gmra.mxu0 %v4466
      %v4869 = vpop.f32.mrf.mxu0
      %v4870 = vadd.f32 %v4781, %v4869
      %v4871 = vpop.f32.mrf.mxu0
      %v4872 = vadd.f32 %v4783, %v4871
      %4873 = vmatmul.bf16.gmra.mxu0 %v4468
      %v4874 = vpop.f32.mrf.mxu0
      %v4875 = vadd.f32 %v4786, %v4874
      %v4876 = vpop.f32.mrf.mxu0
      %v4877 = vadd.f32 %v4788, %v4876
      %4878 = vmatmul.bf16.gmra.mxu0 %v4470
      %v4879 = vpop.f32.mrf.mxu0
      %v4880 = vadd.f32 %v4791, %v4879
      %v4881 = vpop.f32.mrf.mxu0
      %v4882 = vadd.f32 %v4793, %v4881
      %4883 = vmatmul.bf16.gmra.mxu0 %v4472
      %v4884 = vpop.f32.mrf.mxu0
      %v4885 = vadd.f32 %v4796, %v4884
      %v4886 = vpop.f32.mrf.mxu0
      %v4887 = vadd.f32 %v4798, %v4886
      %4888 = vmatmul.bf16.gmra.mxu0 %v4474
      %v4889 = vpop.f32.mrf.mxu0
      %v4890 = vadd.f32 %v4801, %v4889
      %v4891 = vpop.f32.mrf.mxu0
      %v4892 = vadd.f32 %v4803, %v4891
      %4893 = vmatmul.bf16.gmra.mxu0 %v4476
      %v4894 = vpop.f32.mrf.mxu0
      %v4895 = vadd.f32 %v4806, %v4894
      %v4896 = vpop.f32.mrf.mxu0
      %v4897 = vadd.f32 %v4808, %v4896
      %4898 = vmatmul.bf16.gmra.mxu0 %v4478
      %v4899 = vpop.f32.mrf.mxu0
      %v4900 = vadd.f32 %v4811, %v4899
      %v4901 = vpop.f32.mrf.mxu0
      %v4902 = vadd.f32 %v4813, %v4901
      %4903 = vmatmul.bf16.gmra.mxu0 %v4480
      %v4904 = vpop.f32.mrf.mxu0
      %v4905 = vadd.f32 %v4816, %v4904
      %v4906 = vpop.f32.mrf.mxu0
      %v4907 = vadd.f32 %v4818, %v4906
      %4908 = vmatmul.bf16.gmra.mxu0 %v4482
      %v4909 = vpop.f32.mrf.mxu0
      %v4910 = vadd.f32 %v4821, %v4909
      %v4911 = vpop.f32.mrf.mxu0
      %v4912 = vadd.f32 %v4823, %v4911
      %4913 = vmatmul.bf16.gmra.mxu0 %v4484
      %v4914 = vpop.f32.mrf.mxu0
      %v4915 = vadd.f32 %v4826, %v4914
      %v4916 = vpop.f32.mrf.mxu0
      %v4917 = vadd.f32 %v4828, %v4916
      %4918 = vdwg.mxu0
      %4919 = vmatpush.bf16.msra.mxu0 %v4692
      %4920 = vmatpush.bf16.msra.mxu0 %v4690
      %4921 = vmatpush.bf16.msra.mxu0 %v4688
      %4922 = vmatpush.bf16.msra.mxu0 %v4686
      %4923 = vmatpush.bf16.msra.mxu0 %v4684
      %4924 = vmatpush.bf16.msra.mxu0 %v4682
      %4925 = vmatpush.bf16.msra.mxu0 %v4680
      %4926 = vmatpush.bf16.msra.mxu0 %v4678
      %4927 = vmatmul.bf16.gmra.mxu0 %v4453
      %v4928 = vpop.f32.mrf.mxu0
      %v4929 = vadd.f32 %v4518, %v4928
      %v4930 = vpop.f32.mrf.mxu0
      %v4931 = vadd.f32 %v4520, %v4930
      %4932 = vmatmul.bf16.gmra.mxu0 %v4455
      %v4933 = vpop.f32.mrf.mxu0
      %v4934 = vadd.f32 %v4522, %v4933
      %v4935 = vpop.f32.mrf.mxu0
      %v4936 = vadd.f32 %v4524, %v4935
      %4937 = vmatmul.bf16.gmra.mxu0 %v4457
      %v4938 = vpop.f32.mrf.mxu0
      %v4939 = vadd.f32 %v4526, %v4938
      %v4940 = vpop.f32.mrf.mxu0
      %v4941 = vadd.f32 %v4528, %v4940
      %4942 = vmatmul.bf16.gmra.mxu0 %v4459
      %v4943 = vpop.f32.mrf.mxu0
      %v4944 = vadd.f32 %v4530, %v4943
      %v4945 = vpop.f32.mrf.mxu0
      %v4946 = vadd.f32 %v4532, %v4945
      %4947 = vmatmul.bf16.gmra.mxu0 %v4461
      %v4948 = vpop.f32.mrf.mxu0
      %v4949 = vadd.f32 %v4534, %v4948
      %v4950 = vpop.f32.mrf.mxu0
      %v4951 = vadd.f32 %v4536, %v4950
      %4952 = vmatmul.bf16.gmra.mxu0 %v4463
      %v4953 = vpop.f32.mrf.mxu0
      %v4954 = vadd.f32 %v4538, %v4953
      %v4955 = vpop.f32.mrf.mxu0
      %v4956 = vadd.f32 %v4540, %v4955
      %4957 = vmatmul.bf16.gmra.mxu0 %v4465
      %v4958 = vpop.f32.mrf.mxu0
      %v4959 = vadd.f32 %v4542, %v4958
      %v4960 = vpop.f32.mrf.mxu0
      %v4961 = vadd.f32 %v4544, %v4960
      %4962 = vmatmul.bf16.gmra.mxu0 %v4467
      %v4963 = vpop.f32.mrf.mxu0
      %v4964 = vadd.f32 %v4546, %v4963
      %v4965 = vpop.f32.mrf.mxu0
      %v4966 = vadd.f32 %v4548, %v4965
      %4967 = vmatmul.bf16.gmra.mxu0 %v4469
      %v4968 = vpop.f32.mrf.mxu0
      %v4969 = vadd.f32 %v4550, %v4968
      %v4970 = vpop.f32.mrf.mxu0
      %v4971 = vadd.f32 %v4552, %v4970
      %4972 = vmatmul.bf16.gmra.mxu0 %v4471
      %v4973 = vpop.f32.mrf.mxu0
      %v4974 = vadd.f32 %v4554, %v4973
      %v4975 = vpop.f32.mrf.mxu0
      %v4976 = vadd.f32 %v4556, %v4975
      %4977 = vmatmul.bf16.gmra.mxu0 %v4473
      %v4978 = vpop.f32.mrf.mxu0
      %v4979 = vadd.f32 %v4558, %v4978
      %v4980 = vpop.f32.mrf.mxu0
      %v4981 = vadd.f32 %v4560, %v4980
      %4982 = vmatmul.bf16.gmra.mxu0 %v4475
      %v4983 = vpop.f32.mrf.mxu0
      %v4984 = vadd.f32 %v4562, %v4983
      %v4985 = vpop.f32.mrf.mxu0
      %v4986 = vadd.f32 %v4564, %v4985
      %4987 = vmatmul.bf16.gmra.mxu0 %v4477
      %v4988 = vpop.f32.mrf.mxu0
      %v4989 = vadd.f32 %v4566, %v4988
      %v4990 = vpop.f32.mrf.mxu0
      %v4991 = vadd.f32 %v4568, %v4990
      %4992 = vmatmul.bf16.gmra.mxu0 %v4479
      %v4993 = vpop.f32.mrf.mxu0
      %v4994 = vadd.f32 %v4570, %v4993
      %v4995 = vpop.f32.mrf.mxu0
      %v4996 = vadd.f32 %v4572, %v4995
      %4997 = vmatmul.bf16.gmra.mxu0 %v4481
      %v4998 = vpop.f32.mrf.mxu0
      %v4999 = vadd.f32 %v4574, %v4998
      %v5000 = vpop.f32.mrf.mxu0
      %v5001 = vadd.f32 %v4576, %v5000
      %5002 = vmatmul.bf16.gmra.mxu0 %v4483
      %v5003 = vpop.f32.mrf.mxu0
      %v5004 = vadd.f32 %v4578, %v5003
      %v5005 = vpop.f32.mrf.mxu0
      %v5006 = vadd.f32 %v4580, %v5005
      %5007 = vdwg.mxu0
      %5008 = vmatpush.bf16.msra.mxu0 %v4708
      %5009 = vmatpush.bf16.msra.mxu0 %v4706
      %5010 = vmatpush.bf16.msra.mxu0 %v4704
      %5011 = vmatpush.bf16.msra.mxu0 %v4702
      %5012 = vmatpush.bf16.msra.mxu0 %v4700
      %5013 = vmatpush.bf16.msra.mxu0 %v4698
      %5014 = vmatpush.bf16.msra.mxu0 %v4696
      %5015 = vmatpush.bf16.msra.mxu0 %v4694
      %5016 = vmatmul.bf16.gmra.mxu0 %v4454
      %v5017 = vpop.f32.mrf.mxu0
      %v5018 = vadd.f32 %v4929, %v5017
      %v5019 = vpop.f32.mrf.mxu0
      %v5020 = vadd.f32 %v4931, %v5019
      %5021 = vmatmul.bf16.gmra.mxu0 %v4456
      %v5022 = vpop.f32.mrf.mxu0
      %v5023 = vadd.f32 %v4934, %v5022
      %v5024 = vpop.f32.mrf.mxu0
      %v5025 = vadd.f32 %v4936, %v5024
      %5026 = vmatmul.bf16.gmra.mxu0 %v4458
      %v5027 = vpop.f32.mrf.mxu0
      %v5028 = vadd.f32 %v4939, %v5027
      %v5029 = vpop.f32.mrf.mxu0
      %v5030 = vadd.f32 %v4941, %v5029
      %5031 = vmatmul.bf16.gmra.mxu0 %v4460
      %v5032 = vpop.f32.mrf.mxu0
      %v5033 = vadd.f32 %v4944, %v5032
      %v5034 = vpop.f32.mrf.mxu0
      %v5035 = vadd.f32 %v4946, %v5034
      %5036 = vmatmul.bf16.gmra.mxu0 %v4462
      %v5037 = vpop.f32.mrf.mxu0
      %v5038 = vadd.f32 %v4949, %v5037
      %v5039 = vpop.f32.mrf.mxu0
      %v5040 = vadd.f32 %v4951, %v5039
      %5041 = vmatmul.bf16.gmra.mxu0 %v4464
      %v5042 = vpop.f32.mrf.mxu0
      %v5043 = vadd.f32 %v4954, %v5042
      %v5044 = vpop.f32.mrf.mxu0
      %v5045 = vadd.f32 %v4956, %v5044
      %5046 = vmatmul.bf16.gmra.mxu0 %v4466
      %v5047 = vpop.f32.mrf.mxu0
      %v5048 = vadd.f32 %v4959, %v5047
      %v5049 = vpop.f32.mrf.mxu0
      %v5050 = vadd.f32 %v4961, %v5049
      %5051 = vmatmul.bf16.gmra.mxu0 %v4468
      %v5052 = vpop.f32.mrf.mxu0
      %v5053 = vadd.f32 %v4964, %v5052
      %v5054 = vpop.f32.mrf.mxu0
      %v5055 = vadd.f32 %v4966, %v5054
      %5056 = vmatmul.bf16.gmra.mxu0 %v4470
      %v5057 = vpop.f32.mrf.mxu0
      %v5058 = vadd.f32 %v4969, %v5057
      %v5059 = vpop.f32.mrf.mxu0
      %v5060 = vadd.f32 %v4971, %v5059
      %5061 = vmatmul.bf16.gmra.mxu0 %v4472
      %v5062 = vpop.f32.mrf.mxu0
      %v5063 = vadd.f32 %v4974, %v5062
      %v5064 = vpop.f32.mrf.mxu0
      %v5065 = vadd.f32 %v4976, %v5064
      %5066 = vmatmul.bf16.gmra.mxu0 %v4474
      %v5067 = vpop.f32.mrf.mxu0
      %v5068 = vadd.f32 %v4979, %v5067
      %v5069 = vpop.f32.mrf.mxu0
      %v5070 = vadd.f32 %v4981, %v5069
      %5071 = vmatmul.bf16.gmra.mxu0 %v4476
      %v5072 = vpop.f32.mrf.mxu0
      %v5073 = vadd.f32 %v4984, %v5072
      %v5074 = vpop.f32.mrf.mxu0
      %v5075 = vadd.f32 %v4986, %v5074
      %5076 = vmatmul.bf16.gmra.mxu0 %v4478
      %v5077 = vpop.f32.mrf.mxu0
      %v5078 = vadd.f32 %v4989, %v5077
      %v5079 = vpop.f32.mrf.mxu0
      %v5080 = vadd.f32 %v4991, %v5079
      %5081 = vmatmul.bf16.gmra.mxu0 %v4480
      %v5082 = vpop.f32.mrf.mxu0
      %v5083 = vadd.f32 %v4994, %v5082
      %v5084 = vpop.f32.mrf.mxu0
      %v5085 = vadd.f32 %v4996, %v5084
      %5086 = vmatmul.bf16.gmra.mxu0 %v4482
      %v5087 = vpop.f32.mrf.mxu0
      %v5088 = vadd.f32 %v4999, %v5087
      %v5089 = vpop.f32.mrf.mxu0
      %v5090 = vadd.f32 %v5001, %v5089
      %5091 = vmatmul.bf16.gmra.mxu0 %v4484
      %v5092 = vpop.f32.mrf.mxu0
      %v5093 = vadd.f32 %v5004, %v5092
      %v5094 = vpop.f32.mrf.mxu0
      %v5095 = vadd.f32 %v5006, %v5094
      %5096 = vdwg.mxu0
      %v5097 = vld [vmem:[%s12] sm:$0x3]
      %v5099 = vperm.slane %v5097, 0
      %v5100 = vperm.slane %v5097, 1
      %v5103 = vadd.f32 %v4840, %v5099
      %v5104 = vadd.f32 %v5018, %v5100
      %v5105 = vadd.f32 %v4842, %v5099
      %v5106 = vadd.f32 %v5020, %v5100
      %v5107 = vadd.f32 %v4845, %v5099
      %v5108 = vadd.f32 %v5023, %v5100
      %v5109 = vadd.f32 %v4847, %v5099
      %v5110 = vadd.f32 %v5025, %v5100
      %v5111 = vadd.f32 %v4850, %v5099
      %v5112 = vadd.f32 %v5028, %v5100
      %v5113 = vadd.f32 %v4852, %v5099
      %v5114 = vadd.f32 %v5030, %v5100
      %v5115 = vadd.f32 %v4855, %v5099
      %v5116 = vadd.f32 %v5033, %v5100
      %v5117 = vadd.f32 %v4857, %v5099
      %v5118 = vadd.f32 %v5035, %v5100
      %v5119 = vadd.f32 %v4860, %v5099
      %v5120 = vadd.f32 %v5038, %v5100
      %v5121 = vadd.f32 %v4862, %v5099
      %v5122 = vadd.f32 %v5040, %v5100
      %v5123 = vadd.f32 %v4865, %v5099
      %v5124 = vadd.f32 %v5043, %v5100
      %v5125 = vadd.f32 %v4867, %v5099
      %v5126 = vadd.f32 %v5045, %v5100
      %v5127 = vadd.f32 %v4870, %v5099
      %v5128 = vadd.f32 %v5048, %v5100
      %v5129 = vadd.f32 %v4872, %v5099
      %v5130 = vadd.f32 %v5050, %v5100
      %v5131 = vadd.f32 %v4875, %v5099
      %v5132 = vadd.f32 %v5053, %v5100
      %v5133 = vadd.f32 %v4877, %v5099
      %v5134 = vadd.f32 %v5055, %v5100
      %v5135 = vadd.f32 %v4880, %v5099
      %v5136 = vadd.f32 %v5058, %v5100
      %v5137 = vadd.f32 %v4882, %v5099
      %v5138 = vadd.f32 %v5060, %v5100
      %v5139 = vadd.f32 %v4885, %v5099
      %v5140 = vadd.f32 %v5063, %v5100
      %v5141 = vadd.f32 %v4887, %v5099
      %v5142 = vadd.f32 %v5065, %v5100
      %v5143 = vadd.f32 %v4890, %v5099
      %v5144 = vadd.f32 %v5068, %v5100
      %v5145 = vadd.f32 %v4892, %v5099
      %v5146 = vadd.f32 %v5070, %v5100
      %v5147 = vadd.f32 %v4895, %v5099
      %v5148 = vadd.f32 %v5073, %v5100
      %v5149 = vadd.f32 %v4897, %v5099
      %v5150 = vadd.f32 %v5075, %v5100
      %v5151 = vadd.f32 %v4900, %v5099
      %v5152 = vadd.f32 %v5078, %v5100
      %v5153 = vadd.f32 %v4902, %v5099
      %v5154 = vadd.f32 %v5080, %v5100
      %v5155 = vadd.f32 %v4905, %v5099
      %v5156 = vadd.f32 %v5083, %v5100
      %v5157 = vadd.f32 %v4907, %v5099
      %v5158 = vadd.f32 %v5085, %v5100
      %v5159 = vadd.f32 %v4910, %v5099
      %v5160 = vadd.f32 %v5088, %v5100
      %v5161 = vadd.f32 %v4912, %v5099
      %v5162 = vadd.f32 %v5090, %v5100
      %v5163 = vadd.f32 %v4915, %v5099
      %v5164 = vadd.f32 %v5093, %v5100
      %v5165 = vadd.f32 %v4917, %v5099
      %v5166 = vadd.f32 %v5095, %v5100
      %v5167 = vpack.c.bf16 %v5104, %v5103
      %v5168 = vpack.c.bf16 %v5106, %v5105
      %v5169 = vpack.c.bf16 %v5108, %v5107
      %v5170 = vpack.c.bf16 %v5110, %v5109
      %v5171 = vpack.c.bf16 %v5112, %v5111
      %v5172 = vpack.c.bf16 %v5114, %v5113
      %v5173 = vpack.c.bf16 %v5116, %v5115
      %v5174 = vpack.c.bf16 %v5118, %v5117
      %v5175 = vpack.c.bf16 %v5120, %v5119
      %v5176 = vpack.c.bf16 %v5122, %v5121
      %v5177 = vpack.c.bf16 %v5124, %v5123
      %v5178 = vpack.c.bf16 %v5126, %v5125
      %v5179 = vpack.c.bf16 %v5128, %v5127
      %v5180 = vpack.c.bf16 %v5130, %v5129
      %v5181 = vpack.c.bf16 %v5132, %v5131
      %v5182 = vpack.c.bf16 %v5134, %v5133
      %v5183 = vpack.c.bf16 %v5136, %v5135
      %v5184 = vpack.c.bf16 %v5138, %v5137
      %v5185 = vpack.c.bf16 %v5140, %v5139
      %v5186 = vpack.c.bf16 %v5142, %v5141
      %v5187 = vpack.c.bf16 %v5144, %v5143
      %v5188 = vpack.c.bf16 %v5146, %v5145
      %v5189 = vpack.c.bf16 %v5148, %v5147
      %v5190 = vpack.c.bf16 %v5150, %v5149
      %v5191 = vpack.c.bf16 %v5152, %v5151
      %v5192 = vpack.c.bf16 %v5154, %v5153
      %v5193 = vpack.c.bf16 %v5156, %v5155
      %v5194 = vpack.c.bf16 %v5158, %v5157
      %v5195 = vpack.c.bf16 %v5160, %v5159
      %v5196 = vpack.c.bf16 %v5162, %v5161
      %v5197 = vpack.c.bf16 %v5164, %v5163
      %v5198 = vpack.c.bf16 %v5166, %v5165
      %v5199 = vunpack.c.l.bf16 %v5167
      %v5200 = vunpack.c.h.bf16 %v5167
      %v5201 = vunpack.c.l.bf16 %v5168
      %v5202 = vunpack.c.h.bf16 %v5168
      %v5203 = vunpack.c.l.bf16 %v5169
      %v5204 = vunpack.c.h.bf16 %v5169
      %v5205 = vunpack.c.l.bf16 %v5170
      %v5206 = vunpack.c.h.bf16 %v5170
      %v5207 = vunpack.c.l.bf16 %v5171
      %v5208 = vunpack.c.h.bf16 %v5171
      %v5209 = vunpack.c.l.bf16 %v5172
      %v5210 = vunpack.c.h.bf16 %v5172
      %v5211 = vunpack.c.l.bf16 %v5173
      %v5212 = vunpack.c.h.bf16 %v5173
      %v5213 = vunpack.c.l.bf16 %v5174
      %v5214 = vunpack.c.h.bf16 %v5174
      %v5215 = vunpack.c.l.bf16 %v5175
      %v5216 = vunpack.c.h.bf16 %v5175
      %v5217 = vunpack.c.l.bf16 %v5176
      %v5218 = vunpack.c.h.bf16 %v5176
      %v5219 = vunpack.c.l.bf16 %v5177
      %v5220 = vunpack.c.h.bf16 %v5177
      %v5221 = vunpack.c.l.bf16 %v5178
      %v5222 = vunpack.c.h.bf16 %v5178
      %v5223 = vunpack.c.l.bf16 %v5179
      %v5224 = vunpack.c.h.bf16 %v5179
      %v5225 = vunpack.c.l.bf16 %v5180
      %v5226 = vunpack.c.h.bf16 %v5180
      %v5227 = vunpack.c.l.bf16 %v5181
      %v5228 = vunpack.c.h.bf16 %v5181
      %v5229 = vunpack.c.l.bf16 %v5182
      %v5230 = vunpack.c.h.bf16 %v5182
      %v5231 = vunpack.c.l.bf16 %v5183
      %v5232 = vunpack.c.h.bf16 %v5183
      %v5233 = vunpack.c.l.bf16 %v5184
      %v5234 = vunpack.c.h.bf16 %v5184
      %v5235 = vunpack.c.l.bf16 %v5185
      %v5236 = vunpack.c.h.bf16 %v5185
      %v5237 = vunpack.c.l.bf16 %v5186
      %v5238 = vunpack.c.h.bf16 %v5186
      %v5239 = vunpack.c.l.bf16 %v5187
      %v5240 = vunpack.c.h.bf16 %v5187
      %v5241 = vunpack.c.l.bf16 %v5188
      %v5242 = vunpack.c.h.bf16 %v5188
      %v5243 = vunpack.c.l.bf16 %v5189
      %v5244 = vunpack.c.h.bf16 %v5189
      %v5245 = vunpack.c.l.bf16 %v5190
      %v5246 = vunpack.c.h.bf16 %v5190
      %v5247 = vunpack.c.l.bf16 %v5191
      %v5248 = vunpack.c.h.bf16 %v5191
      %v5249 = vunpack.c.l.bf16 %v5192
      %v5250 = vunpack.c.h.bf16 %v5192
      %v5251 = vunpack.c.l.bf16 %v5193
      %v5252 = vunpack.c.h.bf16 %v5193
      %v5253 = vunpack.c.l.bf16 %v5194
      %v5254 = vunpack.c.h.bf16 %v5194
      %v5255 = vunpack.c.l.bf16 %v5195
      %v5256 = vunpack.c.h.bf16 %v5195
      %v5257 = vunpack.c.l.bf16 %v5196
      %v5258 = vunpack.c.h.bf16 %v5196
      %v5259 = vunpack.c.l.bf16 %v5197
      %v5260 = vunpack.c.h.bf16 %v5197
      %v5261 = vunpack.c.l.bf16 %v5198
      %v5262 = vunpack.c.h.bf16 %v5198
      %v5263 = vmax.f32 %v5199, 0.0
      %v5264 = vmax.f32 %v5200, 0.0
      %v5265 = vmax.f32 %v5201, 0.0
      %v5266 = vmax.f32 %v5202, 0.0
      %v5267 = vmax.f32 %v5203, 0.0
      %v5268 = vmax.f32 %v5204, 0.0
      %v5269 = vmax.f32 %v5205, 0.0
      %v5270 = vmax.f32 %v5206, 0.0
      %v5271 = vmax.f32 %v5207, 0.0
      %v5272 = vmax.f32 %v5208, 0.0
      %v5273 = vmax.f32 %v5209, 0.0
      %v5274 = vmax.f32 %v5210, 0.0
      %v5275 = vmax.f32 %v5211, 0.0
      %v5276 = vmax.f32 %v5212, 0.0
      %v5277 = vmax.f32 %v5213, 0.0
      %v5278 = vmax.f32 %v5214, 0.0
      %v5279 = vmax.f32 %v5215, 0.0
      %v5280 = vmax.f32 %v5216, 0.0
      %v5281 = vmax.f32 %v5217, 0.0
      %v5282 = vmax.f32 %v5218, 0.0
      %v5283 = vmax.f32 %v5219, 0.0
      %v5284 = vmax.f32 %v5220, 0.0
      %v5285 = vmax.f32 %v5221, 0.0
      %v5286 = vmax.f32 %v5222, 0.0
      %v5287 = vmax.f32 %v5223, 0.0
      %v5288 = vmax.f32 %v5224, 0.0
      %v5289 = vmax.f32 %v5225, 0.0
      %v5290 = vmax.f32 %v5226, 0.0
      %v5291 = vmax.f32 %v5227, 0.0
      %v5292 = vmax.f32 %v5228, 0.0
      %v5293 = vmax.f32 %v5229, 0.0
      %v5294 = vmax.f32 %v5230, 0.0
      %v5295 = vmax.f32 %v5231, 0.0
      %v5296 = vmax.f32 %v5232, 0.0
      %v5297 = vmax.f32 %v5233, 0.0
      %v5298 = vmax.f32 %v5234, 0.0
      %v5299 = vmax.f32 %v5235, 0.0
      %v5300 = vmax.f32 %v5236, 0.0
      %v5301 = vmax.f32 %v5237, 0.0
      %v5302 = vmax.f32 %v5238, 0.0
      %v5303 = vmax.f32 %v5239, 0.0
      %v5304 = vmax.f32 %v5240, 0.0
      %v5305 = vmax.f32 %v5241, 0.0
      %v5306 = vmax.f32 %v5242, 0.0
      %v5307 = vmax.f32 %v5243, 0.0
      %v5308 = vmax.f32 %v5244, 0.0
      %v5309 = vmax.f32 %v5245, 0.0
      %v5310 = vmax.f32 %v5246, 0.0
      %v5311 = vmax.f32 %v5247, 0.0
      %v5312 = vmax.f32 %v5248, 0.0
      %v5313 = vmax.f32 %v5249, 0.0
      %v5314 = vmax.f32 %v5250, 0.0
      %v5315 = vmax.f32 %v5251, 0.0
      %v5316 = vmax.f32 %v5252, 0.0
      %v5317 = vmax.f32 %v5253, 0.0
      %v5318 = vmax.f32 %v5254, 0.0
      %v5319 = vmax.f32 %v5255, 0.0
      %v5320 = vmax.f32 %v5256, 0.0
      %v5321 = vmax.f32 %v5257, 0.0
      %v5322 = vmax.f32 %v5258, 0.0
      %v5323 = vmax.f32 %v5259, 0.0
      %v5324 = vmax.f32 %v5260, 0.0
      %v5325 = vmax.f32 %v5261, 0.0
      %v5326 = vmax.f32 %v5262, 0.0
      %v5327 = vpack.c.bf16 %v5265, %v5263
      %v5328 = vpack.c.bf16 %v5266, %v5264
      %v5329 = vpack.c.bf16 %v5269, %v5267
      %v5330 = vpack.c.bf16 %v5270, %v5268
      %v5331 = vpack.c.bf16 %v5273, %v5271
      %v5332 = vpack.c.bf16 %v5274, %v5272
      %v5333 = vpack.c.bf16 %v5277, %v5275
      %v5334 = vpack.c.bf16 %v5278, %v5276
      %v5335 = vpack.c.bf16 %v5281, %v5279
      %v5336 = vpack.c.bf16 %v5282, %v5280
      %v5337 = vpack.c.bf16 %v5285, %v5283
      %v5338 = vpack.c.bf16 %v5286, %v5284
      %v5339 = vpack.c.bf16 %v5289, %v5287
      %v5340 = vpack.c.bf16 %v5290, %v5288
      %v5341 = vpack.c.bf16 %v5293, %v5291
      %v5342 = vpack.c.bf16 %v5294, %v5292
      %v5343 = vpack.c.bf16 %v5297, %v5295
      %v5344 = vpack.c.bf16 %v5298, %v5296
      %v5345 = vpack.c.bf16 %v5301, %v5299
      %v5346 = vpack.c.bf16 %v5302, %v5300
      %v5347 = vpack.c.bf16 %v5305, %v5303
      %v5348 = vpack.c.bf16 %v5306, %v5304
      %v5349 = vpack.c.bf16 %v5309, %v5307
      %v5350 = vpack.c.bf16 %v5310, %v5308
      %v5351 = vpack.c.bf16 %v5313, %v5311
      %v5352 = vpack.c.bf16 %v5314, %v5312
      %v5353 = vpack.c.bf16 %v5317, %v5315
      %v5354 = vpack.c.bf16 %v5318, %v5316
      %v5355 = vpack.c.bf16 %v5321, %v5319
      %v5356 = vpack.c.bf16 %v5322, %v5320
      %v5357 = vpack.c.bf16 %v5325, %v5323
      %v5358 = vpack.c.bf16 %v5326, %v5324
      %v5359 = vld [vmem:[%s13] sm:$0xff]
      %v5360 = vld [vmem:[%s13 + $0x8] sm:$0xff]
      %v5361 = vld [vmem:[%s13 + $0x10] sm:$0xff]
      %v5362 = vld [vmem:[%s13 + $0x18] sm:$0xff]
      %v5363 = vld [vmem:[%s13 + $0x20] sm:$0xff]
      %v5364 = vld [vmem:[%s13 + $0x28] sm:$0xff]
      %v5365 = vld [vmem:[%s13 + $0x30] sm:$0xff]
      %v5366 = vld [vmem:[%s13 + $0x38] sm:$0xff]
      %v5367 = vld [vmem:[%s13 + $0x40] sm:$0xff]
      %v5368 = vld [vmem:[%s13 + $0x48] sm:$0xff]
      %v5369 = vld [vmem:[%s13 + $0x50] sm:$0xff]
      %v5370 = vld [vmem:[%s13 + $0x58] sm:$0xff]
      %v5371 = vld [vmem:[%s13 + $0x60] sm:$0xff]
      %v5372 = vld [vmem:[%s13 + $0x68] sm:$0xff]
      %v5373 = vld [vmem:[%s13 + $0x70] sm:$0xff]
      %v5374 = vld [vmem:[%s13 + $0x78] sm:$0xff]
      %v5375 = vld [vmem:[%s13 + $0x80] sm:$0xff]
      %v5376 = vld [vmem:[%s13 + $0x88] sm:$0xff]
      %v5377 = vld [vmem:[%s13 + $0x90] sm:$0xff]
      %v5378 = vld [vmem:[%s13 + $0x98] sm:$0xff]
      %v5379 = vld [vmem:[%s13 + $0xa0] sm:$0xff]
      %v5380 = vld [vmem:[%s13 + $0xa8] sm:$0xff]
      %v5381 = vld [vmem:[%s13 + $0xb0] sm:$0xff]
      %v5382 = vld [vmem:[%s13 + $0xb8] sm:$0xff]
      %v5383 = vld [vmem:[%s13 + $0xc0] sm:$0xff]
      %v5384 = vld [vmem:[%s13 + $0xc8] sm:$0xff]
      %v5385 = vld [vmem:[%s13 + $0xd0] sm:$0xff]
      %v5386 = vld [vmem:[%s13 + $0xd8] sm:$0xff]
      %v5387 = vld [vmem:[%s13 + $0xe0] sm:$0xff]
      %v5388 = vld [vmem:[%s13 + $0xe8] sm:$0xff]
      %v5389 = vld [vmem:[%s13 + $0xf0] sm:$0xff]
      %v5390 = vld [vmem:[%s13 + $0xf8] sm:$0xff]
      %v5391 = vld [vmem:[%s14] sm:$0x3]
      %v5393 = vperm.slane %v5391, 0
      %v5394 = vperm.slane %v5391, 1
      %v5429 = vunpack.c.l.b16 %v5359
      %v5430 = vunpack.c.h.b16 %v5359
      %v5431 = vunpack.c.l.b16 %v5360
      %v5432 = vunpack.c.h.b16 %v5360
      %v5433 = vunpack.c.l.b16 %v5361
      %v5434 = vunpack.c.h.b16 %v5361
      %v5435 = vunpack.c.l.b16 %v5362
      %v5436 = vunpack.c.h.b16 %v5362
      %v5437 = vunpack.c.l.b16 %v5363
      %v5438 = vunpack.c.h.b16 %v5363
      %v5439 = vunpack.c.l.b16 %v5364
      %v5440 = vunpack.c.h.b16 %v5364
      %v5441 = vunpack.c.l.b16 %v5365
      %v5442 = vunpack.c.h.b16 %v5365
      %v5443 = vunpack.c.l.b16 %v5366
      %v5444 = vunpack.c.h.b16 %v5366
      %v5445 = vunpack.c.l.b16 %v5367
      %v5446 = vunpack.c.h.b16 %v5367
      %v5447 = vunpack.c.l.b16 %v5368
      %v5448 = vunpack.c.h.b16 %v5368
      %v5449 = vunpack.c.l.b16 %v5369
      %v5450 = vunpack.c.h.b16 %v5369
      %v5451 = vunpack.c.l.b16 %v5370
      %v5452 = vunpack.c.h.b16 %v5370
      %v5453 = vunpack.c.l.b16 %v5371
      %v5454 = vunpack.c.h.b16 %v5371
      %v5455 = vunpack.c.l.b16 %v5372
      %v5456 = vunpack.c.h.b16 %v5372
      %v5457 = vunpack.c.l.b16 %v5373
      %v5458 = vunpack.c.h.b16 %v5373
      %v5459 = vunpack.c.l.b16 %v5374
      %v5460 = vunpack.c.h.b16 %v5374
      %v5461 = vunpack.c.l.b16 %v5375
      %v5462 = vunpack.c.h.b16 %v5375
      %v5463 = vunpack.c.l.b16 %v5376
      %v5464 = vunpack.c.h.b16 %v5376
      %v5465 = vunpack.c.l.b16 %v5377
      %v5466 = vunpack.c.h.b16 %v5377
      %v5467 = vunpack.c.l.b16 %v5378
      %v5468 = vunpack.c.h.b16 %v5378
      %v5469 = vunpack.c.l.b16 %v5379
      %v5470 = vunpack.c.h.b16 %v5379
      %v5471 = vunpack.c.l.b16 %v5380
      %v5472 = vunpack.c.h.b16 %v5380
      %v5473 = vunpack.c.l.b16 %v5381
      %v5474 = vunpack.c.h.b16 %v5381
      %v5475 = vunpack.c.l.b16 %v5382
      %v5476 = vunpack.c.h.b16 %v5382
      %v5477 = vunpack.c.l.b16 %v5383
      %v5478 = vunpack.c.h.b16 %v5383
      %v5479 = vunpack.c.l.b16 %v5384
      %v5480 = vunpack.c.h.b16 %v5384
      %v5481 = vunpack.c.l.b16 %v5385
      %v5482 = vunpack.c.h.b16 %v5385
      %v5483 = vunpack.c.l.b16 %v5386
      %v5484 = vunpack.c.h.b16 %v5386
      %v5485 = vunpack.c.l.b16 %v5387
      %v5486 = vunpack.c.h.b16 %v5387
      %v5487 = vunpack.c.l.b16 %v5388
      %v5488 = vunpack.c.h.b16 %v5388
      %v5489 = vunpack.c.l.b16 %v5389
      %v5490 = vunpack.c.h.b16 %v5389
      %v5491 = vunpack.c.l.b16 %v5390
      %v5492 = vunpack.c.h.b16 %v5390
      %v5493 = vpack.c.b16 %v5431, %v5429
      %v5494 = vpack.c.b16 %v5432, %v5430
      %v5495 = vpack.c.b16 %v5435, %v5433
      %v5496 = vpack.c.b16 %v5436, %v5434
      %v5497 = vpack.c.b16 %v5439, %v5437
      %v5498 = vpack.c.b16 %v5440, %v5438
      %v5499 = vpack.c.b16 %v5443, %v5441
      %v5500 = vpack.c.b16 %v5444, %v5442
      %v5501 = vpack.c.b16 %v5447, %v5445
      %v5502 = vpack.c.b16 %v5448, %v5446
      %v5503 = vpack.c.b16 %v5451, %v5449
      %v5504 = vpack.c.b16 %v5452, %v5450
      %v5505 = vpack.c.b16 %v5455, %v5453
      %v5506 = vpack.c.b16 %v5456, %v5454
      %v5507 = vpack.c.b16 %v5459, %v5457
      %v5508 = vpack.c.b16 %v5460, %v5458
      %v5509 = vpack.c.b16 %v5463, %v5461
      %v5510 = vpack.c.b16 %v5464, %v5462
      %v5511 = vpack.c.b16 %v5467, %v5465
      %v5512 = vpack.c.b16 %v5468, %v5466
      %v5513 = vpack.c.b16 %v5471, %v5469
      %v5514 = vpack.c.b16 %v5472, %v5470
      %v5515 = vpack.c.b16 %v5475, %v5473
      %v5516 = vpack.c.b16 %v5476, %v5474
      %v5517 = vpack.c.b16 %v5479, %v5477
      %v5518 = vpack.c.b16 %v5480, %v5478
      %v5519 = vpack.c.b16 %v5483, %v5481
      %v5520 = vpack.c.b16 %v5484, %v5482
      %v5521 = vpack.c.b16 %v5487, %v5485
      %v5522 = vpack.c.b16 %v5488, %v5486
      %v5523 = vpack.c.b16 %v5491, %v5489
      %v5524 = vpack.c.b16 %v5492, %v5490
      %5557 = vmatpush.bf16.msra.mxu0 %v5507
      %5558 = vmatpush.bf16.msra.mxu0 %v5505
      %5559 = vmatpush.bf16.msra.mxu0 %v5503
      %5560 = vmatpush.bf16.msra.mxu0 %v5501
      %5561 = vmatpush.bf16.msra.mxu0 %v5499
      %5562 = vmatpush.bf16.msra.mxu0 %v5497
      %5563 = vmatpush.bf16.msra.mxu0 %v5495
      %5564 = vmatpush.bf16.msra.mxu0 %v5493
      %5565 = vmatmul.bf16.gmra.mxu0 %v5327
      %v5566 = vpop.f32.mrf.mxu0
      %v5567 = vadd.f32 %v5393, %v5566
      %v5568 = vpop.f32.mrf.mxu0
      %v5569 = vadd.f32 %v5393, %v5568
      %5570 = vmatmul.bf16.gmra.mxu0 %v5329
      %v5571 = vpop.f32.mrf.mxu0
      %v5572 = vadd.f32 %v5393, %v5571
      %v5573 = vpop.f32.mrf.mxu0
      %v5574 = vadd.f32 %v5393, %v5573
      %5575 = vmatmul.bf16.gmra.mxu0 %v5331
      %v5576 = vpop.f32.mrf.mxu0
      %v5577 = vadd.f32 %v5393, %v5576
      %v5578 = vpop.f32.mrf.mxu0
      %v5579 = vadd.f32 %v5393, %v5578
      %5580 = vmatmul.bf16.gmra.mxu0 %v5333
      %v5581 = vpop.f32.mrf.mxu0
      %v5582 = vadd.f32 %v5393, %v5581
      %v5583 = vpop.f32.mrf.mxu0
      %v5584 = vadd.f32 %v5393, %v5583
      %5585 = vmatmul.bf16.gmra.mxu0 %v5335
      %v5586 = vpop.f32.mrf.mxu0
      %v5587 = vadd.f32 %v5393, %v5586
      %v5588 = vpop.f32.mrf.mxu0
      %v5589 = vadd.f32 %v5393, %v5588
      %5590 = vmatmul.bf16.gmra.mxu0 %v5337
      %v5591 = vpop.f32.mrf.mxu0
      %v5592 = vadd.f32 %v5393, %v5591
      %v5593 = vpop.f32.mrf.mxu0
      %v5594 = vadd.f32 %v5393, %v5593
      %5595 = vmatmul.bf16.gmra.mxu0 %v5339
      %v5596 = vpop.f32.mrf.mxu0
      %v5597 = vadd.f32 %v5393, %v5596
      %v5598 = vpop.f32.mrf.mxu0
      %v5599 = vadd.f32 %v5393, %v5598
      %5600 = vmatmul.bf16.gmra.mxu0 %v5341
      %v5601 = vpop.f32.mrf.mxu0
      %v5602 = vadd.f32 %v5393, %v5601
      %v5603 = vpop.f32.mrf.mxu0
      %v5604 = vadd.f32 %v5393, %v5603
      %5605 = vmatmul.bf16.gmra.mxu0 %v5343
      %v5606 = vpop.f32.mrf.mxu0
      %v5607 = vadd.f32 %v5393, %v5606
      %v5608 = vpop.f32.mrf.mxu0
      %v5609 = vadd.f32 %v5393, %v5608
      %5610 = vmatmul.bf16.gmra.mxu0 %v5345
      %v5611 = vpop.f32.mrf.mxu0
      %v5612 = vadd.f32 %v5393, %v5611
      %v5613 = vpop.f32.mrf.mxu0
      %v5614 = vadd.f32 %v5393, %v5613
      %5615 = vmatmul.bf16.gmra.mxu0 %v5347
      %v5616 = vpop.f32.mrf.mxu0
      %v5617 = vadd.f32 %v5393, %v5616
      %v5618 = vpop.f32.mrf.mxu0
      %v5619 = vadd.f32 %v5393, %v5618
      %5620 = vmatmul.bf16.gmra.mxu0 %v5349
      %v5621 = vpop.f32.mrf.mxu0
      %v5622 = vadd.f32 %v5393, %v5621
      %v5623 = vpop.f32.mrf.mxu0
      %v5624 = vadd.f32 %v5393, %v5623
      %5625 = vmatmul.bf16.gmra.mxu0 %v5351
      %v5626 = vpop.f32.mrf.mxu0
      %v5627 = vadd.f32 %v5393, %v5626
      %v5628 = vpop.f32.mrf.mxu0
      %v5629 = vadd.f32 %v5393, %v5628
      %5630 = vmatmul.bf16.gmra.mxu0 %v5353
      %v5631 = vpop.f32.mrf.mxu0
      %v5632 = vadd.f32 %v5393, %v5631
      %v5633 = vpop.f32.mrf.mxu0
      %v5634 = vadd.f32 %v5393, %v5633
      %5635 = vmatmul.bf16.gmra.mxu0 %v5355
      %v5636 = vpop.f32.mrf.mxu0
      %v5637 = vadd.f32 %v5393, %v5636
      %v5638 = vpop.f32.mrf.mxu0
      %v5639 = vadd.f32 %v5393, %v5638
      %5640 = vmatmul.bf16.gmra.mxu0 %v5357
      %v5641 = vpop.f32.mrf.mxu0
      %v5642 = vadd.f32 %v5393, %v5641
      %v5643 = vpop.f32.mrf.mxu0
      %v5644 = vadd.f32 %v5393, %v5643
      %5645 = vdwg.mxu0
      %5646 = vmatpush.bf16.msra.mxu0 %v5523
      %5647 = vmatpush.bf16.msra.mxu0 %v5521
      %5648 = vmatpush.bf16.msra.mxu0 %v5519
      %5649 = vmatpush.bf16.msra.mxu0 %v5517
      %5650 = vmatpush.bf16.msra.mxu0 %v5515
      %5651 = vmatpush.bf16.msra.mxu0 %v5513
      %5652 = vmatpush.bf16.msra.mxu0 %v5511
      %5653 = vmatpush.bf16.msra.mxu0 %v5509
      %5654 = vmatmul.bf16.gmra.mxu0 %v5328
      %v5655 = vpop.f32.mrf.mxu0
      %v5656 = vadd.f32 %v5567, %v5655
      %v5657 = vpop.f32.mrf.mxu0
      %v5658 = vadd.f32 %v5569, %v5657
      %5659 = vmatmul.bf16.gmra.mxu0 %v5330
      %v5660 = vpop.f32.mrf.mxu0
      %v5661 = vadd.f32 %v5572, %v5660
      %v5662 = vpop.f32.mrf.mxu0
      %v5663 = vadd.f32 %v5574, %v5662
      %5664 = vmatmul.bf16.gmra.mxu0 %v5332
      %v5665 = vpop.f32.mrf.mxu0
      %v5666 = vadd.f32 %v5577, %v5665
      %v5667 = vpop.f32.mrf.mxu0
      %v5668 = vadd.f32 %v5579, %v5667
      %5669 = vmatmul.bf16.gmra.mxu0 %v5334
      %v5670 = vpop.f32.mrf.mxu0
      %v5671 = vadd.f32 %v5582, %v5670
      %v5672 = vpop.f32.mrf.mxu0
      %v5673 = vadd.f32 %v5584, %v5672
      %5674 = vmatmul.bf16.gmra.mxu0 %v5336
      %v5675 = vpop.f32.mrf.mxu0
      %v5676 = vadd.f32 %v5587, %v5675
      %v5677 = vpop.f32.mrf.mxu0
      %v5678 = vadd.f32 %v5589, %v5677
      %5679 = vmatmul.bf16.gmra.mxu0 %v5338
      %v5680 = vpop.f32.mrf.mxu0
      %v5681 = vadd.f32 %v5592, %v5680
      %v5682 = vpop.f32.mrf.mxu0
      %v5683 = vadd.f32 %v5594, %v5682
      %5684 = vmatmul.bf16.gmra.mxu0 %v5340
      %v5685 = vpop.f32.mrf.mxu0
      %v5686 = vadd.f32 %v5597, %v5685
      %v5687 = vpop.f32.mrf.mxu0
      %v5688 = vadd.f32 %v5599, %v5687
      %5689 = vmatmul.bf16.gmra.mxu0 %v5342
      %v5690 = vpop.f32.mrf.mxu0
      %v5691 = vadd.f32 %v5602, %v5690
      %v5692 = vpop.f32.mrf.mxu0
      %v5693 = vadd.f32 %v5604, %v5692
      %5694 = vmatmul.bf16.gmra.mxu0 %v5344
      %v5695 = vpop.f32.mrf.mxu0
      %v5696 = vadd.f32 %v5607, %v5695
      %v5697 = vpop.f32.mrf.mxu0
      %v5698 = vadd.f32 %v5609, %v5697
      %5699 = vmatmul.bf16.gmra.mxu0 %v5346
      %v5700 = vpop.f32.mrf.mxu0
      %v5701 = vadd.f32 %v5612, %v5700
      %v5702 = vpop.f32.mrf.mxu0
      %v5703 = vadd.f32 %v5614, %v5702
      %5704 = vmatmul.bf16.gmra.mxu0 %v5348
      %v5705 = vpop.f32.mrf.mxu0
      %v5706 = vadd.f32 %v5617, %v5705
      %v5707 = vpop.f32.mrf.mxu0
      %v5708 = vadd.f32 %v5619, %v5707
      %5709 = vmatmul.bf16.gmra.mxu0 %v5350
      %v5710 = vpop.f32.mrf.mxu0
      %v5711 = vadd.f32 %v5622, %v5710
      %v5712 = vpop.f32.mrf.mxu0
      %v5713 = vadd.f32 %v5624, %v5712
      %5714 = vmatmul.bf16.gmra.mxu0 %v5352
      %v5715 = vpop.f32.mrf.mxu0
      %v5716 = vadd.f32 %v5627, %v5715
      %v5717 = vpop.f32.mrf.mxu0
      %v5718 = vadd.f32 %v5629, %v5717
      %5719 = vmatmul.bf16.gmra.mxu0 %v5354
      %v5720 = vpop.f32.mrf.mxu0
      %v5721 = vadd.f32 %v5632, %v5720
      %v5722 = vpop.f32.mrf.mxu0
      %v5723 = vadd.f32 %v5634, %v5722
      %5724 = vmatmul.bf16.gmra.mxu0 %v5356
      %v5725 = vpop.f32.mrf.mxu0
      %v5726 = vadd.f32 %v5637, %v5725
      %v5727 = vpop.f32.mrf.mxu0
      %v5728 = vadd.f32 %v5639, %v5727
      %5729 = vmatmul.bf16.gmra.mxu0 %v5358
      %v5730 = vpop.f32.mrf.mxu0
      %v5731 = vadd.f32 %v5642, %v5730
      %v5732 = vpop.f32.mrf.mxu0
      %v5733 = vadd.f32 %v5644, %v5732
      %5734 = vdwg.mxu0
      %5735 = vmatpush.bf16.msra.mxu0 %v5508
      %5736 = vmatpush.bf16.msra.mxu0 %v5506
      %5737 = vmatpush.bf16.msra.mxu0 %v5504
      %5738 = vmatpush.bf16.msra.mxu0 %v5502
      %5739 = vmatpush.bf16.msra.mxu0 %v5500
      %5740 = vmatpush.bf16.msra.mxu0 %v5498
      %5741 = vmatpush.bf16.msra.mxu0 %v5496
      %5742 = vmatpush.bf16.msra.mxu0 %v5494
      %5743 = vmatmul.bf16.gmra.mxu0 %v5327
      %v5744 = vpop.f32.mrf.mxu0
      %v5745 = vadd.f32 %v5394, %v5744
      %v5746 = vpop.f32.mrf.mxu0
      %v5747 = vadd.f32 %v5394, %v5746
      %5748 = vmatmul.bf16.gmra.mxu0 %v5329
      %v5749 = vpop.f32.mrf.mxu0
      %v5750 = vadd.f32 %v5394, %v5749
      %v5751 = vpop.f32.mrf.mxu0
      %v5752 = vadd.f32 %v5394, %v5751
      %5753 = vmatmul.bf16.gmra.mxu0 %v5331
      %v5754 = vpop.f32.mrf.mxu0
      %v5755 = vadd.f32 %v5394, %v5754
      %v5756 = vpop.f32.mrf.mxu0
      %v5757 = vadd.f32 %v5394, %v5756
      %5758 = vmatmul.bf16.gmra.mxu0 %v5333
      %v5759 = vpop.f32.mrf.mxu0
      %v5760 = vadd.f32 %v5394, %v5759
      %v5761 = vpop.f32.mrf.mxu0
      %v5762 = vadd.f32 %v5394, %v5761
      %5763 = vmatmul.bf16.gmra.mxu0 %v5335
      %v5764 = vpop.f32.mrf.mxu0
      %v5765 = vadd.f32 %v5394, %v5764
      %v5766 = vpop.f32.mrf.mxu0
      %v5767 = vadd.f32 %v5394, %v5766
      %5768 = vmatmul.bf16.gmra.mxu0 %v5337
      %v5769 = vpop.f32.mrf.mxu0
      %v5770 = vadd.f32 %v5394, %v5769
      %v5771 = vpop.f32.mrf.mxu0
      %v5772 = vadd.f32 %v5394, %v5771
      %5773 = vmatmul.bf16.gmra.mxu0 %v5339
      %v5774 = vpop.f32.mrf.mxu0
      %v5775 = vadd.f32 %v5394, %v5774
      %v5776 = vpop.f32.mrf.mxu0
      %v5777 = vadd.f32 %v5394, %v5776
      %5778 = vmatmul.bf16.gmra.mxu0 %v5341
      %v5779 = vpop.f32.mrf.mxu0
      %v5780 = vadd.f32 %v5394, %v5779
      %v5781 = vpop.f32.mrf.mxu0
      %v5782 = vadd.f32 %v5394, %v5781
      %5783 = vmatmul.bf16.gmra.mxu0 %v5343
      %v5784 = vpop.f32.mrf.mxu0
      %v5785 = vadd.f32 %v5394, %v5784
      %v5786 = vpop.f32.mrf.mxu0
      %v5787 = vadd.f32 %v5394, %v5786
      %5788 = vmatmul.bf16.gmra.mxu0 %v5345
      %v5789 = vpop.f32.mrf.mxu0
      %v5790 = vadd.f32 %v5394, %v5789
      %v5791 = vpop.f32.mrf.mxu0
      %v5792 = vadd.f32 %v5394, %v5791
      %5793 = vmatmul.bf16.gmra.mxu0 %v5347
      %v5794 = vpop.f32.mrf.mxu0
      %v5795 = vadd.f32 %v5394, %v5794
      %v5796 = vpop.f32.mrf.mxu0
      %v5797 = vadd.f32 %v5394, %v5796
      %5798 = vmatmul.bf16.gmra.mxu0 %v5349
      %v5799 = vpop.f32.mrf.mxu0
      %v5800 = vadd.f32 %v5394, %v5799
      %v5801 = vpop.f32.mrf.mxu0
      %v5802 = vadd.f32 %v5394, %v5801
      %5803 = vmatmul.bf16.gmra.mxu0 %v5351
      %v5804 = vpop.f32.mrf.mxu0
      %v5805 = vadd.f32 %v5394, %v5804
      %v5806 = vpop.f32.mrf.mxu0
      %v5807 = vadd.f32 %v5394, %v5806
      %5808 = vmatmul.bf16.gmra.mxu0 %v5353
      %v5809 = vpop.f32.mrf.mxu0
      %v5810 = vadd.f32 %v5394, %v5809
      %v5811 = vpop.f32.mrf.mxu0
      %v5812 = vadd.f32 %v5394, %v5811
      %5813 = vmatmul.bf16.gmra.mxu0 %v5355
      %v5814 = vpop.f32.mrf.mxu0
      %v5815 = vadd.f32 %v5394, %v5814
      %v5816 = vpop.f32.mrf.mxu0
      %v5817 = vadd.f32 %v5394, %v5816
      %5818 = vmatmul.bf16.gmra.mxu0 %v5357
      %v5819 = vpop.f32.mrf.mxu0
      %v5820 = vadd.f32 %v5394, %v5819
      %v5821 = vpop.f32.mrf.mxu0
      %v5822 = vadd.f32 %v5394, %v5821
      %5823 = vdwg.mxu0
      %5824 = vmatpush.bf16.msra.mxu0 %v5524
      %5825 = vmatpush.bf16.msra.mxu0 %v5522
      %5826 = vmatpush.bf16.msra.mxu0 %v5520
      %5827 = vmatpush.bf16.msra.mxu0 %v5518
      %5828 = vmatpush.bf16.msra.mxu0 %v5516
      %5829 = vmatpush.bf16.msra.mxu0 %v5514
      %5830 = vmatpush.bf16.msra.mxu0 %v5512
      %5831 = vmatpush.bf16.msra.mxu0 %v5510
      %5832 = vmatmul.bf16.gmra.mxu0 %v5328
      %v5833 = vpop.f32.mrf.mxu0
      %v5834 = vadd.f32 %v5745, %v5833
      %v5835 = vpop.f32.mrf.mxu0
      %v5836 = vadd.f32 %v5747, %v5835
      %5837 = vmatmul.bf16.gmra.mxu0 %v5330
      %v5838 = vpop.f32.mrf.mxu0
      %v5839 = vadd.f32 %v5750, %v5838
      %v5840 = vpop.f32.mrf.mxu0
      %v5841 = vadd.f32 %v5752, %v5840
      %5842 = vmatmul.bf16.gmra.mxu0 %v5332
      %v5843 = vpop.f32.mrf.mxu0
      %v5844 = vadd.f32 %v5755, %v5843
      %v5845 = vpop.f32.mrf.mxu0
      %v5846 = vadd.f32 %v5757, %v5845
      %5847 = vmatmul.bf16.gmra.mxu0 %v5334
      %v5848 = vpop.f32.mrf.mxu0
      %v5849 = vadd.f32 %v5760, %v5848
      %v5850 = vpop.f32.mrf.mxu0
      %v5851 = vadd.f32 %v5762, %v5850
      %5852 = vmatmul.bf16.gmra.mxu0 %v5336
      %v5853 = vpop.f32.mrf.mxu0
      %v5854 = vadd.f32 %v5765, %v5853
      %v5855 = vpop.f32.mrf.mxu0
      %v5856 = vadd.f32 %v5767, %v5855
      %5857 = vmatmul.bf16.gmra.mxu0 %v5338
      %v5858 = vpop.f32.mrf.mxu0
      %v5859 = vadd.f32 %v5770, %v5858
      %v5860 = vpop.f32.mrf.mxu0
      %v5861 = vadd.f32 %v5772, %v5860
      %5862 = vmatmul.bf16.gmra.mxu0 %v5340
      %v5863 = vpop.f32.mrf.mxu0
      %v5864 = vadd.f32 %v5775, %v5863
      %v5865 = vpop.f32.mrf.mxu0
      %v5866 = vadd.f32 %v5777, %v5865
      %5867 = vmatmul.bf16.gmra.mxu0 %v5342
      %v5868 = vpop.f32.mrf.mxu0
      %v5869 = vadd.f32 %v5780, %v5868
      %v5870 = vpop.f32.mrf.mxu0
      %v5871 = vadd.f32 %v5782, %v5870
      %5872 = vmatmul.bf16.gmra.mxu0 %v5344
      %v5873 = vpop.f32.mrf.mxu0
      %v5874 = vadd.f32 %v5785, %v5873
      %v5875 = vpop.f32.mrf.mxu0
      %v5876 = vadd.f32 %v5787, %v5875
      %5877 = vmatmul.bf16.gmra.mxu0 %v5346
      %v5878 = vpop.f32.mrf.mxu0
      %v5879 = vadd.f32 %v5790, %v5878
      %v5880 = vpop.f32.mrf.mxu0
      %v5881 = vadd.f32 %v5792, %v5880
      %5882 = vmatmul.bf16.gmra.mxu0 %v5348
      %v5883 = vpop.f32.mrf.mxu0
      %v5884 = vadd.f32 %v5795, %v5883
      %v5885 = vpop.f32.mrf.mxu0
      %v5886 = vadd.f32 %v5797, %v5885
      %5887 = vmatmul.bf16.gmra.mxu0 %v5350
      %v5888 = vpop.f32.mrf.mxu0
      %v5889 = vadd.f32 %v5800, %v5888
      %v5890 = vpop.f32.mrf.mxu0
      %v5891 = vadd.f32 %v5802, %v5890
      %5892 = vmatmul.bf16.gmra.mxu0 %v5352
      %v5893 = vpop.f32.mrf.mxu0
      %v5894 = vadd.f32 %v5805, %v5893
      %v5895 = vpop.f32.mrf.mxu0
      %v5896 = vadd.f32 %v5807, %v5895
      %5897 = vmatmul.bf16.gmra.mxu0 %v5354
      %v5898 = vpop.f32.mrf.mxu0
      %v5899 = vadd.f32 %v5810, %v5898
      %v5900 = vpop.f32.mrf.mxu0
      %v5901 = vadd.f32 %v5812, %v5900
      %5902 = vmatmul.bf16.gmra.mxu0 %v5356
      %v5903 = vpop.f32.mrf.mxu0
      %v5904 = vadd.f32 %v5815, %v5903
      %v5905 = vpop.f32.mrf.mxu0
      %v5906 = vadd.f32 %v5817, %v5905
      %5907 = vmatmul.bf16.gmra.mxu0 %v5358
      %v5908 = vpop.f32.mrf.mxu0
      %v5909 = vadd.f32 %v5820, %v5908
      %v5910 = vpop.f32.mrf.mxu0
      %v5911 = vadd.f32 %v5822, %v5910
      %5912 = vdwg.mxu0
      %v5913 = vpack.c.bf16 %v5834, %v5656
      %v5914 = vpack.c.bf16 %v5836, %v5658
      %v5915 = vpack.c.bf16 %v5839, %v5661
      %v5916 = vpack.c.bf16 %v5841, %v5663
      %v5917 = vpack.c.bf16 %v5844, %v5666
      %v5918 = vpack.c.bf16 %v5846, %v5668
      %v5919 = vpack.c.bf16 %v5849, %v5671
      %v5920 = vpack.c.bf16 %v5851, %v5673
      %v5921 = vpack.c.bf16 %v5854, %v5676
      %v5922 = vpack.c.bf16 %v5856, %v5678
      %v5923 = vpack.c.bf16 %v5859, %v5681
      %v5924 = vpack.c.bf16 %v5861, %v5683
      %v5925 = vpack.c.bf16 %v5864, %v5686
      %v5926 = vpack.c.bf16 %v5866, %v5688
      %v5927 = vpack.c.bf16 %v5869, %v5691
      %v5928 = vpack.c.bf16 %v5871, %v5693
      %v5929 = vpack.c.bf16 %v5874, %v5696
      %v5930 = vpack.c.bf16 %v5876, %v5698
      %v5931 = vpack.c.bf16 %v5879, %v5701
      %v5932 = vpack.c.bf16 %v5881, %v5703
      %v5933 = vpack.c.bf16 %v5884, %v5706
      %v5934 = vpack.c.bf16 %v5886, %v5708
      %v5935 = vpack.c.bf16 %v5889, %v5711
      %v5936 = vpack.c.bf16 %v5891, %v5713
      %v5937 = vpack.c.bf16 %v5894, %v5716
      %v5938 = vpack.c.bf16 %v5896, %v5718
      %v5939 = vpack.c.bf16 %v5899, %v5721
      %v5940 = vpack.c.bf16 %v5901, %v5723
      %v5941 = vpack.c.bf16 %v5904, %v5726
      %v5942 = vpack.c.bf16 %v5906, %v5728
      %v5943 = vpack.c.bf16 %v5909, %v5731
      %v5944 = vpack.c.bf16 %v5911, %v5733
      %v5945 = vunpack.c.l.bf16 %v5913
      %v5946 = vunpack.c.h.bf16 %v5913
      %v5947 = vunpack.c.l.bf16 %v5914
      %v5948 = vunpack.c.h.bf16 %v5914
      %v5949 = vunpack.c.l.bf16 %v5915
      %v5950 = vunpack.c.h.bf16 %v5915
      %v5951 = vunpack.c.l.bf16 %v5916
      %v5952 = vunpack.c.h.bf16 %v5916
      %v5953 = vunpack.c.l.bf16 %v5917
      %v5954 = vunpack.c.h.bf16 %v5917
      %v5955 = vunpack.c.l.bf16 %v5918
      %v5956 = vunpack.c.h.bf16 %v5918
      %v5957 = vunpack.c.l.bf16 %v5919
      %v5958 = vunpack.c.h.bf16 %v5919
      %v5959 = vunpack.c.l.bf16 %v5920
      %v5960 = vunpack.c.h.bf16 %v5920
      %v5961 = vunpack.c.l.bf16 %v5921
      %v5962 = vunpack.c.h.bf16 %v5921
      %v5963 = vunpack.c.l.bf16 %v5922
      %v5964 = vunpack.c.h.bf16 %v5922
      %v5965 = vunpack.c.l.bf16 %v5923
      %v5966 = vunpack.c.h.bf16 %v5923
      %v5967 = vunpack.c.l.bf16 %v5924
      %v5968 = vunpack.c.h.bf16 %v5924
      %v5969 = vunpack.c.l.bf16 %v5925
      %v5970 = vunpack.c.h.bf16 %v5925
      %v5971 = vunpack.c.l.bf16 %v5926
      %v5972 = vunpack.c.h.bf16 %v5926
      %v5973 = vunpack.c.l.bf16 %v5927
      %v5974 = vunpack.c.h.bf16 %v5927
      %v5975 = vunpack.c.l.bf16 %v5928
      %v5976 = vunpack.c.h.bf16 %v5928
      %v5977 = vunpack.c.l.bf16 %v5929
      %v5978 = vunpack.c.h.bf16 %v5929
      %v5979 = vunpack.c.l.bf16 %v5930
      %v5980 = vunpack.c.h.bf16 %v5930
      %v5981 = vunpack.c.l.bf16 %v5931
      %v5982 = vunpack.c.h.bf16 %v5931
      %v5983 = vunpack.c.l.bf16 %v5932
      %v5984 = vunpack.c.h.bf16 %v5932
      %v5985 = vunpack.c.l.bf16 %v5933
      %v5986 = vunpack.c.h.bf16 %v5933
      %v5987 = vunpack.c.l.bf16 %v5934
      %v5988 = vunpack.c.h.bf16 %v5934
      %v5989 = vunpack.c.l.bf16 %v5935
      %v5990 = vunpack.c.h.bf16 %v5935
      %v5991 = vunpack.c.l.bf16 %v5936
      %v5992 = vunpack.c.h.bf16 %v5936
      %v5993 = vunpack.c.l.bf16 %v5937
      %v5994 = vunpack.c.h.bf16 %v5937
      %v5995 = vunpack.c.l.bf16 %v5938
      %v5996 = vunpack.c.h.bf16 %v5938
      %v5997 = vunpack.c.l.bf16 %v5939
      %v5998 = vunpack.c.h.bf16 %v5939
      %v5999 = vunpack.c.l.bf16 %v5940
      %v6000 = vunpack.c.h.bf16 %v5940
      %v6001 = vunpack.c.l.bf16 %v5941
      %v6002 = vunpack.c.h.bf16 %v5941
      %v6003 = vunpack.c.l.bf16 %v5942
      %v6004 = vunpack.c.h.bf16 %v5942
      %v6005 = vunpack.c.l.bf16 %v5943
      %v6006 = vunpack.c.h.bf16 %v5943
      %v6007 = vunpack.c.l.bf16 %v5944
      %v6008 = vunpack.c.h.bf16 %v5944
      %v6009 = vmax.f32 %v5945, 0.0
      %v6010 = vmax.f32 %v5946, 0.0
      %v6011 = vmax.f32 %v5947, 0.0
      %v6012 = vmax.f32 %v5948, 0.0
      %v6013 = vmax.f32 %v5949, 0.0
      %v6014 = vmax.f32 %v5950, 0.0
      %v6015 = vmax.f32 %v5951, 0.0
      %v6016 = vmax.f32 %v5952, 0.0
      %v6017 = vmax.f32 %v5953, 0.0
      %v6018 = vmax.f32 %v5954, 0.0
      %v6019 = vmax.f32 %v5955, 0.0
      %v6020 = vmax.f32 %v5956, 0.0
      %v6021 = vmax.f32 %v5957, 0.0
      %v6022 = vmax.f32 %v5958, 0.0
      %v6023 = vmax.f32 %v5959, 0.0
      %v6024 = vmax.f32 %v5960, 0.0
      %v6025 = vmax.f32 %v5961, 0.0
      %v6026 = vmax.f32 %v5962, 0.0
      %v6027 = vmax.f32 %v5963, 0.0
      %v6028 = vmax.f32 %v5964, 0.0
      %v6029 = vmax.f32 %v5965, 0.0
      %v6030 = vmax.f32 %v5966, 0.0
      %v6031 = vmax.f32 %v5967, 0.0
      %v6032 = vmax.f32 %v5968, 0.0
      %v6033 = vmax.f32 %v5969, 0.0
      %v6034 = vmax.f32 %v5970, 0.0
      %v6035 = vmax.f32 %v5971, 0.0
      %v6036 = vmax.f32 %v5972, 0.0
      %v6037 = vmax.f32 %v5973, 0.0
      %v6038 = vmax.f32 %v5974, 0.0
      %v6039 = vmax.f32 %v5975, 0.0
      %v6040 = vmax.f32 %v5976, 0.0
      %v6041 = vmax.f32 %v5977, 0.0
      %v6042 = vmax.f32 %v5978, 0.0
      %v6043 = vmax.f32 %v5979, 0.0
      %v6044 = vmax.f32 %v5980, 0.0
      %v6045 = vmax.f32 %v5981, 0.0
      %v6046 = vmax.f32 %v5982, 0.0
      %v6047 = vmax.f32 %v5983, 0.0
      %v6048 = vmax.f32 %v5984, 0.0
      %v6049 = vmax.f32 %v5985, 0.0
      %v6050 = vmax.f32 %v5986, 0.0
      %v6051 = vmax.f32 %v5987, 0.0
      %v6052 = vmax.f32 %v5988, 0.0
      %v6053 = vmax.f32 %v5989, 0.0
      %v6054 = vmax.f32 %v5990, 0.0
      %v6055 = vmax.f32 %v5991, 0.0
      %v6056 = vmax.f32 %v5992, 0.0
      %v6057 = vmax.f32 %v5993, 0.0
      %v6058 = vmax.f32 %v5994, 0.0
      %v6059 = vmax.f32 %v5995, 0.0
      %v6060 = vmax.f32 %v5996, 0.0
      %v6061 = vmax.f32 %v5997, 0.0
      %v6062 = vmax.f32 %v5998, 0.0
      %v6063 = vmax.f32 %v5999, 0.0
      %v6064 = vmax.f32 %v6000, 0.0
      %v6065 = vmax.f32 %v6001, 0.0
      %v6066 = vmax.f32 %v6002, 0.0
      %v6067 = vmax.f32 %v6003, 0.0
      %v6068 = vmax.f32 %v6004, 0.0
      %v6069 = vmax.f32 %v6005, 0.0
      %v6070 = vmax.f32 %v6006, 0.0
      %v6071 = vmax.f32 %v6007, 0.0
      %v6072 = vmax.f32 %v6008, 0.0
      %v6073 = vpack.c.bf16 %v6011, %v6009
      %v6074 = vpack.c.bf16 %v6012, %v6010
      %v6075 = vpack.c.bf16 %v6015, %v6013
      %v6076 = vpack.c.bf16 %v6016, %v6014
      %v6077 = vpack.c.bf16 %v6019, %v6017
      %v6078 = vpack.c.bf16 %v6020, %v6018
      %v6079 = vpack.c.bf16 %v6023, %v6021
      %v6080 = vpack.c.bf16 %v6024, %v6022
      %v6081 = vpack.c.bf16 %v6027, %v6025
      %v6082 = vpack.c.bf16 %v6028, %v6026
      %v6083 = vpack.c.bf16 %v6031, %v6029
      %v6084 = vpack.c.bf16 %v6032, %v6030
      %v6085 = vpack.c.bf16 %v6035, %v6033
      %v6086 = vpack.c.bf16 %v6036, %v6034
      %v6087 = vpack.c.bf16 %v6039, %v6037
      %v6088 = vpack.c.bf16 %v6040, %v6038
      %v6089 = vpack.c.bf16 %v6043, %v6041
      %v6090 = vpack.c.bf16 %v6044, %v6042
      %v6091 = vpack.c.bf16 %v6047, %v6045
      %v6092 = vpack.c.bf16 %v6048, %v6046
      %v6093 = vpack.c.bf16 %v6051, %v6049
      %v6094 = vpack.c.bf16 %v6052, %v6050
      %v6095 = vpack.c.bf16 %v6055, %v6053
      %v6096 = vpack.c.bf16 %v6056, %v6054
      %v6097 = vpack.c.bf16 %v6059, %v6057
      %v6098 = vpack.c.bf16 %v6060, %v6058
      %v6099 = vpack.c.bf16 %v6063, %v6061
      %v6100 = vpack.c.bf16 %v6064, %v6062
      %v6101 = vpack.c.bf16 %v6067, %v6065
      %v6102 = vpack.c.bf16 %v6068, %v6066
      %v6103 = vpack.c.bf16 %v6071, %v6069
      %v6104 = vpack.c.bf16 %v6072, %v6070
      %v6105 = vld [vmem:[%s15] sm:$0xff]
      %v6106 = vld [vmem:[%s15 + $0x8] sm:$0xff]
      %v6107 = vld [vmem:[%s15 + $0x10] sm:$0xff]
      %v6108 = vld [vmem:[%s15 + $0x18] sm:$0xff]
      %v6109 = vld [vmem:[%s15 + $0x20] sm:$0xff]
      %v6110 = vld [vmem:[%s15 + $0x28] sm:$0xff]
      %v6111 = vld [vmem:[%s15 + $0x30] sm:$0xff]
      %v6112 = vld [vmem:[%s15 + $0x38] sm:$0xff]
      %v6113 = vld [vmem:[%s15 + $0x40] sm:$0xff]
      %v6114 = vld [vmem:[%s15 + $0x48] sm:$0xff]
      %v6115 = vld [vmem:[%s15 + $0x50] sm:$0xff]
      %v6116 = vld [vmem:[%s15 + $0x58] sm:$0xff]
      %v6117 = vld [vmem:[%s15 + $0x60] sm:$0xff]
      %v6118 = vld [vmem:[%s15 + $0x68] sm:$0xff]
      %v6119 = vld [vmem:[%s15 + $0x70] sm:$0xff]
      %v6120 = vld [vmem:[%s15 + $0x78] sm:$0xff]
      %v6121 = vld [vmem:[%s15 + $0x80] sm:$0xff]
      %v6122 = vld [vmem:[%s15 + $0x88] sm:$0xff]
      %v6123 = vld [vmem:[%s15 + $0x90] sm:$0xff]
      %v6124 = vld [vmem:[%s15 + $0x98] sm:$0xff]
      %v6125 = vld [vmem:[%s15 + $0xa0] sm:$0xff]
      %v6126 = vld [vmem:[%s15 + $0xa8] sm:$0xff]
      %v6127 = vld [vmem:[%s15 + $0xb0] sm:$0xff]
      %v6128 = vld [vmem:[%s15 + $0xb8] sm:$0xff]
      %v6129 = vld [vmem:[%s15 + $0xc0] sm:$0xff]
      %v6130 = vld [vmem:[%s15 + $0xc8] sm:$0xff]
      %v6131 = vld [vmem:[%s15 + $0xd0] sm:$0xff]
      %v6132 = vld [vmem:[%s15 + $0xd8] sm:$0xff]
      %v6133 = vld [vmem:[%s15 + $0xe0] sm:$0xff]
      %v6134 = vld [vmem:[%s15 + $0xe8] sm:$0xff]
      %v6135 = vld [vmem:[%s15 + $0xf0] sm:$0xff]
      %v6136 = vld [vmem:[%s15 + $0xf8] sm:$0xff]
      %v6137 = vld [vmem:[%s16] sm:$0x3]
      %v6139 = vperm.slane %v6137, 0
      %v6140 = vperm.slane %v6137, 1
      %v6175 = vunpack.c.l.b16 %v6105
      %v6176 = vunpack.c.h.b16 %v6105
      %v6177 = vunpack.c.l.b16 %v6106
      %v6178 = vunpack.c.h.b16 %v6106
      %v6179 = vunpack.c.l.b16 %v6107
      %v6180 = vunpack.c.h.b16 %v6107
      %v6181 = vunpack.c.l.b16 %v6108
      %v6182 = vunpack.c.h.b16 %v6108
      %v6183 = vunpack.c.l.b16 %v6109
      %v6184 = vunpack.c.h.b16 %v6109
      %v6185 = vunpack.c.l.b16 %v6110
      %v6186 = vunpack.c.h.b16 %v6110
      %v6187 = vunpack.c.l.b16 %v6111
      %v6188 = vunpack.c.h.b16 %v6111
      %v6189 = vunpack.c.l.b16 %v6112
      %v6190 = vunpack.c.h.b16 %v6112
      %v6191 = vunpack.c.l.b16 %v6113
      %v6192 = vunpack.c.h.b16 %v6113
      %v6193 = vunpack.c.l.b16 %v6114
      %v6194 = vunpack.c.h.b16 %v6114
      %v6195 = vunpack.c.l.b16 %v6115
      %v6196 = vunpack.c.h.b16 %v6115
      %v6197 = vunpack.c.l.b16 %v6116
      %v6198 = vunpack.c.h.b16 %v6116
      %v6199 = vunpack.c.l.b16 %v6117
      %v6200 = vunpack.c.h.b16 %v6117
      %v6201 = vunpack.c.l.b16 %v6118
      %v6202 = vunpack.c.h.b16 %v6118
      %v6203 = vunpack.c.l.b16 %v6119
      %v6204 = vunpack.c.h.b16 %v6119
      %v6205 = vunpack.c.l.b16 %v6120
      %v6206 = vunpack.c.h.b16 %v6120
      %v6207 = vunpack.c.l.b16 %v6121
      %v6208 = vunpack.c.h.b16 %v6121
      %v6209 = vunpack.c.l.b16 %v6122
      %v6210 = vunpack.c.h.b16 %v6122
      %v6211 = vunpack.c.l.b16 %v6123
      %v6212 = vunpack.c.h.b16 %v6123
      %v6213 = vunpack.c.l.b16 %v6124
      %v6214 = vunpack.c.h.b16 %v6124
      %v6215 = vunpack.c.l.b16 %v6125
      %v6216 = vunpack.c.h.b16 %v6125
      %v6217 = vunpack.c.l.b16 %v6126
      %v6218 = vunpack.c.h.b16 %v6126
      %v6219 = vunpack.c.l.b16 %v6127
      %v6220 = vunpack.c.h.b16 %v6127
      %v6221 = vunpack.c.l.b16 %v6128
      %v6222 = vunpack.c.h.b16 %v6128
      %v6223 = vunpack.c.l.b16 %v6129
      %v6224 = vunpack.c.h.b16 %v6129
      %v6225 = vunpack.c.l.b16 %v6130
      %v6226 = vunpack.c.h.b16 %v6130
      %v6227 = vunpack.c.l.b16 %v6131
      %v6228 = vunpack.c.h.b16 %v6131
      %v6229 = vunpack.c.l.b16 %v6132
      %v6230 = vunpack.c.h.b16 %v6132
      %v6231 = vunpack.c.l.b16 %v6133
      %v6232 = vunpack.c.h.b16 %v6133
      %v6233 = vunpack.c.l.b16 %v6134
      %v6234 = vunpack.c.h.b16 %v6134
      %v6235 = vunpack.c.l.b16 %v6135
      %v6236 = vunpack.c.h.b16 %v6135
      %v6237 = vunpack.c.l.b16 %v6136
      %v6238 = vunpack.c.h.b16 %v6136
      %v6239 = vpack.c.b16 %v6177, %v6175
      %v6240 = vpack.c.b16 %v6178, %v6176
      %v6241 = vpack.c.b16 %v6181, %v6179
      %v6242 = vpack.c.b16 %v6182, %v6180
      %v6243 = vpack.c.b16 %v6185, %v6183
      %v6244 = vpack.c.b16 %v6186, %v6184
      %v6245 = vpack.c.b16 %v6189, %v6187
      %v6246 = vpack.c.b16 %v6190, %v6188
      %v6247 = vpack.c.b16 %v6193, %v6191
      %v6248 = vpack.c.b16 %v6194, %v6192
      %v6249 = vpack.c.b16 %v6197, %v6195
      %v6250 = vpack.c.b16 %v6198, %v6196
      %v6251 = vpack.c.b16 %v6201, %v6199
      %v6252 = vpack.c.b16 %v6202, %v6200
      %v6253 = vpack.c.b16 %v6205, %v6203
      %v6254 = vpack.c.b16 %v6206, %v6204
      %v6255 = vpack.c.b16 %v6209, %v6207
      %v6256 = vpack.c.b16 %v6210, %v6208
      %v6257 = vpack.c.b16 %v6213, %v6211
      %v6258 = vpack.c.b16 %v6214, %v6212
      %v6259 = vpack.c.b16 %v6217, %v6215
      %v6260 = vpack.c.b16 %v6218, %v6216
      %v6261 = vpack.c.b16 %v6221, %v6219
      %v6262 = vpack.c.b16 %v6222, %v6220
      %v6263 = vpack.c.b16 %v6225, %v6223
      %v6264 = vpack.c.b16 %v6226, %v6224
      %v6265 = vpack.c.b16 %v6229, %v6227
      %v6266 = vpack.c.b16 %v6230, %v6228
      %v6267 = vpack.c.b16 %v6233, %v6231
      %v6268 = vpack.c.b16 %v6234, %v6232
      %v6269 = vpack.c.b16 %v6237, %v6235
      %v6270 = vpack.c.b16 %v6238, %v6236
      %6303 = vmatpush.bf16.msra.mxu0 %v6253
      %6304 = vmatpush.bf16.msra.mxu0 %v6251
      %6305 = vmatpush.bf16.msra.mxu0 %v6249
      %6306 = vmatpush.bf16.msra.mxu0 %v6247
      %6307 = vmatpush.bf16.msra.mxu0 %v6245
      %6308 = vmatpush.bf16.msra.mxu0 %v6243
      %6309 = vmatpush.bf16.msra.mxu0 %v6241
      %6310 = vmatpush.bf16.msra.mxu0 %v6239
      %6311 = vmatmul.bf16.gmra.mxu0 %v6073
      %v6312 = vpop.f32.mrf.mxu0
      %v6313 = vadd.f32 %v6139, %v6312
      %v6314 = vpop.f32.mrf.mxu0
      %v6315 = vadd.f32 %v6139, %v6314
      %6316 = vmatmul.bf16.gmra.mxu0 %v6075
      %v6317 = vpop.f32.mrf.mxu0
      %v6318 = vadd.f32 %v6139, %v6317
      %v6319 = vpop.f32.mrf.mxu0
      %v6320 = vadd.f32 %v6139, %v6319
      %6321 = vmatmul.bf16.gmra.mxu0 %v6077
      %v6322 = vpop.f32.mrf.mxu0
      %v6323 = vadd.f32 %v6139, %v6322
      %v6324 = vpop.f32.mrf.mxu0
      %v6325 = vadd.f32 %v6139, %v6324
      %6326 = vmatmul.bf16.gmra.mxu0 %v6079
      %v6327 = vpop.f32.mrf.mxu0
      %v6328 = vadd.f32 %v6139, %v6327
      %v6329 = vpop.f32.mrf.mxu0
      %v6330 = vadd.f32 %v6139, %v6329
      %6331 = vmatmul.bf16.gmra.mxu0 %v6081
      %v6332 = vpop.f32.mrf.mxu0
      %v6333 = vadd.f32 %v6139, %v6332
      %v6334 = vpop.f32.mrf.mxu0
      %v6335 = vadd.f32 %v6139, %v6334
      %6336 = vmatmul.bf16.gmra.mxu0 %v6083
      %v6337 = vpop.f32.mrf.mxu0
      %v6338 = vadd.f32 %v6139, %v6337
      %v6339 = vpop.f32.mrf.mxu0
      %v6340 = vadd.f32 %v6139, %v6339
      %6341 = vmatmul.bf16.gmra.mxu0 %v6085
      %v6342 = vpop.f32.mrf.mxu0
      %v6343 = vadd.f32 %v6139, %v6342
      %v6344 = vpop.f32.mrf.mxu0
      %v6345 = vadd.f32 %v6139, %v6344
      %6346 = vmatmul.bf16.gmra.mxu0 %v6087
      %v6347 = vpop.f32.mrf.mxu0
      %v6348 = vadd.f32 %v6139, %v6347
      %v6349 = vpop.f32.mrf.mxu0
      %v6350 = vadd.f32 %v6139, %v6349
      %6351 = vmatmul.bf16.gmra.mxu0 %v6089
      %v6352 = vpop.f32.mrf.mxu0
      %v6353 = vadd.f32 %v6139, %v6352
      %v6354 = vpop.f32.mrf.mxu0
      %v6355 = vadd.f32 %v6139, %v6354
      %6356 = vmatmul.bf16.gmra.mxu0 %v6091
      %v6357 = vpop.f32.mrf.mxu0
      %v6358 = vadd.f32 %v6139, %v6357
      %v6359 = vpop.f32.mrf.mxu0
      %v6360 = vadd.f32 %v6139, %v6359
      %6361 = vmatmul.bf16.gmra.mxu0 %v6093
      %v6362 = vpop.f32.mrf.mxu0
      %v6363 = vadd.f32 %v6139, %v6362
      %v6364 = vpop.f32.mrf.mxu0
      %v6365 = vadd.f32 %v6139, %v6364
      %6366 = vmatmul.bf16.gmra.mxu0 %v6095
      %v6367 = vpop.f32.mrf.mxu0
      %v6368 = vadd.f32 %v6139, %v6367
      %v6369 = vpop.f32.mrf.mxu0
      %v6370 = vadd.f32 %v6139, %v6369
      %6371 = vmatmul.bf16.gmra.mxu0 %v6097
      %v6372 = vpop.f32.mrf.mxu0
      %v6373 = vadd.f32 %v6139, %v6372
      %v6374 = vpop.f32.mrf.mxu0
      %v6375 = vadd.f32 %v6139, %v6374
      %6376 = vmatmul.bf16.gmra.mxu0 %v6099
      %v6377 = vpop.f32.mrf.mxu0
      %v6378 = vadd.f32 %v6139, %v6377
      %v6379 = vpop.f32.mrf.mxu0
      %v6380 = vadd.f32 %v6139, %v6379
      %6381 = vmatmul.bf16.gmra.mxu0 %v6101
      %v6382 = vpop.f32.mrf.mxu0
      %v6383 = vadd.f32 %v6139, %v6382
      %v6384 = vpop.f32.mrf.mxu0
      %v6385 = vadd.f32 %v6139, %v6384
      %6386 = vmatmul.bf16.gmra.mxu0 %v6103
      %v6387 = vpop.f32.mrf.mxu0
      %v6388 = vadd.f32 %v6139, %v6387
      %v6389 = vpop.f32.mrf.mxu0
      %v6390 = vadd.f32 %v6139, %v6389
      %6391 = vdwg.mxu0
      %6392 = vmatpush.bf16.msra.mxu0 %v6269
      %6393 = vmatpush.bf16.msra.mxu0 %v6267
      %6394 = vmatpush.bf16.msra.mxu0 %v6265
      %6395 = vmatpush.bf16.msra.mxu0 %v6263
      %6396 = vmatpush.bf16.msra.mxu0 %v6261
      %6397 = vmatpush.bf16.msra.mxu0 %v6259
      %6398 = vmatpush.bf16.msra.mxu0 %v6257
      %6399 = vmatpush.bf16.msra.mxu0 %v6255
      %6400 = vmatmul.bf16.gmra.mxu0 %v6074
      %v6401 = vpop.f32.mrf.mxu0
      %v6402 = vadd.f32 %v6313, %v6401
      %v6403 = vpop.f32.mrf.mxu0
      %v6404 = vadd.f32 %v6315, %v6403
      %6405 = vmatmul.bf16.gmra.mxu0 %v6076
      %v6406 = vpop.f32.mrf.mxu0
      %v6407 = vadd.f32 %v6318, %v6406
      %v6408 = vpop.f32.mrf.mxu0
      %v6409 = vadd.f32 %v6320, %v6408
      %6410 = vmatmul.bf16.gmra.mxu0 %v6078
      %v6411 = vpop.f32.mrf.mxu0
      %v6412 = vadd.f32 %v6323, %v6411
      %v6413 = vpop.f32.mrf.mxu0
      %v6414 = vadd.f32 %v6325, %v6413
      %6415 = vmatmul.bf16.gmra.mxu0 %v6080
      %v6416 = vpop.f32.mrf.mxu0
      %v6417 = vadd.f32 %v6328, %v6416
      %v6418 = vpop.f32.mrf.mxu0
      %v6419 = vadd.f32 %v6330, %v6418
      %6420 = vmatmul.bf16.gmra.mxu0 %v6082
      %v6421 = vpop.f32.mrf.mxu0
      %v6422 = vadd.f32 %v6333, %v6421
      %v6423 = vpop.f32.mrf.mxu0
      %v6424 = vadd.f32 %v6335, %v6423
      %6425 = vmatmul.bf16.gmra.mxu0 %v6084
      %v6426 = vpop.f32.mrf.mxu0
      %v6427 = vadd.f32 %v6338, %v6426
      %v6428 = vpop.f32.mrf.mxu0
      %v6429 = vadd.f32 %v6340, %v6428
      %6430 = vmatmul.bf16.gmra.mxu0 %v6086
      %v6431 = vpop.f32.mrf.mxu0
      %v6432 = vadd.f32 %v6343, %v6431
      %v6433 = vpop.f32.mrf.mxu0
      %v6434 = vadd.f32 %v6345, %v6433
      %6435 = vmatmul.bf16.gmra.mxu0 %v6088
      %v6436 = vpop.f32.mrf.mxu0
      %v6437 = vadd.f32 %v6348, %v6436
      %v6438 = vpop.f32.mrf.mxu0
      %v6439 = vadd.f32 %v6350, %v6438
      %6440 = vmatmul.bf16.gmra.mxu0 %v6090
      %v6441 = vpop.f32.mrf.mxu0
      %v6442 = vadd.f32 %v6353, %v6441
      %v6443 = vpop.f32.mrf.mxu0
      %v6444 = vadd.f32 %v6355, %v6443
      %6445 = vmatmul.bf16.gmra.mxu0 %v6092
      %v6446 = vpop.f32.mrf.mxu0
      %v6447 = vadd.f32 %v6358, %v6446
      %v6448 = vpop.f32.mrf.mxu0
      %v6449 = vadd.f32 %v6360, %v6448
      %6450 = vmatmul.bf16.gmra.mxu0 %v6094
      %v6451 = vpop.f32.mrf.mxu0
      %v6452 = vadd.f32 %v6363, %v6451
      %v6453 = vpop.f32.mrf.mxu0
      %v6454 = vadd.f32 %v6365, %v6453
      %6455 = vmatmul.bf16.gmra.mxu0 %v6096
      %v6456 = vpop.f32.mrf.mxu0
      %v6457 = vadd.f32 %v6368, %v6456
      %v6458 = vpop.f32.mrf.mxu0
      %v6459 = vadd.f32 %v6370, %v6458
      %6460 = vmatmul.bf16.gmra.mxu0 %v6098
      %v6461 = vpop.f32.mrf.mxu0
      %v6462 = vadd.f32 %v6373, %v6461
      %v6463 = vpop.f32.mrf.mxu0
      %v6464 = vadd.f32 %v6375, %v6463
      %6465 = vmatmul.bf16.gmra.mxu0 %v6100
      %v6466 = vpop.f32.mrf.mxu0
      %v6467 = vadd.f32 %v6378, %v6466
      %v6468 = vpop.f32.mrf.mxu0
      %v6469 = vadd.f32 %v6380, %v6468
      %6470 = vmatmul.bf16.gmra.mxu0 %v6102
      %v6471 = vpop.f32.mrf.mxu0
      %v6472 = vadd.f32 %v6383, %v6471
      %v6473 = vpop.f32.mrf.mxu0
      %v6474 = vadd.f32 %v6385, %v6473
      %6475 = vmatmul.bf16.gmra.mxu0 %v6104
      %v6476 = vpop.f32.mrf.mxu0
      %v6477 = vadd.f32 %v6388, %v6476
      %v6478 = vpop.f32.mrf.mxu0
      %v6479 = vadd.f32 %v6390, %v6478
      %6480 = vdwg.mxu0
      %6481 = vmatpush.bf16.msra.mxu0 %v6254
      %6482 = vmatpush.bf16.msra.mxu0 %v6252
      %6483 = vmatpush.bf16.msra.mxu0 %v6250
      %6484 = vmatpush.bf16.msra.mxu0 %v6248
      %6485 = vmatpush.bf16.msra.mxu0 %v6246
      %6486 = vmatpush.bf16.msra.mxu0 %v6244
      %6487 = vmatpush.bf16.msra.mxu0 %v6242
      %6488 = vmatpush.bf16.msra.mxu0 %v6240
      %6489 = vmatmul.bf16.gmra.mxu0 %v6073
      %v6490 = vpop.f32.mrf.mxu0
      %v6491 = vadd.f32 %v6140, %v6490
      %v6492 = vpop.f32.mrf.mxu0
      %v6493 = vadd.f32 %v6140, %v6492
      %6494 = vmatmul.bf16.gmra.mxu0 %v6075
      %v6495 = vpop.f32.mrf.mxu0
      %v6496 = vadd.f32 %v6140, %v6495
      %v6497 = vpop.f32.mrf.mxu0
      %v6498 = vadd.f32 %v6140, %v6497
      %6499 = vmatmul.bf16.gmra.mxu0 %v6077
      %v6500 = vpop.f32.mrf.mxu0
      %v6501 = vadd.f32 %v6140, %v6500
      %v6502 = vpop.f32.mrf.mxu0
      %v6503 = vadd.f32 %v6140, %v6502
      %6504 = vmatmul.bf16.gmra.mxu0 %v6079
      %v6505 = vpop.f32.mrf.mxu0
      %v6506 = vadd.f32 %v6140, %v6505
      %v6507 = vpop.f32.mrf.mxu0
      %v6508 = vadd.f32 %v6140, %v6507
      %6509 = vmatmul.bf16.gmra.mxu0 %v6081
      %v6510 = vpop.f32.mrf.mxu0
      %v6511 = vadd.f32 %v6140, %v6510
      %v6512 = vpop.f32.mrf.mxu0
      %v6513 = vadd.f32 %v6140, %v6512
      %6514 = vmatmul.bf16.gmra.mxu0 %v6083
      %v6515 = vpop.f32.mrf.mxu0
      %v6516 = vadd.f32 %v6140, %v6515
      %v6517 = vpop.f32.mrf.mxu0
      %v6518 = vadd.f32 %v6140, %v6517
      %6519 = vmatmul.bf16.gmra.mxu0 %v6085
      %v6520 = vpop.f32.mrf.mxu0
      %v6521 = vadd.f32 %v6140, %v6520
      %v6522 = vpop.f32.mrf.mxu0
      %v6523 = vadd.f32 %v6140, %v6522
      %6524 = vmatmul.bf16.gmra.mxu0 %v6087
      %v6525 = vpop.f32.mrf.mxu0
      %v6526 = vadd.f32 %v6140, %v6525
      %v6527 = vpop.f32.mrf.mxu0
      %v6528 = vadd.f32 %v6140, %v6527
      %6529 = vmatmul.bf16.gmra.mxu0 %v6089
      %v6530 = vpop.f32.mrf.mxu0
      %v6531 = vadd.f32 %v6140, %v6530
      %v6532 = vpop.f32.mrf.mxu0
      %v6533 = vadd.f32 %v6140, %v6532
      %6534 = vmatmul.bf16.gmra.mxu0 %v6091
      %v6535 = vpop.f32.mrf.mxu0
      %v6536 = vadd.f32 %v6140, %v6535
      %v6537 = vpop.f32.mrf.mxu0
      %v6538 = vadd.f32 %v6140, %v6537
      %6539 = vmatmul.bf16.gmra.mxu0 %v6093
      %v6540 = vpop.f32.mrf.mxu0
      %v6541 = vadd.f32 %v6140, %v6540
      %v6542 = vpop.f32.mrf.mxu0
      %v6543 = vadd.f32 %v6140, %v6542
      %6544 = vmatmul.bf16.gmra.mxu0 %v6095
      %v6545 = vpop.f32.mrf.mxu0
      %v6546 = vadd.f32 %v6140, %v6545
      %v6547 = vpop.f32.mrf.mxu0
      %v6548 = vadd.f32 %v6140, %v6547
      %6549 = vmatmul.bf16.gmra.mxu0 %v6097
      %v6550 = vpop.f32.mrf.mxu0
      %v6551 = vadd.f32 %v6140, %v6550
      %v6552 = vpop.f32.mrf.mxu0
      %v6553 = vadd.f32 %v6140, %v6552
      %6554 = vmatmul.bf16.gmra.mxu0 %v6099
      %v6555 = vpop.f32.mrf.mxu0
      %v6556 = vadd.f32 %v6140, %v6555
      %v6557 = vpop.f32.mrf.mxu0
      %v6558 = vadd.f32 %v6140, %v6557
      %6559 = vmatmul.bf16.gmra.mxu0 %v6101
      %v6560 = vpop.f32.mrf.mxu0
      %v6561 = vadd.f32 %v6140, %v6560
      %v6562 = vpop.f32.mrf.mxu0
      %v6563 = vadd.f32 %v6140, %v6562
      %6564 = vmatmul.bf16.gmra.mxu0 %v6103
      %v6565 = vpop.f32.mrf.mxu0
      %v6566 = vadd.f32 %v6140, %v6565
      %v6567 = vpop.f32.mrf.mxu0
      %v6568 = vadd.f32 %v6140, %v6567
      %6569 = vdwg.mxu0
      %6570 = vmatpush.bf16.msra.mxu0 %v6270
      %6571 = vmatpush.bf16.msra.mxu0 %v6268
      %6572 = vmatpush.bf16.msra.mxu0 %v6266
      %6573 = vmatpush.bf16.msra.mxu0 %v6264
      %6574 = vmatpush.bf16.msra.mxu0 %v6262
      %6575 = vmatpush.bf16.msra.mxu0 %v6260
      %6576 = vmatpush.bf16.msra.mxu0 %v6258
      %6577 = vmatpush.bf16.msra.mxu0 %v6256
      %6578 = vmatmul.bf16.gmra.mxu0 %v6074
      %v6579 = vpop.f32.mrf.mxu0
      %v6580 = vadd.f32 %v6491, %v6579
      %v6581 = vpop.f32.mrf.mxu0
      %v6582 = vadd.f32 %v6493, %v6581
      %6583 = vmatmul.bf16.gmra.mxu0 %v6076
      %v6584 = vpop.f32.mrf.mxu0
      %v6585 = vadd.f32 %v6496, %v6584
      %v6586 = vpop.f32.mrf.mxu0
      %v6587 = vadd.f32 %v6498, %v6586
      %6588 = vmatmul.bf16.gmra.mxu0 %v6078
      %v6589 = vpop.f32.mrf.mxu0
      %v6590 = vadd.f32 %v6501, %v6589
      %v6591 = vpop.f32.mrf.mxu0
      %v6592 = vadd.f32 %v6503, %v6591
      %6593 = vmatmul.bf16.gmra.mxu0 %v6080
      %v6594 = vpop.f32.mrf.mxu0
      %v6595 = vadd.f32 %v6506, %v6594
      %v6596 = vpop.f32.mrf.mxu0
      %v6597 = vadd.f32 %v6508, %v6596
      %6598 = vmatmul.bf16.gmra.mxu0 %v6082
      %v6599 = vpop.f32.mrf.mxu0
      %v6600 = vadd.f32 %v6511, %v6599
      %v6601 = vpop.f32.mrf.mxu0
      %v6602 = vadd.f32 %v6513, %v6601
      %6603 = vmatmul.bf16.gmra.mxu0 %v6084
      %v6604 = vpop.f32.mrf.mxu0
      %v6605 = vadd.f32 %v6516, %v6604
      %v6606 = vpop.f32.mrf.mxu0
      %v6607 = vadd.f32 %v6518, %v6606
      %6608 = vmatmul.bf16.gmra.mxu0 %v6086
      %v6609 = vpop.f32.mrf.mxu0
      %v6610 = vadd.f32 %v6521, %v6609
      %v6611 = vpop.f32.mrf.mxu0
      %v6612 = vadd.f32 %v6523, %v6611
      %6613 = vmatmul.bf16.gmra.mxu0 %v6088
      %v6614 = vpop.f32.mrf.mxu0
      %v6615 = vadd.f32 %v6526, %v6614
      %v6616 = vpop.f32.mrf.mxu0
      %v6617 = vadd.f32 %v6528, %v6616
      %6618 = vmatmul.bf16.gmra.mxu0 %v6090
      %v6619 = vpop.f32.mrf.mxu0
      %v6620 = vadd.f32 %v6531, %v6619
      %v6621 = vpop.f32.mrf.mxu0
      %v6622 = vadd.f32 %v6533, %v6621
      %6623 = vmatmul.bf16.gmra.mxu0 %v6092
      %v6624 = vpop.f32.mrf.mxu0
      %v6625 = vadd.f32 %v6536, %v6624
      %v6626 = vpop.f32.mrf.mxu0
      %v6627 = vadd.f32 %v6538, %v6626
      %6628 = vmatmul.bf16.gmra.mxu0 %v6094
      %v6629 = vpop.f32.mrf.mxu0
      %v6630 = vadd.f32 %v6541, %v6629
      %v6631 = vpop.f32.mrf.mxu0
      %v6632 = vadd.f32 %v6543, %v6631
      %6633 = vmatmul.bf16.gmra.mxu0 %v6096
      %v6634 = vpop.f32.mrf.mxu0
      %v6635 = vadd.f32 %v6546, %v6634
      %v6636 = vpop.f32.mrf.mxu0
      %v6637 = vadd.f32 %v6548, %v6636
      %6638 = vmatmul.bf16.gmra.mxu0 %v6098
      %v6639 = vpop.f32.mrf.mxu0
      %v6640 = vadd.f32 %v6551, %v6639
      %v6641 = vpop.f32.mrf.mxu0
      %v6642 = vadd.f32 %v6553, %v6641
      %6643 = vmatmul.bf16.gmra.mxu0 %v6100
      %v6644 = vpop.f32.mrf.mxu0
      %v6645 = vadd.f32 %v6556, %v6644
      %v6646 = vpop.f32.mrf.mxu0
      %v6647 = vadd.f32 %v6558, %v6646
      %6648 = vmatmul.bf16.gmra.mxu0 %v6102
      %v6649 = vpop.f32.mrf.mxu0
      %v6650 = vadd.f32 %v6561, %v6649
      %v6651 = vpop.f32.mrf.mxu0
      %v6652 = vadd.f32 %v6563, %v6651
      %6653 = vmatmul.bf16.gmra.mxu0 %v6104
      %v6654 = vpop.f32.mrf.mxu0
      %v6655 = vadd.f32 %v6566, %v6654
      %v6656 = vpop.f32.mrf.mxu0
      %v6657 = vadd.f32 %v6568, %v6656
      %6658 = vdwg.mxu0
      %v6659 = vpack.c.bf16 %v6580, %v6402
      %v6660 = vpack.c.bf16 %v6582, %v6404
      %v6661 = vpack.c.bf16 %v6585, %v6407
      %v6662 = vpack.c.bf16 %v6587, %v6409
      %v6663 = vpack.c.bf16 %v6590, %v6412
      %v6664 = vpack.c.bf16 %v6592, %v6414
      %v6665 = vpack.c.bf16 %v6595, %v6417
      %v6666 = vpack.c.bf16 %v6597, %v6419
      %v6667 = vpack.c.bf16 %v6600, %v6422
      %v6668 = vpack.c.bf16 %v6602, %v6424
      %v6669 = vpack.c.bf16 %v6605, %v6427
      %v6670 = vpack.c.bf16 %v6607, %v6429
      %v6671 = vpack.c.bf16 %v6610, %v6432
      %v6672 = vpack.c.bf16 %v6612, %v6434
      %v6673 = vpack.c.bf16 %v6615, %v6437
      %v6674 = vpack.c.bf16 %v6617, %v6439
      %v6675 = vpack.c.bf16 %v6620, %v6442
      %v6676 = vpack.c.bf16 %v6622, %v6444
      %v6677 = vpack.c.bf16 %v6625, %v6447
      %v6678 = vpack.c.bf16 %v6627, %v6449
      %v6679 = vpack.c.bf16 %v6630, %v6452
      %v6680 = vpack.c.bf16 %v6632, %v6454
      %v6681 = vpack.c.bf16 %v6635, %v6457
      %v6682 = vpack.c.bf16 %v6637, %v6459
      %v6683 = vpack.c.bf16 %v6640, %v6462
      %v6684 = vpack.c.bf16 %v6642, %v6464
      %v6685 = vpack.c.bf16 %v6645, %v6467
      %v6686 = vpack.c.bf16 %v6647, %v6469
      %v6687 = vpack.c.bf16 %v6650, %v6472
      %v6688 = vpack.c.bf16 %v6652, %v6474
      %v6689 = vpack.c.bf16 %v6655, %v6477
      %v6690 = vpack.c.bf16 %v6657, %v6479
      %v6691 = vunpack.c.l.bf16 %v6659
      %v6692 = vunpack.c.h.bf16 %v6659
      %v6693 = vunpack.c.l.bf16 %v6660
      %v6694 = vunpack.c.h.bf16 %v6660
      %v6695 = vunpack.c.l.bf16 %v6661
      %v6696 = vunpack.c.h.bf16 %v6661
      %v6697 = vunpack.c.l.bf16 %v6662
      %v6698 = vunpack.c.h.bf16 %v6662
      %v6699 = vunpack.c.l.bf16 %v6663
      %v6700 = vunpack.c.h.bf16 %v6663
      %v6701 = vunpack.c.l.bf16 %v6664
      %v6702 = vunpack.c.h.bf16 %v6664
      %v6703 = vunpack.c.l.bf16 %v6665
      %v6704 = vunpack.c.h.bf16 %v6665
      %v6705 = vunpack.c.l.bf16 %v6666
      %v6706 = vunpack.c.h.bf16 %v6666
      %v6707 = vunpack.c.l.bf16 %v6667
      %v6708 = vunpack.c.h.bf16 %v6667
      %v6709 = vunpack.c.l.bf16 %v6668
      %v6710 = vunpack.c.h.bf16 %v6668
      %v6711 = vunpack.c.l.bf16 %v6669
      %v6712 = vunpack.c.h.bf16 %v6669
      %v6713 = vunpack.c.l.bf16 %v6670
      %v6714 = vunpack.c.h.bf16 %v6670
      %v6715 = vunpack.c.l.bf16 %v6671
      %v6716 = vunpack.c.h.bf16 %v6671
      %v6717 = vunpack.c.l.bf16 %v6672
      %v6718 = vunpack.c.h.bf16 %v6672
      %v6719 = vunpack.c.l.bf16 %v6673
      %v6720 = vunpack.c.h.bf16 %v6673
      %v6721 = vunpack.c.l.bf16 %v6674
      %v6722 = vunpack.c.h.bf16 %v6674
      %v6723 = vunpack.c.l.bf16 %v6675
      %v6724 = vunpack.c.h.bf16 %v6675
      %v6725 = vunpack.c.l.bf16 %v6676
      %v6726 = vunpack.c.h.bf16 %v6676
      %v6727 = vunpack.c.l.bf16 %v6677
      %v6728 = vunpack.c.h.bf16 %v6677
      %v6729 = vunpack.c.l.bf16 %v6678
      %v6730 = vunpack.c.h.bf16 %v6678
      %v6731 = vunpack.c.l.bf16 %v6679
      %v6732 = vunpack.c.h.bf16 %v6679
      %v6733 = vunpack.c.l.bf16 %v6680
      %v6734 = vunpack.c.h.bf16 %v6680
      %v6735 = vunpack.c.l.bf16 %v6681
      %v6736 = vunpack.c.h.bf16 %v6681
      %v6737 = vunpack.c.l.bf16 %v6682
      %v6738 = vunpack.c.h.bf16 %v6682
      %v6739 = vunpack.c.l.bf16 %v6683
      %v6740 = vunpack.c.h.bf16 %v6683
      %v6741 = vunpack.c.l.bf16 %v6684
      %v6742 = vunpack.c.h.bf16 %v6684
      %v6743 = vunpack.c.l.bf16 %v6685
      %v6744 = vunpack.c.h.bf16 %v6685
      %v6745 = vunpack.c.l.bf16 %v6686
      %v6746 = vunpack.c.h.bf16 %v6686
      %v6747 = vunpack.c.l.bf16 %v6687
      %v6748 = vunpack.c.h.bf16 %v6687
      %v6749 = vunpack.c.l.bf16 %v6688
      %v6750 = vunpack.c.h.bf16 %v6688
      %v6751 = vunpack.c.l.bf16 %v6689
      %v6752 = vunpack.c.h.bf16 %v6689
      %v6753 = vunpack.c.l.bf16 %v6690
      %v6754 = vunpack.c.h.bf16 %v6690
      %v6755 = vmax.f32 %v6691, 0.0
      %v6756 = vmax.f32 %v6692, 0.0
      %v6757 = vmax.f32 %v6693, 0.0
      %v6758 = vmax.f32 %v6694, 0.0
      %v6759 = vmax.f32 %v6695, 0.0
      %v6760 = vmax.f32 %v6696, 0.0
      %v6761 = vmax.f32 %v6697, 0.0
      %v6762 = vmax.f32 %v6698, 0.0
      %v6763 = vmax.f32 %v6699, 0.0
      %v6764 = vmax.f32 %v6700, 0.0
      %v6765 = vmax.f32 %v6701, 0.0
      %v6766 = vmax.f32 %v6702, 0.0
      %v6767 = vmax.f32 %v6703, 0.0
      %v6768 = vmax.f32 %v6704, 0.0
      %v6769 = vmax.f32 %v6705, 0.0
      %v6770 = vmax.f32 %v6706, 0.0
      %v6771 = vmax.f32 %v6707, 0.0
      %v6772 = vmax.f32 %v6708, 0.0
      %v6773 = vmax.f32 %v6709, 0.0
      %v6774 = vmax.f32 %v6710, 0.0
      %v6775 = vmax.f32 %v6711, 0.0
      %v6776 = vmax.f32 %v6712, 0.0
      %v6777 = vmax.f32 %v6713, 0.0
      %v6778 = vmax.f32 %v6714, 0.0
      %v6779 = vmax.f32 %v6715, 0.0
      %v6780 = vmax.f32 %v6716, 0.0
      %v6781 = vmax.f32 %v6717, 0.0
      %v6782 = vmax.f32 %v6718, 0.0
      %v6783 = vmax.f32 %v6719, 0.0
      %v6784 = vmax.f32 %v6720, 0.0
      %v6785 = vmax.f32 %v6721, 0.0
      %v6786 = vmax.f32 %v6722, 0.0
      %v6787 = vmax.f32 %v6723, 0.0
      %v6788 = vmax.f32 %v6724, 0.0
      %v6789 = vmax.f32 %v6725, 0.0
      %v6790 = vmax.f32 %v6726, 0.0
      %v6791 = vmax.f32 %v6727, 0.0
      %v6792 = vmax.f32 %v6728, 0.0
      %v6793 = vmax.f32 %v6729, 0.0
      %v6794 = vmax.f32 %v6730, 0.0
      %v6795 = vmax.f32 %v6731, 0.0
      %v6796 = vmax.f32 %v6732, 0.0
      %v6797 = vmax.f32 %v6733, 0.0
      %v6798 = vmax.f32 %v6734, 0.0
      %v6799 = vmax.f32 %v6735, 0.0
      %v6800 = vmax.f32 %v6736, 0.0
      %v6801 = vmax.f32 %v6737, 0.0
      %v6802 = vmax.f32 %v6738, 0.0
      %v6803 = vmax.f32 %v6739, 0.0
      %v6804 = vmax.f32 %v6740, 0.0
      %v6805 = vmax.f32 %v6741, 0.0
      %v6806 = vmax.f32 %v6742, 0.0
      %v6807 = vmax.f32 %v6743, 0.0
      %v6808 = vmax.f32 %v6744, 0.0
      %v6809 = vmax.f32 %v6745, 0.0
      %v6810 = vmax.f32 %v6746, 0.0
      %v6811 = vmax.f32 %v6747, 0.0
      %v6812 = vmax.f32 %v6748, 0.0
      %v6813 = vmax.f32 %v6749, 0.0
      %v6814 = vmax.f32 %v6750, 0.0
      %v6815 = vmax.f32 %v6751, 0.0
      %v6816 = vmax.f32 %v6752, 0.0
      %v6817 = vmax.f32 %v6753, 0.0
      %v6818 = vmax.f32 %v6754, 0.0
      %v6819 = vpack.c.bf16 %v6757, %v6755
      %v6820 = vpack.c.bf16 %v6758, %v6756
      %v6821 = vpack.c.bf16 %v6761, %v6759
      %v6822 = vpack.c.bf16 %v6762, %v6760
      %v6823 = vpack.c.bf16 %v6765, %v6763
      %v6824 = vpack.c.bf16 %v6766, %v6764
      %v6825 = vpack.c.bf16 %v6769, %v6767
      %v6826 = vpack.c.bf16 %v6770, %v6768
      %v6827 = vpack.c.bf16 %v6773, %v6771
      %v6828 = vpack.c.bf16 %v6774, %v6772
      %v6829 = vpack.c.bf16 %v6777, %v6775
      %v6830 = vpack.c.bf16 %v6778, %v6776
      %v6831 = vpack.c.bf16 %v6781, %v6779
      %v6832 = vpack.c.bf16 %v6782, %v6780
      %v6833 = vpack.c.bf16 %v6785, %v6783
      %v6834 = vpack.c.bf16 %v6786, %v6784
      %v6835 = vpack.c.bf16 %v6789, %v6787
      %v6836 = vpack.c.bf16 %v6790, %v6788
      %v6837 = vpack.c.bf16 %v6793, %v6791
      %v6838 = vpack.c.bf16 %v6794, %v6792
      %v6839 = vpack.c.bf16 %v6797, %v6795
      %v6840 = vpack.c.bf16 %v6798, %v6796
      %v6841 = vpack.c.bf16 %v6801, %v6799
      %v6842 = vpack.c.bf16 %v6802, %v6800
      %v6843 = vpack.c.bf16 %v6805, %v6803
      %v6844 = vpack.c.bf16 %v6806, %v6804
      %v6845 = vpack.c.bf16 %v6809, %v6807
      %v6846 = vpack.c.bf16 %v6810, %v6808
      %v6847 = vpack.c.bf16 %v6813, %v6811
      %v6848 = vpack.c.bf16 %v6814, %v6812
      %v6849 = vpack.c.bf16 %v6817, %v6815
      %v6850 = vpack.c.bf16 %v6818, %v6816
      %v6851 = vld [vmem:[%s17] sm:$0xf]
      %v6852 = vld [vmem:[%s17 + $0x4] sm:$0xf]
      %v6853 = vld [vmem:[%s17 + $0x8] sm:$0xf]
      %v6854 = vld [vmem:[%s17 + $0xc] sm:$0xf]
      %v6855 = vld [vmem:[%s17 + $0x10] sm:$0xf]
      %v6856 = vld [vmem:[%s17 + $0x14] sm:$0xf]
      %v6857 = vld [vmem:[%s17 + $0x18] sm:$0xf]
      %v6858 = vld [vmem:[%s17 + $0x1c] sm:$0xf]
      %v6859 = vld [vmem:[%s17 + $0x20] sm:$0xf]
      %v6860 = vld [vmem:[%s17 + $0x24] sm:$0xf]
      %v6861 = vld [vmem:[%s17 + $0x28] sm:$0xf]
      %v6862 = vld [vmem:[%s17 + $0x2c] sm:$0xf]
      %v6863 = vld [vmem:[%s17 + $0x30] sm:$0xf]
      %v6864 = vld [vmem:[%s17 + $0x34] sm:$0xf]
      %v6865 = vld [vmem:[%s17 + $0x38] sm:$0xf]
      %v6866 = vld [vmem:[%s17 + $0x3c] sm:$0xf]
      %v6867 = vld [vmem:[%s17 + $0x40] sm:$0xf]
      %v6868 = vld [vmem:[%s17 + $0x44] sm:$0xf]
      %v6869 = vld [vmem:[%s17 + $0x48] sm:$0xf]
      %v6870 = vld [vmem:[%s17 + $0x4c] sm:$0xf]
      %v6871 = vld [vmem:[%s17 + $0x50] sm:$0xf]
      %v6872 = vld [vmem:[%s17 + $0x54] sm:$0xf]
      %v6873 = vld [vmem:[%s17 + $0x58] sm:$0xf]
      %v6874 = vld [vmem:[%s17 + $0x5c] sm:$0xf]
      %v6875 = vld [vmem:[%s17 + $0x60] sm:$0xf]
      %v6876 = vld [vmem:[%s17 + $0x64] sm:$0xf]
      %v6877 = vld [vmem:[%s17 + $0x68] sm:$0xf]
      %v6878 = vld [vmem:[%s17 + $0x6c] sm:$0xf]
      %v6879 = vld [vmem:[%s17 + $0x70] sm:$0xf]
      %v6880 = vld [vmem:[%s17 + $0x74] sm:$0xf]
      %v6881 = vld [vmem:[%s17 + $0x78] sm:$0xf]
      %v6882 = vld [vmem:[%s17 + $0x7c] sm:$0xf]
      %v6883 = vld [vmem:[%s18] sm:$0x1]
      %v6885 = vperm.slane %v6883, 0
      %v6919 = vunpack.c.l.b16 %v6851
      %v6920 = vunpack.c.l.b16 %v6852
      %v6921 = vunpack.c.l.b16 %v6853
      %v6922 = vunpack.c.l.b16 %v6854
      %v6923 = vunpack.c.l.b16 %v6855
      %v6924 = vunpack.c.l.b16 %v6856
      %v6925 = vunpack.c.l.b16 %v6857
      %v6926 = vunpack.c.l.b16 %v6858
      %v6927 = vunpack.c.l.b16 %v6859
      %v6928 = vunpack.c.l.b16 %v6860
      %v6929 = vunpack.c.l.b16 %v6861
      %v6930 = vunpack.c.l.b16 %v6862
      %v6931 = vunpack.c.l.b16 %v6863
      %v6932 = vunpack.c.l.b16 %v6864
      %v6933 = vunpack.c.l.b16 %v6865
      %v6934 = vunpack.c.l.b16 %v6866
      %v6935 = vunpack.c.l.b16 %v6867
      %v6936 = vunpack.c.l.b16 %v6868
      %v6937 = vunpack.c.l.b16 %v6869
      %v6938 = vunpack.c.l.b16 %v6870
      %v6939 = vunpack.c.l.b16 %v6871
      %v6940 = vunpack.c.l.b16 %v6872
      %v6941 = vunpack.c.l.b16 %v6873
      %v6942 = vunpack.c.l.b16 %v6874
      %v6943 = vunpack.c.l.b16 %v6875
      %v6944 = vunpack.c.l.b16 %v6876
      %v6945 = vunpack.c.l.b16 %v6877
      %v6946 = vunpack.c.l.b16 %v6878
      %v6947 = vunpack.c.l.b16 %v6879
      %v6948 = vunpack.c.l.b16 %v6880
      %v6949 = vunpack.c.l.b16 %v6881
      %v6950 = vunpack.c.l.b16 %v6882
      %v6951 = vpack.c.b16 %v6920, %v6919
      %v6952 = vpack.c.b16 %v6922, %v6921
      %v6953 = vpack.c.b16 %v6924, %v6923
      %v6954 = vpack.c.b16 %v6926, %v6925
      %v6955 = vpack.c.b16 %v6928, %v6927
      %v6956 = vpack.c.b16 %v6930, %v6929
      %v6957 = vpack.c.b16 %v6932, %v6931
      %v6958 = vpack.c.b16 %v6934, %v6933
      %v6959 = vpack.c.b16 %v6936, %v6935
      %v6960 = vpack.c.b16 %v6938, %v6937
      %v6961 = vpack.c.b16 %v6940, %v6939
      %v6962 = vpack.c.b16 %v6942, %v6941
      %v6963 = vpack.c.b16 %v6944, %v6943
      %v6964 = vpack.c.b16 %v6946, %v6945
      %v6965 = vpack.c.b16 %v6948, %v6947
      %v6966 = vpack.c.b16 %v6950, %v6949
      %6983 = vmatpush.bf16.msra.mxu0 %v6958
      %6984 = vmatpush.bf16.msra.mxu0 %v6957
      %6985 = vmatpush.bf16.msra.mxu0 %v6956
      %6986 = vmatpush.bf16.msra.mxu0 %v6955
      %6987 = vmatpush.bf16.msra.mxu0 %v6954
      %6988 = vmatpush.bf16.msra.mxu0 %v6953
      %6989 = vmatpush.bf16.msra.mxu0 %v6952
      %6990 = vmatpush.bf16.msra.mxu0 %v6951
      %6991 = vmatmul.bf16.gmra.mxu0 %v6819
      %v6992 = vpop.f32.mrf.mxu0
      %v6993 = vadd.f32 %v6885, %v6992
      %v6994 = vpop.f32.mrf.mxu0
      %v6995 = vadd.f32 %v6885, %v6994
      %6996 = vmatmul.bf16.gmra.mxu0 %v6821
      %v6997 = vpop.f32.mrf.mxu0
      %v6998 = vadd.f32 %v6885, %v6997
      %v6999 = vpop.f32.mrf.mxu0
      %v7000 = vadd.f32 %v6885, %v6999
      %7001 = vmatmul.bf16.gmra.mxu0 %v6823
      %v7002 = vpop.f32.mrf.mxu0
      %v7003 = vadd.f32 %v6885, %v7002
      %v7004 = vpop.f32.mrf.mxu0
      %v7005 = vadd.f32 %v6885, %v7004
      %7006 = vmatmul.bf16.gmra.mxu0 %v6825
      %v7007 = vpop.f32.mrf.mxu0
      %v7008 = vadd.f32 %v6885, %v7007
      %v7009 = vpop.f32.mrf.mxu0
      %v7010 = vadd.f32 %v6885, %v7009
      %7011 = vmatmul.bf16.gmra.mxu0 %v6827
      %v7012 = vpop.f32.mrf.mxu0
      %v7013 = vadd.f32 %v6885, %v7012
      %v7014 = vpop.f32.mrf.mxu0
      %v7015 = vadd.f32 %v6885, %v7014
      %7016 = vmatmul.bf16.gmra.mxu0 %v6829
      %v7017 = vpop.f32.mrf.mxu0
      %v7018 = vadd.f32 %v6885, %v7017
      %v7019 = vpop.f32.mrf.mxu0
      %v7020 = vadd.f32 %v6885, %v7019
      %7021 = vmatmul.bf16.gmra.mxu0 %v6831
      %v7022 = vpop.f32.mrf.mxu0
      %v7023 = vadd.f32 %v6885, %v7022
      %v7024 = vpop.f32.mrf.mxu0
      %v7025 = vadd.f32 %v6885, %v7024
      %7026 = vmatmul.bf16.gmra.mxu0 %v6833
      %v7027 = vpop.f32.mrf.mxu0
      %v7028 = vadd.f32 %v6885, %v7027
      %v7029 = vpop.f32.mrf.mxu0
      %v7030 = vadd.f32 %v6885, %v7029
      %7031 = vmatmul.bf16.gmra.mxu0 %v6835
      %v7032 = vpop.f32.mrf.mxu0
      %v7033 = vadd.f32 %v6885, %v7032
      %v7034 = vpop.f32.mrf.mxu0
      %v7035 = vadd.f32 %v6885, %v7034
      %7036 = vmatmul.bf16.gmra.mxu0 %v6837
      %v7037 = vpop.f32.mrf.mxu0
      %v7038 = vadd.f32 %v6885, %v7037
      %v7039 = vpop.f32.mrf.mxu0
      %v7040 = vadd.f32 %v6885, %v7039
      %7041 = vmatmul.bf16.gmra.mxu0 %v6839
      %v7042 = vpop.f32.mrf.mxu0
      %v7043 = vadd.f32 %v6885, %v7042
      %v7044 = vpop.f32.mrf.mxu0
      %v7045 = vadd.f32 %v6885, %v7044
      %7046 = vmatmul.bf16.gmra.mxu0 %v6841
      %v7047 = vpop.f32.mrf.mxu0
      %v7048 = vadd.f32 %v6885, %v7047
      %v7049 = vpop.f32.mrf.mxu0
      %v7050 = vadd.f32 %v6885, %v7049
      %7051 = vmatmul.bf16.gmra.mxu0 %v6843
      %v7052 = vpop.f32.mrf.mxu0
      %v7053 = vadd.f32 %v6885, %v7052
      %v7054 = vpop.f32.mrf.mxu0
      %v7055 = vadd.f32 %v6885, %v7054
      %7056 = vmatmul.bf16.gmra.mxu0 %v6845
      %v7057 = vpop.f32.mrf.mxu0
      %v7058 = vadd.f32 %v6885, %v7057
      %v7059 = vpop.f32.mrf.mxu0
      %v7060 = vadd.f32 %v6885, %v7059
      %7061 = vmatmul.bf16.gmra.mxu0 %v6847
      %v7062 = vpop.f32.mrf.mxu0
      %v7063 = vadd.f32 %v6885, %v7062
      %v7064 = vpop.f32.mrf.mxu0
      %v7065 = vadd.f32 %v6885, %v7064
      %7066 = vmatmul.bf16.gmra.mxu0 %v6849
      %v7067 = vpop.f32.mrf.mxu0
      %v7068 = vadd.f32 %v6885, %v7067
      %v7069 = vpop.f32.mrf.mxu0
      %v7070 = vadd.f32 %v6885, %v7069
      %7071 = vdwg.mxu0
      %7072 = vmatpush.bf16.msra.mxu0 %v6966
      %7073 = vmatpush.bf16.msra.mxu0 %v6965
      %7074 = vmatpush.bf16.msra.mxu0 %v6964
      %7075 = vmatpush.bf16.msra.mxu0 %v6963
      %7076 = vmatpush.bf16.msra.mxu0 %v6962
      %7077 = vmatpush.bf16.msra.mxu0 %v6961
      %7078 = vmatpush.bf16.msra.mxu0 %v6960
      %7079 = vmatpush.bf16.msra.mxu0 %v6959
      %7080 = vmatmul.bf16.gmra.mxu0 %v6820
      %v7081 = vpop.f32.mrf.mxu0
      %v7082 = vadd.f32 %v6993, %v7081
      %v7083 = vpop.f32.mrf.mxu0
      %v7084 = vadd.f32 %v6995, %v7083
      %7085 = vmatmul.bf16.gmra.mxu0 %v6822
      %v7086 = vpop.f32.mrf.mxu0
      %v7087 = vadd.f32 %v6998, %v7086
      %v7088 = vpop.f32.mrf.mxu0
      %v7089 = vadd.f32 %v7000, %v7088
      %7090 = vmatmul.bf16.gmra.mxu0 %v6824
      %v7091 = vpop.f32.mrf.mxu0
      %v7092 = vadd.f32 %v7003, %v7091
      %v7093 = vpop.f32.mrf.mxu0
      %v7094 = vadd.f32 %v7005, %v7093
      %7095 = vmatmul.bf16.gmra.mxu0 %v6826
      %v7096 = vpop.f32.mrf.mxu0
      %v7097 = vadd.f32 %v7008, %v7096
      %v7098 = vpop.f32.mrf.mxu0
      %v7099 = vadd.f32 %v7010, %v7098
      %7100 = vmatmul.bf16.gmra.mxu0 %v6828
      %v7101 = vpop.f32.mrf.mxu0
      %v7102 = vadd.f32 %v7013, %v7101
      %v7103 = vpop.f32.mrf.mxu0
      %v7104 = vadd.f32 %v7015, %v7103
      %7105 = vmatmul.bf16.gmra.mxu0 %v6830
      %v7106 = vpop.f32.mrf.mxu0
      %v7107 = vadd.f32 %v7018, %v7106
      %v7108 = vpop.f32.mrf.mxu0
      %v7109 = vadd.f32 %v7020, %v7108
      %7110 = vmatmul.bf16.gmra.mxu0 %v6832
      %v7111 = vpop.f32.mrf.mxu0
      %v7112 = vadd.f32 %v7023, %v7111
      %v7113 = vpop.f32.mrf.mxu0
      %v7114 = vadd.f32 %v7025, %v7113
      %7115 = vmatmul.bf16.gmra.mxu0 %v6834
      %v7116 = vpop.f32.mrf.mxu0
      %v7117 = vadd.f32 %v7028, %v7116
      %v7118 = vpop.f32.mrf.mxu0
      %v7119 = vadd.f32 %v7030, %v7118
      %7120 = vmatmul.bf16.gmra.mxu0 %v6836
      %v7121 = vpop.f32.mrf.mxu0
      %v7122 = vadd.f32 %v7033, %v7121
      %v7123 = vpop.f32.mrf.mxu0
      %v7124 = vadd.f32 %v7035, %v7123
      %7125 = vmatmul.bf16.gmra.mxu0 %v6838
      %v7126 = vpop.f32.mrf.mxu0
      %v7127 = vadd.f32 %v7038, %v7126
      %v7128 = vpop.f32.mrf.mxu0
      %v7129 = vadd.f32 %v7040, %v7128
      %7130 = vmatmul.bf16.gmra.mxu0 %v6840
      %v7131 = vpop.f32.mrf.mxu0
      %v7132 = vadd.f32 %v7043, %v7131
      %v7133 = vpop.f32.mrf.mxu0
      %v7134 = vadd.f32 %v7045, %v7133
      %7135 = vmatmul.bf16.gmra.mxu0 %v6842
      %v7136 = vpop.f32.mrf.mxu0
      %v7137 = vadd.f32 %v7048, %v7136
      %v7138 = vpop.f32.mrf.mxu0
      %v7139 = vadd.f32 %v7050, %v7138
      %7140 = vmatmul.bf16.gmra.mxu0 %v6844
      %v7141 = vpop.f32.mrf.mxu0
      %v7142 = vadd.f32 %v7053, %v7141
      %v7143 = vpop.f32.mrf.mxu0
      %v7144 = vadd.f32 %v7055, %v7143
      %7145 = vmatmul.bf16.gmra.mxu0 %v6846
      %v7146 = vpop.f32.mrf.mxu0
      %v7147 = vadd.f32 %v7058, %v7146
      %v7148 = vpop.f32.mrf.mxu0
      %v7149 = vadd.f32 %v7060, %v7148
      %7150 = vmatmul.bf16.gmra.mxu0 %v6848
      %v7151 = vpop.f32.mrf.mxu0
      %v7152 = vadd.f32 %v7063, %v7151
      %v7153 = vpop.f32.mrf.mxu0
      %v7154 = vadd.f32 %v7065, %v7153
      %7155 = vmatmul.bf16.gmra.mxu0 %v6850
      %v7156 = vpop.f32.mrf.mxu0
      %v7157 = vadd.f32 %v7068, %v7156
      %v7158 = vpop.f32.mrf.mxu0
      %v7159 = vadd.f32 %v7070, %v7158
      %7160 = vdwg.mxu0
      %v7161 = vpack.c.bf16 %v7082, %v7082
      %v7162 = vpack.c.bf16 %v7084, %v7084
      %v7163 = vpack.c.bf16 %v7087, %v7087
      %v7164 = vpack.c.bf16 %v7089, %v7089
      %v7165 = vpack.c.bf16 %v7092, %v7092
      %v7166 = vpack.c.bf16 %v7094, %v7094
      %v7167 = vpack.c.bf16 %v7097, %v7097
      %v7168 = vpack.c.bf16 %v7099, %v7099
      %v7169 = vpack.c.bf16 %v7102, %v7102
      %v7170 = vpack.c.bf16 %v7104, %v7104
      %v7171 = vpack.c.bf16 %v7107, %v7107
      %v7172 = vpack.c.bf16 %v7109, %v7109
      %v7173 = vpack.c.bf16 %v7112, %v7112
      %v7174 = vpack.c.bf16 %v7114, %v7114
      %v7175 = vpack.c.bf16 %v7117, %v7117
      %v7176 = vpack.c.bf16 %v7119, %v7119
      %v7177 = vpack.c.bf16 %v7122, %v7122
      %v7178 = vpack.c.bf16 %v7124, %v7124
      %v7179 = vpack.c.bf16 %v7127, %v7127
      %v7180 = vpack.c.bf16 %v7129, %v7129
      %v7181 = vpack.c.bf16 %v7132, %v7132
      %v7182 = vpack.c.bf16 %v7134, %v7134
      %v7183 = vpack.c.bf16 %v7137, %v7137
      %v7184 = vpack.c.bf16 %v7139, %v7139
      %v7185 = vpack.c.bf16 %v7142, %v7142
      %v7186 = vpack.c.bf16 %v7144, %v7144
      %v7187 = vpack.c.bf16 %v7147, %v7147
      %v7188 = vpack.c.bf16 %v7149, %v7149
      %v7189 = vpack.c.bf16 %v7152, %v7152
      %v7190 = vpack.c.bf16 %v7154, %v7154
      %v7191 = vpack.c.bf16 %v7157, %v7157
      %v7192 = vpack.c.bf16 %v7159, %v7159
      %7193 = vst [vmem:[%s604] sm:$0xf] %v7161
      %7194 = vst [vmem:[%s604 + $0x4] sm:$0xf] %v7162
      %7195 = vst [vmem:[%s604 + $0x8] sm:$0xf] %v7163
      %7196 = vst [vmem:[%s604 + $0xc] sm:$0xf] %v7164
      %7197 = vst [vmem:[%s604 + $0x10] sm:$0xf] %v7165
      %7198 = vst [vmem:[%s604 + $0x14] sm:$0xf] %v7166
      %7199 = vst [vmem:[%s604 + $0x18] sm:$0xf] %v7167
      %7200 = vst [vmem:[%s604 + $0x1c] sm:$0xf] %v7168
      %7201 = vst [vmem:[%s604 + $0x20] sm:$0xf] %v7169
      %7202 = vst [vmem:[%s604 + $0x24] sm:$0xf] %v7170
      %7203 = vst [vmem:[%s604 + $0x28] sm:$0xf] %v7171
      %7204 = vst [vmem:[%s604 + $0x2c] sm:$0xf] %v7172
      %7205 = vst [vmem:[%s604 + $0x30] sm:$0xf] %v7173
      %7206 = vst [vmem:[%s604 + $0x34] sm:$0xf] %v7174
      %7207 = vst [vmem:[%s604 + $0x38] sm:$0xf] %v7175
      %7208 = vst [vmem:[%s604 + $0x3c] sm:$0xf] %v7176
      %7209 = vst [vmem:[%s604 + $0x40] sm:$0xf] %v7177
      %7210 = vst [vmem:[%s604 + $0x44] sm:$0xf] %v7178
      %7211 = vst [vmem:[%s604 + $0x48] sm:$0xf] %v7179
      %7212 = vst [vmem:[%s604 + $0x4c] sm:$0xf] %v7180
      %7213 = vst [vmem:[%s604 + $0x50] sm:$0xf] %v7181
      %7214 = vst [vmem:[%s604 + $0x54] sm:$0xf] %v7182
      %7215 = vst [vmem:[%s604 + $0x58] sm:$0xf] %v7183
      %7216 = vst [vmem:[%s604 + $0x5c] sm:$0xf] %v7184
      %7217 = vst [vmem:[%s604 + $0x60] sm:$0xf] %v7185
      %7218 = vst [vmem:[%s604 + $0x64] sm:$0xf] %v7186
      %7219 = vst [vmem:[%s604 + $0x68] sm:$0xf] %v7187
      %7220 = vst [vmem:[%s604 + $0x6c] sm:$0xf] %v7188
      %7221 = vst [vmem:[%s604 + $0x70] sm:$0xf] %v7189
      %7222 = vst [vmem:[%s604 + $0x74] sm:$0xf] %v7190
      %7223 = vst [vmem:[%s604 + $0x78] sm:$0xf] %v7191
      %7224 = vst [vmem:[%s604 + $0x7c] sm:$0xf] %v7192
      %s7225 = smul.u32 32, %s30
      %p7226 = scmp.lt.s32.totalorder %s7225, 63
      %s7227 = scalar_select %p7226, %s7225, 63
      %s7228 = smul.addr %s7227, 4
      %s7229 = scalar_lea.vmem %s19, %s7228
      // Predicated region
      $region97: #{nerf_forward.1} parent=95 // pred_check
        %p7230 = pneg %p452
      $region98: #{nerf_forward.1} parent=95 // pred_check_branch
        %7232 = sbr.rel (%p7230) target = $region100
      $region99: #{nerf_forward.1} parent=95 // pred_region
        %s7233 = smul.u32 32, %s30
      $region100: #{nerf_forward.1} parent=95 // pred_fallthru
        _
    $region96: #{nerf_forward.1} parent=5 // pred_fallthru
      _
    %p7234 = scmp.le.s32.totalorder 2, %s25
    // Predicated region
    $region101: #{nerf_forward.1} parent=5 // pred_check
      %p7235 = pneg %p7234
    $region102: #{nerf_forward.1} parent=5 // pred_check_branch
      %7237 = sbr.rel (%p7235) target = $region104
    $region103: #{nerf_forward.1} parent=5 // pred_region
      %s7238 = ssub.s32 %s25, 2
      // Predicated region
      $region105: #{nerf_forward.1} parent=103 // pred_check
        %p7239 = pneg %p458
      $region106: #{nerf_forward.1} parent=103 // pred_check_branch
        %7241 = sbr.rel (%p7239) target = $region108
      $region107: #{nerf_forward.1} parent=103 // pred_region
        %s7242 = smul.u32 32, %s31
        %p7243 = scmp.lt.s32.totalorder %s7242, 63
        %s7244 = scalar_select %p7243, %s7242, 63
        %s7245 = smul.addr %s7244, 4
        %s7246 = scalar_lea.vmem %s19, %s7245
      $region108: #{nerf_forward.1} parent=103 // pred_fallthru
        _
    $region104: #{nerf_forward.1} parent=5 // pred_fallthru
      _
  $region6: #{nerf_forward.1} parent=0 // loop_footer
    %s29 = sadd.s32 1, %s25
  $region7: #{nerf_forward.1} parent=0 // loop_footer_branch
    %24 = sbr.rel target = $region3
  $region8: #{nerf_forward.1} parent=0 // loop_exit
    _

</llo_original>
